<compile_context>
chip_gen: v5e
topology: v5e:2x2
jax: 0.10.0
libtpu: 0.0.40
codegen_flags: <defaults>
</compile_context>

<pallas_src>
import math
from functools import partial

import jax
import jax.numpy as jnp
from jax.experimental import pallas as pl
from jax.experimental.pallas import tpu as pltpu

MXU_DTYPE = jnp.bfloat16          # MXU matmul input dtype (f32 accumulation)

# Per-layer parameters, stacked along a leading n_layer axis (layer grid dim).
LAYER_KEYS = (
    "ln1_g", "ln1_b", "wqkv", "bqkv", "self_wo", "self_bo",
    "ln2_g", "ln2_b", "src_wq", "src_bq", "src_wkv", "src_bkv",
    "src_wo", "src_bo", "ln3_g", "ln3_b",
    "ff_w1", "ff_b1", "ff_w2", "ff_b2",
)
# Constant (layer-independent) parameters: after_norm + padded output Linear.
FINAL_KEYS = ("an_g", "an_b", "out_w_pad", "out_b_pad")


def _vmem_limit_bytes():
    """Generation-aware scoped-VMEM budget: ~75% of physical, capped at 100 MiB."""
    try:
        phys = pltpu.get_tpu_info().vmem_capacity_bytes
    except Exception:
        phys = 64 * 1024 * 1024          # conservative: v7x per-core VMEM
    return int(min(0.75 * phys, 100 * 1024 * 1024))


# ----------------------------------------------------------------------------
# In-kernel helpers (operate on values, not refs)
# ----------------------------------------------------------------------------
def _layer_norm(x, g, b):
    # x: (N, H) f32, g/b: (1, H) f32 ; ESPnet LayerNorm, eps=1e-12
    m = jnp.mean(x, axis=-1, keepdims=True)
    c = x - m
    v = jnp.mean(c * c, axis=-1, keepdims=True)
    return c * jax.lax.rsqrt(v + 1e-12) * g + b


def _mha(q, k, v, wo, bo, key_mask, n_head, scale):
    """Multi-head attention + output projection for one batch element.

    q: (Lq, H) f32, k/v: (Lk, H) f32, wo: (H, H) bf16, bo: (1, H) f32,
    key_mask: (1, Lk) bool or None.  Each head's context is folded directly
    through the matching row-slice of wo, so no lane-axis concat of head
    outputs is ever materialised.  Returns (Lq, H) f32.
    """
    H = q.shape[-1]
    dh = H // n_head
    neg = jnp.finfo(jnp.float32).min
    q16 = q.astype(MXU_DTYPE)
    k16 = k.astype(MXU_DTYPE)
    v16 = v.astype(MXU_DTYPE)
    acc = None
    for h in range(n_head):
        s0, s1 = h * dh, (h + 1) * dh
        scores = jax.lax.dot_general(
            q16[:, s0:s1], k16[:, s0:s1], (((1,), (1,)), ((), ())),
            preferred_element_type=jnp.float32) * scale            # (Lq, Lk) f32
        if key_mask is not None:
            scores = jnp.where(key_mask, scores, neg)
        mx = jnp.max(scores, axis=-1, keepdims=True)
        e = jnp.exp(scores - mx)
        attn = e * pl.reciprocal(jnp.sum(e, axis=-1, keepdims=True), approx=True)
        if key_mask is not None:
            attn = jnp.where(key_mask, attn, 0.0)                   # ESPnet zeroing
        ctx = jax.lax.dot_general(
            attn.astype(MXU_DTYPE), v16[:, s0:s1], (((1,), (0,)), ((), ())),
            preferred_element_type=jnp.float32)                     # (Lq, dh) f32
        part = jnp.dot(ctx.astype(MXU_DTYPE), wo[s0:s1, :],
                       preferred_element_type=jnp.float32)          # (Lq, H) f32
        acc = part if acc is None else acc + part
    return acc + bo


# ----------------------------------------------------------------------------
# Fused decoder-stack kernel: one grid step = (batch element, decoder layer)
# ----------------------------------------------------------------------------
def _decoder_stack_kernel(
        y_ref, mem_ref, mask_ref,
        ln1_g, ln1_b, wqkv, bqkv, wo1, bo1,
        ln2_g, ln2_b, wq2, bq2, wkv2, bkv2, wo2, bo2,
        ln3_g, ln3_b, w1, b1, w2, b2,
        an_g, an_b, wout, bout,
        o_ref, resid,
        *, n_head, scale):
    l = pl.program_id(1)
    H = y_ref.shape[-1]

    @pl.when(l == 0)
    def _():
        resid[...] = y_ref[...]              # residual stream lives in VMEM (f32)

    y = resid[...]                           # (L, H) f32
    key_mask = mask_ref[...] > 0.0           # (1, S) — hoisted out of head loop

    # ---- self-attention (tgt_mask is None in the reference module) ----
    yn = _layer_norm(y, ln1_g[...], ln1_b[...])
    qkv = jnp.dot(yn.astype(MXU_DTYPE), wqkv[...],
                  preferred_element_type=jnp.float32) + bqkv[...]   # (L, 3H)
    y = y + _mha(qkv[:, :H], qkv[:, H:2 * H], qkv[:, 2 * H:],
                 wo1[...], bo1[...], None, n_head, scale)

    # ---- source attention over the encoder memory ----
    yn = _layer_norm(y, ln2_g[...], ln2_b[...])
    q = jnp.dot(yn.astype(MXU_DTYPE), wq2[...],
                preferred_element_type=jnp.float32) + bq2[...]      # (L, H)
    kv = jnp.dot(mem_ref[...], wkv2[...],
                 preferred_element_type=jnp.float32) + bkv2[...]    # (S, 2H)
    y = y + _mha(q, kv[:, :H], kv[:, H:],
                 wo2[...], bo2[...], key_mask, n_head, scale)

    # ---- position-wise FFN ----
    yn = _layer_norm(y, ln3_g[...], ln3_b[...])
    h = jnp.maximum(jnp.dot(yn.astype(MXU_DTYPE), w1[...],
                            preferred_element_type=jnp.float32) + b1[...], 0.0)
    y = y + (jnp.dot(h.astype(MXU_DTYPE), w2[...],
                     preferred_element_type=jnp.float32) + b2[...])

    resid[...] = y

    # ---- after the last layer: after_norm + linear_out (lane-padded) ----
    @pl.when(l == pl.num_programs(1) - 1)
    def _():
        yn = _layer_norm(y, an_g[...], an_b[...])
        o_ref[...] = jnp.dot(yn.astype(MXU_DTYPE), wout[...],
                             preferred_element_type=jnp.float32) + bout[...]


# ----------------------------------------------------------------------------
# pallas_call wrapper
# ----------------------------------------------------------------------------
def _build_specs_and_args(params, y, memory_bf16, mask, single_buffer_consts):
    B, L, H = y.shape
    S = memory_bf16.shape[1]
    bmap = lambda b, l: (b, 0, 0)            # per-batch blocks (constant over l)
    lmap = lambda b, l: (l, 0, 0)            # per-layer blocks (prefetch over l)
    cmap = lambda b, l: (0, 0)               # constant blocks

    in_specs = [
        pl.BlockSpec((None, L, H), bmap),    # y (f32, read once per batch elem)
        pl.BlockSpec((None, S, H), bmap),    # encoder memory (bf16)
        pl.BlockSpec((None, 1, S), bmap),    # key mask (f32)
    ]
    args = [y, memory_bf16, mask]
    for name in LAYER_KEYS:
        arr = params[name]
        in_specs.append(pl.BlockSpec((None,) + arr.shape[1:], lmap))
        args.append(arr)
    for name in FINAL_KEYS:
        arr = params[name]
        if single_buffer_consts:
            spec = pl.BlockSpec(arr.shape, cmap, pipeline_mode=pl.Buffered(1))
        else:
            spec = pl.BlockSpec(arr.shape, cmap)
        in_specs.append(spec)
        args.append(arr)
    return in_specs, args


def _decoder_stack_call(params, y, memory_bf16, mask, n_head, n_layer,
                        single_buffer_consts):
    B, L, H = y.shape
    Opad = params["out_w_pad"].shape[1]
    scale = 1.0 / math.sqrt(H // n_head)
    in_specs, args = _build_specs_and_args(params, y, memory_bf16, mask,
                                           single_buffer_consts)
    return pl.pallas_call(
        partial(_decoder_stack_kernel, n_head=n_head, scale=scale),
        out_shape=jax.ShapeDtypeStruct((B, L, Opad), jnp.float32),
        grid=(B, n_layer),
        in_specs=in_specs,
        out_specs=pl.BlockSpec((None, L, Opad), lambda b, l: (b, 0, 0)),
        scratch_shapes=[pltpu.VMEM((L, H), jnp.float32)],   # residual carry
        compiler_params=pltpu.CompilerParams(
            dimension_semantics=("parallel", "arbitrary"),
            vmem_limit_bytes=_vmem_limit_bytes(),
        ),
    )(*args)


def parallel_decoder_forward(params, y, memory, memory_mask, n_head, i_dim):
    """Mirrors ParallelDecoder.forward (dropout = identity / inference)."""
    B, L, H = y.shape
    S = memory.shape[1]
    n_layer = params["wqkv"].shape[0]

    if memory_mask is not None:
        mm = memory_mask[:, :-2:2][:, :-2:2]
        assert mm.shape == (B, S)
        mask = mm.astype(jnp.float32)[:, None, :]            # (B, 1, S)
    else:
        mask = jnp.ones((B, 1, S), jnp.float32)

    memory_bf16 = memory.astype(MXU_DTYPE)   # halve encoder-memory HBM traffic
    y = y.astype(jnp.float32)

    try:
        out_pad = _decoder_stack_call(params, y, memory_bf16, mask, n_head,
                                      n_layer, single_buffer_consts=True)
    except Exception:
        # Fallback for JAX/Mosaic versions without BlockSpec(pipeline_mode=
        # pl.Buffered(1)) support on grid-pipelined pallas_call inputs.
        out_pad = _decoder_stack_call(params, y, memory_bf16, mask, n_head,
                                      n_layer, single_buffer_consts=False)
    return out_pad[:, :, :i_dim]


# ----------------------------------------------------------------------------
# Deterministic parameter init (synthetic; no checkpoint load)
# ----------------------------------------------------------------------------
def init_params(key, i_dim, h_dim, ff_dim, n_layer):
    def nxt():
        nonlocal key
        key, sub = jax.random.split(key)
        return sub

    def w(shape):   # matmul weights stored in bf16 (MXU input dtype)
        return (0.02 * jax.random.normal(nxt(), shape, jnp.float32)).astype(MXU_DTYPE)

    def zeros(shape):
        return jnp.zeros(shape, jnp.float32)

    def ones(shape):
        return jnp.ones(shape, jnp.float32)

    nl, H, F = n_layer, h_dim, ff_dim
    o_pad = ((i_dim + 127) // 128) * 128
    out_w = 0.02 * jax.random.normal(nxt(), (H, i_dim), jnp.float32)
    out_w_pad = jnp.zeros((H, o_pad), jnp.float32).at[:, :i_dim].set(out_w)

    return {
        # per-layer, stacked along the leading n_layer axis (layer grid dim)
        "ln1_g": ones((nl, 1, H)), "ln1_b": zeros((nl, 1, H)),
        "wqkv": w((nl, H, 3 * H)), "bqkv": zeros((nl, 1, 3 * H)),
        "self_wo": w((nl, H, H)), "self_bo": zeros((nl, 1, H)),
        "ln2_g": ones((nl, 1, H)), "ln2_b": zeros((nl, 1, H)),
        "src_wq": w((nl, H, H)), "src_bq": zeros((nl, 1, H)),
        "src_wkv": w((nl, H, 2 * H)), "src_bkv": zeros((nl, 1, 2 * H)),
        "src_wo": w((nl, H, H)), "src_bo": zeros((nl, 1, H)),
        "ln3_g": ones((nl, 1, H)), "ln3_b": zeros((nl, 1, H)),
        "ff_w1": w((nl, H, F)), "ff_b1": zeros((nl, 1, F)),
        "ff_w2": w((nl, F, H)), "ff_b2": zeros((nl, 1, H)),
        # final LayerNorm + Linear(h_dim -> i_dim), lane-padded to 128 multiple
        "an_g": ones((1, H)), "an_b": zeros((1, H)),
        "out_w_pad": out_w_pad.astype(MXU_DTYPE),
        "out_b_pad": zeros((1, o_pad)),
    }


# ----------------------------------------------------------------------------
if __name__ == "__main__":
    # small shapes consistent with the module
    i_dim, h_dim, ff_dim, n_head, n_layer = 16, 32, 64, 4, 2
    B, L, S = 2, 8, 8             # target length L, encoder memory length S
    T_orig = 4 * S + 3            # so that [:-2:2][:-2:2] yields exactly S frames

    key = jax.random.PRNGKey(0)
    k_p, k_y, k_m = jax.random.split(key, 3)

    params = init_params(k_p, i_dim, h_dim, ff_dim, n_layer)

    y = jax.random.normal(k_y, (B, L, h_dim), jnp.float32)          # acoustic embeddings
    memory = jax.random.normal(k_m, (B, S, h_dim), jnp.float32)     # encoder output
    lengths = jnp.array([T_orig, T_orig - 8], jnp.int32)            # per-utt valid frames
    memory_mask = (jnp.arange(T_orig)[None, :] < lengths[:, None])  # (B, T_orig) bool

    # TODO(synk): dropout layers are identity (inference mode); no RNG dropout kernel.
    out = parallel_decoder_forward(params, y, memory, memory_mask, n_head, i_dim)
    out = jax.block_until_ready(out)
    assert out.shape == (B, L, i_dim), out.shape
    assert bool(jnp.all(jnp.isfinite(out)))
    print("KERNEL_OK")
</pallas_src>

<mosaic_0001>
module attributes {stable_mosaic.version = 11 : i64} {
  func.func @_decoder_stack_kernel(%arg0: i32, %arg1: i32, %arg2: memref<1x8x32xf32, #tpu.memory_space<vmem>>, %arg3: memref<1x8x32xbf16, #tpu.memory_space<vmem>>, %arg4: memref<1x1x8xf32, #tpu.memory_space<vmem>>, %arg5: memref<1x1x32xf32, #tpu.memory_space<vmem>>, %arg6: memref<1x1x32xf32, #tpu.memory_space<vmem>>, %arg7: memref<1x32x96xbf16, #tpu.memory_space<vmem>>, %arg8: memref<1x1x96xf32, #tpu.memory_space<vmem>>, %arg9: memref<1x32x32xbf16, #tpu.memory_space<vmem>>, %arg10: memref<1x1x32xf32, #tpu.memory_space<vmem>>, %arg11: memref<1x1x32xf32, #tpu.memory_space<vmem>>, %arg12: memref<1x1x32xf32, #tpu.memory_space<vmem>>, %arg13: memref<1x32x32xbf16, #tpu.memory_space<vmem>>, %arg14: memref<1x1x32xf32, #tpu.memory_space<vmem>>, %arg15: memref<1x32x64xbf16, #tpu.memory_space<vmem>>, %arg16: memref<1x1x64xf32, #tpu.memory_space<vmem>>, %arg17: memref<1x32x32xbf16, #tpu.memory_space<vmem>>, %arg18: memref<1x1x32xf32, #tpu.memory_space<vmem>>, %arg19: memref<1x1x32xf32, #tpu.memory_space<vmem>>, %arg20: memref<1x1x32xf32, #tpu.memory_space<vmem>>, %arg21: memref<1x32x64xbf16, #tpu.memory_space<vmem>>, %arg22: memref<1x1x64xf32, #tpu.memory_space<vmem>>, %arg23: memref<1x64x32xbf16, #tpu.memory_space<vmem>>, %arg24: memref<1x1x32xf32, #tpu.memory_space<vmem>>, %arg25: memref<1x32xf32, #tpu.memory_space<vmem>>, %arg26: memref<1x32xf32, #tpu.memory_space<vmem>>, %arg27: memref<32x128xbf16, #tpu.memory_space<vmem>>, %arg28: memref<1x128xf32, #tpu.memory_space<vmem>>, %arg29: memref<1x8x128xf32, #tpu.memory_space<vmem>>, %arg30: memref<8x32xf32, #tpu.memory_space<vmem>>) attributes {dimension_semantics = [#tpu.dimension_semantics<parallel>, #tpu.dimension_semantics<arbitrary>], iteration_bounds = array<i64: 2, 2>, scalar_prefetch = 0 : i64, scratch_operands = 1 : i64, tpu.core_type = #tpu.core_type<tc>, window_params = [{transform_indices = @transform_0, window_bounds = array<i64: 1, 8, 32>}, {transform_indices = @transform_1, window_bounds = array<i64: 1, 8, 32>}, {transform_indices = @transform_2, window_bounds = array<i64: 1, 1, 8>}, {transform_indices = @transform_3, window_bounds = array<i64: 1, 1, 32>}, {transform_indices = @transform_4, window_bounds = array<i64: 1, 1, 32>}, {transform_indices = @transform_5, window_bounds = array<i64: 1, 32, 96>}, {transform_indices = @transform_6, window_bounds = array<i64: 1, 1, 96>}, {transform_indices = @transform_7, window_bounds = array<i64: 1, 32, 32>}, {transform_indices = @transform_8, window_bounds = array<i64: 1, 1, 32>}, {transform_indices = @transform_9, window_bounds = array<i64: 1, 1, 32>}, {transform_indices = @transform_10, window_bounds = array<i64: 1, 1, 32>}, {transform_indices = @transform_11, window_bounds = array<i64: 1, 32, 32>}, {transform_indices = @transform_12, window_bounds = array<i64: 1, 1, 32>}, {transform_indices = @transform_13, window_bounds = array<i64: 1, 32, 64>}, {transform_indices = @transform_14, window_bounds = array<i64: 1, 1, 64>}, {transform_indices = @transform_15, window_bounds = array<i64: 1, 32, 32>}, {transform_indices = @transform_16, window_bounds = array<i64: 1, 1, 32>}, {transform_indices = @transform_17, window_bounds = array<i64: 1, 1, 32>}, {transform_indices = @transform_18, window_bounds = array<i64: 1, 1, 32>}, {transform_indices = @transform_19, window_bounds = array<i64: 1, 32, 64>}, {transform_indices = @transform_20, window_bounds = array<i64: 1, 1, 64>}, {transform_indices = @transform_21, window_bounds = array<i64: 1, 64, 32>}, {transform_indices = @transform_22, window_bounds = array<i64: 1, 1, 32>}, {pipeline_mode = #tpu.pipeline_mode<synchronous>, transform_indices = @transform_23, window_bounds = array<i64: 1, 32>}, {pipeline_mode = #tpu.pipeline_mode<synchronous>, transform_indices = @transform_24, window_bounds = array<i64: 1, 32>}, {pipeline_mode = #tpu.pipeline_mode<synchronous>, transform_indices = @transform_25, window_bounds = array<i64: 32, 128>}, {pipeline_mode = #tpu.pipeline_mode<synchronous>, transform_indices = @transform_26, window_bounds = array<i64: 1, 128>}, {transform_indices = @transform_27, window_bounds = array<i64: 1, 8, 128>}]} {
    %c0_i32 = arith.constant 0 : i32
    %0 = arith.cmpi eq, %arg1, %c0_i32 : i32
    %1 = arith.extui %0 : i1 to i32
    %c0_i32_0 = arith.constant 0 : i32
    %2 = arith.cmpi ne, %1, %c0_i32_0 : i32
    scf.if %2 {
      %c0_148 = arith.constant 0 : index
      %c0_149 = arith.constant 0 : index
      %c0_150 = arith.constant 0 : index
      %359 = vector.load %arg2[%c0_148, %c0_149, %c0_150] : memref<1x8x32xf32, #tpu.memory_space<vmem>>, vector<1x8x32xf32>
      %360 = vector.shape_cast %359 : vector<1x8x32xf32> to vector<8x32xf32>
      %c0_151 = arith.constant 0 : index
      %c0_152 = arith.constant 0 : index
      %361 = vector.load %arg30[%c0_151, %c0_152] : memref<8x32xf32, #tpu.memory_space<vmem>>, vector<8x32xf32>
      tpu.vector_store %arg30[%c0_151, %c0_152], %360 {strides = array<i32>} : memref<8x32xf32, #tpu.memory_space<vmem>>, vector<8x32xf32>,
    } else {
    }
    %c0 = arith.constant 0 : index
    %c0_1 = arith.constant 0 : index
    %3 = vector.load %arg30[%c0, %c0_1] : memref<8x32xf32, #tpu.memory_space<vmem>>, vector<8x32xf32>
    %c0_2 = arith.constant 0 : index
    %c0_3 = arith.constant 0 : index
    %c0_4 = arith.constant 0 : index
    %4 = vector.load %arg4[%c0_2, %c0_3, %c0_4] : memref<1x1x8xf32, #tpu.memory_space<vmem>>, vector<1x1x8xf32>
    %5 = vector.shape_cast %4 : vector<1x1x8xf32> to vector<1x8xf32>
    %cst = arith.constant 0.000000e+00 : f32
    %6 = vector.broadcast %cst : f32 to vector<1x8xf32>
    %7 = arith.cmpf ogt, %5, %6 : vector<1x8xf32>
    %c0_5 = arith.constant 0 : index
    %c0_6 = arith.constant 0 : index
    %c0_7 = arith.constant 0 : index
    %8 = vector.load %arg5[%c0_5, %c0_6, %c0_7] : memref<1x1x32xf32, #tpu.memory_space<vmem>>, vector<1x1x32xf32>
    %9 = vector.shape_cast %8 : vector<1x1x32xf32> to vector<1x32xf32>
    %c0_8 = arith.constant 0 : index
    %c0_9 = arith.constant 0 : index
    %c0_10 = arith.constant 0 : index
    %10 = vector.load %arg6[%c0_8, %c0_9, %c0_10] : memref<1x1x32xf32, #tpu.memory_space<vmem>>, vector<1x1x32xf32>
    %11 = vector.shape_cast %10 : vector<1x1x32xf32> to vector<1x32xf32>
    %cst_11 = arith.constant dense<0.000000e+00> : vector<8xf32>
    %12 = vector.multi_reduction <add>, %3, %cst_11 [1] : vector<8x32xf32> to vector<8xf32>
    %13 = vector.shape_cast %12 : vector<8xf32> to vector<8x1xf32>
    %cst_12 = arith.constant 3.200000e+01 : f32
    %14 = vector.broadcast %cst_12 : f32 to vector<8x1xf32>
    %15 = arith.divf %13, %14 : vector<8x1xf32>
    %16 = vector.broadcast %15 : vector<8x1xf32> to vector<8x32xf32>
    %17 = arith.subf %3, %16 : vector<8x32xf32>
    %18 = arith.mulf %17, %17 : vector<8x32xf32>
    %cst_13 = arith.constant dense<0.000000e+00> : vector<8xf32>
    %19 = vector.multi_reduction <add>, %18, %cst_13 [1] : vector<8x32xf32> to vector<8xf32>
    %20 = vector.shape_cast %19 : vector<8xf32> to vector<8x1xf32>
    %cst_14 = arith.constant 3.200000e+01 : f32
    %21 = vector.broadcast %cst_14 : f32 to vector<8x1xf32>
    %22 = arith.divf %20, %21 : vector<8x1xf32>
    %cst_15 = arith.constant 9.99999996E-13 : f32
    %23 = vector.broadcast %cst_15 : f32 to vector<8x1xf32>
    %24 = arith.addf %22, %23 : vector<8x1xf32>
    %25 = math.rsqrt %24 : vector<8x1xf32>
    %26 = vector.broadcast %25 : vector<8x1xf32> to vector<8x32xf32>
    %27 = arith.mulf %17, %26 : vector<8x32xf32>
    %28 = vector.broadcast %9 : vector<1x32xf32> to vector<8x32xf32>
    %29 = arith.mulf %27, %28 : vector<8x32xf32>
    %30 = vector.broadcast %11 : vector<1x32xf32> to vector<8x32xf32>
    %31 = arith.addf %29, %30 : vector<8x32xf32>
    %32 = arith.truncf %31 : vector<8x32xf32> to vector<8x32xbf16>
    %c0_16 = arith.constant 0 : index
    %c0_17 = arith.constant 0 : index
    %c0_18 = arith.constant 0 : index
    %33 = vector.load %arg7[%c0_16, %c0_17, %c0_18] : memref<1x32x96xbf16, #tpu.memory_space<vmem>>, vector<1x32x96xbf16>
    %34 = vector.shape_cast %33 : vector<1x32x96xbf16> to vector<32x96xbf16>
    %cst_19 = arith.constant dense<0.000000e+00> : vector<8x96xf32>
    %35 = tpu.matmul %32, %34, %cst_19 {dimension_numbers = #tpu.dot_dimension_numbers<[1], [0], [0], [1], [0, 0, 1, 1], [], []>} : vector<8x32xbf16>, vector<32x96xbf16>, vector<8x96xf32> -> vector<8x96xf32>
    %c0_20 = arith.constant 0 : index
    %c0_21 = arith.constant 0 : index
    %c0_22 = arith.constant 0 : index
    %36 = vector.load %arg8[%c0_20, %c0_21, %c0_22] : memref<1x1x96xf32, #tpu.memory_space<vmem>>, vector<1x1x96xf32>
    %37 = vector.shape_cast %36 : vector<1x1x96xf32> to vector<1x96xf32>
    %38 = vector.broadcast %37 : vector<1x96xf32> to vector<8x96xf32>
    %39 = arith.addf %35, %38 : vector<8x96xf32>
    %40 = vector.extract_strided_slice %39 {offsets = [0, 0], sizes = [8, 32], strides = [1, 1]} : vector<8x96xf32> to vector<8x32xf32>
    %41 = vector.extract_strided_slice %39 {offsets = [0, 32], sizes = [8, 32], strides = [1, 1]} : vector<8x96xf32> to vector<8x32xf32>
    %42 = vector.extract_strided_slice %39 {offsets = [0, 64], sizes = [8, 32], strides = [1, 1]} : vector<8x96xf32> to vector<8x32xf32>
    %c0_23 = arith.constant 0 : index
    %c0_24 = arith.constant 0 : index
    %c0_25 = arith.constant 0 : index
    %43 = vector.load %arg9[%c0_23, %c0_24, %c0_25] : memref<1x32x32xbf16, #tpu.memory_space<vmem>>, vector<1x32x32xbf16>
    %44 = vector.shape_cast %43 : vector<1x32x32xbf16> to vector<32x32xbf16>
    %c0_26 = arith.constant 0 : index
    %c0_27 = arith.constant 0 : index
    %c0_28 = arith.constant 0 : index
    %45 = vector.load %arg10[%c0_26, %c0_27, %c0_28] : memref<1x1x32xf32, #tpu.memory_space<vmem>>, vector<1x1x32xf32>
    %46 = vector.shape_cast %45 : vector<1x1x32xf32> to vector<1x32xf32>
    %47 = arith.truncf %40 : vector<8x32xf32> to vector<8x32xbf16>
    %48 = arith.truncf %41 : vector<8x32xf32> to vector<8x32xbf16>
    %49 = arith.truncf %42 : vector<8x32xf32> to vector<8x32xbf16>
    %50 = vector.extract_strided_slice %47 {offsets = [0, 0], sizes = [8, 8], strides = [1, 1]} : vector<8x32xbf16> to vector<8x8xbf16>
    %51 = vector.extract_strided_slice %48 {offsets = [0, 0], sizes = [8, 8], strides = [1, 1]} : vector<8x32xbf16> to vector<8x8xbf16>
    %cst_29 = arith.constant dense<0.000000e+00> : vector<8x8xf32>
    %52 = tpu.matmul %50, %51, %cst_29 {dimension_numbers = #tpu.dot_dimension_numbers<[1], [1], [0], [0], [0, 0, 1, 0], [], []>} : vector<8x8xbf16>, vector<8x8xbf16>, vector<8x8xf32> -> vector<8x8xf32>
    %cst_30 = arith.constant 0.353553385 : f32
    %53 = vector.broadcast %cst_30 : f32 to vector<8x8xf32>
    %54 = arith.mulf %52, %53 : vector<8x8xf32>
    %cst_31 = arith.constant dense<0xFF800000> : vector<8xf32>
    %55 = vector.multi_reduction <maximumf>, %54, %cst_31 [1] : vector<8x8xf32> to vector<8xf32>
    %56 = vector.shape_cast %55 : vector<8xf32> to vector<8x1xf32>
    %57 = vector.broadcast %56 : vector<8x1xf32> to vector<8x8xf32>
    %58 = arith.subf %54, %57 : vector<8x8xf32>
    %59 = math.exp %58 : vector<8x8xf32>
    %cst_32 = arith.constant dense<0.000000e+00> : vector<8xf32>
    %60 = vector.multi_reduction <add>, %59, %cst_32 [1] : vector<8x8xf32> to vector<8xf32>
    %61 = vector.shape_cast %60 : vector<8xf32> to vector<8x1xf32>
    %62 = tpu.reciprocal %61 {approx = true} : vector<8x1xf32> -> vector<8x1xf32>
    %63 = vector.broadcast %62 : vector<8x1xf32> to vector<8x8xf32>
    %64 = arith.mulf %59, %63 : vector<8x8xf32>
    %65 = arith.truncf %64 : vector<8x8xf32> to vector<8x8xbf16>
    %66 = vector.extract_strided_slice %49 {offsets = [0, 0], sizes = [8, 8], strides = [1, 1]} : vector<8x32xbf16> to vector<8x8xbf16>
    %cst_33 = arith.constant dense<0.000000e+00> : vector<8x8xf32>
    %67 = tpu.matmul %65, %66, %cst_33 {dimension_numbers = #tpu.dot_dimension_numbers<[1], [0], [0], [1], [0, 0, 1, 1], [], []>} : vector<8x8xbf16>, vector<8x8xbf16>, vector<8x8xf32> -> vector<8x8xf32>
    %68 = arith.truncf %67 : vector<8x8xf32> to vector<8x8xbf16>
    %69 = vector.extract_strided_slice %44 {offsets = [0, 0], sizes = [8, 32], strides = [1, 1]} : vector<32x32xbf16> to vector<8x32xbf16>
    %cst_34 = arith.constant dense<0.000000e+00> : vector<8x32xf32>
    %70 = tpu.matmul %68, %69, %cst_34 {dimension_numbers = #tpu.dot_dimension_numbers<[1], [0], [0], [1], [0, 0, 1, 1], [], []>} : vector<8x8xbf16>, vector<8x32xbf16>, vector<8x32xf32> -> vector<8x32xf32>
    %71 = vector.extract_strided_slice %47 {offsets = [0, 8], sizes = [8, 8], strides = [1, 1]} : vector<8x32xbf16> to vector<8x8xbf16>
    %72 = vector.extract_strided_slice %48 {offsets = [0, 8], sizes = [8, 8], strides = [1, 1]} : vector<8x32xbf16> to vector<8x8xbf16>
    %cst_35 = arith.constant dense<0.000000e+00> : vector<8x8xf32>
    %73 = tpu.matmul %71, %72, %cst_35 {dimension_numbers = #tpu.dot_dimension_numbers<[1], [1], [0], [0], [0, 0, 1, 0], [], []>} : vector<8x8xbf16>, vector<8x8xbf16>, vector<8x8xf32> -> vector<8x8xf32>
    %cst_36 = arith.constant 0.353553385 : f32
    %74 = vector.broadcast %cst_36 : f32 to vector<8x8xf32>
    %75 = arith.mulf %73, %74 : vector<8x8xf32>
    %cst_37 = arith.constant dense<0xFF800000> : vector<8xf32>
    %76 = vector.multi_reduction <maximumf>, %75, %cst_37 [1] : vector<8x8xf32> to vector<8xf32>
    %77 = vector.shape_cast %76 : vector<8xf32> to vector<8x1xf32>
    %78 = vector.broadcast %77 : vector<8x1xf32> to vector<8x8xf32>
    %79 = arith.subf %75, %78 : vector<8x8xf32>
    %80 = math.exp %79 : vector<8x8xf32>
    %cst_38 = arith.constant dense<0.000000e+00> : vector<8xf32>
    %81 = vector.multi_reduction <add>, %80, %cst_38 [1] : vector<8x8xf32> to vector<8xf32>
    %82 = vector.shape_cast %81 : vector<8xf32> to vector<8x1xf32>
    %83 = tpu.reciprocal %82 {approx = true} : vector<8x1xf32> -> vector<8x1xf32>
    %84 = vector.broadcast %83 : vector<8x1xf32> to vector<8x8xf32>
    %85 = arith.mulf %80, %84 : vector<8x8xf32>
    %86 = arith.truncf %85 : vector<8x8xf32> to vector<8x8xbf16>
    %87 = vector.extract_strided_slice %49 {offsets = [0, 8], sizes = [8, 8], strides = [1, 1]} : vector<8x32xbf16> to vector<8x8xbf16>
    %cst_39 = arith.constant dense<0.000000e+00> : vector<8x8xf32>
    %88 = tpu.matmul %86, %87, %cst_39 {dimension_numbers = #tpu.dot_dimension_numbers<[1], [0], [0], [1], [0, 0, 1, 1], [], []>} : vector<8x8xbf16>, vector<8x8xbf16>, vector<8x8xf32> -> vector<8x8xf32>
    %89 = arith.truncf %88 : vector<8x8xf32> to vector<8x8xbf16>
    %90 = vector.extract_strided_slice %44 {offsets = [8, 0], sizes = [8, 32], strides = [1, 1]} : vector<32x32xbf16> to vector<8x32xbf16>
    %cst_40 = arith.constant dense<0.000000e+00> : vector<8x32xf32>
    %91 = tpu.matmul %89, %90, %cst_40 {dimension_numbers = #tpu.dot_dimension_numbers<[1], [0], [0], [1], [0, 0, 1, 1], [], []>} : vector<8x8xbf16>, vector<8x32xbf16>, vector<8x32xf32> -> vector<8x32xf32>
    %92 = arith.addf %70, %91 : vector<8x32xf32>
    %93 = vector.extract_strided_slice %47 {offsets = [0, 16], sizes = [8, 8], strides = [1, 1]} : vector<8x32xbf16> to vector<8x8xbf16>
    %94 = vector.extract_strided_slice %48 {offsets = [0, 16], sizes = [8, 8], strides = [1, 1]} : vector<8x32xbf16> to vector<8x8xbf16>
    %cst_41 = arith.constant dense<0.000000e+00> : vector<8x8xf32>
    %95 = tpu.matmul %93, %94, %cst_41 {dimension_numbers = #tpu.dot_dimension_numbers<[1], [1], [0], [0], [0, 0, 1, 0], [], []>} : vector<8x8xbf16>, vector<8x8xbf16>, vector<8x8xf32> -> vector<8x8xf32>
    %cst_42 = arith.constant 0.353553385 : f32
    %96 = vector.broadcast %cst_42 : f32 to vector<8x8xf32>
    %97 = arith.mulf %95, %96 : vector<8x8xf32>
    %cst_43 = arith.constant dense<0xFF800000> : vector<8xf32>
    %98 = vector.multi_reduction <maximumf>, %97, %cst_43 [1] : vector<8x8xf32> to vector<8xf32>
    %99 = vector.shape_cast %98 : vector<8xf32> to vector<8x1xf32>
    %100 = vector.broadcast %99 : vector<8x1xf32> to vector<8x8xf32>
    %101 = arith.subf %97, %100 : vector<8x8xf32>
    %102 = math.exp %101 : vector<8x8xf32>
    %cst_44 = arith.constant dense<0.000000e+00> : vector<8xf32>
    %103 = vector.multi_reduction <add>, %102, %cst_44 [1] : vector<8x8xf32> to vector<8xf32>
    %104 = vector.shape_cast %103 : vector<8xf32> to vector<8x1xf32>
    %105 = tpu.reciprocal %104 {approx = true} : vector<8x1xf32> -> vector<8x1xf32>
    %106 = vector.broadcast %105 : vector<8x1xf32> to vector<8x8xf32>
    %107 = arith.mulf %102, %106 : vector<8x8xf32>
    %108 = arith.truncf %107 : vector<8x8xf32> to vector<8x8xbf16>
    %109 = vector.extract_strided_slice %49 {offsets = [0, 16], sizes = [8, 8], strides = [1, 1]} : vector<8x32xbf16> to vector<8x8xbf16>
    %cst_45 = arith.constant dense<0.000000e+00> : vector<8x8xf32>
    %110 = tpu.matmul %108, %109, %cst_45 {dimension_numbers = #tpu.dot_dimension_numbers<[1], [0], [0], [1], [0, 0, 1, 1], [], []>} : vector<8x8xbf16>, vector<8x8xbf16>, vector<8x8xf32> -> vector<8x8xf32>
    %111 = arith.truncf %110 : vector<8x8xf32> to vector<8x8xbf16>
    %112 = vector.extract_strided_slice %44 {offsets = [16, 0], sizes = [8, 32], strides = [1, 1]} : vector<32x32xbf16> to vector<8x32xbf16>
    %cst_46 = arith.constant dense<0.000000e+00> : vector<8x32xf32>
    %113 = tpu.matmul %111, %112, %cst_46 {dimension_numbers = #tpu.dot_dimension_numbers<[1], [0], [0], [1], [0, 0, 1, 1], [], []>} : vector<8x8xbf16>, vector<8x32xbf16>, vector<8x32xf32> -> vector<8x32xf32>
    %114 = arith.addf %92, %113 : vector<8x32xf32>
    %115 = vector.extract_strided_slice %47 {offsets = [0, 24], sizes = [8, 8], strides = [1, 1]} : vector<8x32xbf16> to vector<8x8xbf16>
    %116 = vector.extract_strided_slice %48 {offsets = [0, 24], sizes = [8, 8], strides = [1, 1]} : vector<8x32xbf16> to vector<8x8xbf16>
    %cst_47 = arith.constant dense<0.000000e+00> : vector<8x8xf32>
    %117 = tpu.matmul %115, %116, %cst_47 {dimension_numbers = #tpu.dot_dimension_numbers<[1], [1], [0], [0], [0, 0, 1, 0], [], []>} : vector<8x8xbf16>, vector<8x8xbf16>, vector<8x8xf32> -> vector<8x8xf32>
    %cst_48 = arith.constant 0.353553385 : f32
    %118 = vector.broadcast %cst_48 : f32 to vector<8x8xf32>
    %119 = arith.mulf %117, %118 : vector<8x8xf32>
    %cst_49 = arith.constant dense<0xFF800000> : vector<8xf32>
    %120 = vector.multi_reduction <maximumf>, %119, %cst_49 [1] : vector<8x8xf32> to vector<8xf32>
    %121 = vector.shape_cast %120 : vector<8xf32> to vector<8x1xf32>
    %122 = vector.broadcast %121 : vector<8x1xf32> to vector<8x8xf32>
    %123 = arith.subf %119, %122 : vector<8x8xf32>
    %124 = math.exp %123 : vector<8x8xf32>
    %cst_50 = arith.constant dense<0.000000e+00> : vector<8xf32>
    %125 = vector.multi_reduction <add>, %124, %cst_50 [1] : vector<8x8xf32> to vector<8xf32>
    %126 = vector.shape_cast %125 : vector<8xf32> to vector<8x1xf32>
    %127 = tpu.reciprocal %126 {approx = true} : vector<8x1xf32> -> vector<8x1xf32>
    %128 = vector.broadcast %127 : vector<8x1xf32> to vector<8x8xf32>
    %129 = arith.mulf %124, %128 : vector<8x8xf32>
    %130 = arith.truncf %129 : vector<8x8xf32> to vector<8x8xbf16>
    %131 = vector.extract_strided_slice %49 {offsets = [0, 24], sizes = [8, 8], strides = [1, 1]} : vector<8x32xbf16> to vector<8x8xbf16>
    %cst_51 = arith.constant dense<0.000000e+00> : vector<8x8xf32>
    %132 = tpu.matmul %130, %131, %cst_51 {dimension_numbers = #tpu.dot_dimension_numbers<[1], [0], [0], [1], [0, 0, 1, 1], [], []>} : vector<8x8xbf16>, vector<8x8xbf16>, vector<8x8xf32> -> vector<8x8xf32>
    %133 = arith.truncf %132 : vector<8x8xf32> to vector<8x8xbf16>
    %134 = vector.extract_strided_slice %44 {offsets = [24, 0], sizes = [8, 32], strides = [1, 1]} : vector<32x32xbf16> to vector<8x32xbf16>
    %cst_52 = arith.constant dense<0.000000e+00> : vector<8x32xf32>
    %135 = tpu.matmul %133, %134, %cst_52 {dimension_numbers = #tpu.dot_dimension_numbers<[1], [0], [0], [1], [0, 0, 1, 1], [], []>} : vector<8x8xbf16>, vector<8x32xbf16>, vector<8x32xf32> -> vector<8x32xf32>
    %136 = arith.addf %114, %135 : vector<8x32xf32>
    %137 = vector.broadcast %46 : vector<1x32xf32> to vector<8x32xf32>
    %138 = arith.addf %136, %137 : vector<8x32xf32>
    %139 = arith.addf %3, %138 : vector<8x32xf32>
    %c0_53 = arith.constant 0 : index
    %c0_54 = arith.constant 0 : index
    %c0_55 = arith.constant 0 : index
    %140 = vector.load %arg11[%c0_53, %c0_54, %c0_55] : memref<1x1x32xf32, #tpu.memory_space<vmem>>, vector<1x1x32xf32>
    %141 = vector.shape_cast %140 : vector<1x1x32xf32> to vector<1x32xf32>
    %c0_56 = arith.constant 0 : index
    %c0_57 = arith.constant 0 : index
    %c0_58 = arith.constant 0 : index
    %142 = vector.load %arg12[%c0_56, %c0_57, %c0_58] : memref<1x1x32xf32, #tpu.memory_space<vmem>>, vector<1x1x32xf32>
    %143 = vector.shape_cast %142 : vector<1x1x32xf32> to vector<1x32xf32>
    %cst_59 = arith.constant dense<0.000000e+00> : vector<8xf32>
    %144 = vector.multi_reduction <add>, %139, %cst_59 [1] : vector<8x32xf32> to vector<8xf32>
    %145 = vector.shape_cast %144 : vector<8xf32> to vector<8x1xf32>
    %cst_60 = arith.constant 3.200000e+01 : f32
    %146 = vector.broadcast %cst_60 : f32 to vector<8x1xf32>
    %147 = arith.divf %145, %146 : vector<8x1xf32>
    %148 = vector.broadcast %147 : vector<8x1xf32> to vector<8x32xf32>
    %149 = arith.subf %139, %148 : vector<8x32xf32>
    %150 = arith.mulf %149, %149 : vector<8x32xf32>
    %cst_61 = arith.constant dense<0.000000e+00> : vector<8xf32>
    %151 = vector.multi_reduction <add>, %150, %cst_61 [1] : vector<8x32xf32> to vector<8xf32>
    %152 = vector.shape_cast %151 : vector<8xf32> to vector<8x1xf32>
    %cst_62 = arith.constant 3.200000e+01 : f32
    %153 = vector.broadcast %cst_62 : f32 to vector<8x1xf32>
    %154 = arith.divf %152, %153 : vector<8x1xf32>
    %cst_63 = arith.constant 9.99999996E-13 : f32
    %155 = vector.broadcast %cst_63 : f32 to vector<8x1xf32>
    %156 = arith.addf %154, %155 : vector<8x1xf32>
    %157 = math.rsqrt %156 : vector<8x1xf32>
    %158 = vector.broadcast %157 : vector<8x1xf32> to vector<8x32xf32>
    %159 = arith.mulf %149, %158 : vector<8x32xf32>
    %160 = vector.broadcast %141 : vector<1x32xf32> to vector<8x32xf32>
    %161 = arith.mulf %159, %160 : vector<8x32xf32>
    %162 = vector.broadcast %143 : vector<1x32xf32> to vector<8x32xf32>
    %163 = arith.addf %161, %162 : vector<8x32xf32>
    %164 = arith.truncf %163 : vector<8x32xf32> to vector<8x32xbf16>
    %c0_64 = arith.constant 0 : index
    %c0_65 = arith.constant 0 : index
    %c0_66 = arith.constant 0 : index
    %165 = vector.load %arg13[%c0_64, %c0_65, %c0_66] : memref<1x32x32xbf16, #tpu.memory_space<vmem>>, vector<1x32x32xbf16>
    %166 = vector.shape_cast %165 : vector<1x32x32xbf16> to vector<32x32xbf16>
    %cst_67 = arith.constant dense<0.000000e+00> : vector<8x32xf32>
    %167 = tpu.matmul %164, %166, %cst_67 {dimension_numbers = #tpu.dot_dimension_numbers<[1], [0], [0], [1], [0, 0, 1, 1], [], []>} : vector<8x32xbf16>, vector<32x32xbf16>, vector<8x32xf32> -> vector<8x32xf32>
    %c0_68 = arith.constant 0 : index
    %c0_69 = arith.constant 0 : index
    %c0_70 = arith.constant 0 : index
    %168 = vector.load %arg14[%c0_68, %c0_69, %c0_70] : memref<1x1x32xf32, #tpu.memory_space<vmem>>, vector<1x1x32xf32>
    %169 = vector.shape_cast %168 : vector<1x1x32xf32> to vector<1x32xf32>
    %170 = vector.broadcast %169 : vector<1x32xf32> to vector<8x32xf32>
    %171 = arith.addf %167, %170 : vector<8x32xf32>
    %c0_71 = arith.constant 0 : index
    %c0_72 = arith.constant 0 : index
    %c0_73 = arith.constant 0 : index
    %172 = vector.load %arg3[%c0_71, %c0_72, %c0_73] : memref<1x8x32xbf16, #tpu.memory_space<vmem>>, vector<1x8x32xbf16>
    %173 = vector.shape_cast %172 : vector<1x8x32xbf16> to vector<8x32xbf16>
    %c0_74 = arith.constant 0 : index
    %c0_75 = arith.constant 0 : index
    %c0_76 = arith.constant 0 : index
    %174 = vector.load %arg15[%c0_74, %c0_75, %c0_76] : memref<1x32x64xbf16, #tpu.memory_space<vmem>>, vector<1x32x64xbf16>
    %175 = vector.shape_cast %174 : vector<1x32x64xbf16> to vector<32x64xbf16>
    %cst_77 = arith.constant dense<0.000000e+00> : vector<8x64xf32>
    %176 = tpu.matmul %173, %175, %cst_77 {dimension_numbers = #tpu.dot_dimension_numbers<[1], [0], [0], [1], [0, 0, 1, 1], [], []>} : vector<8x32xbf16>, vector<32x64xbf16>, vector<8x64xf32> -> vector<8x64xf32>
    %c0_78 = arith.constant 0 : index
    %c0_79 = arith.constant 0 : index
    %c0_80 = arith.constant 0 : index
    %177 = vector.load %arg16[%c0_78, %c0_79, %c0_80] : memref<1x1x64xf32, #tpu.memory_space<vmem>>, vector<1x1x64xf32>
    %178 = vector.shape_cast %177 : vector<1x1x64xf32> to vector<1x64xf32>
    %179 = vector.broadcast %178 : vector<1x64xf32> to vector<8x64xf32>
    %180 = arith.addf %176, %179 : vector<8x64xf32>
    %181 = vector.extract_strided_slice %180 {offsets = [0, 0], sizes = [8, 32], strides = [1, 1]} : vector<8x64xf32> to vector<8x32xf32>
    %182 = vector.extract_strided_slice %180 {offsets = [0, 32], sizes = [8, 32], strides = [1, 1]} : vector<8x64xf32> to vector<8x32xf32>
    %c0_81 = arith.constant 0 : index
    %c0_82 = arith.constant 0 : index
    %c0_83 = arith.constant 0 : index
    %183 = vector.load %arg17[%c0_81, %c0_82, %c0_83] : memref<1x32x32xbf16, #tpu.memory_space<vmem>>, vector<1x32x32xbf16>
    %184 = vector.shape_cast %183 : vector<1x32x32xbf16> to vector<32x32xbf16>
    %c0_84 = arith.constant 0 : index
    %c0_85 = arith.constant 0 : index
    %c0_86 = arith.constant 0 : index
    %185 = vector.load %arg18[%c0_84, %c0_85, %c0_86] : memref<1x1x32xf32, #tpu.memory_space<vmem>>, vector<1x1x32xf32>
    %186 = vector.shape_cast %185 : vector<1x1x32xf32> to vector<1x32xf32>
    %187 = arith.truncf %171 : vector<8x32xf32> to vector<8x32xbf16>
    %188 = arith.truncf %181 : vector<8x32xf32> to vector<8x32xbf16>
    %189 = arith.truncf %182 : vector<8x32xf32> to vector<8x32xbf16>
    %190 = vector.extract_strided_slice %187 {offsets = [0, 0], sizes = [8, 8], strides = [1, 1]} : vector<8x32xbf16> to vector<8x8xbf16>
    %191 = vector.extract_strided_slice %188 {offsets = [0, 0], sizes = [8, 8], strides = [1, 1]} : vector<8x32xbf16> to vector<8x8xbf16>
    %cst_87 = arith.constant dense<0.000000e+00> : vector<8x8xf32>
    %192 = tpu.matmul %190, %191, %cst_87 {dimension_numbers = #tpu.dot_dimension_numbers<[1], [1], [0], [0], [0, 0, 1, 0], [], []>} : vector<8x8xbf16>, vector<8x8xbf16>, vector<8x8xf32> -> vector<8x8xf32>
    %cst_88 = arith.constant 0.353553385 : f32
    %193 = vector.broadcast %cst_88 : f32 to vector<8x8xf32>
    %194 = arith.mulf %192, %193 : vector<8x8xf32>
    %cst_89 = arith.constant -3.40282347E+38 : f32
    %195 = vector.shape_cast %7 : vector<1x8xi1> to vector<1x8xi1>
    %196 = vector.broadcast %195 : vector<1x8xi1> to vector<8x8xi1>
    %197 = vector.broadcast %cst_89 : f32 to vector<8x8xf32>
    %198 = arith.select %196, %194, %197 : vector<8x8xi1>, vector<8x8xf32>
    %cst_90 = arith.constant dense<0xFF800000> : vector<8xf32>
    %199 = vector.multi_reduction <maximumf>, %198, %cst_90 [1] : vector<8x8xf32> to vector<8xf32>
    %200 = vector.shape_cast %199 : vector<8xf32> to vector<8x1xf32>
    %201 = vector.broadcast %200 : vector<8x1xf32> to vector<8x8xf32>
    %202 = arith.subf %198, %201 : vector<8x8xf32>
    %203 = math.exp %202 : vector<8x8xf32>
    %cst_91 = arith.constant dense<0.000000e+00> : vector<8xf32>
    %204 = vector.multi_reduction <add>, %203, %cst_91 [1] : vector<8x8xf32> to vector<8xf32>
    %205 = vector.shape_cast %204 : vector<8xf32> to vector<8x1xf32>
    %206 = tpu.reciprocal %205 {approx = true} : vector<8x1xf32> -> vector<8x1xf32>
    %207 = vector.broadcast %206 : vector<8x1xf32> to vector<8x8xf32>
    %208 = arith.mulf %203, %207 : vector<8x8xf32>
    %cst_92 = arith.constant 0.000000e+00 : f32
    %209 = vector.shape_cast %7 : vector<1x8xi1> to vector<1x8xi1>
    %210 = vector.broadcast %209 : vector<1x8xi1> to vector<8x8xi1>
    %211 = vector.broadcast %cst_92 : f32 to vector<8x8xf32>
    %212 = arith.select %210, %208, %211 : vector<8x8xi1>, vector<8x8xf32>
    %213 = arith.truncf %212 : vector<8x8xf32> to vector<8x8xbf16>
    %214 = vector.extract_strided_slice %189 {offsets = [0, 0], sizes = [8, 8], strides = [1, 1]} : vector<8x32xbf16> to vector<8x8xbf16>
    %cst_93 = arith.constant dense<0.000000e+00> : vector<8x8xf32>
    %215 = tpu.matmul %213, %214, %cst_93 {dimension_numbers = #tpu.dot_dimension_numbers<[1], [0], [0], [1], [0, 0, 1, 1], [], []>} : vector<8x8xbf16>, vector<8x8xbf16>, vector<8x8xf32> -> vector<8x8xf32>
    %216 = arith.truncf %215 : vector<8x8xf32> to vector<8x8xbf16>
    %217 = vector.extract_strided_slice %184 {offsets = [0, 0], sizes = [8, 32], strides = [1, 1]} : vector<32x32xbf16> to vector<8x32xbf16>
    %cst_94 = arith.constant dense<0.000000e+00> : vector<8x32xf32>
    %218 = tpu.matmul %216, %217, %cst_94 {dimension_numbers = #tpu.dot_dimension_numbers<[1], [0], [0], [1], [0, 0, 1, 1], [], []>} : vector<8x8xbf16>, vector<8x32xbf16>, vector<8x32xf32> -> vector<8x32xf32>
    %219 = vector.extract_strided_slice %187 {offsets = [0, 8], sizes = [8, 8], strides = [1, 1]} : vector<8x32xbf16> to vector<8x8xbf16>
    %220 = vector.extract_strided_slice %188 {offsets = [0, 8], sizes = [8, 8], strides = [1, 1]} : vector<8x32xbf16> to vector<8x8xbf16>
    %cst_95 = arith.constant dense<0.000000e+00> : vector<8x8xf32>
    %221 = tpu.matmul %219, %220, %cst_95 {dimension_numbers = #tpu.dot_dimension_numbers<[1], [1], [0], [0], [0, 0, 1, 0], [], []>} : vector<8x8xbf16>, vector<8x8xbf16>, vector<8x8xf32> -> vector<8x8xf32>
    %cst_96 = arith.constant 0.353553385 : f32
    %222 = vector.broadcast %cst_96 : f32 to vector<8x8xf32>
    %223 = arith.mulf %221, %222 : vector<8x8xf32>
    %cst_97 = arith.constant -3.40282347E+38 : f32
    %224 = vector.shape_cast %7 : vector<1x8xi1> to vector<1x8xi1>
    %225 = vector.broadcast %224 : vector<1x8xi1> to vector<8x8xi1>
    %226 = vector.broadcast %cst_97 : f32 to vector<8x8xf32>
    %227 = arith.select %225, %223, %226 : vector<8x8xi1>, vector<8x8xf32>
    %cst_98 = arith.constant dense<0xFF800000> : vector<8xf32>
    %228 = vector.multi_reduction <maximumf>, %227, %cst_98 [1] : vector<8x8xf32> to vector<8xf32>
    %229 = vector.shape_cast %228 : vector<8xf32> to vector<8x1xf32>
    %230 = vector.broadcast %229 : vector<8x1xf32> to vector<8x8xf32>
    %231 = arith.subf %227, %230 : vector<8x8xf32>
    %232 = math.exp %231 : vector<8x8xf32>
    %cst_99 = arith.constant dense<0.000000e+00> : vector<8xf32>
    %233 = vector.multi_reduction <add>, %232, %cst_99 [1] : vector<8x8xf32> to vector<8xf32>
    %234 = vector.shape_cast %233 : vector<8xf32> to vector<8x1xf32>
    %235 = tpu.reciprocal %234 {approx = true} : vector<8x1xf32> -> vector<8x1xf32>
    %236 = vector.broadcast %235 : vector<8x1xf32> to vector<8x8xf32>
    %237 = arith.mulf %232, %236 : vector<8x8xf32>
    %cst_100 = arith.constant 0.000000e+00 : f32
    %238 = vector.shape_cast %7 : vector<1x8xi1> to vector<1x8xi1>
    %239 = vector.broadcast %238 : vector<1x8xi1> to vector<8x8xi1>
    %240 = vector.broadcast %cst_100 : f32 to vector<8x8xf32>
    %241 = arith.select %239, %237, %240 : vector<8x8xi1>, vector<8x8xf32>
    %242 = arith.truncf %241 : vector<8x8xf32> to vector<8x8xbf16>
    %243 = vector.extract_strided_slice %189 {offsets = [0, 8], sizes = [8, 8], strides = [1, 1]} : vector<8x32xbf16> to vector<8x8xbf16>
    %cst_101 = arith.constant dense<0.000000e+00> : vector<8x8xf32>
    %244 = tpu.matmul %242, %243, %cst_101 {dimension_numbers = #tpu.dot_dimension_numbers<[1], [0], [0], [1], [0, 0, 1, 1], [], []>} : vector<8x8xbf16>, vector<8x8xbf16>, vector<8x8xf32> -> vector<8x8xf32>
    %245 = arith.truncf %244 : vector<8x8xf32> to vector<8x8xbf16>
    %246 = vector.extract_strided_slice %184 {offsets = [8, 0], sizes = [8, 32], strides = [1, 1]} : vector<32x32xbf16> to vector<8x32xbf16>
    %cst_102 = arith.constant dense<0.000000e+00> : vector<8x32xf32>
    %247 = tpu.matmul %245, %246, %cst_102 {dimension_numbers = #tpu.dot_dimension_numbers<[1], [0], [0], [1], [0, 0, 1, 1], [], []>} : vector<8x8xbf16>, vector<8x32xbf16>, vector<8x32xf32> -> vector<8x32xf32>
    %248 = arith.addf %218, %247 : vector<8x32xf32>
    %249 = vector.extract_strided_slice %187 {offsets = [0, 16], sizes = [8, 8], strides = [1, 1]} : vector<8x32xbf16> to vector<8x8xbf16>
    %250 = vector.extract_strided_slice %188 {offsets = [0, 16], sizes = [8, 8], strides = [1, 1]} : vector<8x32xbf16> to vector<8x8xbf16>
    %cst_103 = arith.constant dense<0.000000e+00> : vector<8x8xf32>
    %251 = tpu.matmul %249, %250, %cst_103 {dimension_numbers = #tpu.dot_dimension_numbers<[1], [1], [0], [0], [0, 0, 1, 0], [], []>} : vector<8x8xbf16>, vector<8x8xbf16>, vector<8x8xf32> -> vector<8x8xf32>
    %cst_104 = arith.constant 0.353553385 : f32
    %252 = vector.broadcast %cst_104 : f32 to vector<8x8xf32>
    %253 = arith.mulf %251, %252 : vector<8x8xf32>
    %cst_105 = arith.constant -3.40282347E+38 : f32
    %254 = vector.shape_cast %7 : vector<1x8xi1> to vector<1x8xi1>
    %255 = vector.broadcast %254 : vector<1x8xi1> to vector<8x8xi1>
    %256 = vector.broadcast %cst_105 : f32 to vector<8x8xf32>
    %257 = arith.select %255, %253, %256 : vector<8x8xi1>, vector<8x8xf32>
    %cst_106 = arith.constant dense<0xFF800000> : vector<8xf32>
    %258 = vector.multi_reduction <maximumf>, %257, %cst_106 [1] : vector<8x8xf32> to vector<8xf32>
    %259 = vector.shape_cast %258 : vector<8xf32> to vector<8x1xf32>
    %260 = vector.broadcast %259 : vector<8x1xf32> to vector<8x8xf32>
    %261 = arith.subf %257, %260 : vector<8x8xf32>
    %262 = math.exp %261 : vector<8x8xf32>
    %cst_107 = arith.constant dense<0.000000e+00> : vector<8xf32>
    %263 = vector.multi_reduction <add>, %262, %cst_107 [1] : vector<8x8xf32> to vector<8xf32>
    %264 = vector.shape_cast %263 : vector<8xf32> to vector<8x1xf32>
    %265 = tpu.reciprocal %264 {approx = true} : vector<8x1xf32> -> vector<8x1xf32>
    %266 = vector.broadcast %265 : vector<8x1xf32> to vector<8x8xf32>
    %267 = arith.mulf %262, %266 : vector<8x8xf32>
    %cst_108 = arith.constant 0.000000e+00 : f32
    %268 = vector.shape_cast %7 : vector<1x8xi1> to vector<1x8xi1>
    %269 = vector.broadcast %268 : vector<1x8xi1> to vector<8x8xi1>
    %270 = vector.broadcast %cst_108 : f32 to vector<8x8xf32>
    %271 = arith.select %269, %267, %270 : vector<8x8xi1>, vector<8x8xf32>
    %272 = arith.truncf %271 : vector<8x8xf32> to vector<8x8xbf16>
    %273 = vector.extract_strided_slice %189 {offsets = [0, 16], sizes = [8, 8], strides = [1, 1]} : vector<8x32xbf16> to vector<8x8xbf16>
    %cst_109 = arith.constant dense<0.000000e+00> : vector<8x8xf32>
    %274 = tpu.matmul %272, %273, %cst_109 {dimension_numbers = #tpu.dot_dimension_numbers<[1], [0], [0], [1], [0, 0, 1, 1], [], []>} : vector<8x8xbf16>, vector<8x8xbf16>, vector<8x8xf32> -> vector<8x8xf32>
    %275 = arith.truncf %274 : vector<8x8xf32> to vector<8x8xbf16>
    %276 = vector.extract_strided_slice %184 {offsets = [16, 0], sizes = [8, 32], strides = [1, 1]} : vector<32x32xbf16> to vector<8x32xbf16>
    %cst_110 = arith.constant dense<0.000000e+00> : vector<8x32xf32>
    %277 = tpu.matmul %275, %276, %cst_110 {dimension_numbers = #tpu.dot_dimension_numbers<[1], [0], [0], [1], [0, 0, 1, 1], [], []>} : vector<8x8xbf16>, vector<8x32xbf16>, vector<8x32xf32> -> vector<8x32xf32>
    %278 = arith.addf %248, %277 : vector<8x32xf32>
    %279 = vector.extract_strided_slice %187 {offsets = [0, 24], sizes = [8, 8], strides = [1, 1]} : vector<8x32xbf16> to vector<8x8xbf16>
    %280 = vector.extract_strided_slice %188 {offsets = [0, 24], sizes = [8, 8], strides = [1, 1]} : vector<8x32xbf16> to vector<8x8xbf16>
    %cst_111 = arith.constant dense<0.000000e+00> : vector<8x8xf32>
    %281 = tpu.matmul %279, %280, %cst_111 {dimension_numbers = #tpu.dot_dimension_numbers<[1], [1], [0], [0], [0, 0, 1, 0], [], []>} : vector<8x8xbf16>, vector<8x8xbf16>, vector<8x8xf32> -> vector<8x8xf32>
    %cst_112 = arith.constant 0.353553385 : f32
    %282 = vector.broadcast %cst_112 : f32 to vector<8x8xf32>
    %283 = arith.mulf %281, %282 : vector<8x8xf32>
    %cst_113 = arith.constant -3.40282347E+38 : f32
    %284 = vector.shape_cast %7 : vector<1x8xi1> to vector<1x8xi1>
    %285 = vector.broadcast %284 : vector<1x8xi1> to vector<8x8xi1>
    %286 = vector.broadcast %cst_113 : f32 to vector<8x8xf32>
    %287 = arith.select %285, %283, %286 : vector<8x8xi1>, vector<8x8xf32>
    %cst_114 = arith.constant dense<0xFF800000> : vector<8xf32>
    %288 = vector.multi_reduction <maximumf>, %287, %cst_114 [1] : vector<8x8xf32> to vector<8xf32>
    %289 = vector.shape_cast %288 : vector<8xf32> to vector<8x1xf32>
    %290 = vector.broadcast %289 : vector<8x1xf32> to vector<8x8xf32>
    %291 = arith.subf %287, %290 : vector<8x8xf32>
    %292 = math.exp %291 : vector<8x8xf32>
    %cst_115 = arith.constant dense<0.000000e+00> : vector<8xf32>
    %293 = vector.multi_reduction <add>, %292, %cst_115 [1] : vector<8x8xf32> to vector<8xf32>
    %294 = vector.shape_cast %293 : vector<8xf32> to vector<8x1xf32>
    %295 = tpu.reciprocal %294 {approx = true} : vector<8x1xf32> -> vector<8x1xf32>
    %296 = vector.broadcast %295 : vector<8x1xf32> to vector<8x8xf32>
    %297 = arith.mulf %292, %296 : vector<8x8xf32>
    %cst_116 = arith.constant 0.000000e+00 : f32
    %298 = vector.shape_cast %7 : vector<1x8xi1> to vector<1x8xi1>
    %299 = vector.broadcast %298 : vector<1x8xi1> to vector<8x8xi1>
    %300 = vector.broadcast %cst_116 : f32 to vector<8x8xf32>
    %301 = arith.select %299, %297, %300 : vector<8x8xi1>, vector<8x8xf32>
    %302 = arith.truncf %301 : vector<8x8xf32> to vector<8x8xbf16>
    %303 = vector.extract_strided_slice %189 {offsets = [0, 24], sizes = [8, 8], strides = [1, 1]} : vector<8x32xbf16> to vector<8x8xbf16>
    %cst_117 = arith.constant dense<0.000000e+00> : vector<8x8xf32>
    %304 = tpu.matmul %302, %303, %cst_117 {dimension_numbers = #tpu.dot_dimension_numbers<[1], [0], [0], [1], [0, 0, 1, 1], [], []>} : vector<8x8xbf16>, vector<8x8xbf16>, vector<8x8xf32> -> vector<8x8xf32>
    %305 = arith.truncf %304 : vector<8x8xf32> to vector<8x8xbf16>
    %306 = vector.extract_strided_slice %184 {offsets = [24, 0], sizes = [8, 32], strides = [1, 1]} : vector<32x32xbf16> to vector<8x32xbf16>
    %cst_118 = arith.constant dense<0.000000e+00> : vector<8x32xf32>
    %307 = tpu.matmul %305, %306, %cst_118 {dimension_numbers = #tpu.dot_dimension_numbers<[1], [0], [0], [1], [0, 0, 1, 1], [], []>} : vector<8x8xbf16>, vector<8x32xbf16>, vector<8x32xf32> -> vector<8x32xf32>
    %308 = arith.addf %278, %307 : vector<8x32xf32>
    %309 = vector.broadcast %186 : vector<1x32xf32> to vector<8x32xf32>
    %310 = arith.addf %308, %309 : vector<8x32xf32>
    %311 = arith.addf %139, %310 : vector<8x32xf32>
    %c0_119 = arith.constant 0 : index
    %c0_120 = arith.constant 0 : index
    %c0_121 = arith.constant 0 : index
    %312 = vector.load %arg19[%c0_119, %c0_120, %c0_121] : memref<1x1x32xf32, #tpu.memory_space<vmem>>, vector<1x1x32xf32>
    %313 = vector.shape_cast %312 : vector<1x1x32xf32> to vector<1x32xf32>
    %c0_122 = arith.constant 0 : index
    %c0_123 = arith.constant 0 : index
    %c0_124 = arith.constant 0 : index
    %314 = vector.load %arg20[%c0_122, %c0_123, %c0_124] : memref<1x1x32xf32, #tpu.memory_space<vmem>>, vector<1x1x32xf32>
    %315 = vector.shape_cast %314 : vector<1x1x32xf32> to vector<1x32xf32>
    %cst_125 = arith.constant dense<0.000000e+00> : vector<8xf32>
    %316 = vector.multi_reduction <add>, %311, %cst_125 [1] : vector<8x32xf32> to vector<8xf32>
    %317 = vector.shape_cast %316 : vector<8xf32> to vector<8x1xf32>
    %cst_126 = arith.constant 3.200000e+01 : f32
    %318 = vector.broadcast %cst_126 : f32 to vector<8x1xf32>
    %319 = arith.divf %317, %318 : vector<8x1xf32>
    %320 = vector.broadcast %319 : vector<8x1xf32> to vector<8x32xf32>
    %321 = arith.subf %311, %320 : vector<8x32xf32>
    %322 = arith.mulf %321, %321 : vector<8x32xf32>
    %cst_127 = arith.constant dense<0.000000e+00> : vector<8xf32>
    %323 = vector.multi_reduction <add>, %322, %cst_127 [1] : vector<8x32xf32> to vector<8xf32>
    %324 = vector.shape_cast %323 : vector<8xf32> to vector<8x1xf32>
    %cst_128 = arith.constant 3.200000e+01 : f32
    %325 = vector.broadcast %cst_128 : f32 to vector<8x1xf32>
    %326 = arith.divf %324, %325 : vector<8x1xf32>
    %cst_129 = arith.constant 9.99999996E-13 : f32
    %327 = vector.broadcast %cst_129 : f32 to vector<8x1xf32>
    %328 = arith.addf %326, %327 : vector<8x1xf32>
    %329 = math.rsqrt %328 : vector<8x1xf32>
    %330 = vector.broadcast %329 : vector<8x1xf32> to vector<8x32xf32>
    %331 = arith.mulf %321, %330 : vector<8x32xf32>
    %332 = vector.broadcast %313 : vector<1x32xf32> to vector<8x32xf32>
    %333 = arith.mulf %331, %332 : vector<8x32xf32>
    %334 = vector.broadcast %315 : vector<1x32xf32> to vector<8x32xf32>
    %335 = arith.addf %333, %334 : vector<8x32xf32>
    %336 = arith.truncf %335 : vector<8x32xf32> to vector<8x32xbf16>
    %c0_130 = arith.constant 0 : index
    %c0_131 = arith.constant 0 : index
    %c0_132 = arith.constant 0 : index
    %337 = vector.load %arg21[%c0_130, %c0_131, %c0_132] : memref<1x32x64xbf16, #tpu.memory_space<vmem>>, vector<1x32x64xbf16>
    %338 = vector.shape_cast %337 : vector<1x32x64xbf16> to vector<32x64xbf16>
    %cst_133 = arith.constant dense<0.000000e+00> : vector<8x64xf32>
    %339 = tpu.matmul %336, %338, %cst_133 {dimension_numbers = #tpu.dot_dimension_numbers<[1], [0], [0], [1], [0, 0, 1, 1], [], []>} : vector<8x32xbf16>, vector<32x64xbf16>, vector<8x64xf32> -> vector<8x64xf32>
    %c0_134 = arith.constant 0 : index
    %c0_135 = arith.constant 0 : index
    %c0_136 = arith.constant 0 : index
    %340 = vector.load %arg22[%c0_134, %c0_135, %c0_136] : memref<1x1x64xf32, #tpu.memory_space<vmem>>, vector<1x1x64xf32>
    %341 = vector.shape_cast %340 : vector<1x1x64xf32> to vector<1x64xf32>
    %342 = vector.broadcast %341 : vector<1x64xf32> to vector<8x64xf32>
    %343 = arith.addf %339, %342 : vector<8x64xf32>
    %cst_137 = arith.constant 0.000000e+00 : f32
    %344 = vector.broadcast %cst_137 : f32 to vector<8x64xf32>
    %345 = arith.maximumf %343, %344 : vector<8x64xf32>
    %346 = arith.truncf %345 : vector<8x64xf32> to vector<8x64xbf16>
    %c0_138 = arith.constant 0 : index
    %c0_139 = arith.constant 0 : index
    %c0_140 = arith.constant 0 : index
    %347 = vector.load %arg23[%c0_138, %c0_139, %c0_140] : memref<1x64x32xbf16, #tpu.memory_space<vmem>>, vector<1x64x32xbf16>
    %348 = vector.shape_cast %347 : vector<1x64x32xbf16> to vector<64x32xbf16>
    %cst_141 = arith.constant dense<0.000000e+00> : vector<8x32xf32>
    %349 = tpu.matmul %346, %348, %cst_141 {dimension_numbers = #tpu.dot_dimension_numbers<[1], [0], [0], [1], [0, 0, 1, 1], [], []>} : vector<8x64xbf16>, vector<64x32xbf16>, vector<8x32xf32> -> vector<8x32xf32>
    %c0_142 = arith.constant 0 : index
    %c0_143 = arith.constant 0 : index
    %c0_144 = arith.constant 0 : index
    %350 = vector.load %arg24[%c0_142, %c0_143, %c0_144] : memref<1x1x32xf32, #tpu.memory_space<vmem>>, vector<1x1x32xf32>
    %351 = vector.shape_cast %350 : vector<1x1x32xf32> to vector<1x32xf32>
    %352 = vector.broadcast %351 : vector<1x32xf32> to vector<8x32xf32>
    %353 = arith.addf %349, %352 : vector<8x32xf32>
    %354 = arith.addf %311, %353 : vector<8x32xf32>
    %c0_145 = arith.constant 0 : index
    %c0_146 = arith.constant 0 : index
    %355 = vector.load %arg30[%c0_145, %c0_146] : memref<8x32xf32, #tpu.memory_space<vmem>>, vector<8x32xf32>
    tpu.vector_store %arg30[%c0_145, %c0_146], %354 {strides = array<i32>} : memref<8x32xf32, #tpu.memory_space<vmem>>, vector<8x32xf32>,
    %c1_i32 = arith.constant 1 : i32
    %356 = arith.cmpi eq, %arg1, %c1_i32 : i32
    %357 = arith.extui %356 : i1 to i32
    %c0_i32_147 = arith.constant 0 : i32
    %358 = arith.cmpi ne, %357, %c0_i32_147 : i32
    scf.if %358 {
      %c0_148 = arith.constant 0 : index
      %c0_149 = arith.constant 0 : index
      %359 = vector.load %arg25[%c0_148, %c0_149] : memref<1x32xf32, #tpu.memory_space<vmem>>, vector<1x32xf32>
      %c0_150 = arith.constant 0 : index
      %c0_151 = arith.constant 0 : index
      %360 = vector.load %arg26[%c0_150, %c0_151] : memref<1x32xf32, #tpu.memory_space<vmem>>, vector<1x32xf32>
      %cst_152 = arith.constant dense<0.000000e+00> : vector<8xf32>
      %361 = vector.multi_reduction <add>, %354, %cst_152 [1] : vector<8x32xf32> to vector<8xf32>
      %362 = vector.shape_cast %361 : vector<8xf32> to vector<8x1xf32>
      %cst_153 = arith.constant 3.200000e+01 : f32
      %363 = vector.broadcast %cst_153 : f32 to vector<8x1xf32>
      %364 = arith.divf %362, %363 : vector<8x1xf32>
      %365 = vector.broadcast %364 : vector<8x1xf32> to vector<8x32xf32>
      %366 = arith.subf %354, %365 : vector<8x32xf32>
      %367 = arith.mulf %366, %366 : vector<8x32xf32>
      %cst_154 = arith.constant dense<0.000000e+00> : vector<8xf32>
      %368 = vector.multi_reduction <add>, %367, %cst_154 [1] : vector<8x32xf32> to vector<8xf32>
      %369 = vector.shape_cast %368 : vector<8xf32> to vector<8x1xf32>
      %cst_155 = arith.constant 3.200000e+01 : f32
      %370 = vector.broadcast %cst_155 : f32 to vector<8x1xf32>
      %371 = arith.divf %369, %370 : vector<8x1xf32>
      %cst_156 = arith.constant 9.99999996E-13 : f32
      %372 = vector.broadcast %cst_156 : f32 to vector<8x1xf32>
      %373 = arith.addf %371, %372 : vector<8x1xf32>
      %374 = math.rsqrt %373 : vector<8x1xf32>
      %375 = vector.broadcast %374 : vector<8x1xf32> to vector<8x32xf32>
      %376 = arith.mulf %366, %375 : vector<8x32xf32>
      %377 = vector.broadcast %359 : vector<1x32xf32> to vector<8x32xf32>
      %378 = arith.mulf %376, %377 : vector<8x32xf32>
      %379 = vector.broadcast %360 : vector<1x32xf32> to vector<8x32xf32>
      %380 = arith.addf %378, %379 : vector<8x32xf32>
      %381 = arith.truncf %380 : vector<8x32xf32> to vector<8x32xbf16>
      %c0_157 = arith.constant 0 : index
      %c0_158 = arith.constant 0 : index
      %382 = vector.load %arg27[%c0_157, %c0_158] : memref<32x128xbf16, #tpu.memory_space<vmem>>, vector<32x128xbf16>
      %cst_159 = arith.constant dense<0.000000e+00> : vector<8x128xf32>
      %383 = tpu.matmul %381, %382, %cst_159 {dimension_numbers = #tpu.dot_dimension_numbers<[1], [0], [0], [1], [0, 0, 1, 1], [], []>} : vector<8x32xbf16>, vector<32x128xbf16>, vector<8x128xf32> -> vector<8x128xf32>
      %c0_160 = arith.constant 0 : index
      %c0_161 = arith.constant 0 : index
      %384 = vector.load %arg28[%c0_160, %c0_161] : memref<1x128xf32, #tpu.memory_space<vmem>>, vector<1x128xf32>
      %385 = vector.broadcast %384 : vector<1x128xf32> to vector<8x128xf32>
      %386 = arith.addf %383, %385 : vector<8x128xf32>
      %c0_162 = arith.constant 0 : index
      %c0_163 = arith.constant 0 : index
      %c0_164 = arith.constant 0 : index
      %387 = vector.load %arg29[%c0_162, %c0_163, %c0_164] : memref<1x8x128xf32, #tpu.memory_space<vmem>>, vector<1x8x128xf32>
      %388 = vector.shape_cast %387 : vector<1x8x128xf32> to vector<8x128xf32>
      %389 = vector.shape_cast %386 : vector<8x128xf32> to vector<1x8x128xf32>
      tpu.vector_store %arg29[%c0_162, %c0_163, %c0_164], %389 {strides = array<i32>} : memref<1x8x128xf32, #tpu.memory_space<vmem>>, vector<1x8x128xf32>,
    } else {
    }
    return
  }
  func.func @transform_0(%arg0: i32, %arg1: i32) -> (i32, i32, i32) {
    %c0_i32 = arith.constant 0 : i32
    %c0_i32_0 = arith.constant 0 : i32
    %c0_i32_1 = arith.constant 0 : i32
    return %arg0, %c0_i32, %c0_i32_0 : i32, i32, i32
  }
  func.func @transform_1(%arg0: i32, %arg1: i32) -> (i32, i32, i32) {
    %c0_i32 = arith.constant 0 : i32
    %c0_i32_0 = arith.constant 0 : i32
    %c0_i32_1 = arith.constant 0 : i32
    return %arg0, %c0_i32, %c0_i32_0 : i32, i32, i32
  }
  func.func @transform_2(%arg0: i32, %arg1: i32) -> (i32, i32, i32) {
    %c0_i32 = arith.constant 0 : i32
    %c0_i32_0 = arith.constant 0 : i32
    %c0_i32_1 = arith.constant 0 : i32
    return %arg0, %c0_i32, %c0_i32_0 : i32, i32, i32
  }
  func.func @transform_3(%arg0: i32, %arg1: i32) -> (i32, i32, i32) {
    %c0_i32 = arith.constant 0 : i32
    %c0_i32_0 = arith.constant 0 : i32
    %c0_i32_1 = arith.constant 0 : i32
    return %arg1, %c0_i32, %c0_i32_0 : i32, i32, i32
  }
  func.func @transform_4(%arg0: i32, %arg1: i32) -> (i32, i32, i32) {
    %c0_i32 = arith.constant 0 : i32
    %c0_i32_0 = arith.constant 0 : i32
    %c0_i32_1 = arith.constant 0 : i32
    return %arg1, %c0_i32, %c0_i32_0 : i32, i32, i32
  }
  func.func @transform_5(%arg0: i32, %arg1: i32) -> (i32, i32, i32) {
    %c0_i32 = arith.constant 0 : i32
    %c0_i32_0 = arith.constant 0 : i32
    %c0_i32_1 = arith.constant 0 : i32
    return %arg1, %c0_i32, %c0_i32_0 : i32, i32, i32
  }
  func.func @transform_6(%arg0: i32, %arg1: i32) -> (i32, i32, i32) {
    %c0_i32 = arith.constant 0 : i32
    %c0_i32_0 = arith.constant 0 : i32
    %c0_i32_1 = arith.constant 0 : i32
    return %arg1, %c0_i32, %c0_i32_0 : i32, i32, i32
  }
  func.func @transform_7(%arg0: i32, %arg1: i32) -> (i32, i32, i32) {
    %c0_i32 = arith.constant 0 : i32
    %c0_i32_0 = arith.constant 0 : i32
    %c0_i32_1 = arith.constant 0 : i32
    return %arg1, %c0_i32, %c0_i32_0 : i32, i32, i32
  }
  func.func @transform_8(%arg0: i32, %arg1: i32) -> (i32, i32, i32) {
    %c0_i32 = arith.constant 0 : i32
    %c0_i32_0 = arith.constant 0 : i32
    %c0_i32_1 = arith.constant 0 : i32
    return %arg1, %c0_i32, %c0_i32_0 : i32, i32, i32
  }
  func.func @transform_9(%arg0: i32, %arg1: i32) -> (i32, i32, i32) {
    %c0_i32 = arith.constant 0 : i32
    %c0_i32_0 = arith.constant 0 : i32
    %c0_i32_1 = arith.constant 0 : i32
    return %arg1, %c0_i32, %c0_i32_0 : i32, i32, i32
  }
  func.func @transform_10(%arg0: i32, %arg1: i32) -> (i32, i32, i32) {
    %c0_i32 = arith.constant 0 : i32
    %c0_i32_0 = arith.constant 0 : i32
    %c0_i32_1 = arith.constant 0 : i32
    return %arg1, %c0_i32, %c0_i32_0 : i32, i32, i32
  }
  func.func @transform_11(%arg0: i32, %arg1: i32) -> (i32, i32, i32) {
    %c0_i32 = arith.constant 0 : i32
    %c0_i32_0 = arith.constant 0 : i32
    %c0_i32_1 = arith.constant 0 : i32
    return %arg1, %c0_i32, %c0_i32_0 : i32, i32, i32
  }
  func.func @transform_12(%arg0: i32, %arg1: i32) -> (i32, i32, i32) {
    %c0_i32 = arith.constant 0 : i32
    %c0_i32_0 = arith.constant 0 : i32
    %c0_i32_1 = arith.constant 0 : i32
    return %arg1, %c0_i32, %c0_i32_0 : i32, i32, i32
  }
  func.func @transform_13(%arg0: i32, %arg1: i32) -> (i32, i32, i32) {
    %c0_i32 = arith.constant 0 : i32
    %c0_i32_0 = arith.constant 0 : i32
    %c0_i32_1 = arith.constant 0 : i32
    return %arg1, %c0_i32, %c0_i32_0 : i32, i32, i32
  }
  func.func @transform_14(%arg0: i32, %arg1: i32) -> (i32, i32, i32) {
    %c0_i32 = arith.constant 0 : i32
    %c0_i32_0 = arith.constant 0 : i32
    %c0_i32_1 = arith.constant 0 : i32
    return %arg1, %c0_i32, %c0_i32_0 : i32, i32, i32
  }
  func.func @transform_15(%arg0: i32, %arg1: i32) -> (i32, i32, i32) {
    %c0_i32 = arith.constant 0 : i32
    %c0_i32_0 = arith.constant 0 : i32
    %c0_i32_1 = arith.constant 0 : i32
    return %arg1, %c0_i32, %c0_i32_0 : i32, i32, i32
  }
  func.func @transform_16(%arg0: i32, %arg1: i32) -> (i32, i32, i32) {
    %c0_i32 = arith.constant 0 : i32
    %c0_i32_0 = arith.constant 0 : i32
    %c0_i32_1 = arith.constant 0 : i32
    return %arg1, %c0_i32, %c0_i32_0 : i32, i32, i32
  }
  func.func @transform_17(%arg0: i32, %arg1: i32) -> (i32, i32, i32) {
    %c0_i32 = arith.constant 0 : i32
    %c0_i32_0 = arith.constant 0 : i32
    %c0_i32_1 = arith.constant 0 : i32
    return %arg1, %c0_i32, %c0_i32_0 : i32, i32, i32
  }
  func.func @transform_18(%arg0: i32, %arg1: i32) -> (i32, i32, i32) {
    %c0_i32 = arith.constant 0 : i32
    %c0_i32_0 = arith.constant 0 : i32
    %c0_i32_1 = arith.constant 0 : i32
    return %arg1, %c0_i32, %c0_i32_0 : i32, i32, i32
  }
  func.func @transform_19(%arg0: i32, %arg1: i32) -> (i32, i32, i32) {
    %c0_i32 = arith.constant 0 : i32
    %c0_i32_0 = arith.constant 0 : i32
    %c0_i32_1 = arith.constant 0 : i32
    return %arg1, %c0_i32, %c0_i32_0 : i32, i32, i32
  }
  func.func @transform_20(%arg0: i32, %arg1: i32) -> (i32, i32, i32) {
    %c0_i32 = arith.constant 0 : i32
    %c0_i32_0 = arith.constant 0 : i32
    %c0_i32_1 = arith.constant 0 : i32
    return %arg1, %c0_i32, %c0_i32_0 : i32, i32, i32
  }
  func.func @transform_21(%arg0: i32, %arg1: i32) -> (i32, i32, i32) {
    %c0_i32 = arith.constant 0 : i32
    %c0_i32_0 = arith.constant 0 : i32
    %c0_i32_1 = arith.constant 0 : i32
    return %arg1, %c0_i32, %c0_i32_0 : i32, i32, i32
  }
  func.func @transform_22(%arg0: i32, %arg1: i32) -> (i32, i32, i32) {
    %c0_i32 = arith.constant 0 : i32
    %c0_i32_0 = arith.constant 0 : i32
    %c0_i32_1 = arith.constant 0 : i32
    return %arg1, %c0_i32, %c0_i32_0 : i32, i32, i32
  }
  func.func @transform_23(%arg0: i32, %arg1: i32) -> (i32, i32) {
    %c0_i32 = arith.constant 0 : i32
    %c0_i32_0 = arith.constant 0 : i32
    %c0_i32_1 = arith.constant 0 : i32
    return %c0_i32, %c0_i32_0 : i32, i32
  }
  func.func @transform_24(%arg0: i32, %arg1: i32) -> (i32, i32) {
    %c0_i32 = arith.constant 0 : i32
    %c0_i32_0 = arith.constant 0 : i32
    %c0_i32_1 = arith.constant 0 : i32
    return %c0_i32, %c0_i32_0 : i32, i32
  }
  func.func @transform_25(%arg0: i32, %arg1: i32) -> (i32, i32) {
    %c0_i32 = arith.constant 0 : i32
    %c0_i32_0 = arith.constant 0 : i32
    %c0_i32_1 = arith.constant 0 : i32
    return %c0_i32, %c0_i32_0 : i32, i32
  }
  func.func @transform_26(%arg0: i32, %arg1: i32) -> (i32, i32) {
    %c0_i32 = arith.constant 0 : i32
    %c0_i32_0 = arith.constant 0 : i32
    %c0_i32_1 = arith.constant 0 : i32
    return %c0_i32, %c0_i32_0 : i32, i32
  }
  func.func @transform_27(%arg0: i32, %arg1: i32) -> (i32, i32, i32) {
    %c0_i32 = arith.constant 0 : i32
    %c0_i32_0 = arith.constant 0 : i32
    %c0_i32_1 = arith.constant 0 : i32
    return %arg0, %c0_i32, %c0_i32_0 : i32, i32, i32
  }
}

module attributes {stable_mosaic.version = 11 : i64} {
  func.func @_decoder_stack_kernel(%arg0: i32, %arg1: i32, %arg2: memref<1x8x32xf32, #tpu.memory_space<vmem>>, %arg3: memref<1x8x32xbf16, #tpu.memory_space<vmem>>, %arg4: memref<1x1x8xf32, #tpu.memory_space<vmem>>, %arg5: memref<1x1x32xf32, #tpu.memory_space<vmem>>, %arg6: memref<1x1x32xf32, #tpu.memory_space<vmem>>, %arg7: memref<1x32x96xbf16, #tpu.memory_space<vmem>>, %arg8: memref<1x1x96xf32, #tpu.memory_space<vmem>>, %arg9: memref<1x32x32xbf16, #tpu.memory_space<vmem>>, %arg10: memref<1x1x32xf32, #tpu.memory_space<vmem>>, %arg11: memref<1x1x32xf32, #tpu.memory_space<vmem>>, %arg12: memref<1x1x32xf32, #tpu.memory_space<vmem>>, %arg13: memref<1x32x32xbf16, #tpu.memory_space<vmem>>, %arg14: memref<1x1x32xf32, #tpu.memory_space<vmem>>, %arg15: memref<1x32x64xbf16, #tpu.memory_space<vmem>>, %arg16: memref<1x1x64xf32, #tpu.memory_space<vmem>>, %arg17: memref<1x32x32xbf16, #tpu.memory_space<vmem>>, %arg18: memref<1x1x32xf32, #tpu.memory_space<vmem>>, %arg19: memref<1x1x32xf32, #tpu.memory_space<vmem>>, %arg20: memref<1x1x32xf32, #tpu.memory_space<vmem>>, %arg21: memref<1x32x64xbf16, #tpu.memory_space<vmem>>, %arg22: memref<1x1x64xf32, #tpu.memory_space<vmem>>, %arg23: memref<1x64x32xbf16, #tpu.memory_space<vmem>>, %arg24: memref<1x1x32xf32, #tpu.memory_space<vmem>>, %arg25: memref<1x32xf32, #tpu.memory_space<vmem>>, %arg26: memref<1x32xf32, #tpu.memory_space<vmem>>, %arg27: memref<32x128xbf16, #tpu.memory_space<vmem>>, %arg28: memref<1x128xf32, #tpu.memory_space<vmem>>, %arg29: memref<1x8x128xf32, #tpu.memory_space<vmem>>, %arg30: memref<8x32xf32, #tpu.memory_space<vmem>>) attributes {dimension_semantics = [#tpu.dimension_semantics<parallel>, #tpu.dimension_semantics<arbitrary>], iteration_bounds = array<i64: 2, 2>, scalar_prefetch = 0 : i64, scratch_operands = 1 : i64, tpu.core_type = #tpu.core_type<tc>, window_params = [{transform_indices = @transform_0, window_bounds = array<i64: 1, 8, 32>}, {transform_indices = @transform_1, window_bounds = array<i64: 1, 8, 32>}, {transform_indices = @transform_2, window_bounds = array<i64: 1, 1, 8>}, {transform_indices = @transform_3, window_bounds = array<i64: 1, 1, 32>}, {transform_indices = @transform_4, window_bounds = array<i64: 1, 1, 32>}, {transform_indices = @transform_5, window_bounds = array<i64: 1, 32, 96>}, {transform_indices = @transform_6, window_bounds = array<i64: 1, 1, 96>}, {transform_indices = @transform_7, window_bounds = array<i64: 1, 32, 32>}, {transform_indices = @transform_8, window_bounds = array<i64: 1, 1, 32>}, {transform_indices = @transform_9, window_bounds = array<i64: 1, 1, 32>}, {transform_indices = @transform_10, window_bounds = array<i64: 1, 1, 32>}, {transform_indices = @transform_11, window_bounds = array<i64: 1, 32, 32>}, {transform_indices = @transform_12, window_bounds = array<i64: 1, 1, 32>}, {transform_indices = @transform_13, window_bounds = array<i64: 1, 32, 64>}, {transform_indices = @transform_14, window_bounds = array<i64: 1, 1, 64>}, {transform_indices = @transform_15, window_bounds = array<i64: 1, 32, 32>}, {transform_indices = @transform_16, window_bounds = array<i64: 1, 1, 32>}, {transform_indices = @transform_17, window_bounds = array<i64: 1, 1, 32>}, {transform_indices = @transform_18, window_bounds = array<i64: 1, 1, 32>}, {transform_indices = @transform_19, window_bounds = array<i64: 1, 32, 64>}, {transform_indices = @transform_20, window_bounds = array<i64: 1, 1, 64>}, {transform_indices = @transform_21, window_bounds = array<i64: 1, 64, 32>}, {transform_indices = @transform_22, window_bounds = array<i64: 1, 1, 32>}, {pipeline_mode = #tpu.pipeline_mode<synchronous>, transform_indices = @transform_23, window_bounds = array<i64: 1, 32>}, {pipeline_mode = #tpu.pipeline_mode<synchronous>, transform_indices = @transform_24, window_bounds = array<i64: 1, 32>}, {pipeline_mode = #tpu.pipeline_mode<synchronous>, transform_indices = @transform_25, window_bounds = array<i64: 32, 128>}, {pipeline_mode = #tpu.pipeline_mode<synchronous>, transform_indices = @transform_26, window_bounds = array<i64: 1, 128>}, {transform_indices = @transform_27, window_bounds = array<i64: 1, 8, 128>}]} {
    %c0_i32 = arith.constant 0 : i32
    %0 = arith.cmpi eq, %arg1, %c0_i32 : i32
    %1 = arith.extui %0 : i1 to i32
    %c0_i32_0 = arith.constant 0 : i32
    %2 = arith.cmpi ne, %1, %c0_i32_0 : i32
    scf.if %2 {
      %c0_148 = arith.constant 0 : index
      %c0_149 = arith.constant 0 : index
      %c0_150 = arith.constant 0 : index
      %359 = vector.load %arg2[%c0_148, %c0_149, %c0_150] : memref<1x8x32xf32, #tpu.memory_space<vmem>>, vector<1x8x32xf32>
      %360 = vector.shape_cast %359 : vector<1x8x32xf32> to vector<8x32xf32>
      %c0_151 = arith.constant 0 : index
      %c0_152 = arith.constant 0 : index
      %361 = vector.load %arg30[%c0_151, %c0_152] : memref<8x32xf32, #tpu.memory_space<vmem>>, vector<8x32xf32>
      tpu.vector_store %arg30[%c0_151, %c0_152], %360 {strides = array<i32>} : memref<8x32xf32, #tpu.memory_space<vmem>>, vector<8x32xf32>,
    } else {
    }
    %c0 = arith.constant 0 : index
    %c0_1 = arith.constant 0 : index
    %3 = vector.load %arg30[%c0, %c0_1] : memref<8x32xf32, #tpu.memory_space<vmem>>, vector<8x32xf32>
    %c0_2 = arith.constant 0 : index
    %c0_3 = arith.constant 0 : index
    %c0_4 = arith.constant 0 : index
    %4 = vector.load %arg4[%c0_2, %c0_3, %c0_4] : memref<1x1x8xf32, #tpu.memory_space<vmem>>, vector<1x1x8xf32>
    %5 = vector.shape_cast %4 : vector<1x1x8xf32> to vector<1x8xf32>
    %cst = arith.constant 0.000000e+00 : f32
    %6 = vector.broadcast %cst : f32 to vector<1x8xf32>
    %7 = arith.cmpf ogt, %5, %6 : vector<1x8xf32>
    %c0_5 = arith.constant 0 : index
    %c0_6 = arith.constant 0 : index
    %c0_7 = arith.constant 0 : index
    %8 = vector.load %arg5[%c0_5, %c0_6, %c0_7] : memref<1x1x32xf32, #tpu.memory_space<vmem>>, vector<1x1x32xf32>
    %9 = vector.shape_cast %8 : vector<1x1x32xf32> to vector<1x32xf32>
    %c0_8 = arith.constant 0 : index
    %c0_9 = arith.constant 0 : index
    %c0_10 = arith.constant 0 : index
    %10 = vector.load %arg6[%c0_8, %c0_9, %c0_10] : memref<1x1x32xf32, #tpu.memory_space<vmem>>, vector<1x1x32xf32>
    %11 = vector.shape_cast %10 : vector<1x1x32xf32> to vector<1x32xf32>
    %cst_11 = arith.constant dense<0.000000e+00> : vector<8xf32>
    %12 = vector.multi_reduction <add>, %3, %cst_11 [1] : vector<8x32xf32> to vector<8xf32>
    %13 = vector.shape_cast %12 : vector<8xf32> to vector<8x1xf32>
    %cst_12 = arith.constant 3.200000e+01 : f32
    %14 = vector.broadcast %cst_12 : f32 to vector<8x1xf32>
    %15 = arith.divf %13, %14 : vector<8x1xf32>
    %16 = vector.broadcast %15 : vector<8x1xf32> to vector<8x32xf32>
    %17 = arith.subf %3, %16 : vector<8x32xf32>
    %18 = arith.mulf %17, %17 : vector<8x32xf32>
    %cst_13 = arith.constant dense<0.000000e+00> : vector<8xf32>
    %19 = vector.multi_reduction <add>, %18, %cst_13 [1] : vector<8x32xf32> to vector<8xf32>
    %20 = vector.shape_cast %19 : vector<8xf32> to vector<8x1xf32>
    %cst_14 = arith.constant 3.200000e+01 : f32
    %21 = vector.broadcast %cst_14 : f32 to vector<8x1xf32>
    %22 = arith.divf %20, %21 : vector<8x1xf32>
    %cst_15 = arith.constant 9.99999996E-13 : f32
    %23 = vector.broadcast %cst_15 : f32 to vector<8x1xf32>
    %24 = arith.addf %22, %23 : vector<8x1xf32>
    %25 = math.rsqrt %24 : vector<8x1xf32>
    %26 = vector.broadcast %25 : vector<8x1xf32> to vector<8x32xf32>
    %27 = arith.mulf %17, %26 : vector<8x32xf32>
    %28 = vector.broadcast %9 : vector<1x32xf32> to vector<8x32xf32>
    %29 = arith.mulf %27, %28 : vector<8x32xf32>
    %30 = vector.broadcast %11 : vector<1x32xf32> to vector<8x32xf32>
    %31 = arith.addf %29, %30 : vector<8x32xf32>
    %32 = arith.truncf %31 : vector<8x32xf32> to vector<8x32xbf16>
    %c0_16 = arith.constant 0 : index
    %c0_17 = arith.constant 0 : index
    %c0_18 = arith.constant 0 : index
    %33 = vector.load %arg7[%c0_16, %c0_17, %c0_18] : memref<1x32x96xbf16, #tpu.memory_space<vmem>>, vector<1x32x96xbf16>
    %34 = vector.shape_cast %33 : vector<1x32x96xbf16> to vector<32x96xbf16>
    %cst_19 = arith.constant dense<0.000000e+00> : vector<8x96xf32>
    %35 = tpu.matmul %32, %34, %cst_19 {dimension_numbers = #tpu.dot_dimension_numbers<[1], [0], [0], [1], [0, 0, 1, 1], [], []>} : vector<8x32xbf16>, vector<32x96xbf16>, vector<8x96xf32> -> vector<8x96xf32>
    %c0_20 = arith.constant 0 : index
    %c0_21 = arith.constant 0 : index
    %c0_22 = arith.constant 0 : index
    %36 = vector.load %arg8[%c0_20, %c0_21, %c0_22] : memref<1x1x96xf32, #tpu.memory_space<vmem>>, vector<1x1x96xf32>
    %37 = vector.shape_cast %36 : vector<1x1x96xf32> to vector<1x96xf32>
    %38 = vector.broadcast %37 : vector<1x96xf32> to vector<8x96xf32>
    %39 = arith.addf %35, %38 : vector<8x96xf32>
    %40 = vector.extract_strided_slice %39 {offsets = [0, 0], sizes = [8, 32], strides = [1, 1]} : vector<8x96xf32> to vector<8x32xf32>
    %41 = vector.extract_strided_slice %39 {offsets = [0, 32], sizes = [8, 32], strides = [1, 1]} : vector<8x96xf32> to vector<8x32xf32>
    %42 = vector.extract_strided_slice %39 {offsets = [0, 64], sizes = [8, 32], strides = [1, 1]} : vector<8x96xf32> to vector<8x32xf32>
    %c0_23 = arith.constant 0 : index
    %c0_24 = arith.constant 0 : index
    %c0_25 = arith.constant 0 : index
    %43 = vector.load %arg9[%c0_23, %c0_24, %c0_25] : memref<1x32x32xbf16, #tpu.memory_space<vmem>>, vector<1x32x32xbf16>
    %44 = vector.shape_cast %43 : vector<1x32x32xbf16> to vector<32x32xbf16>
    %c0_26 = arith.constant 0 : index
    %c0_27 = arith.constant 0 : index
    %c0_28 = arith.constant 0 : index
    %45 = vector.load %arg10[%c0_26, %c0_27, %c0_28] : memref<1x1x32xf32, #tpu.memory_space<vmem>>, vector<1x1x32xf32>
    %46 = vector.shape_cast %45 : vector<1x1x32xf32> to vector<1x32xf32>
    %47 = arith.truncf %40 : vector<8x32xf32> to vector<8x32xbf16>
    %48 = arith.truncf %41 : vector<8x32xf32> to vector<8x32xbf16>
    %49 = arith.truncf %42 : vector<8x32xf32> to vector<8x32xbf16>
    %50 = vector.extract_strided_slice %47 {offsets = [0, 0], sizes = [8, 8], strides = [1, 1]} : vector<8x32xbf16> to vector<8x8xbf16>
    %51 = vector.extract_strided_slice %48 {offsets = [0, 0], sizes = [8, 8], strides = [1, 1]} : vector<8x32xbf16> to vector<8x8xbf16>
    %cst_29 = arith.constant dense<0.000000e+00> : vector<8x8xf32>
    %52 = tpu.matmul %50, %51, %cst_29 {dimension_numbers = #tpu.dot_dimension_numbers<[1], [1], [0], [0], [0, 0, 1, 0], [], []>} : vector<8x8xbf16>, vector<8x8xbf16>, vector<8x8xf32> -> vector<8x8xf32>
    %cst_30 = arith.constant 0.353553385 : f32
    %53 = vector.broadcast %cst_30 : f32 to vector<8x8xf32>
    %54 = arith.mulf %52, %53 : vector<8x8xf32>
    %cst_31 = arith.constant dense<0xFF800000> : vector<8xf32>
    %55 = vector.multi_reduction <maximumf>, %54, %cst_31 [1] : vector<8x8xf32> to vector<8xf32>
    %56 = vector.shape_cast %55 : vector<8xf32> to vector<8x1xf32>
    %57 = vector.broadcast %56 : vector<8x1xf32> to vector<8x8xf32>
    %58 = arith.subf %54, %57 : vector<8x8xf32>
    %59 = math.exp %58 : vector<8x8xf32>
    %cst_32 = arith.constant dense<0.000000e+00> : vector<8xf32>
    %60 = vector.multi_reduction <add>, %59, %cst_32 [1] : vector<8x8xf32> to vector<8xf32>
    %61 = vector.shape_cast %60 : vector<8xf32> to vector<8x1xf32>
    %62 = tpu.reciprocal %61 {approx = true} : vector<8x1xf32> -> vector<8x1xf32>
    %63 = vector.broadcast %62 : vector<8x1xf32> to vector<8x8xf32>
    %64 = arith.mulf %59, %63 : vector<8x8xf32>
    %65 = arith.truncf %64 : vector<8x8xf32> to vector<8x8xbf16>
    %66 = vector.extract_strided_slice %49 {offsets = [0, 0], sizes = [8, 8], strides = [1, 1]} : vector<8x32xbf16> to vector<8x8xbf16>
    %cst_33 = arith.constant dense<0.000000e+00> : vector<8x8xf32>
    %67 = tpu.matmul %65, %66, %cst_33 {dimension_numbers = #tpu.dot_dimension_numbers<[1], [0], [0], [1], [0, 0, 1, 1], [], []>} : vector<8x8xbf16>, vector<8x8xbf16>, vector<8x8xf32> -> vector<8x8xf32>
    %68 = arith.truncf %67 : vector<8x8xf32> to vector<8x8xbf16>
    %69 = vector.extract_strided_slice %44 {offsets = [0, 0], sizes = [8, 32], strides = [1, 1]} : vector<32x32xbf16> to vector<8x32xbf16>
    %cst_34 = arith.constant dense<0.000000e+00> : vector<8x32xf32>
    %70 = tpu.matmul %68, %69, %cst_34 {dimension_numbers = #tpu.dot_dimension_numbers<[1], [0], [0], [1], [0, 0, 1, 1], [], []>} : vector<8x8xbf16>, vector<8x32xbf16>, vector<8x32xf32> -> vector<8x32xf32>
    %71 = vector.extract_strided_slice %47 {offsets = [0, 8], sizes = [8, 8], strides = [1, 1]} : vector<8x32xbf16> to vector<8x8xbf16>
    %72 = vector.extract_strided_slice %48 {offsets = [0, 8], sizes = [8, 8], strides = [1, 1]} : vector<8x32xbf16> to vector<8x8xbf16>
    %cst_35 = arith.constant dense<0.000000e+00> : vector<8x8xf32>
    %73 = tpu.matmul %71, %72, %cst_35 {dimension_numbers = #tpu.dot_dimension_numbers<[1], [1], [0], [0], [0, 0, 1, 0], [], []>} : vector<8x8xbf16>, vector<8x8xbf16>, vector<8x8xf32> -> vector<8x8xf32>
    %cst_36 = arith.constant 0.353553385 : f32
    %74 = vector.broadcast %cst_36 : f32 to vector<8x8xf32>
    %75 = arith.mulf %73, %74 : vector<8x8xf32>
    %cst_37 = arith.constant dense<0xFF800000> : vector<8xf32>
    %76 = vector.multi_reduction <maximumf>, %75, %cst_37 [1] : vector<8x8xf32> to vector<8xf32>
    %77 = vector.shape_cast %76 : vector<8xf32> to vector<8x1xf32>
    %78 = vector.broadcast %77 : vector<8x1xf32> to vector<8x8xf32>
    %79 = arith.subf %75, %78 : vector<8x8xf32>
    %80 = math.exp %79 : vector<8x8xf32>
    %cst_38 = arith.constant dense<0.000000e+00> : vector<8xf32>
    %81 = vector.multi_reduction <add>, %80, %cst_38 [1] : vector<8x8xf32> to vector<8xf32>
    %82 = vector.shape_cast %81 : vector<8xf32> to vector<8x1xf32>
    %83 = tpu.reciprocal %82 {approx = true} : vector<8x1xf32> -> vector<8x1xf32>
    %84 = vector.broadcast %83 : vector<8x1xf32> to vector<8x8xf32>
    %85 = arith.mulf %80, %84 : vector<8x8xf32>
    %86 = arith.truncf %85 : vector<8x8xf32> to vector<8x8xbf16>
    %87 = vector.extract_strided_slice %49 {offsets = [0, 8], sizes = [8, 8], strides = [1, 1]} : vector<8x32xbf16> to vector<8x8xbf16>
    %cst_39 = arith.constant dense<0.000000e+00> : vector<8x8xf32>
    %88 = tpu.matmul %86, %87, %cst_39 {dimension_numbers = #tpu.dot_dimension_numbers<[1], [0], [0], [1], [0, 0, 1, 1], [], []>} : vector<8x8xbf16>, vector<8x8xbf16>, vector<8x8xf32> -> vector<8x8xf32>
    %89 = arith.truncf %88 : vector<8x8xf32> to vector<8x8xbf16>
    %90 = vector.extract_strided_slice %44 {offsets = [8, 0], sizes = [8, 32], strides = [1, 1]} : vector<32x32xbf16> to vector<8x32xbf16>
    %cst_40 = arith.constant dense<0.000000e+00> : vector<8x32xf32>
    %91 = tpu.matmul %89, %90, %cst_40 {dimension_numbers = #tpu.dot_dimension_numbers<[1], [0], [0], [1], [0, 0, 1, 1], [], []>} : vector<8x8xbf16>, vector<8x32xbf16>, vector<8x32xf32> -> vector<8x32xf32>
    %92 = arith.addf %70, %91 : vector<8x32xf32>
    %93 = vector.extract_strided_slice %47 {offsets = [0, 16], sizes = [8, 8], strides = [1, 1]} : vector<8x32xbf16> to vector<8x8xbf16>
    %94 = vector.extract_strided_slice %48 {offsets = [0, 16], sizes = [8, 8], strides = [1, 1]} : vector<8x32xbf16> to vector<8x8xbf16>
    %cst_41 = arith.constant dense<0.000000e+00> : vector<8x8xf32>
    %95 = tpu.matmul %93, %94, %cst_41 {dimension_numbers = #tpu.dot_dimension_numbers<[1], [1], [0], [0], [0, 0, 1, 0], [], []>} : vector<8x8xbf16>, vector<8x8xbf16>, vector<8x8xf32> -> vector<8x8xf32>
    %cst_42 = arith.constant 0.353553385 : f32
    %96 = vector.broadcast %cst_42 : f32 to vector<8x8xf32>
    %97 = arith.mulf %95, %96 : vector<8x8xf32>
    %cst_43 = arith.constant dense<0xFF800000> : vector<8xf32>
    %98 = vector.multi_reduction <maximumf>, %97, %cst_43 [1] : vector<8x8xf32> to vector<8xf32>
    %99 = vector.shape_cast %98 : vector<8xf32> to vector<8x1xf32>
    %100 = vector.broadcast %99 : vector<8x1xf32> to vector<8x8xf32>
    %101 = arith.subf %97, %100 : vector<8x8xf32>
    %102 = math.exp %101 : vector<8x8xf32>
    %cst_44 = arith.constant dense<0.000000e+00> : vector<8xf32>
    %103 = vector.multi_reduction <add>, %102, %cst_44 [1] : vector<8x8xf32> to vector<8xf32>
    %104 = vector.shape_cast %103 : vector<8xf32> to vector<8x1xf32>
    %105 = tpu.reciprocal %104 {approx = true} : vector<8x1xf32> -> vector<8x1xf32>
    %106 = vector.broadcast %105 : vector<8x1xf32> to vector<8x8xf32>
    %107 = arith.mulf %102, %106 : vector<8x8xf32>
    %108 = arith.truncf %107 : vector<8x8xf32> to vector<8x8xbf16>
    %109 = vector.extract_strided_slice %49 {offsets = [0, 16], sizes = [8, 8], strides = [1, 1]} : vector<8x32xbf16> to vector<8x8xbf16>
    %cst_45 = arith.constant dense<0.000000e+00> : vector<8x8xf32>
    %110 = tpu.matmul %108, %109, %cst_45 {dimension_numbers = #tpu.dot_dimension_numbers<[1], [0], [0], [1], [0, 0, 1, 1], [], []>} : vector<8x8xbf16>, vector<8x8xbf16>, vector<8x8xf32> -> vector<8x8xf32>
    %111 = arith.truncf %110 : vector<8x8xf32> to vector<8x8xbf16>
    %112 = vector.extract_strided_slice %44 {offsets = [16, 0], sizes = [8, 32], strides = [1, 1]} : vector<32x32xbf16> to vector<8x32xbf16>
    %cst_46 = arith.constant dense<0.000000e+00> : vector<8x32xf32>
    %113 = tpu.matmul %111, %112, %cst_46 {dimension_numbers = #tpu.dot_dimension_numbers<[1], [0], [0], [1], [0, 0, 1, 1], [], []>} : vector<8x8xbf16>, vector<8x32xbf16>, vector<8x32xf32> -> vector<8x32xf32>
    %114 = arith.addf %92, %113 : vector<8x32xf32>
    %115 = vector.extract_strided_slice %47 {offsets = [0, 24], sizes = [8, 8], strides = [1, 1]} : vector<8x32xbf16> to vector<8x8xbf16>
    %116 = vector.extract_strided_slice %48 {offsets = [0, 24], sizes = [8, 8], strides = [1, 1]} : vector<8x32xbf16> to vector<8x8xbf16>
    %cst_47 = arith.constant dense<0.000000e+00> : vector<8x8xf32>
    %117 = tpu.matmul %115, %116, %cst_47 {dimension_numbers = #tpu.dot_dimension_numbers<[1], [1], [0], [0], [0, 0, 1, 0], [], []>} : vector<8x8xbf16>, vector<8x8xbf16>, vector<8x8xf32> -> vector<8x8xf32>
    %cst_48 = arith.constant 0.353553385 : f32
    %118 = vector.broadcast %cst_48 : f32 to vector<8x8xf32>
    %119 = arith.mulf %117, %118 : vector<8x8xf32>
    %cst_49 = arith.constant dense<0xFF800000> : vector<8xf32>
    %120 = vector.multi_reduction <maximumf>, %119, %cst_49 [1] : vector<8x8xf32> to vector<8xf32>
    %121 = vector.shape_cast %120 : vector<8xf32> to vector<8x1xf32>
    %122 = vector.broadcast %121 : vector<8x1xf32> to vector<8x8xf32>
    %123 = arith.subf %119, %122 : vector<8x8xf32>
    %124 = math.exp %123 : vector<8x8xf32>
    %cst_50 = arith.constant dense<0.000000e+00> : vector<8xf32>
    %125 = vector.multi_reduction <add>, %124, %cst_50 [1] : vector<8x8xf32> to vector<8xf32>
    %126 = vector.shape_cast %125 : vector<8xf32> to vector<8x1xf32>
    %127 = tpu.reciprocal %126 {approx = true} : vector<8x1xf32> -> vector<8x1xf32>
    %128 = vector.broadcast %127 : vector<8x1xf32> to vector<8x8xf32>
    %129 = arith.mulf %124, %128 : vector<8x8xf32>
    %130 = arith.truncf %129 : vector<8x8xf32> to vector<8x8xbf16>
    %131 = vector.extract_strided_slice %49 {offsets = [0, 24], sizes = [8, 8], strides = [1, 1]} : vector<8x32xbf16> to vector<8x8xbf16>
    %cst_51 = arith.constant dense<0.000000e+00> : vector<8x8xf32>
    %132 = tpu.matmul %130, %131, %cst_51 {dimension_numbers = #tpu.dot_dimension_numbers<[1], [0], [0], [1], [0, 0, 1, 1], [], []>} : vector<8x8xbf16>, vector<8x8xbf16>, vector<8x8xf32> -> vector<8x8xf32>
    %133 = arith.truncf %132 : vector<8x8xf32> to vector<8x8xbf16>
    %134 = vector.extract_strided_slice %44 {offsets = [24, 0], sizes = [8, 32], strides = [1, 1]} : vector<32x32xbf16> to vector<8x32xbf16>
    %cst_52 = arith.constant dense<0.000000e+00> : vector<8x32xf32>
    %135 = tpu.matmul %133, %134, %cst_52 {dimension_numbers = #tpu.dot_dimension_numbers<[1], [0], [0], [1], [0, 0, 1, 1], [], []>} : vector<8x8xbf16>, vector<8x32xbf16>, vector<8x32xf32> -> vector<8x32xf32>
    %136 = arith.addf %114, %135 : vector<8x32xf32>
    %137 = vector.broadcast %46 : vector<1x32xf32> to vector<8x32xf32>
    %138 = arith.addf %136, %137 : vector<8x32xf32>
    %139 = arith.addf %3, %138 : vector<8x32xf32>
    %c0_53 = arith.constant 0 : index
    %c0_54 = arith.constant 0 : index
    %c0_55 = arith.constant 0 : index
    %140 = vector.load %arg11[%c0_53, %c0_54, %c0_55] : memref<1x1x32xf32, #tpu.memory_space<vmem>>, vector<1x1x32xf32>
    %141 = vector.shape_cast %140 : vector<1x1x32xf32> to vector<1x32xf32>
    %c0_56 = arith.constant 0 : index
    %c0_57 = arith.constant 0 : index
    %c0_58 = arith.constant 0 : index
    %142 = vector.load %arg12[%c0_56, %c0_57, %c0_58] : memref<1x1x32xf32, #tpu.memory_space<vmem>>, vector<1x1x32xf32>
    %143 = vector.shape_cast %142 : vector<1x1x32xf32> to vector<1x32xf32>
    %cst_59 = arith.constant dense<0.000000e+00> : vector<8xf32>
    %144 = vector.multi_reduction <add>, %139, %cst_59 [1] : vector<8x32xf32> to vector<8xf32>
    %145 = vector.shape_cast %144 : vector<8xf32> to vector<8x1xf32>
    %cst_60 = arith.constant 3.200000e+01 : f32
    %146 = vector.broadcast %cst_60 : f32 to vector<8x1xf32>
    %147 = arith.divf %145, %146 : vector<8x1xf32>
    %148 = vector.broadcast %147 : vector<8x1xf32> to vector<8x32xf32>
    %149 = arith.subf %139, %148 : vector<8x32xf32>
    %150 = arith.mulf %149, %149 : vector<8x32xf32>
    %cst_61 = arith.constant dense<0.000000e+00> : vector<8xf32>
    %151 = vector.multi_reduction <add>, %150, %cst_61 [1] : vector<8x32xf32> to vector<8xf32>
    %152 = vector.shape_cast %151 : vector<8xf32> to vector<8x1xf32>
    %cst_62 = arith.constant 3.200000e+01 : f32
    %153 = vector.broadcast %cst_62 : f32 to vector<8x1xf32>
    %154 = arith.divf %152, %153 : vector<8x1xf32>
    %cst_63 = arith.constant 9.99999996E-13 : f32
    %155 = vector.broadcast %cst_63 : f32 to vector<8x1xf32>
    %156 = arith.addf %154, %155 : vector<8x1xf32>
    %157 = math.rsqrt %156 : vector<8x1xf32>
    %158 = vector.broadcast %157 : vector<8x1xf32> to vector<8x32xf32>
    %159 = arith.mulf %149, %158 : vector<8x32xf32>
    %160 = vector.broadcast %141 : vector<1x32xf32> to vector<8x32xf32>
    %161 = arith.mulf %159, %160 : vector<8x32xf32>
    %162 = vector.broadcast %143 : vector<1x32xf32> to vector<8x32xf32>
    %163 = arith.addf %161, %162 : vector<8x32xf32>
    %164 = arith.truncf %163 : vector<8x32xf32> to vector<8x32xbf16>
    %c0_64 = arith.constant 0 : index
    %c0_65 = arith.constant 0 : index
    %c0_66 = arith.constant 0 : index
    %165 = vector.load %arg13[%c0_64, %c0_65, %c0_66] : memref<1x32x32xbf16, #tpu.memory_space<vmem>>, vector<1x32x32xbf16>
    %166 = vector.shape_cast %165 : vector<1x32x32xbf16> to vector<32x32xbf16>
    %cst_67 = arith.constant dense<0.000000e+00> : vector<8x32xf32>
    %167 = tpu.matmul %164, %166, %cst_67 {dimension_numbers = #tpu.dot_dimension_numbers<[1], [0], [0], [1], [0, 0, 1, 1], [], []>} : vector<8x32xbf16>, vector<32x32xbf16>, vector<8x32xf32> -> vector<8x32xf32>
    %c0_68 = arith.constant 0 : index
    %c0_69 = arith.constant 0 : index
    %c0_70 = arith.constant 0 : index
    %168 = vector.load %arg14[%c0_68, %c0_69, %c0_70] : memref<1x1x32xf32, #tpu.memory_space<vmem>>, vector<1x1x32xf32>
    %169 = vector.shape_cast %168 : vector<1x1x32xf32> to vector<1x32xf32>
    %170 = vector.broadcast %169 : vector<1x32xf32> to vector<8x32xf32>
    %171 = arith.addf %167, %170 : vector<8x32xf32>
    %c0_71 = arith.constant 0 : index
    %c0_72 = arith.constant 0 : index
    %c0_73 = arith.constant 0 : index
    %172 = vector.load %arg3[%c0_71, %c0_72, %c0_73] : memref<1x8x32xbf16, #tpu.memory_space<vmem>>, vector<1x8x32xbf16>
    %173 = vector.shape_cast %172 : vector<1x8x32xbf16> to vector<8x32xbf16>
    %c0_74 = arith.constant 0 : index
    %c0_75 = arith.constant 0 : index
    %c0_76 = arith.constant 0 : index
    %174 = vector.load %arg15[%c0_74, %c0_75, %c0_76] : memref<1x32x64xbf16, #tpu.memory_space<vmem>>, vector<1x32x64xbf16>
    %175 = vector.shape_cast %174 : vector<1x32x64xbf16> to vector<32x64xbf16>
    %cst_77 = arith.constant dense<0.000000e+00> : vector<8x64xf32>
    %176 = tpu.matmul %173, %175, %cst_77 {dimension_numbers = #tpu.dot_dimension_numbers<[1], [0], [0], [1], [0, 0, 1, 1], [], []>} : vector<8x32xbf16>, vector<32x64xbf16>, vector<8x64xf32> -> vector<8x64xf32>
    %c0_78 = arith.constant 0 : index
    %c0_79 = arith.constant 0 : index
    %c0_80 = arith.constant 0 : index
    %177 = vector.load %arg16[%c0_78, %c0_79, %c0_80] : memref<1x1x64xf32, #tpu.memory_space<vmem>>, vector<1x1x64xf32>
    %178 = vector.shape_cast %177 : vector<1x1x64xf32> to vector<1x64xf32>
    %179 = vector.broadcast %178 : vector<1x64xf32> to vector<8x64xf32>
    %180 = arith.addf %176, %179 : vector<8x64xf32>
    %181 = vector.extract_strided_slice %180 {offsets = [0, 0], sizes = [8, 32], strides = [1, 1]} : vector<8x64xf32> to vector<8x32xf32>
    %182 = vector.extract_strided_slice %180 {offsets = [0, 32], sizes = [8, 32], strides = [1, 1]} : vector<8x64xf32> to vector<8x32xf32>
    %c0_81 = arith.constant 0 : index
    %c0_82 = arith.constant 0 : index
    %c0_83 = arith.constant 0 : index
    %183 = vector.load %arg17[%c0_81, %c0_82, %c0_83] : memref<1x32x32xbf16, #tpu.memory_space<vmem>>, vector<1x32x32xbf16>
    %184 = vector.shape_cast %183 : vector<1x32x32xbf16> to vector<32x32xbf16>
    %c0_84 = arith.constant 0 : index
    %c0_85 = arith.constant 0 : index
    %c0_86 = arith.constant 0 : index
    %185 = vector.load %arg18[%c0_84, %c0_85, %c0_86] : memref<1x1x32xf32, #tpu.memory_space<vmem>>, vector<1x1x32xf32>
    %186 = vector.shape_cast %185 : vector<1x1x32xf32> to vector<1x32xf32>
    %187 = arith.truncf %171 : vector<8x32xf32> to vector<8x32xbf16>
    %188 = arith.truncf %181 : vector<8x32xf32> to vector<8x32xbf16>
    %189 = arith.truncf %182 : vector<8x32xf32> to vector<8x32xbf16>
    %190 = vector.extract_strided_slice %187 {offsets = [0, 0], sizes = [8, 8], strides = [1, 1]} : vector<8x32xbf16> to vector<8x8xbf16>
    %191 = vector.extract_strided_slice %188 {offsets = [0, 0], sizes = [8, 8], strides = [1, 1]} : vector<8x32xbf16> to vector<8x8xbf16>
    %cst_87 = arith.constant dense<0.000000e+00> : vector<8x8xf32>
    %192 = tpu.matmul %190, %191, %cst_87 {dimension_numbers = #tpu.dot_dimension_numbers<[1], [1], [0], [0], [0, 0, 1, 0], [], []>} : vector<8x8xbf16>, vector<8x8xbf16>, vector<8x8xf32> -> vector<8x8xf32>
    %cst_88 = arith.constant 0.353553385 : f32
    %193 = vector.broadcast %cst_88 : f32 to vector<8x8xf32>
    %194 = arith.mulf %192, %193 : vector<8x8xf32>
    %cst_89 = arith.constant -3.40282347E+38 : f32
    %195 = vector.shape_cast %7 : vector<1x8xi1> to vector<1x8xi1>
    %196 = vector.broadcast %195 : vector<1x8xi1> to vector<8x8xi1>
    %197 = vector.broadcast %cst_89 : f32 to vector<8x8xf32>
    %198 = arith.select %196, %194, %197 : vector<8x8xi1>, vector<8x8xf32>
    %cst_90 = arith.constant dense<0xFF800000> : vector<8xf32>
    %199 = vector.multi_reduction <maximumf>, %198, %cst_90 [1] : vector<8x8xf32> to vector<8xf32>
    %200 = vector.shape_cast %199 : vector<8xf32> to vector<8x1xf32>
    %201 = vector.broadcast %200 : vector<8x1xf32> to vector<8x8xf32>
    %202 = arith.subf %198, %201 : vector<8x8xf32>
    %203 = math.exp %202 : vector<8x8xf32>
    %cst_91 = arith.constant dense<0.000000e+00> : vector<8xf32>
    %204 = vector.multi_reduction <add>, %203, %cst_91 [1] : vector<8x8xf32> to vector<8xf32>
    %205 = vector.shape_cast %204 : vector<8xf32> to vector<8x1xf32>
    %206 = tpu.reciprocal %205 {approx = true} : vector<8x1xf32> -> vector<8x1xf32>
    %207 = vector.broadcast %206 : vector<8x1xf32> to vector<8x8xf32>
    %208 = arith.mulf %203, %207 : vector<8x8xf32>
    %cst_92 = arith.constant 0.000000e+00 : f32
    %209 = vector.shape_cast %7 : vector<1x8xi1> to vector<1x8xi1>
    %210 = vector.broadcast %209 : vector<1x8xi1> to vector<8x8xi1>
    %211 = vector.broadcast %cst_92 : f32 to vector<8x8xf32>
    %212 = arith.select %210, %208, %211 : vector<8x8xi1>, vector<8x8xf32>
    %213 = arith.truncf %212 : vector<8x8xf32> to vector<8x8xbf16>
    %214 = vector.extract_strided_slice %189 {offsets = [0, 0], sizes = [8, 8], strides = [1, 1]} : vector<8x32xbf16> to vector<8x8xbf16>
    %cst_93 = arith.constant dense<0.000000e+00> : vector<8x8xf32>
    %215 = tpu.matmul %213, %214, %cst_93 {dimension_numbers = #tpu.dot_dimension_numbers<[1], [0], [0], [1], [0, 0, 1, 1], [], []>} : vector<8x8xbf16>, vector<8x8xbf16>, vector<8x8xf32> -> vector<8x8xf32>
    %216 = arith.truncf %215 : vector<8x8xf32> to vector<8x8xbf16>
    %217 = vector.extract_strided_slice %184 {offsets = [0, 0], sizes = [8, 32], strides = [1, 1]} : vector<32x32xbf16> to vector<8x32xbf16>
    %cst_94 = arith.constant dense<0.000000e+00> : vector<8x32xf32>
    %218 = tpu.matmul %216, %217, %cst_94 {dimension_numbers = #tpu.dot_dimension_numbers<[1], [0], [0], [1], [0, 0, 1, 1], [], []>} : vector<8x8xbf16>, vector<8x32xbf16>, vector<8x32xf32> -> vector<8x32xf32>
    %219 = vector.extract_strided_slice %187 {offsets = [0, 8], sizes = [8, 8], strides = [1, 1]} : vector<8x32xbf16> to vector<8x8xbf16>
    %220 = vector.extract_strided_slice %188 {offsets = [0, 8], sizes = [8, 8], strides = [1, 1]} : vector<8x32xbf16> to vector<8x8xbf16>
    %cst_95 = arith.constant dense<0.000000e+00> : vector<8x8xf32>
    %221 = tpu.matmul %219, %220, %cst_95 {dimension_numbers = #tpu.dot_dimension_numbers<[1], [1], [0], [0], [0, 0, 1, 0], [], []>} : vector<8x8xbf16>, vector<8x8xbf16>, vector<8x8xf32> -> vector<8x8xf32>
    %cst_96 = arith.constant 0.353553385 : f32
    %222 = vector.broadcast %cst_96 : f32 to vector<8x8xf32>
    %223 = arith.mulf %221, %222 : vector<8x8xf32>
    %cst_97 = arith.constant -3.40282347E+38 : f32
    %224 = vector.shape_cast %7 : vector<1x8xi1> to vector<1x8xi1>
    %225 = vector.broadcast %224 : vector<1x8xi1> to vector<8x8xi1>
    %226 = vector.broadcast %cst_97 : f32 to vector<8x8xf32>
    %227 = arith.select %225, %223, %226 : vector<8x8xi1>, vector<8x8xf32>
    %cst_98 = arith.constant dense<0xFF800000> : vector<8xf32>
    %228 = vector.multi_reduction <maximumf>, %227, %cst_98 [1] : vector<8x8xf32> to vector<8xf32>
    %229 = vector.shape_cast %228 : vector<8xf32> to vector<8x1xf32>
    %230 = vector.broadcast %229 : vector<8x1xf32> to vector<8x8xf32>
    %231 = arith.subf %227, %230 : vector<8x8xf32>
    %232 = math.exp %231 : vector<8x8xf32>
    %cst_99 = arith.constant dense<0.000000e+00> : vector<8xf32>
    %233 = vector.multi_reduction <add>, %232, %cst_99 [1] : vector<8x8xf32> to vector<8xf32>
    %234 = vector.shape_cast %233 : vector<8xf32> to vector<8x1xf32>
    %235 = tpu.reciprocal %234 {approx = true} : vector<8x1xf32> -> vector<8x1xf32>
    %236 = vector.broadcast %235 : vector<8x1xf32> to vector<8x8xf32>
    %237 = arith.mulf %232, %236 : vector<8x8xf32>
    %cst_100 = arith.constant 0.000000e+00 : f32
    %238 = vector.shape_cast %7 : vector<1x8xi1> to vector<1x8xi1>
    %239 = vector.broadcast %238 : vector<1x8xi1> to vector<8x8xi1>
    %240 = vector.broadcast %cst_100 : f32 to vector<8x8xf32>
    %241 = arith.select %239, %237, %240 : vector<8x8xi1>, vector<8x8xf32>
    %242 = arith.truncf %241 : vector<8x8xf32> to vector<8x8xbf16>
    %243 = vector.extract_strided_slice %189 {offsets = [0, 8], sizes = [8, 8], strides = [1, 1]} : vector<8x32xbf16> to vector<8x8xbf16>
    %cst_101 = arith.constant dense<0.000000e+00> : vector<8x8xf32>
    %244 = tpu.matmul %242, %243, %cst_101 {dimension_numbers = #tpu.dot_dimension_numbers<[1], [0], [0], [1], [0, 0, 1, 1], [], []>} : vector<8x8xbf16>, vector<8x8xbf16>, vector<8x8xf32> -> vector<8x8xf32>
    %245 = arith.truncf %244 : vector<8x8xf32> to vector<8x8xbf16>
    %246 = vector.extract_strided_slice %184 {offsets = [8, 0], sizes = [8, 32], strides = [1, 1]} : vector<32x32xbf16> to vector<8x32xbf16>
    %cst_102 = arith.constant dense<0.000000e+00> : vector<8x32xf32>
    %247 = tpu.matmul %245, %246, %cst_102 {dimension_numbers = #tpu.dot_dimension_numbers<[1], [0], [0], [1], [0, 0, 1, 1], [], []>} : vector<8x8xbf16>, vector<8x32xbf16>, vector<8x32xf32> -> vector<8x32xf32>
    %248 = arith.addf %218, %247 : vector<8x32xf32>
    %249 = vector.extract_strided_slice %187 {offsets = [0, 16], sizes = [8, 8], strides = [1, 1]} : vector<8x32xbf16> to vector<8x8xbf16>
    %250 = vector.extract_strided_slice %188 {offsets = [0, 16], sizes = [8, 8], strides = [1, 1]} : vector<8x32xbf16> to vector<8x8xbf16>
    %cst_103 = arith.constant dense<0.000000e+00> : vector<8x8xf32>
    %251 = tpu.matmul %249, %250, %cst_103 {dimension_numbers = #tpu.dot_dimension_numbers<[1], [1], [0], [0], [0, 0, 1, 0], [], []>} : vector<8x8xbf16>, vector<8x8xbf16>, vector<8x8xf32> -> vector<8x8xf32>
    %cst_104 = arith.constant 0.353553385 : f32
    %252 = vector.broadcast %cst_104 : f32 to vector<8x8xf32>
    %253 = arith.mulf %251, %252 : vector<8x8xf32>
    %cst_105 = arith.constant -3.40282347E+38 : f32
    %254 = vector.shape_cast %7 : vector<1x8xi1> to vector<1x8xi1>
    %255 = vector.broadcast %254 : vector<1x8xi1> to vector<8x8xi1>
    %256 = vector.broadcast %cst_105 : f32 to vector<8x8xf32>
    %257 = arith.select %255, %253, %256 : vector<8x8xi1>, vector<8x8xf32>
    %cst_106 = arith.constant dense<0xFF800000> : vector<8xf32>
    %258 = vector.multi_reduction <maximumf>, %257, %cst_106 [1] : vector<8x8xf32> to vector<8xf32>
    %259 = vector.shape_cast %258 : vector<8xf32> to vector<8x1xf32>
    %260 = vector.broadcast %259 : vector<8x1xf32> to vector<8x8xf32>
    %261 = arith.subf %257, %260 : vector<8x8xf32>
    %262 = math.exp %261 : vector<8x8xf32>
    %cst_107 = arith.constant dense<0.000000e+00> : vector<8xf32>
    %263 = vector.multi_reduction <add>, %262, %cst_107 [1] : vector<8x8xf32> to vector<8xf32>
    %264 = vector.shape_cast %263 : vector<8xf32> to vector<8x1xf32>
    %265 = tpu.reciprocal %264 {approx = true} : vector<8x1xf32> -> vector<8x1xf32>
    %266 = vector.broadcast %265 : vector<8x1xf32> to vector<8x8xf32>
    %267 = arith.mulf %262, %266 : vector<8x8xf32>
    %cst_108 = arith.constant 0.000000e+00 : f32
    %268 = vector.shape_cast %7 : vector<1x8xi1> to vector<1x8xi1>
    %269 = vector.broadcast %268 : vector<1x8xi1> to vector<8x8xi1>
    %270 = vector.broadcast %cst_108 : f32 to vector<8x8xf32>
    %271 = arith.select %269, %267, %270 : vector<8x8xi1>, vector<8x8xf32>
    %272 = arith.truncf %271 : vector<8x8xf32> to vector<8x8xbf16>
    %273 = vector.extract_strided_slice %189 {offsets = [0, 16], sizes = [8, 8], strides = [1, 1]} : vector<8x32xbf16> to vector<8x8xbf16>
    %cst_109 = arith.constant dense<0.000000e+00> : vector<8x8xf32>
    %274 = tpu.matmul %272, %273, %cst_109 {dimension_numbers = #tpu.dot_dimension_numbers<[1], [0], [0], [1], [0, 0, 1, 1], [], []>} : vector<8x8xbf16>, vector<8x8xbf16>, vector<8x8xf32> -> vector<8x8xf32>
    %275 = arith.truncf %274 : vector<8x8xf32> to vector<8x8xbf16>
    %276 = vector.extract_strided_slice %184 {offsets = [16, 0], sizes = [8, 32], strides = [1, 1]} : vector<32x32xbf16> to vector<8x32xbf16>
    %cst_110 = arith.constant dense<0.000000e+00> : vector<8x32xf32>
    %277 = tpu.matmul %275, %276, %cst_110 {dimension_numbers = #tpu.dot_dimension_numbers<[1], [0], [0], [1], [0, 0, 1, 1], [], []>} : vector<8x8xbf16>, vector<8x32xbf16>, vector<8x32xf32> -> vector<8x32xf32>
    %278 = arith.addf %248, %277 : vector<8x32xf32>
    %279 = vector.extract_strided_slice %187 {offsets = [0, 24], sizes = [8, 8], strides = [1, 1]} : vector<8x32xbf16> to vector<8x8xbf16>
    %280 = vector.extract_strided_slice %188 {offsets = [0, 24], sizes = [8, 8], strides = [1, 1]} : vector<8x32xbf16> to vector<8x8xbf16>
    %cst_111 = arith.constant dense<0.000000e+00> : vector<8x8xf32>
    %281 = tpu.matmul %279, %280, %cst_111 {dimension_numbers = #tpu.dot_dimension_numbers<[1], [1], [0], [0], [0, 0, 1, 0], [], []>} : vector<8x8xbf16>, vector<8x8xbf16>, vector<8x8xf32> -> vector<8x8xf32>
    %cst_112 = arith.constant 0.353553385 : f32
    %282 = vector.broadcast %cst_112 : f32 to vector<8x8xf32>
    %283 = arith.mulf %281, %282 : vector<8x8xf32>
    %cst_113 = arith.constant -3.40282347E+38 : f32
    %284 = vector.shape_cast %7 : vector<1x8xi1> to vector<1x8xi1>
    %285 = vector.broadcast %284 : vector<1x8xi1> to vector<8x8xi1>
    %286 = vector.broadcast %cst_113 : f32 to vector<8x8xf32>
    %287 = arith.select %285, %283, %286 : vector<8x8xi1>, vector<8x8xf32>
    %cst_114 = arith.constant dense<0xFF800000> : vector<8xf32>
    %288 = vector.multi_reduction <maximumf>, %287, %cst_114 [1] : vector<8x8xf32> to vector<8xf32>
    %289 = vector.shape_cast %288 : vector<8xf32> to vector<8x1xf32>
    %290 = vector.broadcast %289 : vector<8x1xf32> to vector<8x8xf32>
    %291 = arith.subf %287, %290 : vector<8x8xf32>
    %292 = math.exp %291 : vector<8x8xf32>
    %cst_115 = arith.constant dense<0.000000e+00> : vector<8xf32>
    %293 = vector.multi_reduction <add>, %292, %cst_115 [1] : vector<8x8xf32> to vector<8xf32>
    %294 = vector.shape_cast %293 : vector<8xf32> to vector<8x1xf32>
    %295 = tpu.reciprocal %294 {approx = true} : vector<8x1xf32> -> vector<8x1xf32>
    %296 = vector.broadcast %295 : vector<8x1xf32> to vector<8x8xf32>
    %297 = arith.mulf %292, %296 : vector<8x8xf32>
    %cst_116 = arith.constant 0.000000e+00 : f32
    %298 = vector.shape_cast %7 : vector<1x8xi1> to vector<1x8xi1>
    %299 = vector.broadcast %298 : vector<1x8xi1> to vector<8x8xi1>
    %300 = vector.broadcast %cst_116 : f32 to vector<8x8xf32>
    %301 = arith.select %299, %297, %300 : vector<8x8xi1>, vector<8x8xf32>
    %302 = arith.truncf %301 : vector<8x8xf32> to vector<8x8xbf16>
    %303 = vector.extract_strided_slice %189 {offsets = [0, 24], sizes = [8, 8], strides = [1, 1]} : vector<8x32xbf16> to vector<8x8xbf16>
    %cst_117 = arith.constant dense<0.000000e+00> : vector<8x8xf32>
    %304 = tpu.matmul %302, %303, %cst_117 {dimension_numbers = #tpu.dot_dimension_numbers<[1], [0], [0], [1], [0, 0, 1, 1], [], []>} : vector<8x8xbf16>, vector<8x8xbf16>, vector<8x8xf32> -> vector<8x8xf32>
    %305 = arith.truncf %304 : vector<8x8xf32> to vector<8x8xbf16>
    %306 = vector.extract_strided_slice %184 {offsets = [24, 0], sizes = [8, 32], strides = [1, 1]} : vector<32x32xbf16> to vector<8x32xbf16>
    %cst_118 = arith.constant dense<0.000000e+00> : vector<8x32xf32>
    %307 = tpu.matmul %305, %306, %cst_118 {dimension_numbers = #tpu.dot_dimension_numbers<[1], [0], [0], [1], [0, 0, 1, 1], [], []>} : vector<8x8xbf16>, vector<8x32xbf16>, vector<8x32xf32> -> vector<8x32xf32>
    %308 = arith.addf %278, %307 : vector<8x32xf32>
    %309 = vector.broadcast %186 : vector<1x32xf32> to vector<8x32xf32>
    %310 = arith.addf %308, %309 : vector<8x32xf32>
    %311 = arith.addf %139, %310 : vector<8x32xf32>
    %c0_119 = arith.constant 0 : index
    %c0_120 = arith.constant 0 : index
    %c0_121 = arith.constant 0 : index
    %312 = vector.load %arg19[%c0_119, %c0_120, %c0_121] : memref<1x1x32xf32, #tpu.memory_space<vmem>>, vector<1x1x32xf32>
    %313 = vector.shape_cast %312 : vector<1x1x32xf32> to vector<1x32xf32>
    %c0_122 = arith.constant 0 : index
    %c0_123 = arith.constant 0 : index
    %c0_124 = arith.constant 0 : index
    %314 = vector.load %arg20[%c0_122, %c0_123, %c0_124] : memref<1x1x32xf32, #tpu.memory_space<vmem>>, vector<1x1x32xf32>
    %315 = vector.shape_cast %314 : vector<1x1x32xf32> to vector<1x32xf32>
    %cst_125 = arith.constant dense<0.000000e+00> : vector<8xf32>
    %316 = vector.multi_reduction <add>, %311, %cst_125 [1] : vector<8x32xf32> to vector<8xf32>
    %317 = vector.shape_cast %316 : vector<8xf32> to vector<8x1xf32>
    %cst_126 = arith.constant 3.200000e+01 : f32
    %318 = vector.broadcast %cst_126 : f32 to vector<8x1xf32>
    %319 = arith.divf %317, %318 : vector<8x1xf32>
    %320 = vector.broadcast %319 : vector<8x1xf32> to vector<8x32xf32>
    %321 = arith.subf %311, %320 : vector<8x32xf32>
    %322 = arith.mulf %321, %321 : vector<8x32xf32>
    %cst_127 = arith.constant dense<0.000000e+00> : vector<8xf32>
    %323 = vector.multi_reduction <add>, %322, %cst_127 [1] : vector<8x32xf32> to vector<8xf32>
    %324 = vector.shape_cast %323 : vector<8xf32> to vector<8x1xf32>
    %cst_128 = arith.constant 3.200000e+01 : f32
    %325 = vector.broadcast %cst_128 : f32 to vector<8x1xf32>
    %326 = arith.divf %324, %325 : vector<8x1xf32>
    %cst_129 = arith.constant 9.99999996E-13 : f32
    %327 = vector.broadcast %cst_129 : f32 to vector<8x1xf32>
    %328 = arith.addf %326, %327 : vector<8x1xf32>
    %329 = math.rsqrt %328 : vector<8x1xf32>
    %330 = vector.broadcast %329 : vector<8x1xf32> to vector<8x32xf32>
    %331 = arith.mulf %321, %330 : vector<8x32xf32>
    %332 = vector.broadcast %313 : vector<1x32xf32> to vector<8x32xf32>
    %333 = arith.mulf %331, %332 : vector<8x32xf32>
    %334 = vector.broadcast %315 : vector<1x32xf32> to vector<8x32xf32>
    %335 = arith.addf %333, %334 : vector<8x32xf32>
    %336 = arith.truncf %335 : vector<8x32xf32> to vector<8x32xbf16>
    %c0_130 = arith.constant 0 : index
    %c0_131 = arith.constant 0 : index
    %c0_132 = arith.constant 0 : index
    %337 = vector.load %arg21[%c0_130, %c0_131, %c0_132] : memref<1x32x64xbf16, #tpu.memory_space<vmem>>, vector<1x32x64xbf16>
    %338 = vector.shape_cast %337 : vector<1x32x64xbf16> to vector<32x64xbf16>
    %cst_133 = arith.constant dense<0.000000e+00> : vector<8x64xf32>
    %339 = tpu.matmul %336, %338, %cst_133 {dimension_numbers = #tpu.dot_dimension_numbers<[1], [0], [0], [1], [0, 0, 1, 1], [], []>} : vector<8x32xbf16>, vector<32x64xbf16>, vector<8x64xf32> -> vector<8x64xf32>
    %c0_134 = arith.constant 0 : index
    %c0_135 = arith.constant 0 : index
    %c0_136 = arith.constant 0 : index
    %340 = vector.load %arg22[%c0_134, %c0_135, %c0_136] : memref<1x1x64xf32, #tpu.memory_space<vmem>>, vector<1x1x64xf32>
    %341 = vector.shape_cast %340 : vector<1x1x64xf32> to vector<1x64xf32>
    %342 = vector.broadcast %341 : vector<1x64xf32> to vector<8x64xf32>
    %343 = arith.addf %339, %342 : vector<8x64xf32>
    %cst_137 = arith.constant 0.000000e+00 : f32
    %344 = vector.broadcast %cst_137 : f32 to vector<8x64xf32>
    %345 = arith.maximumf %343, %344 : vector<8x64xf32>
    %346 = arith.truncf %345 : vector<8x64xf32> to vector<8x64xbf16>
    %c0_138 = arith.constant 0 : index
    %c0_139 = arith.constant 0 : index
    %c0_140 = arith.constant 0 : index
    %347 = vector.load %arg23[%c0_138, %c0_139, %c0_140] : memref<1x64x32xbf16, #tpu.memory_space<vmem>>, vector<1x64x32xbf16>
    %348 = vector.shape_cast %347 : vector<1x64x32xbf16> to vector<64x32xbf16>
    %cst_141 = arith.constant dense<0.000000e+00> : vector<8x32xf32>
    %349 = tpu.matmul %346, %348, %cst_141 {dimension_numbers = #tpu.dot_dimension_numbers<[1], [0], [0], [1], [0, 0, 1, 1], [], []>} : vector<8x64xbf16>, vector<64x32xbf16>, vector<8x32xf32> -> vector<8x32xf32>
    %c0_142 = arith.constant 0 : index
    %c0_143 = arith.constant 0 : index
    %c0_144 = arith.constant 0 : index
    %350 = vector.load %arg24[%c0_142, %c0_143, %c0_144] : memref<1x1x32xf32, #tpu.memory_space<vmem>>, vector<1x1x32xf32>
    %351 = vector.shape_cast %350 : vector<1x1x32xf32> to vector<1x32xf32>
    %352 = vector.broadcast %351 : vector<1x32xf32> to vector<8x32xf32>
    %353 = arith.addf %349, %352 : vector<8x32xf32>
    %354 = arith.addf %311, %353 : vector<8x32xf32>
    %c0_145 = arith.constant 0 : index
    %c0_146 = arith.constant 0 : index
    %355 = vector.load %arg30[%c0_145, %c0_146] : memref<8x32xf32, #tpu.memory_space<vmem>>, vector<8x32xf32>
    tpu.vector_store %arg30[%c0_145, %c0_146], %354 {strides = array<i32>} : memref<8x32xf32, #tpu.memory_space<vmem>>, vector<8x32xf32>,
    %c1_i32 = arith.constant 1 : i32
    %356 = arith.cmpi eq, %arg1, %c1_i32 : i32
    %357 = arith.extui %356 : i1 to i32
    %c0_i32_147 = arith.constant 0 : i32
    %358 = arith.cmpi ne, %357, %c0_i32_147 : i32
    scf.if %358 {
      %c0_148 = arith.constant 0 : index
      %c0_149 = arith.constant 0 : index
      %359 = vector.load %arg25[%c0_148, %c0_149] : memref<1x32xf32, #tpu.memory_space<vmem>>, vector<1x32xf32>
      %c0_150 = arith.constant 0 : index
      %c0_151 = arith.constant 0 : index
      %360 = vector.load %arg26[%c0_150, %c0_151] : memref<1x32xf32, #tpu.memory_space<vmem>>, vector<1x32xf32>
      %cst_152 = arith.constant dense<0.000000e+00> : vector<8xf32>
      %361 = vector.multi_reduction <add>, %354, %cst_152 [1] : vector<8x32xf32> to vector<8xf32>
      %362 = vector.shape_cast %361 : vector<8xf32> to vector<8x1xf32>
      %cst_153 = arith.constant 3.200000e+01 : f32
      %363 = vector.broadcast %cst_153 : f32 to vector<8x1xf32>
      %364 = arith.divf %362, %363 : vector<8x1xf32>
      %365 = vector.broadcast %364 : vector<8x1xf32> to vector<8x32xf32>
      %366 = arith.subf %354, %365 : vector<8x32xf32>
      %367 = arith.mulf %366, %366 : vector<8x32xf32>
      %cst_154 = arith.constant dense<0.000000e+00> : vector<8xf32>
      %368 = vector.multi_reduction <add>, %367, %cst_154 [1] : vector<8x32xf32> to vector<8xf32>
      %369 = vector.shape_cast %368 : vector<8xf32> to vector<8x1xf32>
      %cst_155 = arith.constant 3.200000e+01 : f32
      %370 = vector.broadcast %cst_155 : f32 to vector<8x1xf32>
      %371 = arith.divf %369, %370 : vector<8x1xf32>
      %cst_156 = arith.constant 9.99999996E-13 : f32
      %372 = vector.broadcast %cst_156 : f32 to vector<8x1xf32>
      %373 = arith.addf %371, %372 : vector<8x1xf32>
      %374 = math.rsqrt %373 : vector<8x1xf32>
      %375 = vector.broadcast %374 : vector<8x1xf32> to vector<8x32xf32>
      %376 = arith.mulf %366, %375 : vector<8x32xf32>
      %377 = vector.broadcast %359 : vector<1x32xf32> to vector<8x32xf32>
      %378 = arith.mulf %376, %377 : vector<8x32xf32>
      %379 = vector.broadcast %360 : vector<1x32xf32> to vector<8x32xf32>
      %380 = arith.addf %378, %379 : vector<8x32xf32>
      %381 = arith.truncf %380 : vector<8x32xf32> to vector<8x32xbf16>
      %c0_157 = arith.constant 0 : index
      %c0_158 = arith.constant 0 : index
      %382 = vector.load %arg27[%c0_157, %c0_158] : memref<32x128xbf16, #tpu.memory_space<vmem>>, vector<32x128xbf16>
      %cst_159 = arith.constant dense<0.000000e+00> : vector<8x128xf32>
      %383 = tpu.matmul %381, %382, %cst_159 {dimension_numbers = #tpu.dot_dimension_numbers<[1], [0], [0], [1], [0, 0, 1, 1], [], []>} : vector<8x32xbf16>, vector<32x128xbf16>, vector<8x128xf32> -> vector<8x128xf32>
      %c0_160 = arith.constant 0 : index
      %c0_161 = arith.constant 0 : index
      %384 = vector.load %arg28[%c0_160, %c0_161] : memref<1x128xf32, #tpu.memory_space<vmem>>, vector<1x128xf32>
      %385 = vector.broadcast %384 : vector<1x128xf32> to vector<8x128xf32>
      %386 = arith.addf %383, %385 : vector<8x128xf32>
      %c0_162 = arith.constant 0 : index
      %c0_163 = arith.constant 0 : index
      %c0_164 = arith.constant 0 : index
      %387 = vector.load %arg29[%c0_162, %c0_163, %c0_164] : memref<1x8x128xf32, #tpu.memory_space<vmem>>, vector<1x8x128xf32>
      %388 = vector.shape_cast %387 : vector<1x8x128xf32> to vector<8x128xf32>
      %389 = vector.shape_cast %386 : vector<8x128xf32> to vector<1x8x128xf32>
      tpu.vector_store %arg29[%c0_162, %c0_163, %c0_164], %389 {strides = array<i32>} : memref<1x8x128xf32, #tpu.memory_space<vmem>>, vector<1x8x128xf32>,
    } else {
    }
    return
  }
  func.func @transform_0(%arg0: i32, %arg1: i32) -> (i32, i32, i32) {
    %c0_i32 = arith.constant 0 : i32
    %c0_i32_0 = arith.constant 0 : i32
    %c0_i32_1 = arith.constant 0 : i32
    return %arg0, %c0_i32, %c0_i32_0 : i32, i32, i32
  }
  func.func @transform_1(%arg0: i32, %arg1: i32) -> (i32, i32, i32) {
    %c0_i32 = arith.constant 0 : i32
    %c0_i32_0 = arith.constant 0 : i32
    %c0_i32_1 = arith.constant 0 : i32
    return %arg0, %c0_i32, %c0_i32_0 : i32, i32, i32
  }
  func.func @transform_2(%arg0: i32, %arg1: i32) -> (i32, i32, i32) {
    %c0_i32 = arith.constant 0 : i32
    %c0_i32_0 = arith.constant 0 : i32
    %c0_i32_1 = arith.constant 0 : i32
    return %arg0, %c0_i32, %c0_i32_0 : i32, i32, i32
  }
  func.func @transform_3(%arg0: i32, %arg1: i32) -> (i32, i32, i32) {
    %c0_i32 = arith.constant 0 : i32
    %c0_i32_0 = arith.constant 0 : i32
    %c0_i32_1 = arith.constant 0 : i32
    return %arg1, %c0_i32, %c0_i32_0 : i32, i32, i32
  }
  func.func @transform_4(%arg0: i32, %arg1: i32) -> (i32, i32, i32) {
    %c0_i32 = arith.constant 0 : i32
    %c0_i32_0 = arith.constant 0 : i32
    %c0_i32_1 = arith.constant 0 : i32
    return %arg1, %c0_i32, %c0_i32_0 : i32, i32, i32
  }
  func.func @transform_5(%arg0: i32, %arg1: i32) -> (i32, i32, i32) {
    %c0_i32 = arith.constant 0 : i32
    %c0_i32_0 = arith.constant 0 : i32
    %c0_i32_1 = arith.constant 0 : i32
    return %arg1, %c0_i32, %c0_i32_0 : i32, i32, i32
  }
  func.func @transform_6(%arg0: i32, %arg1: i32) -> (i32, i32, i32) {
    %c0_i32 = arith.constant 0 : i32
    %c0_i32_0 = arith.constant 0 : i32
    %c0_i32_1 = arith.constant 0 : i32
    return %arg1, %c0_i32, %c0_i32_0 : i32, i32, i32
  }
  func.func @transform_7(%arg0: i32, %arg1: i32) -> (i32, i32, i32) {
    %c0_i32 = arith.constant 0 : i32
    %c0_i32_0 = arith.constant 0 : i32
    %c0_i32_1 = arith.constant 0 : i32
    return %arg1, %c0_i32, %c0_i32_0 : i32, i32, i32
  }
  func.func @transform_8(%arg0: i32, %arg1: i32) -> (i32, i32, i32) {
    %c0_i32 = arith.constant 0 : i32
    %c0_i32_0 = arith.constant 0 : i32
    %c0_i32_1 = arith.constant 0 : i32
    return %arg1, %c0_i32, %c0_i32_0 : i32, i32, i32
  }
  func.func @transform_9(%arg0: i32, %arg1: i32) -> (i32, i32, i32) {
    %c0_i32 = arith.constant 0 : i32
    %c0_i32_0 = arith.constant 0 : i32
    %c0_i32_1 = arith.constant 0 : i32
    return %arg1, %c0_i32, %c0_i32_0 : i32, i32, i32
  }
  func.func @transform_10(%arg0: i32, %arg1: i32) -> (i32, i32, i32) {
    %c0_i32 = arith.constant 0 : i32
    %c0_i32_0 = arith.constant 0 : i32
    %c0_i32_1 = arith.constant 0 : i32
    return %arg1, %c0_i32, %c0_i32_0 : i32, i32, i32
  }
  func.func @transform_11(%arg0: i32, %arg1: i32) -> (i32, i32, i32) {
    %c0_i32 = arith.constant 0 : i32
    %c0_i32_0 = arith.constant 0 : i32
    %c0_i32_1 = arith.constant 0 : i32
    return %arg1, %c0_i32, %c0_i32_0 : i32, i32, i32
  }
  func.func @transform_12(%arg0: i32, %arg1: i32) -> (i32, i32, i32) {
    %c0_i32 = arith.constant 0 : i32
    %c0_i32_0 = arith.constant 0 : i32
    %c0_i32_1 = arith.constant 0 : i32
    return %arg1, %c0_i32, %c0_i32_0 : i32, i32, i32
  }
  func.func @transform_13(%arg0: i32, %arg1: i32) -> (i32, i32, i32) {
    %c0_i32 = arith.constant 0 : i32
    %c0_i32_0 = arith.constant 0 : i32
    %c0_i32_1 = arith.constant 0 : i32
    return %arg1, %c0_i32, %c0_i32_0 : i32, i32, i32
  }
  func.func @transform_14(%arg0: i32, %arg1: i32) -> (i32, i32, i32) {
    %c0_i32 = arith.constant 0 : i32
    %c0_i32_0 = arith.constant 0 : i32
    %c0_i32_1 = arith.constant 0 : i32
    return %arg1, %c0_i32, %c0_i32_0 : i32, i32, i32
  }
  func.func @transform_15(%arg0: i32, %arg1: i32) -> (i32, i32, i32) {
    %c0_i32 = arith.constant 0 : i32
    %c0_i32_0 = arith.constant 0 : i32
    %c0_i32_1 = arith.constant 0 : i32
    return %arg1, %c0_i32, %c0_i32_0 : i32, i32, i32
  }
  func.func @transform_16(%arg0: i32, %arg1: i32) -> (i32, i32, i32) {
    %c0_i32 = arith.constant 0 : i32
    %c0_i32_0 = arith.constant 0 : i32
    %c0_i32_1 = arith.constant 0 : i32
    return %arg1, %c0_i32, %c0_i32_0 : i32, i32, i32
  }
  func.func @transform_17(%arg0: i32, %arg1: i32) -> (i32, i32, i32) {
    %c0_i32 = arith.constant 0 : i32
    %c0_i32_0 = arith.constant 0 : i32
    %c0_i32_1 = arith.constant 0 : i32
    return %arg1, %c0_i32, %c0_i32_0 : i32, i32, i32
  }
  func.func @transform_18(%arg0: i32, %arg1: i32) -> (i32, i32, i32) {
    %c0_i32 = arith.constant 0 : i32
    %c0_i32_0 = arith.constant 0 : i32
    %c0_i32_1 = arith.constant 0 : i32
    return %arg1, %c0_i32, %c0_i32_0 : i32, i32, i32
  }
  func.func @transform_19(%arg0: i32, %arg1: i32) -> (i32, i32, i32) {
    %c0_i32 = arith.constant 0 : i32
    %c0_i32_0 = arith.constant 0 : i32
    %c0_i32_1 = arith.constant 0 : i32
    return %arg1, %c0_i32, %c0_i32_0 : i32, i32, i32
  }
  func.func @transform_20(%arg0: i32, %arg1: i32) -> (i32, i32, i32) {
    %c0_i32 = arith.constant 0 : i32
    %c0_i32_0 = arith.constant 0 : i32
    %c0_i32_1 = arith.constant 0 : i32
    return %arg1, %c0_i32, %c0_i32_0 : i32, i32, i32
  }
  func.func @transform_21(%arg0: i32, %arg1: i32) -> (i32, i32, i32) {
    %c0_i32 = arith.constant 0 : i32
    %c0_i32_0 = arith.constant 0 : i32
    %c0_i32_1 = arith.constant 0 : i32
    return %arg1, %c0_i32, %c0_i32_0 : i32, i32, i32
  }
  func.func @transform_22(%arg0: i32, %arg1: i32) -> (i32, i32, i32) {
    %c0_i32 = arith.constant 0 : i32
    %c0_i32_0 = arith.constant 0 : i32
    %c0_i32_1 = arith.constant 0 : i32
    return %arg1, %c0_i32, %c0_i32_0 : i32, i32, i32
  }
  func.func @transform_23(%arg0: i32, %arg1: i32) -> (i32, i32) {
    %c0_i32 = arith.constant 0 : i32
    %c0_i32_0 = arith.constant 0 : i32
    %c0_i32_1 = arith.constant 0 : i32
    return %c0_i32, %c0_i32_0 : i32, i32
  }
  func.func @transform_24(%arg0: i32, %arg1: i32) -> (i32, i32) {
    %c0_i32 = arith.constant 0 : i32
    %c0_i32_0 = arith.constant 0 : i32
    %c0_i32_1 = arith.constant 0 : i32
    return %c0_i32, %c0_i32_0 : i32, i32
  }
  func.func @transform_25(%arg0: i32, %arg1: i32) -> (i32, i32) {
    %c0_i32 = arith.constant 0 : i32
    %c0_i32_0 = arith.constant 0 : i32
    %c0_i32_1 = arith.constant 0 : i32
    return %c0_i32, %c0_i32_0 : i32, i32
  }
  func.func @transform_26(%arg0: i32, %arg1: i32) -> (i32, i32) {
    %c0_i32 = arith.constant 0 : i32
    %c0_i32_0 = arith.constant 0 : i32
    %c0_i32_1 = arith.constant 0 : i32
    return %c0_i32, %c0_i32_0 : i32, i32
  }
  func.func @transform_27(%arg0: i32, %arg1: i32) -> (i32, i32, i32) {
    %c0_i32 = arith.constant 0 : i32
    %c0_i32_0 = arith.constant 0 : i32
    %c0_i32_1 = arith.constant 0 : i32
    return %arg0, %c0_i32, %c0_i32_0 : i32, i32, i32
  }
}

</mosaic_0001>

<llo_original>
// kernel: tpu_custom_call.1
$region0: #{tpu_custom_call.1}
  #allocation0 [shape = 'u32[]', space=smem, size = 0x4, offset = 0x4, fixed_abs, tag = 'smem constant byte address 0x4 - core index']
  #allocation1 [shape = 'u32[72,128]{1,0:T(1,128)}', space=vmem, size = 0x9000, scoped, tag = 'internal scratch']
  #allocation2 [shape = 'f32[8,32]{1,0:T(8,128)}', space=vmem, size = 0x1000, scoped, tag = 'scratch operand']
  %s0 = inlined_call_operand.hbm [shape: f32[2,8,32], index: 0, kind: input, shape index: {}]
  %s1 = inlined_call_operand.hbm [shape: bf16[2,8,32], index: 1, kind: input, shape index: {}]
  %s2 = inlined_call_operand.hbm [shape: f32[2,1,8], index: 2, kind: input, shape index: {}]
  %s3 = inlined_call_operand.hbm [shape: f32[2,1,32], index: 3, kind: input, shape index: {}]
  %s4 = inlined_call_operand.hbm [shape: f32[2,1,32], index: 4, kind: input, shape index: {}]
  %s5 = inlined_call_operand.vmem [shape: bf16[2,32,96], index: 5, kind: input, shape index: {}]
  %s6 = inlined_call_operand.hbm [shape: f32[2,1,96], index: 6, kind: input, shape index: {}]
  %s7 = inlined_call_operand.vmem [shape: bf16[2,32,32], index: 7, kind: input, shape index: {}]
  %s8 = inlined_call_operand.hbm [shape: f32[2,1,32], index: 8, kind: input, shape index: {}]
  %s9 = inlined_call_operand.hbm [shape: f32[2,1,32], index: 9, kind: input, shape index: {}]
  %s10 = inlined_call_operand.hbm [shape: f32[2,1,32], index: 10, kind: input, shape index: {}]
  %s11 = inlined_call_operand.vmem [shape: bf16[2,32,32], index: 11, kind: input, shape index: {}]
  %s12 = inlined_call_operand.hbm [shape: f32[2,1,32], index: 12, kind: input, shape index: {}]
  %s13 = inlined_call_operand.hbm [shape: bf16[2,32,64], index: 13, kind: input, shape index: {}]
  %s14 = inlined_call_operand.hbm [shape: f32[2,1,64], index: 14, kind: input, shape index: {}]
  %s15 = inlined_call_operand.hbm [shape: bf16[2,32,32], index: 15, kind: input, shape index: {}]
  %s16 = inlined_call_operand.hbm [shape: f32[2,1,32], index: 16, kind: input, shape index: {}]
  %s17 = inlined_call_operand.hbm [shape: f32[2,1,32], index: 17, kind: input, shape index: {}]
  %s18 = inlined_call_operand.hbm [shape: f32[2,1,32], index: 18, kind: input, shape index: {}]
  %s19 = inlined_call_operand.hbm [shape: bf16[2,32,64], index: 19, kind: input, shape index: {}]
  %s20 = inlined_call_operand.vmem [shape: f32[2,1,64], index: 20, kind: input, shape index: {}]
  %s21 = inlined_call_operand.vmem [shape: bf16[2,64,32], index: 21, kind: input, shape index: {}]
  %s22 = inlined_call_operand.vmem [shape: f32[2,1,32], index: 22, kind: input, shape index: {}]
  %s23 = inlined_call_operand.vmem [shape: f32[1,32], index: 23, kind: input, shape index: {}]
  %s24 = inlined_call_operand.vmem [shape: f32[1,32], index: 24, kind: input, shape index: {}]
  %s25 = inlined_call_operand.vmem [shape: bf16[32,128], index: 25, kind: input, shape index: {}]
  %s26 = inlined_call_operand.vmem [shape: f32[1,128], index: 26, kind: input, shape index: {}]
  %s27 = inlined_call_operand.hbm [shape: f32[2,8,128], index: 27, kind: output, shape index: {}]
  %s28 = sld [smem:[#allocation0]]
  $region217: #{tpu_custom_call.1} parent=0
    _
  %s30 = ssub.s32 1, %s28
  %s31 = scalar_select 0, %s30, %s28
  $region1: #{tpu_custom_call.1} parent=0
    #allocation3 [shape = 'u8[8192]{0}', space=vmem, size = 0x2000, scoped, tag = 'input window, operand 0']
    #allocation4 [shape = 's32[2]{0}', space=sflag, size = 0x8, scoped, tag = 'scoped memory for tpu_custom_call.1']
    #allocation5 [shape = 's32[2]{0}', space=sflag, size = 0x8, scoped, tag = 'scoped memory for tpu_custom_call.1']
    #allocation6 [shape = 'u8[4096]{0}', space=vmem, size = 0x1000, scoped, tag = 'input window, operand 1']
    #allocation7 [shape = 's32[2]{0}', space=sflag, size = 0x8, scoped, tag = 'scoped memory for tpu_custom_call.1']
    #allocation8 [shape = 'u8[1024]{0}', space=vmem, size = 0x400, scoped, tag = 'input window, operand 2']
    #allocation9 [shape = 'u8[1024]{0}', space=vmem, size = 0x400, scoped, tag = 'input window, operand 3']
    #allocation10 [shape = 's32[2]{0}', space=sflag, size = 0x8, scoped, tag = 'scoped memory for tpu_custom_call.1']
    #allocation11 [shape = 'u8[1024]{0}', space=vmem, size = 0x400, scoped, tag = 'input window, operand 4']
    #allocation12 [shape = 'u8[1024]{0}', space=vmem, size = 0x400, scoped, tag = 'input window, operand 6']
    #allocation13 [shape = 's32[2]{0}', space=sflag, size = 0x8, scoped, tag = 'scoped memory for tpu_custom_call.1']
    #allocation14 [shape = 'u8[1024]{0}', space=vmem, size = 0x400, scoped, tag = 'input window, operand 8']
    #allocation15 [shape = 'u8[1024]{0}', space=vmem, size = 0x400, scoped, tag = 'input window, operand 9']
    #allocation16 [shape = 's32[2]{0}', space=sflag, size = 0x8, scoped, tag = 'scoped memory for tpu_custom_call.1']
    #allocation17 [shape = 'u8[1024]{0}', space=vmem, size = 0x400, scoped, tag = 'input window, operand 10']
    #allocation18 [shape = 'u8[1024]{0}', space=vmem, size = 0x400, scoped, tag = 'input window, operand 12']
    #allocation19 [shape = 's32[2]{0}', space=sflag, size = 0x8, scoped, tag = 'scoped memory for tpu_custom_call.1']
    #allocation20 [shape = 'u8[16384]{0}', space=vmem, size = 0x4000, scoped, tag = 'input window, operand 13']
    #allocation21 [shape = 'u8[1024]{0}', space=vmem, size = 0x400, scoped, tag = 'input window, operand 14']
    #allocation22 [shape = 's32[2]{0}', space=sflag, size = 0x8, scoped, tag = 'scoped memory for tpu_custom_call.1']
    #allocation23 [shape = 'u8[16384]{0}', space=vmem, size = 0x4000, scoped, tag = 'input window, operand 15']
    #allocation24 [shape = 'u8[1024]{0}', space=vmem, size = 0x400, scoped, tag = 'input window, operand 16']
    #allocation25 [shape = 's32[2]{0}', space=sflag, size = 0x8, scoped, tag = 'scoped memory for tpu_custom_call.1']
    #allocation26 [shape = 'u8[1024]{0}', space=vmem, size = 0x400, scoped, tag = 'input window, operand 17']
    #allocation27 [shape = 'u8[1024]{0}', space=vmem, size = 0x400, scoped, tag = 'input window, operand 18']
    #allocation28 [shape = 's32[2]{0}', space=sflag, size = 0x8, scoped, tag = 'scoped memory for tpu_custom_call.1']
    #allocation29 [shape = 'u8[16384]{0}', space=vmem, size = 0x4000, scoped, tag = 'input window, operand 19']
    #allocation30 [shape = 'u8[8192]{0}', space=vmem, size = 0x2000, scoped, tag = 'output window, operand 0']
    %32 = vsyncpa [#allocation4], 0
    %s33 = scalar_lea.sflag [#allocation4], 1
    %34 = vsyncpa %s33, 0
    %35 = vsyncpa [#allocation7], 0
    %s36 = scalar_lea.sflag [#allocation7], 1
    %37 = vsyncpa %s36, 0
    %38 = vsyncpa [#allocation10], 0
    %s39 = scalar_lea.sflag [#allocation10], 1
    %40 = vsyncpa %s39, 0
    %41 = vsyncpa [#allocation13], 0
    %s42 = scalar_lea.sflag [#allocation13], 1
    %43 = vsyncpa %s42, 0
    %44 = vsyncpa [#allocation16], 0
    %s45 = scalar_lea.sflag [#allocation16], 1
    %46 = vsyncpa %s45, 0
    %47 = vsyncpa [#allocation19], 0
    %s48 = scalar_lea.sflag [#allocation19], 1
    %49 = vsyncpa %s48, 0
    %50 = vsyncpa [#allocation22], 0
    %s51 = scalar_lea.sflag [#allocation22], 1
    %52 = vsyncpa %s51, 0
    %53 = vsyncpa [#allocation25], 0
    %s54 = scalar_lea.sflag [#allocation25], 1
    %55 = vsyncpa %s54, 0
    %56 = vsyncpa [#allocation28], 0
    %s57 = scalar_lea.sflag [#allocation28], 1
    %58 = vsyncpa %s57, 0
    %59 = vsyncpa [#allocation5], 0
    %s60 = scalar_lea.sflag [#allocation5], 1
    %61 = vsyncpa %s60, 0
    loop: start=0, step=1, limit=6
    $region2: #{tpu_custom_call.1} parent=1 // loop_pre_header
      _
    $region3: #{tpu_custom_call.1} parent=1 // loop_header
      %s63 = sphi 0, %s67
      %p64 = scmp.ge.s32.totalorder %s63, 6
      %s70 = sphi 0, %s82
      %s71 = sphi 0, %s78
      %s72 = sphi 0, %s70
      %s73 = sphi 0, %s71
      %s74 = sphi 0, %s72
      %s75 = sphi 0, %s73
      %s85 = sphi 0, %s87
      %s88 = sphi 0, %s85
      %s89 = sphi 0, %s88
      %s105 = sphi 0, %s89
      %s111 = sphi 0, %s113
      %s114 = sphi 0, %s111
      %s115 = sphi 0, %s114
      %s131 = sphi 0, %s115
      %s137 = sphi 0, %s139
      %s140 = sphi 0, %s137
      %s141 = sphi 0, %s140
      %s157 = sphi 0, %s141
      %s163 = sphi 0, %s165
      %s166 = sphi 0, %s163
      %s167 = sphi 0, %s166
      %s183 = sphi 0, %s167
      %s189 = sphi 0, %s191
      %s192 = sphi 0, %s189
      %s193 = sphi 0, %s192
      %s209 = sphi 0, %s193
      %s215 = sphi 0, %s217
      %s218 = sphi 0, %s215
      %s219 = sphi 0, %s218
      %s235 = sphi 0, %s219
      %s241 = sphi 0, %s243
      %s244 = sphi 0, %s241
      %s245 = sphi 0, %s244
      %s261 = sphi 0, %s245
      %s267 = sphi 0, %s269
      %s270 = sphi 0, %s267
      %s271 = sphi 0, %s270
      %s287 = sphi 0, %s271
      %s293 = sphi 0, %s295
      %s296 = sphi 0, %s293
      %s297 = sphi 0, %s296
      %s313 = sphi 0, %s297
      %s319 = sphi 0, %s321
      %s322 = sphi 0, %s319
      %s323 = sphi 0, %s322
      %s339 = sphi 0, %s323
      %s345 = sphi 0, %s347
      %s348 = sphi 0, %s345
      %s349 = sphi 0, %s348
      %s365 = sphi 0, %s349
      %s371 = sphi 0, %s373
      %s374 = sphi 0, %s371
      %s375 = sphi 0, %s374
      %s391 = sphi 0, %s375
      %s397 = sphi 0, %s399
      %s400 = sphi 0, %s397
      %s401 = sphi 0, %s400
      %s417 = sphi 0, %s401
      %s423 = sphi 0, %s425
      %s426 = sphi 0, %s423
      %s427 = sphi 0, %s426
      %s443 = sphi 0, %s427
      %s449 = sphi 0, %s451
      %s452 = sphi 0, %s449
      %s453 = sphi 0, %s452
      %s469 = sphi 0, %s453
      %s475 = sphi 0, %s477
      %s478 = sphi 0, %s475
      %s479 = sphi 0, %s478
      %s495 = sphi 0, %s479
      %s501 = sphi 0, %s503
      %s504 = sphi 0, %s501
      %s505 = sphi 0, %s504
      %s521 = sphi 0, %s505
      %s527 = sphi 0, %s529
      %s530 = sphi 0, %s527
      %s531 = sphi 0, %s530
      %s547 = sphi 0, %s531
      %s553 = sphi 0, %s555
      %s556 = sphi 0, %s553
      %s557 = sphi 0, %s556
      %s573 = sphi 0, %s557
      %s579 = sphi 0, %s581
      %s582 = sphi 0, %s579
      %s583 = sphi 0, %s582
      %s599 = sphi 0, %s583
      %s605 = sphi 0, %s607
      %s608 = sphi 0, %s605
      %s609 = sphi 0, %s608
      %s625 = sphi 0, %s609
      %s631 = sphi 0, %s633
      %s634 = sphi 0, %s631
      %s635 = sphi 0, %s634
      %s651 = sphi 0, %s635
      %s657 = sphi 0, %s659
      %s660 = sphi 0, %s657
      %s661 = sphi 0, %s660
      %s677 = sphi 0, %s661
      %s681 = sphi 0, %s681
      %s683 = sphi 0, %s681
      %s684 = sphi 0, %s683
      %s698 = sphi 0, %s684
      %s702 = sphi 0, %s702
      %s704 = sphi 0, %s702
      %s705 = sphi 0, %s704
      %s719 = sphi 0, %s705
      %s723 = sphi 0, %s723
      %s725 = sphi 0, %s723
      %s726 = sphi 0, %s725
      %s740 = sphi 0, %s726
      %s744 = sphi 0, %s744
      %s746 = sphi 0, %s744
      %s747 = sphi 0, %s746
      %s761 = sphi 0, %s747
      %s767 = sphi 0, %s769
      %s770 = sphi 0, %s767
      %s771 = sphi 0, %s770
      %s787 = sphi 0, %s771
    $region4: #{tpu_custom_call.1} parent=1 // loop_header_branch
      %66 = sbr.rel (%p64) target = $region8
    $region5: #{tpu_custom_call.1} parent=1 // loop_body
      %s68 = ssub.s32 %s63, 1
      %s69 = ssub.s32 %s63, 2
      %s76 = sadd.s32 1, %s71
      %p77 = scmp.ge.s32.totalorder %s76, 2
      %s78 = scalar_select %p77, 0, %s76
      %s79 = sadd.s32 1, %s70
      %s80 = scalar_select %p77, %s79, %s70
      %p81 = scmp.ge.s32.totalorder %s80, 2
      %s82 = scalar_select %p81, 0, %s80
      %s83 = ssub.s32 %s70, %s82
      %p84 = scmp.eq.s32.totalorder %s83, 0
      %s86 = sadd.s32 %s85, 1
      %s87 = scalar_select %p84, %s85, %s86
      %p90 = pneg %p84
      %p91 = scmp.eq.s32.totalorder %s63, 3
      %p92 = por %p90, %p91
      %p93 = scmp.ne.s32.totalorder %s85, %s88
      %p94 = scmp.eq.s32.totalorder %s63, 0
      %p95 = por %p93, %p94
      %p96 = scmp.ne.s32.totalorder %s85, %s88
      %p97 = scmp.eq.s32.totalorder %s68, 3
      %p98 = por %p96, %p97
      %p99 = scmp.ne.s32.totalorder %s88, %s89
      %p100 = scmp.eq.s32.totalorder %s68, 0
      %p101 = por %p99, %p100
      %p102 = scmp.ne.s32.totalorder %s88, %s89
      %p103 = scmp.eq.s32.totalorder %s69, 3
      %p104 = por %p102, %p103
      %p106 = scmp.ne.s32.totalorder %s89, %s105
      %p107 = scmp.eq.s32.totalorder %s69, 0
      %p108 = por %p106, %p107
      %s109 = ssub.s32 %s70, %s82
      %p110 = scmp.eq.s32.totalorder %s109, 0
      %s112 = sadd.s32 %s111, 1
      %s113 = scalar_select %p110, %s111, %s112
      %p116 = pneg %p110
      %p117 = scmp.eq.s32.totalorder %s63, 3
      %p118 = por %p116, %p117
      %p119 = scmp.ne.s32.totalorder %s111, %s114
      %p120 = scmp.eq.s32.totalorder %s63, 0
      %p121 = por %p119, %p120
      %p122 = scmp.ne.s32.totalorder %s111, %s114
      %p123 = scmp.eq.s32.totalorder %s68, 3
      %p124 = por %p122, %p123
      %p125 = scmp.ne.s32.totalorder %s114, %s115
      %p126 = scmp.eq.s32.totalorder %s68, 0
      %p127 = por %p125, %p126
      %p128 = scmp.ne.s32.totalorder %s114, %s115
      %p129 = scmp.eq.s32.totalorder %s69, 3
      %p130 = por %p128, %p129
      %p132 = scmp.ne.s32.totalorder %s115, %s131
      %p133 = scmp.eq.s32.totalorder %s69, 0
      %p134 = por %p132, %p133
      %s135 = ssub.s32 %s70, %s82
      %p136 = scmp.eq.s32.totalorder %s135, 0
      %s138 = sadd.s32 %s137, 1
      %s139 = scalar_select %p136, %s137, %s138
      %p142 = pneg %p136
      %p143 = scmp.eq.s32.totalorder %s63, 3
      %p144 = por %p142, %p143
      %p145 = scmp.ne.s32.totalorder %s137, %s140
      %p146 = scmp.eq.s32.totalorder %s63, 0
      %p147 = por %p145, %p146
      %p148 = scmp.ne.s32.totalorder %s137, %s140
      %p149 = scmp.eq.s32.totalorder %s68, 3
      %p150 = por %p148, %p149
      %p151 = scmp.ne.s32.totalorder %s140, %s141
      %p152 = scmp.eq.s32.totalorder %s68, 0
      %p153 = por %p151, %p152
      %p154 = scmp.ne.s32.totalorder %s140, %s141
      %p155 = scmp.eq.s32.totalorder %s69, 3
      %p156 = por %p154, %p155
      %p158 = scmp.ne.s32.totalorder %s141, %s157
      %p159 = scmp.eq.s32.totalorder %s69, 0
      %p160 = por %p158, %p159
      %s161 = ssub.s32 %s71, %s78
      %p162 = scmp.eq.s32.totalorder %s161, 0
      %s164 = sadd.s32 %s163, 1
      %s165 = scalar_select %p162, %s163, %s164
      %p168 = pneg %p162
      %p169 = scmp.eq.s32.totalorder %s63, 3
      %p170 = por %p168, %p169
      %p171 = scmp.ne.s32.totalorder %s163, %s166
      %p172 = scmp.eq.s32.totalorder %s63, 0
      %p173 = por %p171, %p172
      %p174 = scmp.ne.s32.totalorder %s163, %s166
      %p175 = scmp.eq.s32.totalorder %s68, 3
      %p176 = por %p174, %p175
      %p177 = scmp.ne.s32.totalorder %s166, %s167
      %p178 = scmp.eq.s32.totalorder %s68, 0
      %p179 = por %p177, %p178
      %p180 = scmp.ne.s32.totalorder %s166, %s167
      %p181 = scmp.eq.s32.totalorder %s69, 3
      %p182 = por %p180, %p181
      %p184 = scmp.ne.s32.totalorder %s167, %s183
      %p185 = scmp.eq.s32.totalorder %s69, 0
      %p186 = por %p184, %p185
      %s187 = ssub.s32 %s71, %s78
      %p188 = scmp.eq.s32.totalorder %s187, 0
      %s190 = sadd.s32 %s189, 1
      %s191 = scalar_select %p188, %s189, %s190
      %p194 = pneg %p188
      %p195 = scmp.eq.s32.totalorder %s63, 3
      %p196 = por %p194, %p195
      %p197 = scmp.ne.s32.totalorder %s189, %s192
      %p198 = scmp.eq.s32.totalorder %s63, 0
      %p199 = por %p197, %p198
      %p200 = scmp.ne.s32.totalorder %s189, %s192
      %p201 = scmp.eq.s32.totalorder %s68, 3
      %p202 = por %p200, %p201
      %p203 = scmp.ne.s32.totalorder %s192, %s193
      %p204 = scmp.eq.s32.totalorder %s68, 0
      %p205 = por %p203, %p204
      %p206 = scmp.ne.s32.totalorder %s192, %s193
      %p207 = scmp.eq.s32.totalorder %s69, 3
      %p208 = por %p206, %p207
      %p210 = scmp.ne.s32.totalorder %s193, %s209
      %p211 = scmp.eq.s32.totalorder %s69, 0
      %p212 = por %p210, %p211
      %s213 = ssub.s32 %s71, %s78
      %p214 = scmp.eq.s32.totalorder %s213, 0
      %s216 = sadd.s32 %s215, 1
      %s217 = scalar_select %p214, %s215, %s216
      %p220 = pneg %p214
      %p221 = scmp.eq.s32.totalorder %s63, 3
      %p222 = por %p220, %p221
      %p223 = scmp.ne.s32.totalorder %s215, %s218
      %p224 = scmp.eq.s32.totalorder %s63, 0
      %p225 = por %p223, %p224
      %p226 = scmp.ne.s32.totalorder %s215, %s218
      %p227 = scmp.eq.s32.totalorder %s68, 3
      %p228 = por %p226, %p227
      %p229 = scmp.ne.s32.totalorder %s218, %s219
      %p230 = scmp.eq.s32.totalorder %s68, 0
      %p231 = por %p229, %p230
      %p232 = scmp.ne.s32.totalorder %s218, %s219
      %p233 = scmp.eq.s32.totalorder %s69, 3
      %p234 = por %p232, %p233
      %p236 = scmp.ne.s32.totalorder %s219, %s235
      %p237 = scmp.eq.s32.totalorder %s69, 0
      %p238 = por %p236, %p237
      %s239 = ssub.s32 %s71, %s78
      %p240 = scmp.eq.s32.totalorder %s239, 0
      %s242 = sadd.s32 %s241, 1
      %s243 = scalar_select %p240, %s241, %s242
      %p246 = pneg %p240
      %p247 = scmp.eq.s32.totalorder %s63, 3
      %p248 = por %p246, %p247
      %p249 = scmp.ne.s32.totalorder %s241, %s244
      %p250 = scmp.eq.s32.totalorder %s63, 0
      %p251 = por %p249, %p250
      %p252 = scmp.ne.s32.totalorder %s241, %s244
      %p253 = scmp.eq.s32.totalorder %s68, 3
      %p254 = por %p252, %p253
      %p255 = scmp.ne.s32.totalorder %s244, %s245
      %p256 = scmp.eq.s32.totalorder %s68, 0
      %p257 = por %p255, %p256
      %p258 = scmp.ne.s32.totalorder %s244, %s245
      %p259 = scmp.eq.s32.totalorder %s69, 3
      %p260 = por %p258, %p259
      %p262 = scmp.ne.s32.totalorder %s245, %s261
      %p263 = scmp.eq.s32.totalorder %s69, 0
      %p264 = por %p262, %p263
      %s265 = ssub.s32 %s71, %s78
      %p266 = scmp.eq.s32.totalorder %s265, 0
      %s268 = sadd.s32 %s267, 1
      %s269 = scalar_select %p266, %s267, %s268
      %p272 = pneg %p266
      %p273 = scmp.eq.s32.totalorder %s63, 3
      %p274 = por %p272, %p273
      %p275 = scmp.ne.s32.totalorder %s267, %s270
      %p276 = scmp.eq.s32.totalorder %s63, 0
      %p277 = por %p275, %p276
      %p278 = scmp.ne.s32.totalorder %s267, %s270
      %p279 = scmp.eq.s32.totalorder %s68, 3
      %p280 = por %p278, %p279
      %p281 = scmp.ne.s32.totalorder %s270, %s271
      %p282 = scmp.eq.s32.totalorder %s68, 0
      %p283 = por %p281, %p282
      %p284 = scmp.ne.s32.totalorder %s270, %s271
      %p285 = scmp.eq.s32.totalorder %s69, 3
      %p286 = por %p284, %p285
      %p288 = scmp.ne.s32.totalorder %s271, %s287
      %p289 = scmp.eq.s32.totalorder %s69, 0
      %p290 = por %p288, %p289
      %s291 = ssub.s32 %s71, %s78
      %p292 = scmp.eq.s32.totalorder %s291, 0
      %s294 = sadd.s32 %s293, 1
      %s295 = scalar_select %p292, %s293, %s294
      %p298 = pneg %p292
      %p299 = scmp.eq.s32.totalorder %s63, 3
      %p300 = por %p298, %p299
      %p301 = scmp.ne.s32.totalorder %s293, %s296
      %p302 = scmp.eq.s32.totalorder %s63, 0
      %p303 = por %p301, %p302
      %p304 = scmp.ne.s32.totalorder %s293, %s296
      %p305 = scmp.eq.s32.totalorder %s68, 3
      %p306 = por %p304, %p305
      %p307 = scmp.ne.s32.totalorder %s296, %s297
      %p308 = scmp.eq.s32.totalorder %s68, 0
      %p309 = por %p307, %p308
      %p310 = scmp.ne.s32.totalorder %s296, %s297
      %p311 = scmp.eq.s32.totalorder %s69, 3
      %p312 = por %p310, %p311
      %p314 = scmp.ne.s32.totalorder %s297, %s313
      %p315 = scmp.eq.s32.totalorder %s69, 0
      %p316 = por %p314, %p315
      %s317 = ssub.s32 %s71, %s78
      %p318 = scmp.eq.s32.totalorder %s317, 0
      %s320 = sadd.s32 %s319, 1
      %s321 = scalar_select %p318, %s319, %s320
      %p324 = pneg %p318
      %p325 = scmp.eq.s32.totalorder %s63, 3
      %p326 = por %p324, %p325
      %p327 = scmp.ne.s32.totalorder %s319, %s322
      %p328 = scmp.eq.s32.totalorder %s63, 0
      %p329 = por %p327, %p328
      %p330 = scmp.ne.s32.totalorder %s319, %s322
      %p331 = scmp.eq.s32.totalorder %s68, 3
      %p332 = por %p330, %p331
      %p333 = scmp.ne.s32.totalorder %s322, %s323
      %p334 = scmp.eq.s32.totalorder %s68, 0
      %p335 = por %p333, %p334
      %p336 = scmp.ne.s32.totalorder %s322, %s323
      %p337 = scmp.eq.s32.totalorder %s69, 3
      %p338 = por %p336, %p337
      %p340 = scmp.ne.s32.totalorder %s323, %s339
      %p341 = scmp.eq.s32.totalorder %s69, 0
      %p342 = por %p340, %p341
      %s343 = ssub.s32 %s71, %s78
      %p344 = scmp.eq.s32.totalorder %s343, 0
      %s346 = sadd.s32 %s345, 1
      %s347 = scalar_select %p344, %s345, %s346
      %p350 = pneg %p344
      %p351 = scmp.eq.s32.totalorder %s63, 3
      %p352 = por %p350, %p351
      %p353 = scmp.ne.s32.totalorder %s345, %s348
      %p354 = scmp.eq.s32.totalorder %s63, 0
      %p355 = por %p353, %p354
      %p356 = scmp.ne.s32.totalorder %s345, %s348
      %p357 = scmp.eq.s32.totalorder %s68, 3
      %p358 = por %p356, %p357
      %p359 = scmp.ne.s32.totalorder %s348, %s349
      %p360 = scmp.eq.s32.totalorder %s68, 0
      %p361 = por %p359, %p360
      %p362 = scmp.ne.s32.totalorder %s348, %s349
      %p363 = scmp.eq.s32.totalorder %s69, 3
      %p364 = por %p362, %p363
      %p366 = scmp.ne.s32.totalorder %s349, %s365
      %p367 = scmp.eq.s32.totalorder %s69, 0
      %p368 = por %p366, %p367
      %s369 = ssub.s32 %s71, %s78
      %p370 = scmp.eq.s32.totalorder %s369, 0
      %s372 = sadd.s32 %s371, 1
      %s373 = scalar_select %p370, %s371, %s372
      %p376 = pneg %p370
      %p377 = scmp.eq.s32.totalorder %s63, 3
      %p378 = por %p376, %p377
      %p379 = scmp.ne.s32.totalorder %s371, %s374
      %p380 = scmp.eq.s32.totalorder %s63, 0
      %p381 = por %p379, %p380
      %p382 = scmp.ne.s32.totalorder %s371, %s374
      %p383 = scmp.eq.s32.totalorder %s68, 3
      %p384 = por %p382, %p383
      %p385 = scmp.ne.s32.totalorder %s374, %s375
      %p386 = scmp.eq.s32.totalorder %s68, 0
      %p387 = por %p385, %p386
      %p388 = scmp.ne.s32.totalorder %s374, %s375
      %p389 = scmp.eq.s32.totalorder %s69, 3
      %p390 = por %p388, %p389
      %p392 = scmp.ne.s32.totalorder %s375, %s391
      %p393 = scmp.eq.s32.totalorder %s69, 0
      %p394 = por %p392, %p393
      %s395 = ssub.s32 %s71, %s78
      %p396 = scmp.eq.s32.totalorder %s395, 0
      %s398 = sadd.s32 %s397, 1
      %s399 = scalar_select %p396, %s397, %s398
      %p402 = pneg %p396
      %p403 = scmp.eq.s32.totalorder %s63, 3
      %p404 = por %p402, %p403
      %p405 = scmp.ne.s32.totalorder %s397, %s400
      %p406 = scmp.eq.s32.totalorder %s63, 0
      %p407 = por %p405, %p406
      %p408 = scmp.ne.s32.totalorder %s397, %s400
      %p409 = scmp.eq.s32.totalorder %s68, 3
      %p410 = por %p408, %p409
      %p411 = scmp.ne.s32.totalorder %s400, %s401
      %p412 = scmp.eq.s32.totalorder %s68, 0
      %p413 = por %p411, %p412
      %p414 = scmp.ne.s32.totalorder %s400, %s401
      %p415 = scmp.eq.s32.totalorder %s69, 3
      %p416 = por %p414, %p415
      %p418 = scmp.ne.s32.totalorder %s401, %s417
      %p419 = scmp.eq.s32.totalorder %s69, 0
      %p420 = por %p418, %p419
      %s421 = ssub.s32 %s71, %s78
      %p422 = scmp.eq.s32.totalorder %s421, 0
      %s424 = sadd.s32 %s423, 1
      %s425 = scalar_select %p422, %s423, %s424
      %p428 = pneg %p422
      %p429 = scmp.eq.s32.totalorder %s63, 3
      %p430 = por %p428, %p429
      %p431 = scmp.ne.s32.totalorder %s423, %s426
      %p432 = scmp.eq.s32.totalorder %s63, 0
      %p433 = por %p431, %p432
      %p434 = scmp.ne.s32.totalorder %s423, %s426
      %p435 = scmp.eq.s32.totalorder %s68, 3
      %p436 = por %p434, %p435
      %p437 = scmp.ne.s32.totalorder %s426, %s427
      %p438 = scmp.eq.s32.totalorder %s68, 0
      %p439 = por %p437, %p438
      %p440 = scmp.ne.s32.totalorder %s426, %s427
      %p441 = scmp.eq.s32.totalorder %s69, 3
      %p442 = por %p440, %p441
      %p444 = scmp.ne.s32.totalorder %s427, %s443
      %p445 = scmp.eq.s32.totalorder %s69, 0
      %p446 = por %p444, %p445
      %s447 = ssub.s32 %s71, %s78
      %p448 = scmp.eq.s32.totalorder %s447, 0
      %s450 = sadd.s32 %s449, 1
      %s451 = scalar_select %p448, %s449, %s450
      %p454 = pneg %p448
      %p455 = scmp.eq.s32.totalorder %s63, 3
      %p456 = por %p454, %p455
      %p457 = scmp.ne.s32.totalorder %s449, %s452
      %p458 = scmp.eq.s32.totalorder %s63, 0
      %p459 = por %p457, %p458
      %p460 = scmp.ne.s32.totalorder %s449, %s452
      %p461 = scmp.eq.s32.totalorder %s68, 3
      %p462 = por %p460, %p461
      %p463 = scmp.ne.s32.totalorder %s452, %s453
      %p464 = scmp.eq.s32.totalorder %s68, 0
      %p465 = por %p463, %p464
      %p466 = scmp.ne.s32.totalorder %s452, %s453
      %p467 = scmp.eq.s32.totalorder %s69, 3
      %p468 = por %p466, %p467
      %p470 = scmp.ne.s32.totalorder %s453, %s469
      %p471 = scmp.eq.s32.totalorder %s69, 0
      %p472 = por %p470, %p471
      %s473 = ssub.s32 %s71, %s78
      %p474 = scmp.eq.s32.totalorder %s473, 0
      %s476 = sadd.s32 %s475, 1
      %s477 = scalar_select %p474, %s475, %s476
      %p480 = pneg %p474
      %p481 = scmp.eq.s32.totalorder %s63, 3
      %p482 = por %p480, %p481
      %p483 = scmp.ne.s32.totalorder %s475, %s478
      %p484 = scmp.eq.s32.totalorder %s63, 0
      %p485 = por %p483, %p484
      %p486 = scmp.ne.s32.totalorder %s475, %s478
      %p487 = scmp.eq.s32.totalorder %s68, 3
      %p488 = por %p486, %p487
      %p489 = scmp.ne.s32.totalorder %s478, %s479
      %p490 = scmp.eq.s32.totalorder %s68, 0
      %p491 = por %p489, %p490
      %p492 = scmp.ne.s32.totalorder %s478, %s479
      %p493 = scmp.eq.s32.totalorder %s69, 3
      %p494 = por %p492, %p493
      %p496 = scmp.ne.s32.totalorder %s479, %s495
      %p497 = scmp.eq.s32.totalorder %s69, 0
      %p498 = por %p496, %p497
      %s499 = ssub.s32 %s71, %s78
      %p500 = scmp.eq.s32.totalorder %s499, 0
      %s502 = sadd.s32 %s501, 1
      %s503 = scalar_select %p500, %s501, %s502
      %p506 = pneg %p500
      %p507 = scmp.eq.s32.totalorder %s63, 3
      %p508 = por %p506, %p507
      %p509 = scmp.ne.s32.totalorder %s501, %s504
      %p510 = scmp.eq.s32.totalorder %s63, 0
      %p511 = por %p509, %p510
      %p512 = scmp.ne.s32.totalorder %s501, %s504
      %p513 = scmp.eq.s32.totalorder %s68, 3
      %p514 = por %p512, %p513
      %p515 = scmp.ne.s32.totalorder %s504, %s505
      %p516 = scmp.eq.s32.totalorder %s68, 0
      %p517 = por %p515, %p516
      %p518 = scmp.ne.s32.totalorder %s504, %s505
      %p519 = scmp.eq.s32.totalorder %s69, 3
      %p520 = por %p518, %p519
      %p522 = scmp.ne.s32.totalorder %s505, %s521
      %p523 = scmp.eq.s32.totalorder %s69, 0
      %p524 = por %p522, %p523
      %s525 = ssub.s32 %s71, %s78
      %p526 = scmp.eq.s32.totalorder %s525, 0
      %s528 = sadd.s32 %s527, 1
      %s529 = scalar_select %p526, %s527, %s528
      %p532 = pneg %p526
      %p533 = scmp.eq.s32.totalorder %s63, 3
      %p534 = por %p532, %p533
      %p535 = scmp.ne.s32.totalorder %s527, %s530
      %p536 = scmp.eq.s32.totalorder %s63, 0
      %p537 = por %p535, %p536
      %p538 = scmp.ne.s32.totalorder %s527, %s530
      %p539 = scmp.eq.s32.totalorder %s68, 3
      %p540 = por %p538, %p539
      %p541 = scmp.ne.s32.totalorder %s530, %s531
      %p542 = scmp.eq.s32.totalorder %s68, 0
      %p543 = por %p541, %p542
      %p544 = scmp.ne.s32.totalorder %s530, %s531
      %p545 = scmp.eq.s32.totalorder %s69, 3
      %p546 = por %p544, %p545
      %p548 = scmp.ne.s32.totalorder %s531, %s547
      %p549 = scmp.eq.s32.totalorder %s69, 0
      %p550 = por %p548, %p549
      %s551 = ssub.s32 %s71, %s78
      %p552 = scmp.eq.s32.totalorder %s551, 0
      %s554 = sadd.s32 %s553, 1
      %s555 = scalar_select %p552, %s553, %s554
      %p558 = pneg %p552
      %p559 = scmp.eq.s32.totalorder %s63, 3
      %p560 = por %p558, %p559
      %p561 = scmp.ne.s32.totalorder %s553, %s556
      %p562 = scmp.eq.s32.totalorder %s63, 0
      %p563 = por %p561, %p562
      %p564 = scmp.ne.s32.totalorder %s553, %s556
      %p565 = scmp.eq.s32.totalorder %s68, 3
      %p566 = por %p564, %p565
      %p567 = scmp.ne.s32.totalorder %s556, %s557
      %p568 = scmp.eq.s32.totalorder %s68, 0
      %p569 = por %p567, %p568
      %p570 = scmp.ne.s32.totalorder %s556, %s557
      %p571 = scmp.eq.s32.totalorder %s69, 3
      %p572 = por %p570, %p571
      %p574 = scmp.ne.s32.totalorder %s557, %s573
      %p575 = scmp.eq.s32.totalorder %s69, 0
      %p576 = por %p574, %p575
      %s577 = ssub.s32 %s71, %s78
      %p578 = scmp.eq.s32.totalorder %s577, 0
      %s580 = sadd.s32 %s579, 1
      %s581 = scalar_select %p578, %s579, %s580
      %p584 = pneg %p578
      %p585 = scmp.eq.s32.totalorder %s63, 3
      %p586 = por %p584, %p585
      %p587 = scmp.ne.s32.totalorder %s579, %s582
      %p588 = scmp.eq.s32.totalorder %s63, 0
      %p589 = por %p587, %p588
      %p590 = scmp.ne.s32.totalorder %s579, %s582
      %p591 = scmp.eq.s32.totalorder %s68, 3
      %p592 = por %p590, %p591
      %p593 = scmp.ne.s32.totalorder %s582, %s583
      %p594 = scmp.eq.s32.totalorder %s68, 0
      %p595 = por %p593, %p594
      %p596 = scmp.ne.s32.totalorder %s582, %s583
      %p597 = scmp.eq.s32.totalorder %s69, 3
      %p598 = por %p596, %p597
      %p600 = scmp.ne.s32.totalorder %s583, %s599
      %p601 = scmp.eq.s32.totalorder %s69, 0
      %p602 = por %p600, %p601
      %s603 = ssub.s32 %s71, %s78
      %p604 = scmp.eq.s32.totalorder %s603, 0
      %s606 = sadd.s32 %s605, 1
      %s607 = scalar_select %p604, %s605, %s606
      %p610 = pneg %p604
      %p611 = scmp.eq.s32.totalorder %s63, 3
      %p612 = por %p610, %p611
      %p613 = scmp.ne.s32.totalorder %s605, %s608
      %p614 = scmp.eq.s32.totalorder %s63, 0
      %p615 = por %p613, %p614
      %p616 = scmp.ne.s32.totalorder %s605, %s608
      %p617 = scmp.eq.s32.totalorder %s68, 3
      %p618 = por %p616, %p617
      %p619 = scmp.ne.s32.totalorder %s608, %s609
      %p620 = scmp.eq.s32.totalorder %s68, 0
      %p621 = por %p619, %p620
      %p622 = scmp.ne.s32.totalorder %s608, %s609
      %p623 = scmp.eq.s32.totalorder %s69, 3
      %p624 = por %p622, %p623
      %p626 = scmp.ne.s32.totalorder %s609, %s625
      %p627 = scmp.eq.s32.totalorder %s69, 0
      %p628 = por %p626, %p627
      %s629 = ssub.s32 %s71, %s78
      %p630 = scmp.eq.s32.totalorder %s629, 0
      %s632 = sadd.s32 %s631, 1
      %s633 = scalar_select %p630, %s631, %s632
      %p636 = pneg %p630
      %p637 = scmp.eq.s32.totalorder %s63, 3
      %p638 = por %p636, %p637
      %p639 = scmp.ne.s32.totalorder %s631, %s634
      %p640 = scmp.eq.s32.totalorder %s63, 0
      %p641 = por %p639, %p640
      %p642 = scmp.ne.s32.totalorder %s631, %s634
      %p643 = scmp.eq.s32.totalorder %s68, 3
      %p644 = por %p642, %p643
      %p645 = scmp.ne.s32.totalorder %s634, %s635
      %p646 = scmp.eq.s32.totalorder %s68, 0
      %p647 = por %p645, %p646
      %p648 = scmp.ne.s32.totalorder %s634, %s635
      %p649 = scmp.eq.s32.totalorder %s69, 3
      %p650 = por %p648, %p649
      %p652 = scmp.ne.s32.totalorder %s635, %s651
      %p653 = scmp.eq.s32.totalorder %s69, 0
      %p654 = por %p652, %p653
      %s655 = ssub.s32 %s71, %s78
      %p656 = scmp.eq.s32.totalorder %s655, 0
      %s658 = sadd.s32 %s657, 1
      %s659 = scalar_select %p656, %s657, %s658
      %p662 = pneg %p656
      %p663 = scmp.eq.s32.totalorder %s63, 3
      %p664 = por %p662, %p663
      %p665 = scmp.ne.s32.totalorder %s657, %s660
      %p666 = scmp.eq.s32.totalorder %s63, 0
      %p667 = por %p665, %p666
      %p668 = scmp.ne.s32.totalorder %s657, %s660
      %p669 = scmp.eq.s32.totalorder %s68, 3
      %p670 = por %p668, %p669
      %p671 = scmp.ne.s32.totalorder %s660, %s661
      %p672 = scmp.eq.s32.totalorder %s68, 0
      %p673 = por %p671, %p672
      %p674 = scmp.ne.s32.totalorder %s660, %s661
      %p675 = scmp.eq.s32.totalorder %s69, 3
      %p676 = por %p674, %p675
      %p678 = scmp.ne.s32.totalorder %s661, %s677
      %p679 = scmp.eq.s32.totalorder %s69, 0
      %p680 = por %p678, %p679
      %s682 = sadd.s32 %s681, 1
      %p685 = scmp.eq.s32.totalorder %s63, 3
      %p686 = scmp.ne.s32.totalorder %s681, %s683
      %p687 = scmp.eq.s32.totalorder %s63, 0
      %p688 = por %p686, %p687
      %p689 = scmp.ne.s32.totalorder %s681, %s683
      %p690 = scmp.eq.s32.totalorder %s68, 3
      %p691 = por %p689, %p690
      %p692 = scmp.ne.s32.totalorder %s683, %s684
      %p693 = scmp.eq.s32.totalorder %s68, 0
      %p694 = por %p692, %p693
      %p695 = scmp.ne.s32.totalorder %s683, %s684
      %p696 = scmp.eq.s32.totalorder %s69, 3
      %p697 = por %p695, %p696
      %p699 = scmp.ne.s32.totalorder %s684, %s698
      %p700 = scmp.eq.s32.totalorder %s69, 0
      %p701 = por %p699, %p700
      %s703 = sadd.s32 %s702, 1
      %p706 = scmp.eq.s32.totalorder %s63, 3
      %p707 = scmp.ne.s32.totalorder %s702, %s704
      %p708 = scmp.eq.s32.totalorder %s63, 0
      %p709 = por %p707, %p708
      %p710 = scmp.ne.s32.totalorder %s702, %s704
      %p711 = scmp.eq.s32.totalorder %s68, 3
      %p712 = por %p710, %p711
      %p713 = scmp.ne.s32.totalorder %s704, %s705
      %p714 = scmp.eq.s32.totalorder %s68, 0
      %p715 = por %p713, %p714
      %p716 = scmp.ne.s32.totalorder %s704, %s705
      %p717 = scmp.eq.s32.totalorder %s69, 3
      %p718 = por %p716, %p717
      %p720 = scmp.ne.s32.totalorder %s705, %s719
      %p721 = scmp.eq.s32.totalorder %s69, 0
      %p722 = por %p720, %p721
      %s724 = sadd.s32 %s723, 1
      %p727 = scmp.eq.s32.totalorder %s63, 3
      %p728 = scmp.ne.s32.totalorder %s723, %s725
      %p729 = scmp.eq.s32.totalorder %s63, 0
      %p730 = por %p728, %p729
      %p731 = scmp.ne.s32.totalorder %s723, %s725
      %p732 = scmp.eq.s32.totalorder %s68, 3
      %p733 = por %p731, %p732
      %p734 = scmp.ne.s32.totalorder %s725, %s726
      %p735 = scmp.eq.s32.totalorder %s68, 0
      %p736 = por %p734, %p735
      %p737 = scmp.ne.s32.totalorder %s725, %s726
      %p738 = scmp.eq.s32.totalorder %s69, 3
      %p739 = por %p737, %p738
      %p741 = scmp.ne.s32.totalorder %s726, %s740
      %p742 = scmp.eq.s32.totalorder %s69, 0
      %p743 = por %p741, %p742
      %s745 = sadd.s32 %s744, 1
      %p748 = scmp.eq.s32.totalorder %s63, 3
      %p749 = scmp.ne.s32.totalorder %s744, %s746
      %p750 = scmp.eq.s32.totalorder %s63, 0
      %p751 = por %p749, %p750
      %p752 = scmp.ne.s32.totalorder %s744, %s746
      %p753 = scmp.eq.s32.totalorder %s68, 3
      %p754 = por %p752, %p753
      %p755 = scmp.ne.s32.totalorder %s746, %s747
      %p756 = scmp.eq.s32.totalorder %s68, 0
      %p757 = por %p755, %p756
      %p758 = scmp.ne.s32.totalorder %s746, %s747
      %p759 = scmp.eq.s32.totalorder %s69, 3
      %p760 = por %p758, %p759
      %p762 = scmp.ne.s32.totalorder %s747, %s761
      %p763 = scmp.eq.s32.totalorder %s69, 0
      %p764 = por %p762, %p763
      %s765 = ssub.s32 %s70, %s82
      %p766 = scmp.eq.s32.totalorder %s765, 0
      %s768 = sadd.s32 %s767, 1
      %s769 = scalar_select %p766, %s767, %s768
      %p772 = pneg %p766
      %p773 = scmp.eq.s32.totalorder %s63, 3
      %p774 = por %p772, %p773
      %p775 = scmp.ne.s32.totalorder %s767, %s770
      %p776 = scmp.eq.s32.totalorder %s63, 0
      %p777 = por %p775, %p776
      %p778 = scmp.ne.s32.totalorder %s767, %s770
      %p779 = scmp.eq.s32.totalorder %s68, 3
      %p780 = por %p778, %p779
      %p781 = scmp.ne.s32.totalorder %s770, %s771
      %p782 = scmp.eq.s32.totalorder %s68, 0
      %p783 = por %p781, %p782
      %p784 = scmp.ne.s32.totalorder %s770, %s771
      %p785 = scmp.eq.s32.totalorder %s69, 3
      %p786 = por %p784, %p785
      %p788 = scmp.ne.s32.totalorder %s771, %s787
      %p789 = scmp.eq.s32.totalorder %s69, 0
      %p790 = por %p788, %p789
      %p791 = scmp.le.s32.totalorder 1, %s63
      %p792 = scmp.lt.s32.totalorder %s63, 5
      %p793 = pnand %p791, %p792
      %p794 = pneg %p793
      // Predicated region
      $region9: #{tpu_custom_call.1} parent=5 // pred_check
        _
      $region10: #{tpu_custom_call.1} parent=5 // pred_check_branch
        %796 = sbr.rel (%p793) target = $region12
      $region11: #{tpu_custom_call.1} parent=5 // pred_region
        %s797 = ssub.s32 %s63, 1
        // Predicated region
        $region13: #{tpu_custom_call.1} parent=11 // pred_check
          %p798 = pneg %p694
        $region14: #{tpu_custom_call.1} parent=11 // pred_check_branch
          %800 = sbr.rel (%p798) target = $region16
        $region15: #{tpu_custom_call.1} parent=11 // pred_region
          _
        $region16: #{tpu_custom_call.1} parent=11 // pred_fallthru
          _
        // Predicated region
        $region17: #{tpu_custom_call.1} parent=11 // pred_check
          %p801 = pneg %p715
        $region18: #{tpu_custom_call.1} parent=11 // pred_check_branch
          %803 = sbr.rel (%p801) target = $region20
        $region19: #{tpu_custom_call.1} parent=11 // pred_region
          _
        $region20: #{tpu_custom_call.1} parent=11 // pred_fallthru
          _
        // Predicated region
        $region21: #{tpu_custom_call.1} parent=11 // pred_check
          %p804 = pneg %p736
        $region22: #{tpu_custom_call.1} parent=11 // pred_check_branch
          %806 = sbr.rel (%p804) target = $region24
        $region23: #{tpu_custom_call.1} parent=11 // pred_region
          _
        $region24: #{tpu_custom_call.1} parent=11 // pred_fallthru
          _
        // Predicated region
        $region25: #{tpu_custom_call.1} parent=11 // pred_check
          %p807 = pneg %p757
        $region26: #{tpu_custom_call.1} parent=11 // pred_check_branch
          %809 = sbr.rel (%p807) target = $region28
        $region27: #{tpu_custom_call.1} parent=11 // pred_region
          _
        $region28: #{tpu_custom_call.1} parent=11 // pred_fallthru
          _
      $region12: #{tpu_custom_call.1} parent=5 // pred_fallthru
        _
      %p810 = scmp.lt.s32.totalorder %s63, 4
      // Predicated region
      $region29: #{tpu_custom_call.1} parent=5 // pred_check
        %p811 = pneg %p810
      $region30: #{tpu_custom_call.1} parent=5 // pred_check_branch
        %813 = sbr.rel (%p811) target = $region32
      $region31: #{tpu_custom_call.1} parent=5 // pred_region
        // Predicated region
        $region33: #{tpu_custom_call.1} parent=31 // pred_check
          %p814 = pneg %p95
        $region34: #{tpu_custom_call.1} parent=31 // pred_check_branch
          %816 = sbr.rel (%p814) target = $region36
        $region35: #{tpu_custom_call.1} parent=31 // pred_region
          %s817 = sand.u32 %s85, 1
          %s818 = scalar_lea.sflag [#allocation4], %s817
          %s819 = sand.u32 %s85, 1
          %s820 = smul.addr %s819, 8
          %s821 = scalar_lea.vmem [#allocation3], %s820
          %823 = vsyncadd %s818, 0
          %s824 = smul.addr %s70, 8
          %s825 = scalar_lea.hbm %s0, %s824
          %s827 = sshll.u32 %s825, 4
          %s828 = int_to_ptr.hbm [resolvable:$true] %s827
          %s829 = sshll.u32 %s821, 4
          %s830 = int_to_ptr.vmem [resolvable:$true] %s829
          %832 = dma.hbm_to_vmem [thread:$0]  %s828, 128, %s830, %s818
        $region36: #{tpu_custom_call.1} parent=31 // pred_fallthru
          _
        // Predicated region
        $region37: #{tpu_custom_call.1} parent=31 // pred_check
          %p833 = pneg %p121
        $region38: #{tpu_custom_call.1} parent=31 // pred_check_branch
          %835 = sbr.rel (%p833) target = $region40
        $region39: #{tpu_custom_call.1} parent=31 // pred_region
          %s836 = sand.u32 %s63, 1
          %s837 = scalar_lea.sflag [#allocation7], %s836
          %s838 = sand.u32 %s111, 1
          %s839 = smul.addr %s838, 4
          %s840 = scalar_lea.vmem [#allocation6], %s839
          %842 = vsyncadd %s837, 0
          %s843 = smul.addr %s70, 4
          %s844 = scalar_lea.hbm %s1, %s843
          %s846 = sshll.u32 %s844, 4
          %s847 = int_to_ptr.hbm [resolvable:$true] %s846
          %s848 = sshll.u32 %s840, 4
          %s849 = int_to_ptr.vmem [resolvable:$true] %s848
          %851 = dma.hbm_to_vmem [thread:$0]  %s847, 64, %s849, %s837
        $region40: #{tpu_custom_call.1} parent=31 // pred_fallthru
          _
        // Predicated region
        $region41: #{tpu_custom_call.1} parent=31 // pred_check
          %p852 = pneg %p147
        $region42: #{tpu_custom_call.1} parent=31 // pred_check_branch
          %854 = sbr.rel (%p852) target = $region44
        $region43: #{tpu_custom_call.1} parent=31 // pred_region
          %s855 = sand.u32 %s63, 1
          %s856 = scalar_lea.sflag [#allocation7], %s855
          %s857 = sand.u32 %s137, 1
          %s858 = scalar_lea.vmem [#allocation8], %s857
          %860 = vsyncadd %s856, 0
          %s861 = scalar_lea.hbm %s2, %s70
          %s863 = sshll.u32 %s861, 4
          %s864 = int_to_ptr.hbm [resolvable:$true] %s863
          %s865 = sshll.u32 %s858, 4
          %s866 = int_to_ptr.vmem [resolvable:$true] %s865
          %868 = dma.hbm_to_vmem [thread:$0]  %s864, 16, %s866, %s856
        $region44: #{tpu_custom_call.1} parent=31 // pred_fallthru
          _
        // Predicated region
        $region45: #{tpu_custom_call.1} parent=31 // pred_check
          %p869 = pneg %p173
        $region46: #{tpu_custom_call.1} parent=31 // pred_check_branch
          %871 = sbr.rel (%p869) target = $region48
        $region47: #{tpu_custom_call.1} parent=31 // pred_region
          %s872 = sand.u32 %s63, 1
          %s873 = scalar_lea.sflag [#allocation10], %s872
          %s874 = sand.u32 %s163, 1
          %s875 = scalar_lea.vmem [#allocation9], %s874
          %877 = vsyncadd %s873, 0
          %s878 = scalar_lea.hbm %s3, %s71
          %s880 = sshll.u32 %s878, 4
          %s881 = int_to_ptr.hbm [resolvable:$true] %s880
          %s882 = sshll.u32 %s875, 4
          %s883 = int_to_ptr.vmem [resolvable:$true] %s882
          %885 = dma.hbm_to_vmem [thread:$0]  %s881, 16, %s883, %s873
        $region48: #{tpu_custom_call.1} parent=31 // pred_fallthru
          _
        // Predicated region
        $region49: #{tpu_custom_call.1} parent=31 // pred_check
          %p886 = pneg %p199
        $region50: #{tpu_custom_call.1} parent=31 // pred_check_branch
          %888 = sbr.rel (%p886) target = $region52
        $region51: #{tpu_custom_call.1} parent=31 // pred_region
          %s889 = sand.u32 %s63, 1
          %s890 = scalar_lea.sflag [#allocation10], %s889
          %s891 = sand.u32 %s189, 1
          %s892 = scalar_lea.vmem [#allocation11], %s891
          %894 = vsyncadd %s890, 0
          %s895 = scalar_lea.hbm %s4, %s71
          %s897 = sshll.u32 %s895, 4
          %s898 = int_to_ptr.hbm [resolvable:$true] %s897
          %s899 = sshll.u32 %s892, 4
          %s900 = int_to_ptr.vmem [resolvable:$true] %s899
          %902 = dma.hbm_to_vmem [thread:$0]  %s898, 16, %s900, %s890
        $region52: #{tpu_custom_call.1} parent=31 // pred_fallthru
          _
        // Predicated region
        $region53: #{tpu_custom_call.1} parent=31 // pred_check
          %p903 = pneg %p225
        $region54: #{tpu_custom_call.1} parent=31 // pred_check_branch
          %905 = sbr.rel (%p903) target = $region56
        $region55: #{tpu_custom_call.1} parent=31 // pred_region
          %p906 = scmp.lt.s32.totalorder %s71, 1
          %s907 = scalar_select %p906, %s71, 1
          %s908 = smul.addr %s907, 4
          %s909 = smul.addr %s908, 4
          %s910 = scalar_lea.vmem %s5, %s909
        $region56: #{tpu_custom_call.1} parent=31 // pred_fallthru
          _
        // Predicated region
        $region57: #{tpu_custom_call.1} parent=31 // pred_check
          %p911 = pneg %p251
        $region58: #{tpu_custom_call.1} parent=31 // pred_check_branch
          %913 = sbr.rel (%p911) target = $region60
        $region59: #{tpu_custom_call.1} parent=31 // pred_region
          %s914 = sand.u32 %s63, 1
          %s915 = scalar_lea.sflag [#allocation13], %s914
          %s916 = sand.u32 %s241, 1
          %s917 = scalar_lea.vmem [#allocation12], %s916
          %919 = vsyncadd %s915, 0
          %s920 = scalar_lea.hbm %s6, %s71
          %s922 = sshll.u32 %s920, 4
          %s923 = int_to_ptr.hbm [resolvable:$true] %s922
          %s924 = sshll.u32 %s917, 4
          %s925 = int_to_ptr.vmem [resolvable:$true] %s924
          %927 = dma.hbm_to_vmem [thread:$0]  %s923, 16, %s925, %s915
        $region60: #{tpu_custom_call.1} parent=31 // pred_fallthru
          _
        // Predicated region
        $region61: #{tpu_custom_call.1} parent=31 // pred_check
          %p928 = pneg %p277
        $region62: #{tpu_custom_call.1} parent=31 // pred_check_branch
          %930 = sbr.rel (%p928) target = $region64
        $region63: #{tpu_custom_call.1} parent=31 // pred_region
          %p931 = scmp.lt.s32.totalorder %s71, 1
          %s932 = scalar_select %p931, %s71, 1
          %s933 = smul.addr %s932, 4
          %s934 = smul.addr %s933, 4
          %s935 = scalar_lea.vmem %s7, %s934
        $region64: #{tpu_custom_call.1} parent=31 // pred_fallthru
          _
        // Predicated region
        $region65: #{tpu_custom_call.1} parent=31 // pred_check
          %p936 = pneg %p303
        $region66: #{tpu_custom_call.1} parent=31 // pred_check_branch
          %938 = sbr.rel (%p936) target = $region68
        $region67: #{tpu_custom_call.1} parent=31 // pred_region
          %s939 = sand.u32 %s63, 1
          %s940 = scalar_lea.sflag [#allocation13], %s939
          %s941 = sand.u32 %s293, 1
          %s942 = scalar_lea.vmem [#allocation14], %s941
          %944 = vsyncadd %s940, 0
          %s945 = scalar_lea.hbm %s8, %s71
          %s947 = sshll.u32 %s945, 4
          %s948 = int_to_ptr.hbm [resolvable:$true] %s947
          %s949 = sshll.u32 %s942, 4
          %s950 = int_to_ptr.vmem [resolvable:$true] %s949
          %952 = dma.hbm_to_vmem [thread:$0]  %s948, 16, %s950, %s940
        $region68: #{tpu_custom_call.1} parent=31 // pred_fallthru
          _
        // Predicated region
        $region69: #{tpu_custom_call.1} parent=31 // pred_check
          %p953 = pneg %p329
        $region70: #{tpu_custom_call.1} parent=31 // pred_check_branch
          %955 = sbr.rel (%p953) target = $region72
        $region71: #{tpu_custom_call.1} parent=31 // pred_region
          %s956 = sand.u32 %s63, 1
          %s957 = scalar_lea.sflag [#allocation16], %s956
          %s958 = sand.u32 %s319, 1
          %s959 = scalar_lea.vmem [#allocation15], %s958
          %961 = vsyncadd %s957, 0
          %s962 = scalar_lea.hbm %s9, %s71
          %s964 = sshll.u32 %s962, 4
          %s965 = int_to_ptr.hbm [resolvable:$true] %s964
          %s966 = sshll.u32 %s959, 4
          %s967 = int_to_ptr.vmem [resolvable:$true] %s966
          %969 = dma.hbm_to_vmem [thread:$0]  %s965, 16, %s967, %s957
        $region72: #{tpu_custom_call.1} parent=31 // pred_fallthru
          _
        // Predicated region
        $region73: #{tpu_custom_call.1} parent=31 // pred_check
          %p970 = pneg %p355
        $region74: #{tpu_custom_call.1} parent=31 // pred_check_branch
          %972 = sbr.rel (%p970) target = $region76
        $region75: #{tpu_custom_call.1} parent=31 // pred_region
          %s973 = sand.u32 %s63, 1
          %s974 = scalar_lea.sflag [#allocation16], %s973
          %s975 = sand.u32 %s345, 1
          %s976 = scalar_lea.vmem [#allocation17], %s975
          %978 = vsyncadd %s974, 0
          %s979 = scalar_lea.hbm %s10, %s71
          %s981 = sshll.u32 %s979, 4
          %s982 = int_to_ptr.hbm [resolvable:$true] %s981
          %s983 = sshll.u32 %s976, 4
          %s984 = int_to_ptr.vmem [resolvable:$true] %s983
          %986 = dma.hbm_to_vmem [thread:$0]  %s982, 16, %s984, %s974
        $region76: #{tpu_custom_call.1} parent=31 // pred_fallthru
          _
        // Predicated region
        $region77: #{tpu_custom_call.1} parent=31 // pred_check
          %p987 = pneg %p381
        $region78: #{tpu_custom_call.1} parent=31 // pred_check_branch
          %989 = sbr.rel (%p987) target = $region80
        $region79: #{tpu_custom_call.1} parent=31 // pred_region
          %p990 = scmp.lt.s32.totalorder %s71, 1
          %s991 = scalar_select %p990, %s71, 1
          %s992 = smul.addr %s991, 4
          %s993 = smul.addr %s992, 4
          %s994 = scalar_lea.vmem %s11, %s993
        $region80: #{tpu_custom_call.1} parent=31 // pred_fallthru
          _
        // Predicated region
        $region81: #{tpu_custom_call.1} parent=31 // pred_check
          %p995 = pneg %p407
        $region82: #{tpu_custom_call.1} parent=31 // pred_check_branch
          %997 = sbr.rel (%p995) target = $region84
        $region83: #{tpu_custom_call.1} parent=31 // pred_region
          %s998 = sand.u32 %s63, 1
          %s999 = scalar_lea.sflag [#allocation19], %s998
          %s1000 = sand.u32 %s397, 1
          %s1001 = scalar_lea.vmem [#allocation18], %s1000
          %1003 = vsyncadd %s999, 0
          %s1004 = scalar_lea.hbm %s12, %s71
          %s1006 = sshll.u32 %s1004, 4
          %s1007 = int_to_ptr.hbm [resolvable:$true] %s1006
          %s1008 = sshll.u32 %s1001, 4
          %s1009 = int_to_ptr.vmem [resolvable:$true] %s1008
          %1011 = dma.hbm_to_vmem [thread:$0]  %s1007, 16, %s1009, %s999
        $region84: #{tpu_custom_call.1} parent=31 // pred_fallthru
          _
        // Predicated region
        $region85: #{tpu_custom_call.1} parent=31 // pred_check
          %p1012 = pneg %p433
        $region86: #{tpu_custom_call.1} parent=31 // pred_check_branch
          %1014 = sbr.rel (%p1012) target = $region88
        $region87: #{tpu_custom_call.1} parent=31 // pred_region
          %s1015 = sand.u32 %s63, 1
          %s1016 = scalar_lea.sflag [#allocation19], %s1015
          %s1017 = sand.u32 %s423, 1
          %s1018 = smul.addr %s1017, 16
          %s1019 = scalar_lea.vmem [#allocation20], %s1018
          %1021 = vsyncadd %s1016, 0
          %s1022 = smul.addr %s71, 4
          %s1023 = smul.addr %s1022, 4
          %s1024 = scalar_lea.hbm %s13, %s1023
          %s1025 = sshll.u32 %s1024, 4
          %s1026 = int_to_ptr.hbm [resolvable:$true] %s1025
          %s1027 = sshll.u32 %s1019, 4
          %s1028 = int_to_ptr.vmem [resolvable:$true] %s1027
          %1033 = dma.hbm_to_vmem [thread:$0]  %s1026, 256, %s1028, %s1016, 64, 64, 4
        $region88: #{tpu_custom_call.1} parent=31 // pred_fallthru
          _
        // Predicated region
        $region89: #{tpu_custom_call.1} parent=31 // pred_check
          %p1034 = pneg %p459
        $region90: #{tpu_custom_call.1} parent=31 // pred_check_branch
          %1036 = sbr.rel (%p1034) target = $region92
        $region91: #{tpu_custom_call.1} parent=31 // pred_region
          %s1037 = sand.u32 %s63, 1
          %s1038 = scalar_lea.sflag [#allocation22], %s1037
          %s1039 = sand.u32 %s449, 1
          %s1040 = scalar_lea.vmem [#allocation21], %s1039
          %1042 = vsyncadd %s1038, 0
          %s1043 = scalar_lea.hbm %s14, %s71
          %s1045 = sshll.u32 %s1043, 4
          %s1046 = int_to_ptr.hbm [resolvable:$true] %s1045
          %s1047 = sshll.u32 %s1040, 4
          %s1048 = int_to_ptr.vmem [resolvable:$true] %s1047
          %1050 = dma.hbm_to_vmem [thread:$0]  %s1046, 16, %s1048, %s1038
        $region92: #{tpu_custom_call.1} parent=31 // pred_fallthru
          _
        // Predicated region
        $region93: #{tpu_custom_call.1} parent=31 // pred_check
          %p1051 = pneg %p485
        $region94: #{tpu_custom_call.1} parent=31 // pred_check_branch
          %1053 = sbr.rel (%p1051) target = $region96
        $region95: #{tpu_custom_call.1} parent=31 // pred_region
          %s1054 = sand.u32 %s63, 1
          %s1055 = scalar_lea.sflag [#allocation22], %s1054
          %s1056 = sand.u32 %s475, 1
          %s1057 = smul.addr %s1056, 16
          %s1058 = scalar_lea.vmem [#allocation23], %s1057
          %1060 = vsyncadd %s1055, 0
          %s1061 = smul.addr %s71, 4
          %s1062 = smul.addr %s1061, 4
          %s1063 = scalar_lea.hbm %s15, %s1062
          %s1064 = sshll.u32 %s1063, 4
          %s1065 = int_to_ptr.hbm [resolvable:$true] %s1064
          %s1066 = sshll.u32 %s1058, 4
          %s1067 = int_to_ptr.vmem [resolvable:$true] %s1066
          %1072 = dma.hbm_to_vmem [thread:$0]  %s1065, 256, %s1067, %s1055, 64, 64, 4
        $region96: #{tpu_custom_call.1} parent=31 // pred_fallthru
          _
        // Predicated region
        $region97: #{tpu_custom_call.1} parent=31 // pred_check
          %p1073 = pneg %p511
        $region98: #{tpu_custom_call.1} parent=31 // pred_check_branch
          %1075 = sbr.rel (%p1073) target = $region100
        $region99: #{tpu_custom_call.1} parent=31 // pred_region
          %s1076 = sand.u32 %s63, 1
          %s1077 = scalar_lea.sflag [#allocation25], %s1076
          %s1078 = sand.u32 %s501, 1
          %s1079 = scalar_lea.vmem [#allocation24], %s1078
          %1081 = vsyncadd %s1077, 0
          %s1082 = scalar_lea.hbm %s16, %s71
          %s1084 = sshll.u32 %s1082, 4
          %s1085 = int_to_ptr.hbm [resolvable:$true] %s1084
          %s1086 = sshll.u32 %s1079, 4
          %s1087 = int_to_ptr.vmem [resolvable:$true] %s1086
          %1089 = dma.hbm_to_vmem [thread:$0]  %s1085, 16, %s1087, %s1077
        $region100: #{tpu_custom_call.1} parent=31 // pred_fallthru
          _
        // Predicated region
        $region101: #{tpu_custom_call.1} parent=31 // pred_check
          %p1090 = pneg %p537
        $region102: #{tpu_custom_call.1} parent=31 // pred_check_branch
          %1092 = sbr.rel (%p1090) target = $region104
        $region103: #{tpu_custom_call.1} parent=31 // pred_region
          %s1093 = sand.u32 %s63, 1
          %s1094 = scalar_lea.sflag [#allocation25], %s1093
          %s1095 = sand.u32 %s527, 1
          %s1096 = scalar_lea.vmem [#allocation26], %s1095
          %1098 = vsyncadd %s1094, 0
          %s1099 = scalar_lea.hbm %s17, %s71
          %s1101 = sshll.u32 %s1099, 4
          %s1102 = int_to_ptr.hbm [resolvable:$true] %s1101
          %s1103 = sshll.u32 %s1096, 4
          %s1104 = int_to_ptr.vmem [resolvable:$true] %s1103
          %1106 = dma.hbm_to_vmem [thread:$0]  %s1102, 16, %s1104, %s1094
        $region104: #{tpu_custom_call.1} parent=31 // pred_fallthru
          _
        // Predicated region
        $region105: #{tpu_custom_call.1} parent=31 // pred_check
          %p1107 = pneg %p563
        $region106: #{tpu_custom_call.1} parent=31 // pred_check_branch
          %1109 = sbr.rel (%p1107) target = $region108
        $region107: #{tpu_custom_call.1} parent=31 // pred_region
          %s1110 = sand.u32 %s63, 1
          %s1111 = scalar_lea.sflag [#allocation28], %s1110
          %s1112 = sand.u32 %s553, 1
          %s1113 = scalar_lea.vmem [#allocation27], %s1112
          %1115 = vsyncadd %s1111, 0
          %s1116 = scalar_lea.hbm %s18, %s71
          %s1118 = sshll.u32 %s1116, 4
          %s1119 = int_to_ptr.hbm [resolvable:$true] %s1118
          %s1120 = sshll.u32 %s1113, 4
          %s1121 = int_to_ptr.vmem [resolvable:$true] %s1120
          %1123 = dma.hbm_to_vmem [thread:$0]  %s1119, 16, %s1121, %s1111
        $region108: #{tpu_custom_call.1} parent=31 // pred_fallthru
          _
        // Predicated region
        $region109: #{tpu_custom_call.1} parent=31 // pred_check
          %p1124 = pneg %p589
        $region110: #{tpu_custom_call.1} parent=31 // pred_check_branch
          %1126 = sbr.rel (%p1124) target = $region112
        $region111: #{tpu_custom_call.1} parent=31 // pred_region
          %s1127 = sand.u32 %s63, 1
          %s1128 = scalar_lea.sflag [#allocation28], %s1127
          %s1129 = sand.u32 %s579, 1
          %s1130 = smul.addr %s1129, 16
          %s1131 = scalar_lea.vmem [#allocation29], %s1130
          %1133 = vsyncadd %s1128, 0
          %s1134 = smul.addr %s71, 4
          %s1135 = smul.addr %s1134, 4
          %s1136 = scalar_lea.hbm %s19, %s1135
          %s1137 = sshll.u32 %s1136, 4
          %s1138 = int_to_ptr.hbm [resolvable:$true] %s1137
          %s1139 = sshll.u32 %s1131, 4
          %s1140 = int_to_ptr.vmem [resolvable:$true] %s1139
          %1145 = dma.hbm_to_vmem [thread:$0]  %s1138, 256, %s1140, %s1128, 64, 64, 4
        $region112: #{tpu_custom_call.1} parent=31 // pred_fallthru
          _
        // Predicated region
        $region113: #{tpu_custom_call.1} parent=31 // pred_check
          %p1146 = pneg %p615
        $region114: #{tpu_custom_call.1} parent=31 // pred_check_branch
          %1148 = sbr.rel (%p1146) target = $region116
        $region115: #{tpu_custom_call.1} parent=31 // pred_region
          %p1149 = scmp.lt.s32.totalorder %s71, 1
          %s1150 = scalar_select %p1149, %s71, 1
          %s1151 = scalar_lea.vmem %s20, %s1150
        $region116: #{tpu_custom_call.1} parent=31 // pred_fallthru
          _
        // Predicated region
        $region117: #{tpu_custom_call.1} parent=31 // pred_check
          %p1152 = pneg %p641
        $region118: #{tpu_custom_call.1} parent=31 // pred_check_branch
          %1154 = sbr.rel (%p1152) target = $region120
        $region119: #{tpu_custom_call.1} parent=31 // pred_region
          %p1155 = scmp.lt.s32.totalorder %s71, 1
          %s1156 = scalar_select %p1155, %s71, 1
          %s1157 = smul.addr %s1156, 8
          %s1158 = smul.addr %s1157, 4
          %s1159 = scalar_lea.vmem %s21, %s1158
        $region120: #{tpu_custom_call.1} parent=31 // pred_fallthru
          _
        // Predicated region
        $region121: #{tpu_custom_call.1} parent=31 // pred_check
          %p1160 = pneg %p667
        $region122: #{tpu_custom_call.1} parent=31 // pred_check_branch
          %1162 = sbr.rel (%p1160) target = $region124
        $region123: #{tpu_custom_call.1} parent=31 // pred_region
          %p1163 = scmp.lt.s32.totalorder %s71, 1
          %s1164 = scalar_select %p1163, %s71, 1
          %s1165 = scalar_lea.vmem %s22, %s1164
        $region124: #{tpu_custom_call.1} parent=31 // pred_fallthru
          _
      $region32: #{tpu_custom_call.1} parent=5 // pred_fallthru
        _
      %p1166 = scmp.le.s32.totalorder 1, %s63
      %p1167 = scmp.lt.s32.totalorder %s63, 5
      %p1168 = pnand %p1166, %p1167
      %p1169 = pneg %p1168
      // Predicated region
      $region125: #{tpu_custom_call.1} parent=5 // pred_check
        _
      $region126: #{tpu_custom_call.1} parent=5 // pred_check_branch
        %1171 = sbr.rel (%p1168) target = $region128
      $region127: #{tpu_custom_call.1} parent=5 // pred_region
        %s1172 = ssub.s32 %s63, 1
        %s1173 = sand.u32 %s88, 1
        %s1174 = scalar_lea.sflag [#allocation4], %s1173
        %s1175 = sand.u32 %s88, 1
        %s1176 = smul.addr %s1175, 8
        %s1177 = scalar_lea.vmem [#allocation3], %s1176
        // Predicated region
        $region129: #{tpu_custom_call.1} parent=127 // pred_check
          %p1178 = pneg %p101
        $region130: #{tpu_custom_call.1} parent=127 // pred_check_branch
          %1180 = sbr.rel (%p1178) target = $region132
        $region131: #{tpu_custom_call.1} parent=127 // pred_region
          %1182 = dma.done %s1174, 128
        $region132: #{tpu_custom_call.1} parent=127 // pred_fallthru
          _
        %s1183 = sand.u32 %s68, 1
        %s1184 = scalar_lea.sflag [#allocation7], %s1183
        %s1185 = sand.u32 %s114, 1
        %s1186 = smul.addr %s1185, 4
        %s1187 = scalar_lea.vmem [#allocation6], %s1186
        // Predicated region
        $region133: #{tpu_custom_call.1} parent=127 // pred_check
          %p1188 = pneg %p127
        $region134: #{tpu_custom_call.1} parent=127 // pred_check_branch
          %1190 = sbr.rel (%p1188) target = $region136
        $region135: #{tpu_custom_call.1} parent=127 // pred_region
          %1192 = dma.done %s1184, 64
        $region136: #{tpu_custom_call.1} parent=127 // pred_fallthru
          _
        %s1193 = sand.u32 %s68, 1
        %s1194 = scalar_lea.sflag [#allocation7], %s1193
        %s1195 = sand.u32 %s140, 1
        %s1196 = scalar_lea.vmem [#allocation8], %s1195
        // Predicated region
        $region137: #{tpu_custom_call.1} parent=127 // pred_check
          %p1197 = pneg %p153
        $region138: #{tpu_custom_call.1} parent=127 // pred_check_branch
          %1199 = sbr.rel (%p1197) target = $region140
        $region139: #{tpu_custom_call.1} parent=127 // pred_region
          %1201 = dma.done %s1194, 16
        $region140: #{tpu_custom_call.1} parent=127 // pred_fallthru
          _
        %s1202 = sand.u32 %s68, 1
        %s1203 = scalar_lea.sflag [#allocation10], %s1202
        %s1204 = sand.u32 %s166, 1
        %s1205 = scalar_lea.vmem [#allocation9], %s1204
        // Predicated region
        $region141: #{tpu_custom_call.1} parent=127 // pred_check
          %p1206 = pneg %p179
        $region142: #{tpu_custom_call.1} parent=127 // pred_check_branch
          %1208 = sbr.rel (%p1206) target = $region144
        $region143: #{tpu_custom_call.1} parent=127 // pred_region
          %1210 = dma.done %s1203, 16
        $region144: #{tpu_custom_call.1} parent=127 // pred_fallthru
          _
        %s1211 = sand.u32 %s68, 1
        %s1212 = scalar_lea.sflag [#allocation10], %s1211
        %s1213 = sand.u32 %s192, 1
        %s1214 = scalar_lea.vmem [#allocation11], %s1213
        // Predicated region
        $region145: #{tpu_custom_call.1} parent=127 // pred_check
          %p1215 = pneg %p205
        $region146: #{tpu_custom_call.1} parent=127 // pred_check_branch
          %1217 = sbr.rel (%p1215) target = $region148
        $region147: #{tpu_custom_call.1} parent=127 // pred_region
          %1219 = dma.done %s1212, 16
        $region148: #{tpu_custom_call.1} parent=127 // pred_fallthru
          _
        %s1220 = sand.u32 %s68, 1
        %s1221 = scalar_lea.sflag [#allocation13], %s1220
        %s1222 = sand.u32 %s244, 1
        %s1223 = scalar_lea.vmem [#allocation12], %s1222
        // Predicated region
        $region149: #{tpu_custom_call.1} parent=127 // pred_check
          %p1224 = pneg %p257
        $region150: #{tpu_custom_call.1} parent=127 // pred_check_branch
          %1226 = sbr.rel (%p1224) target = $region152
        $region151: #{tpu_custom_call.1} parent=127 // pred_region
          %1228 = dma.done %s1221, 16
        $region152: #{tpu_custom_call.1} parent=127 // pred_fallthru
          _
        %s1229 = sand.u32 %s68, 1
        %s1230 = scalar_lea.sflag [#allocation13], %s1229
        %s1231 = sand.u32 %s296, 1
        %s1232 = scalar_lea.vmem [#allocation14], %s1231
        // Predicated region
        $region153: #{tpu_custom_call.1} parent=127 // pred_check
          %p1233 = pneg %p309
        $region154: #{tpu_custom_call.1} parent=127 // pred_check_branch
          %1235 = sbr.rel (%p1233) target = $region156
        $region155: #{tpu_custom_call.1} parent=127 // pred_region
          %1237 = dma.done %s1230, 16
        $region156: #{tpu_custom_call.1} parent=127 // pred_fallthru
          _
        %s1238 = sand.u32 %s68, 1
        %s1239 = scalar_lea.sflag [#allocation16], %s1238
        %s1240 = sand.u32 %s322, 1
        %s1241 = scalar_lea.vmem [#allocation15], %s1240
        // Predicated region
        $region157: #{tpu_custom_call.1} parent=127 // pred_check
          %p1242 = pneg %p335
        $region158: #{tpu_custom_call.1} parent=127 // pred_check_branch
          %1244 = sbr.rel (%p1242) target = $region160
        $region159: #{tpu_custom_call.1} parent=127 // pred_region
          %1246 = dma.done %s1239, 16
        $region160: #{tpu_custom_call.1} parent=127 // pred_fallthru
          _
        %s1247 = sand.u32 %s68, 1
        %s1248 = scalar_lea.sflag [#allocation16], %s1247
        %s1249 = sand.u32 %s348, 1
        %s1250 = scalar_lea.vmem [#allocation17], %s1249
        // Predicated region
        $region161: #{tpu_custom_call.1} parent=127 // pred_check
          %p1251 = pneg %p361
        $region162: #{tpu_custom_call.1} parent=127 // pred_check_branch
          %1253 = sbr.rel (%p1251) target = $region164
        $region163: #{tpu_custom_call.1} parent=127 // pred_region
          %1255 = dma.done %s1248, 16
        $region164: #{tpu_custom_call.1} parent=127 // pred_fallthru
          _
        %s1256 = sand.u32 %s68, 1
        %s1257 = scalar_lea.sflag [#allocation19], %s1256
        %s1258 = sand.u32 %s400, 1
        %s1259 = scalar_lea.vmem [#allocation18], %s1258
        // Predicated region
        $region165: #{tpu_custom_call.1} parent=127 // pred_check
          %p1260 = pneg %p413
        $region166: #{tpu_custom_call.1} parent=127 // pred_check_branch
          %1262 = sbr.rel (%p1260) target = $region168
        $region167: #{tpu_custom_call.1} parent=127 // pred_region
          %1264 = dma.done %s1257, 16
        $region168: #{tpu_custom_call.1} parent=127 // pred_fallthru
          _
        %s1265 = sand.u32 %s68, 1
        %s1266 = scalar_lea.sflag [#allocation19], %s1265
        %s1267 = sand.u32 %s426, 1
        %s1268 = smul.addr %s1267, 16
        %s1269 = scalar_lea.vmem [#allocation20], %s1268
        // Predicated region
        $region169: #{tpu_custom_call.1} parent=127 // pred_check
          %p1270 = pneg %p439
        $region170: #{tpu_custom_call.1} parent=127 // pred_check_branch
          %1272 = sbr.rel (%p1270) target = $region172
        $region171: #{tpu_custom_call.1} parent=127 // pred_region
          %1274 = dma.done %s1266, 256
        $region172: #{tpu_custom_call.1} parent=127 // pred_fallthru
          _
        %s1275 = sand.u32 %s68, 1
        %s1276 = scalar_lea.sflag [#allocation22], %s1275
        %s1277 = sand.u32 %s452, 1
        %s1278 = scalar_lea.vmem [#allocation21], %s1277
        // Predicated region
        $region173: #{tpu_custom_call.1} parent=127 // pred_check
          %p1279 = pneg %p465
        $region174: #{tpu_custom_call.1} parent=127 // pred_check_branch
          %1281 = sbr.rel (%p1279) target = $region176
        $region175: #{tpu_custom_call.1} parent=127 // pred_region
          %1283 = dma.done %s1276, 16
        $region176: #{tpu_custom_call.1} parent=127 // pred_fallthru
          _
        %s1284 = sand.u32 %s68, 1
        %s1285 = scalar_lea.sflag [#allocation22], %s1284
        %s1286 = sand.u32 %s478, 1
        %s1287 = smul.addr %s1286, 16
        %s1288 = scalar_lea.vmem [#allocation23], %s1287
        // Predicated region
        $region177: #{tpu_custom_call.1} parent=127 // pred_check
          %p1289 = pneg %p491
        $region178: #{tpu_custom_call.1} parent=127 // pred_check_branch
          %1291 = sbr.rel (%p1289) target = $region180
        $region179: #{tpu_custom_call.1} parent=127 // pred_region
          %1293 = dma.done %s1285, 256
        $region180: #{tpu_custom_call.1} parent=127 // pred_fallthru
          _
        %s1294 = sand.u32 %s68, 1
        %s1295 = scalar_lea.sflag [#allocation25], %s1294
        %s1296 = sand.u32 %s504, 1
        %s1297 = scalar_lea.vmem [#allocation24], %s1296
        // Predicated region
        $region181: #{tpu_custom_call.1} parent=127 // pred_check
          %p1298 = pneg %p517
        $region182: #{tpu_custom_call.1} parent=127 // pred_check_branch
          %1300 = sbr.rel (%p1298) target = $region184
        $region183: #{tpu_custom_call.1} parent=127 // pred_region
          %1302 = dma.done %s1295, 16
        $region184: #{tpu_custom_call.1} parent=127 // pred_fallthru
          _
        %s1303 = sand.u32 %s68, 1
        %s1304 = scalar_lea.sflag [#allocation25], %s1303
        %s1305 = sand.u32 %s530, 1
        %s1306 = scalar_lea.vmem [#allocation26], %s1305
        // Predicated region
        $region185: #{tpu_custom_call.1} parent=127 // pred_check
          %p1307 = pneg %p543
        $region186: #{tpu_custom_call.1} parent=127 // pred_check_branch
          %1309 = sbr.rel (%p1307) target = $region188
        $region187: #{tpu_custom_call.1} parent=127 // pred_region
          %1311 = dma.done %s1304, 16
        $region188: #{tpu_custom_call.1} parent=127 // pred_fallthru
          _
        %s1312 = sand.u32 %s68, 1
        %s1313 = scalar_lea.sflag [#allocation28], %s1312
        %s1314 = sand.u32 %s556, 1
        %s1315 = scalar_lea.vmem [#allocation27], %s1314
        // Predicated region
        $region189: #{tpu_custom_call.1} parent=127 // pred_check
          %p1316 = pneg %p569
        $region190: #{tpu_custom_call.1} parent=127 // pred_check_branch
          %1318 = sbr.rel (%p1316) target = $region192
        $region191: #{tpu_custom_call.1} parent=127 // pred_region
          %1320 = dma.done %s1313, 16
        $region192: #{tpu_custom_call.1} parent=127 // pred_fallthru
          _
        %s1321 = sand.u32 %s68, 1
        %s1322 = scalar_lea.sflag [#allocation28], %s1321
        %s1323 = sand.u32 %s582, 1
        %s1324 = smul.addr %s1323, 16
        %s1325 = scalar_lea.vmem [#allocation29], %s1324
        // Predicated region
        $region193: #{tpu_custom_call.1} parent=127 // pred_check
          %p1326 = pneg %p595
        $region194: #{tpu_custom_call.1} parent=127 // pred_check_branch
          %1328 = sbr.rel (%p1326) target = $region196
        $region195: #{tpu_custom_call.1} parent=127 // pred_region
          %1330 = dma.done %s1322, 256
        $region196: #{tpu_custom_call.1} parent=127 // pred_fallthru
          _
        %s1331 = sand.u32 %s88, 1
        %s1332 = scalar_lea.sflag [#allocation4], %s1331
        %s1333 = sand.u32 %s88, 1
        %s1334 = smul.addr %s1333, 8
        %s1335 = scalar_lea.vmem [#allocation3], %s1334
        %p1336 = pneg %p101
        %p1337 = pneg %p98
        %s1338 = sand.u32 %s68, 1
        %s1339 = scalar_lea.sflag [#allocation7], %s1338
        %s1340 = sand.u32 %s114, 1
        %s1341 = smul.addr %s1340, 4
        %s1342 = scalar_lea.vmem [#allocation6], %s1341
        %p1343 = pneg %p127
        %p1344 = pneg %p124
        %s1345 = sand.u32 %s68, 1
        %s1346 = scalar_lea.sflag [#allocation7], %s1345
        %s1347 = sand.u32 %s140, 1
        %s1348 = scalar_lea.vmem [#allocation8], %s1347
        %p1349 = pneg %p153
        %p1350 = pneg %p150
        %s1351 = sand.u32 %s68, 1
        %s1352 = scalar_lea.sflag [#allocation10], %s1351
        %s1353 = sand.u32 %s166, 1
        %s1354 = scalar_lea.vmem [#allocation9], %s1353
        %p1355 = pneg %p179
        %p1356 = pneg %p176
        %s1357 = sand.u32 %s68, 1
        %s1358 = scalar_lea.sflag [#allocation10], %s1357
        %s1359 = sand.u32 %s192, 1
        %s1360 = scalar_lea.vmem [#allocation11], %s1359
        %p1361 = pneg %p205
        %p1362 = pneg %p202
        %p1363 = scmp.lt.s32.totalorder %s73, 1
        %s1364 = scalar_select %p1363, %s73, 1
        %s1365 = smul.addr %s1364, 4
        %s1366 = smul.addr %s1365, 4
        %s1367 = scalar_lea.vmem %s5, %s1366
        %p1368 = pneg %p231
        %p1369 = pneg %p228
        %s1370 = sand.u32 %s68, 1
        %s1371 = scalar_lea.sflag [#allocation13], %s1370
        %s1372 = sand.u32 %s244, 1
        %s1373 = scalar_lea.vmem [#allocation12], %s1372
        %p1374 = pneg %p257
        %p1375 = pneg %p254
        %p1376 = scmp.lt.s32.totalorder %s73, 1
        %s1377 = scalar_select %p1376, %s73, 1
        %s1378 = smul.addr %s1377, 4
        %s1379 = smul.addr %s1378, 4
        %s1380 = scalar_lea.vmem %s7, %s1379
        %p1381 = pneg %p283
        %p1382 = pneg %p280
        %s1383 = sand.u32 %s68, 1
        %s1384 = scalar_lea.sflag [#allocation13], %s1383
        %s1385 = sand.u32 %s296, 1
        %s1386 = scalar_lea.vmem [#allocation14], %s1385
        %p1387 = pneg %p309
        %p1388 = pneg %p306
        %s1389 = sand.u32 %s68, 1
        %s1390 = scalar_lea.sflag [#allocation16], %s1389
        %s1391 = sand.u32 %s322, 1
        %s1392 = scalar_lea.vmem [#allocation15], %s1391
        %p1393 = pneg %p335
        %p1394 = pneg %p332
        %s1395 = sand.u32 %s68, 1
        %s1396 = scalar_lea.sflag [#allocation16], %s1395
        %s1397 = sand.u32 %s348, 1
        %s1398 = scalar_lea.vmem [#allocation17], %s1397
        %p1399 = pneg %p361
        %p1400 = pneg %p358
        %p1401 = scmp.lt.s32.totalorder %s73, 1
        %s1402 = scalar_select %p1401, %s73, 1
        %s1403 = smul.addr %s1402, 4
        %s1404 = smul.addr %s1403, 4
        %s1405 = scalar_lea.vmem %s11, %s1404
        %p1406 = pneg %p387
        %p1407 = pneg %p384
        %s1408 = sand.u32 %s68, 1
        %s1409 = scalar_lea.sflag [#allocation19], %s1408
        %s1410 = sand.u32 %s400, 1
        %s1411 = scalar_lea.vmem [#allocation18], %s1410
        %p1412 = pneg %p413
        %p1413 = pneg %p410
        %s1414 = sand.u32 %s68, 1
        %s1415 = scalar_lea.sflag [#allocation19], %s1414
        %s1416 = sand.u32 %s426, 1
        %s1417 = smul.addr %s1416, 16
        %s1418 = scalar_lea.vmem [#allocation20], %s1417
        %p1419 = pneg %p439
        %p1420 = pneg %p436
        %s1421 = sand.u32 %s68, 1
        %s1422 = scalar_lea.sflag [#allocation22], %s1421
        %s1423 = sand.u32 %s452, 1
        %s1424 = scalar_lea.vmem [#allocation21], %s1423
        %p1425 = pneg %p465
        %p1426 = pneg %p462
        %s1427 = sand.u32 %s68, 1
        %s1428 = scalar_lea.sflag [#allocation22], %s1427
        %s1429 = sand.u32 %s478, 1
        %s1430 = smul.addr %s1429, 16
        %s1431 = scalar_lea.vmem [#allocation23], %s1430
        %p1432 = pneg %p491
        %p1433 = pneg %p488
        %s1434 = sand.u32 %s68, 1
        %s1435 = scalar_lea.sflag [#allocation25], %s1434
        %s1436 = sand.u32 %s504, 1
        %s1437 = scalar_lea.vmem [#allocation24], %s1436
        %p1438 = pneg %p517
        %p1439 = pneg %p514
        %s1440 = sand.u32 %s68, 1
        %s1441 = scalar_lea.sflag [#allocation25], %s1440
        %s1442 = sand.u32 %s530, 1
        %s1443 = scalar_lea.vmem [#allocation26], %s1442
        %p1444 = pneg %p543
        %p1445 = pneg %p540
        %s1446 = sand.u32 %s68, 1
        %s1447 = scalar_lea.sflag [#allocation28], %s1446
        %s1448 = sand.u32 %s556, 1
        %s1449 = scalar_lea.vmem [#allocation27], %s1448
        %p1450 = pneg %p569
        %p1451 = pneg %p566
        %s1452 = sand.u32 %s68, 1
        %s1453 = scalar_lea.sflag [#allocation28], %s1452
        %s1454 = sand.u32 %s582, 1
        %s1455 = smul.addr %s1454, 16
        %s1456 = scalar_lea.vmem [#allocation29], %s1455
        %p1457 = pneg %p595
        %p1458 = pneg %p592
        %p1459 = scmp.lt.s32.totalorder %s73, 1
        %s1460 = scalar_select %p1459, %s73, 1
        %s1461 = scalar_lea.vmem %s20, %s1460
        %p1462 = pneg %p621
        %p1463 = pneg %p618
        %p1464 = scmp.lt.s32.totalorder %s73, 1
        %s1465 = scalar_select %p1464, %s73, 1
        %s1466 = smul.addr %s1465, 8
        %s1467 = smul.addr %s1466, 4
        %s1468 = scalar_lea.vmem %s21, %s1467
        %p1469 = pneg %p647
        %p1470 = pneg %p644
        %p1471 = scmp.lt.s32.totalorder %s73, 1
        %s1472 = scalar_select %p1471, %s73, 1
        %s1473 = scalar_lea.vmem %s22, %s1472
        %p1474 = pneg %p673
        %p1475 = pneg %p670
        %p1476 = pneg %p694
        %p1477 = pneg %p691
        %p1478 = pneg %p715
        %p1479 = pneg %p712
        %p1480 = pneg %p736
        %p1481 = pneg %p733
        %p1482 = pneg %p757
        %p1483 = pneg %p754
        %p1484 = pneg %p783
        %p1485 = pneg %p780
        %s1486 = sand.u32 %s770, 1
        %s1487 = scalar_lea.sflag [#allocation5], %s1486
        %s1488 = sand.u32 %s770, 1
        %s1489 = smul.addr %s1488, 8
        %s1490 = scalar_lea.vmem [#allocation30], %s1489
        %p1491 = scmp.lt.s32.totalorder %s73, 1
        %s1492 = scalar_select %p1491, %s73, 1
        %s1493 = smul.addr %s1492, 4
        %s1494 = smul.addr %s1493, 4
        %s1495 = scalar_lea.vmem %s5, %s1494
        %p1496 = scmp.lt.s32.totalorder %s73, 1
        %s1497 = scalar_select %p1496, %s73, 1
        %s1498 = smul.addr %s1497, 4
        %s1499 = smul.addr %s1498, 4
        %s1500 = scalar_lea.vmem %s7, %s1499
        %p1501 = scmp.lt.s32.totalorder %s73, 1
        %s1502 = scalar_select %p1501, %s73, 1
        %s1503 = smul.addr %s1502, 4
        %s1504 = smul.addr %s1503, 4
        %s1505 = scalar_lea.vmem %s11, %s1504
        %p1506 = scmp.lt.s32.totalorder %s73, 1
        %s1507 = scalar_select %p1506, %s73, 1
        %s1508 = scalar_lea.vmem %s20, %s1507
        %p1509 = scmp.lt.s32.totalorder %s73, 1
        %s1510 = scalar_select %p1509, %s73, 1
        %s1511 = smul.addr %s1510, 8
        %s1512 = smul.addr %s1511, 4
        %s1513 = scalar_lea.vmem %s21, %s1512
        %p1514 = scmp.lt.s32.totalorder %s73, 1
        %s1515 = scalar_select %p1514, %s73, 1
        %s1516 = scalar_lea.vmem %s22, %s1515
        %p1518 = scmp.eq.s32.totalorder %s73, 0
        // Predicated region
        $region197: #{tpu_custom_call.1} parent=127 // pred_check
          %p1519 = pneg %p1518
        $region198: #{tpu_custom_call.1} parent=127 // pred_check_branch
          %1521 = sbr.rel (%p1519) target = $region200
        $region199: #{tpu_custom_call.1} parent=127 // pred_region
          %v1522 = vld [vmem:[%s1177] sm:$0xff]
          %vm1523 = vcmask 261120
          %1524 = vst.msk [vmem:[#allocation2] sm:$0xff] %vm1523, %v1522
        $region200: #{tpu_custom_call.1} parent=127 // pred_fallthru
          _
        %v1525 = vld [vmem:[#allocation2] sm:$0xff]
        %v1526 = vld [vmem:[%s1196] sm:$0x1]
        %vm1527 = vcmp.gt.f32.partialorder %v1526, 0.0
        %v1528 = vld [vmem:[%s1205] sm:$0x1]
        %v1529 = vld [vmem:[%s1214] sm:$0x1]
        %vm1530 = vcmask 261120
        %v1531 = vsel %vm1530, %v1525, 0.0
        %1532 = vadd.xlane.f32.xlu0 %v1531
        %v1533 = vpop.xlane.xlu0 %1532
        %v1534 = vrcp.pop 32.0
        %v1535 = vmul.f32 32.0, %v1534
        %v1536 = vsub.f32 1.0, %v1535
        %v1537 = vmul.f32 %v1534, %v1536
        %v1538 = vadd.f32 %v1534, %v1537
        %vm1539 = vweird.f32 %v1534
        %v1540 = vsel %vm1539, %v1534, %v1538
        %v1541 = vmul.f32 %v1533, %v1540
        %v1542 = vsub.f32 %v1525, %v1541
        %v1543 = vmul.f32 %v1542, %v1542
        %v1544 = vsel %vm1530, %v1543, 0.0
        %1545 = vadd.xlane.f32.xlu0 %v1544
        %v1546 = vpop.xlane.xlu0 %1545
        %v1547 = vmul.f32 %v1546, %v1540
        %v1548 = vadd.f32 %v1547, 1e-12
        %v1549 = vrsqrt.pop %v1548
        %v1550 = vmul.f32 %v1549, %v1548
        %v1551 = vmul.f32 %v1550, %v1549
        %v1552 = vmul.f32 0.5, %v1551
        %v1553 = vsub.f32 1.5, %v1552
        %v1554 = vmul.f32 %v1549, %v1553
        %vm1555 = vweird.f32 %v1548
        %vm1556 = vweird.f32 %v1549
        %vm1557 = vmor %vm1555, %vm1556
        %v1558 = vsel %vm1557, %v1549, %v1554
        %v1559 = vmul.f32 %v1542, %v1558
        %v1561 = vperm.slane %v1528, 0
        %v1563 = vmul.f32 %v1559, %v1561
        %v1565 = vperm.slane %v1529, 0
        %v1567 = vadd.f32 %v1563, %v1565
        %v1568 = vpack.c.bf16 %v1567, %v1567
        %v1569 = vld [vmem:[%s1495] sm:$0xf]
        %v1570 = vld [vmem:[%s1495 + $0x4] sm:$0xf]
        %v1571 = vld [vmem:[%s1495 + $0x8] sm:$0xf]
        %v1572 = vld [vmem:[%s1495 + $0xc] sm:$0xf]
        %v1573 = vld [vmem:[%s1223] sm:$0x1]
        %v1575 = vperm.slane %v1573, 0
        %v1581 = vunpack.c.l.b16 %v1569
        %v1582 = vunpack.c.l.b16 %v1570
        %v1583 = vunpack.c.l.b16 %v1571
        %v1584 = vunpack.c.l.b16 %v1572
        %v1585 = vpack.c.b16 %v1582, %v1581
        %v1586 = vpack.c.b16 %v1584, %v1583
        %v1590 = vsel %vm1530, %v1568, 0
        %1592 = vmatpush.bf16.msra.mxu0 0
        %1593 = vmatpush.bf16.msra.mxu0 0
        %1594 = vmatpush.bf16.msra.mxu0 0
        %1595 = vmatpush.bf16.msra.mxu0 0
        %1596 = vmatpush.bf16.msra.mxu0 0
        %1597 = vmatpush.bf16.msra.mxu0 0
        %1598 = vmatpush.bf16.msra.mxu0 %v1586
        %1599 = vmatpush.bf16.msra.mxu0 %v1585
        %1600 = vmatmul.bf16.gmra.mxu0 %v1590
        %v1601 = vpop.f32.mrf.mxu0
        %v1602 = vadd.f32 %v1575, %v1601
        %v1603 = vpop.f32.mrf.mxu0
        %1604 = vdwg.mxu0
        %v1605 = vld [vmem:[%s1500] sm:$0xf]
        %v1606 = vld [vmem:[%s1500 + $0x4] sm:$0xf]
        %v1607 = vld [vmem:[%s1500 + $0x8] sm:$0xf]
        %v1608 = vld [vmem:[%s1500 + $0xc] sm:$0xf]
        %v1609 = vld [vmem:[%s1232] sm:$0x1]
        %v1610 = vpack.c.bf16 %v1602, %v1602
        %v1612 = vunpack.c.l.b16 %v1610
        %v1613 = vpack.c.b16 %v1612, %v1612
        %1614 = vrot.lane.b32.xlu0 %v1613, 96
        %v1615 = vpop.permute.xlu0 %1614
        %vm1616 = vcmask 64512
        %v1618 = vsel %vm1616, %v1610, 0
        %v1621 = vsel %vm1616, %v1615, 0
        %1623 = vmatpush.bf16.xpose.msra.mxu0 0
        %1624 = vmatpush.bf16.xpose.msra.mxu0 0
        %1625 = vmatpush.bf16.xpose.msra.mxu0 0
        %1626 = vmatpush.bf16.xpose.msra.mxu0 0
        %1627 = vmatpush.bf16.xpose.msra.mxu0 0
        %1628 = vmatpush.bf16.xpose.msra.mxu0 0
        %1629 = vmatpush.bf16.xpose.msra.mxu0 0
        %1630 = vmatpush.bf16.xpose.msra.mxu0 %v1621
        %1631 = vmatmul.bf16.gmra.mxu0 %v1618
        %v1632 = vpop.f32.mrf.mxu0
        %v1633 = vadd.f32 0.0, %v1632
        %v1634 = vpop.f32.mrf.mxu0
        %1635 = vdwg.mxu0
        %v1636 = vmul.f32 %v1633, 0.35355338
        %v1637 = vsel %vm1616, %v1636, -inf
        %1638 = vmax.xlane.f32.xlu0 %v1637
        %v1639 = vpop.xlane.xlu0 %1638
        %v1640 = vsub.f32 %v1636, %v1639
        %v1641 = vmul.f32 %v1640, 1.442695
        %v1642 = vpow.pop %v1641
        %v1643 = vsel %vm1616, %v1642, 0.0
        %1644 = vadd.xlane.f32.xlu0 %v1643
        %v1645 = vpop.xlane.xlu0 %1644
        %v1646 = vrcp.pop %v1645
        %v1647 = vmul.f32 %v1642, %v1646
        %v1648 = vpack.c.bf16 %v1647, %v1647
        %1649 = vrot.lane.b32.xlu0 %v1613, 64
        %v1650 = vpop.permute.xlu0 %1649
        %v1652 = vsel %vm1616, %v1648, 0
        %vm1654 = vcmask 1043456
        %v1656 = vsel %vm1654, %v1650, 0
        %1658 = vmatpush.bf16.msra.mxu0 0
        %1659 = vmatpush.bf16.msra.mxu0 0
        %1660 = vmatpush.bf16.msra.mxu0 0
        %1661 = vmatpush.bf16.msra.mxu0 0
        %1662 = vmatpush.bf16.msra.mxu0 0
        %1663 = vmatpush.bf16.msra.mxu0 0
        %1664 = vmatpush.bf16.msra.mxu0 0
        %1665 = vmatpush.bf16.msra.mxu0 %v1656
        %1666 = vmatmul.bf16.gmra.mxu0 %v1652
        %v1667 = vpop.f32.mrf.mxu0
        %v1668 = vadd.f32 0.0, %v1667
        %v1669 = vpop.f32.mrf.mxu0
        %1670 = vdwg.mxu0
        %v1671 = vpack.c.bf16 %v1668, %v1668
        %1672 = vrot.lane.b32.xlu0 %v1613, 120
        %v1673 = vpop.permute.xlu0 %1672
        %1674 = vrot.lane.b32.xlu0 %v1613, 88
        %v1675 = vpop.permute.xlu0 %1674
        %v1677 = vsel %vm1616, %v1673, 0
        %v1680 = vsel %vm1616, %v1675, 0
        %1682 = vmatpush.bf16.xpose.msra.mxu0 0
        %1683 = vmatpush.bf16.xpose.msra.mxu0 0
        %1684 = vmatpush.bf16.xpose.msra.mxu0 0
        %1685 = vmatpush.bf16.xpose.msra.mxu0 0
        %1686 = vmatpush.bf16.xpose.msra.mxu0 0
        %1687 = vmatpush.bf16.xpose.msra.mxu0 0
        %1688 = vmatpush.bf16.xpose.msra.mxu0 0
        %1689 = vmatpush.bf16.xpose.msra.mxu0 %v1680
        %1690 = vmatmul.bf16.gmra.mxu0 %v1677
        %v1691 = vpop.f32.mrf.mxu0
        %v1692 = vadd.f32 0.0, %v1691
        %v1693 = vpop.f32.mrf.mxu0
        %1694 = vdwg.mxu0
        %v1695 = vmul.f32 %v1692, 0.35355338
        %v1696 = vsel %vm1616, %v1695, -inf
        %1697 = vmax.xlane.f32.xlu0 %v1696
        %v1698 = vpop.xlane.xlu0 %1697
        %v1699 = vsub.f32 %v1695, %v1698
        %v1700 = vmul.f32 %v1699, 1.442695
        %v1701 = vpow.pop %v1700
        %v1702 = vsel %vm1616, %v1701, 0.0
        %1703 = vadd.xlane.f32.xlu0 %v1702
        %v1704 = vpop.xlane.xlu0 %1703
        %v1705 = vrcp.pop %v1704
        %v1706 = vmul.f32 %v1701, %v1705
        %v1707 = vpack.c.bf16 %v1706, %v1706
        %1708 = vrot.lane.b32.xlu0 %v1613, 56
        %v1709 = vpop.permute.xlu0 %1708
        %v1711 = vsel %vm1616, %v1707, 0
        %v1714 = vsel %vm1654, %v1709, 0
        %1716 = vmatpush.bf16.msra.mxu0 0
        %1717 = vmatpush.bf16.msra.mxu0 0
        %1718 = vmatpush.bf16.msra.mxu0 0
        %1719 = vmatpush.bf16.msra.mxu0 0
        %1720 = vmatpush.bf16.msra.mxu0 0
        %1721 = vmatpush.bf16.msra.mxu0 0
        %1722 = vmatpush.bf16.msra.mxu0 0
        %1723 = vmatpush.bf16.msra.mxu0 %v1714
        %1724 = vmatmul.bf16.gmra.mxu0 %v1711
        %v1725 = vpop.f32.mrf.mxu0
        %v1726 = vadd.f32 0.0, %v1725
        %v1727 = vpop.f32.mrf.mxu0
        %1728 = vdwg.mxu0
        %v1729 = vpack.c.bf16 %v1726, %v1726
        %v1731 = vsel %vm1616, %v1729, 0
        %v1734 = vsel %vm1654, %v1606, 0
        %1736 = vmatpush.bf16.msra.mxu0 0
        %1737 = vmatpush.bf16.msra.mxu0 0
        %1738 = vmatpush.bf16.msra.mxu0 0
        %1739 = vmatpush.bf16.msra.mxu0 0
        %1740 = vmatpush.bf16.msra.mxu0 0
        %1741 = vmatpush.bf16.msra.mxu0 0
        %1742 = vmatpush.bf16.msra.mxu0 0
        %1743 = vmatpush.bf16.msra.mxu0 %v1734
        %1744 = vmatmul.bf16.gmra.mxu0 %v1731
        %v1745 = vpop.f32.mrf.mxu0
        %v1746 = vadd.f32 0.0, %v1745
        %v1747 = vpop.f32.mrf.mxu0
        %1748 = vdwg.mxu0
        %v1750 = vsel %vm1616, %v1671, 0
        %v1753 = vsel %vm1654, %v1605, 0
        %1755 = vmatpush.bf16.msra.mxu0 0
        %1756 = vmatpush.bf16.msra.mxu0 0
        %1757 = vmatpush.bf16.msra.mxu0 0
        %1758 = vmatpush.bf16.msra.mxu0 0
        %1759 = vmatpush.bf16.msra.mxu0 0
        %1760 = vmatpush.bf16.msra.mxu0 0
        %1761 = vmatpush.bf16.msra.mxu0 0
        %1762 = vmatpush.bf16.msra.mxu0 %v1753
        %1763 = vmatmul.bf16.gmra.mxu0 %v1750
        %v1764 = vpop.f32.mrf.mxu0
        %v1765 = vadd.f32 %v1746, %v1764
        %v1766 = vpop.f32.mrf.mxu0
        %1767 = vdwg.mxu0
        %1768 = vrot.lane.b32.xlu0 %v1613, 112
        %v1769 = vpop.permute.xlu0 %1768
        %1770 = vrot.lane.b32.xlu0 %v1613, 80
        %v1771 = vpop.permute.xlu0 %1770
        %v1773 = vsel %vm1616, %v1769, 0
        %v1776 = vsel %vm1616, %v1771, 0
        %1778 = vmatpush.bf16.xpose.msra.mxu0 0
        %1779 = vmatpush.bf16.xpose.msra.mxu0 0
        %1780 = vmatpush.bf16.xpose.msra.mxu0 0
        %1781 = vmatpush.bf16.xpose.msra.mxu0 0
        %1782 = vmatpush.bf16.xpose.msra.mxu0 0
        %1783 = vmatpush.bf16.xpose.msra.mxu0 0
        %1784 = vmatpush.bf16.xpose.msra.mxu0 0
        %1785 = vmatpush.bf16.xpose.msra.mxu0 %v1776
        %1786 = vmatmul.bf16.gmra.mxu0 %v1773
        %v1787 = vpop.f32.mrf.mxu0
        %v1788 = vadd.f32 0.0, %v1787
        %v1789 = vpop.f32.mrf.mxu0
        %1790 = vdwg.mxu0
        %v1791 = vmul.f32 %v1788, 0.35355338
        %v1792 = vsel %vm1616, %v1791, -inf
        %1793 = vmax.xlane.f32.xlu0 %v1792
        %v1794 = vpop.xlane.xlu0 %1793
        %v1795 = vsub.f32 %v1791, %v1794
        %v1796 = vmul.f32 %v1795, 1.442695
        %v1797 = vpow.pop %v1796
        %v1798 = vsel %vm1616, %v1797, 0.0
        %1799 = vadd.xlane.f32.xlu0 %v1798
        %v1800 = vpop.xlane.xlu0 %1799
        %v1801 = vrcp.pop %v1800
        %v1802 = vmul.f32 %v1797, %v1801
        %v1803 = vpack.c.bf16 %v1802, %v1802
        %1804 = vrot.lane.b32.xlu0 %v1613, 48
        %v1805 = vpop.permute.xlu0 %1804
        %v1807 = vsel %vm1616, %v1803, 0
        %v1810 = vsel %vm1654, %v1805, 0
        %1812 = vmatpush.bf16.msra.mxu0 0
        %1813 = vmatpush.bf16.msra.mxu0 0
        %1814 = vmatpush.bf16.msra.mxu0 0
        %1815 = vmatpush.bf16.msra.mxu0 0
        %1816 = vmatpush.bf16.msra.mxu0 0
        %1817 = vmatpush.bf16.msra.mxu0 0
        %1818 = vmatpush.bf16.msra.mxu0 0
        %1819 = vmatpush.bf16.msra.mxu0 %v1810
        %1820 = vmatmul.bf16.gmra.mxu0 %v1807
        %v1821 = vpop.f32.mrf.mxu0
        %v1822 = vadd.f32 0.0, %v1821
        %v1823 = vpop.f32.mrf.mxu0
        %1824 = vdwg.mxu0
        %v1825 = vpack.c.bf16 %v1822, %v1822
        %v1827 = vsel %vm1616, %v1825, 0
        %v1830 = vsel %vm1654, %v1607, 0
        %1832 = vmatpush.bf16.msra.mxu0 0
        %1833 = vmatpush.bf16.msra.mxu0 0
        %1834 = vmatpush.bf16.msra.mxu0 0
        %1835 = vmatpush.bf16.msra.mxu0 0
        %1836 = vmatpush.bf16.msra.mxu0 0
        %1837 = vmatpush.bf16.msra.mxu0 0
        %1838 = vmatpush.bf16.msra.mxu0 0
        %1839 = vmatpush.bf16.msra.mxu0 %v1830
        %1840 = vmatmul.bf16.gmra.mxu0 %v1827
        %v1841 = vpop.f32.mrf.mxu0
        %v1842 = vadd.f32 0.0, %v1841
        %v1843 = vpop.f32.mrf.mxu0
        %1844 = vdwg.mxu0
        %v1845 = vadd.f32 %v1765, %v1842
        %1846 = vrot.lane.b32.xlu0 %v1613, 104
        %v1847 = vpop.permute.xlu0 %1846
        %1848 = vrot.lane.b32.xlu0 %v1613, 72
        %v1849 = vpop.permute.xlu0 %1848
        %v1851 = vsel %vm1616, %v1847, 0
        %v1854 = vsel %vm1616, %v1849, 0
        %1856 = vmatpush.bf16.xpose.msra.mxu0 0
        %1857 = vmatpush.bf16.xpose.msra.mxu0 0
        %1858 = vmatpush.bf16.xpose.msra.mxu0 0
        %1859 = vmatpush.bf16.xpose.msra.mxu0 0
        %1860 = vmatpush.bf16.xpose.msra.mxu0 0
        %1861 = vmatpush.bf16.xpose.msra.mxu0 0
        %1862 = vmatpush.bf16.xpose.msra.mxu0 0
        %1863 = vmatpush.bf16.xpose.msra.mxu0 %v1854
        %1864 = vmatmul.bf16.gmra.mxu0 %v1851
        %v1865 = vpop.f32.mrf.mxu0
        %v1866 = vadd.f32 0.0, %v1865
        %v1867 = vpop.f32.mrf.mxu0
        %1868 = vdwg.mxu0
        %v1869 = vmul.f32 %v1866, 0.35355338
        %v1870 = vsel %vm1616, %v1869, -inf
        %1871 = vmax.xlane.f32.xlu0 %v1870
        %v1872 = vpop.xlane.xlu0 %1871
        %v1873 = vsub.f32 %v1869, %v1872
        %v1874 = vmul.f32 %v1873, 1.442695
        %v1875 = vpow.pop %v1874
        %v1876 = vsel %vm1616, %v1875, 0.0
        %1877 = vadd.xlane.f32.xlu0 %v1876
        %v1878 = vpop.xlane.xlu0 %1877
        %v1879 = vrcp.pop %v1878
        %v1880 = vmul.f32 %v1875, %v1879
        %v1881 = vpack.c.bf16 %v1880, %v1880
        %1882 = vrot.lane.b32.xlu0 %v1613, 40
        %v1883 = vpop.permute.xlu0 %1882
        %v1885 = vsel %vm1616, %v1881, 0
        %v1888 = vsel %vm1654, %v1883, 0
        %1890 = vmatpush.bf16.msra.mxu0 0
        %1891 = vmatpush.bf16.msra.mxu0 0
        %1892 = vmatpush.bf16.msra.mxu0 0
        %1893 = vmatpush.bf16.msra.mxu0 0
        %1894 = vmatpush.bf16.msra.mxu0 0
        %1895 = vmatpush.bf16.msra.mxu0 0
        %1896 = vmatpush.bf16.msra.mxu0 0
        %1897 = vmatpush.bf16.msra.mxu0 %v1888
        %1898 = vmatmul.bf16.gmra.mxu0 %v1885
        %v1899 = vpop.f32.mrf.mxu0
        %v1900 = vadd.f32 0.0, %v1899
        %v1901 = vpop.f32.mrf.mxu0
        %1902 = vdwg.mxu0
        %v1903 = vpack.c.bf16 %v1900, %v1900
        %v1905 = vsel %vm1616, %v1903, 0
        %v1908 = vsel %vm1654, %v1608, 0
        %1910 = vmatpush.bf16.msra.mxu0 0
        %1911 = vmatpush.bf16.msra.mxu0 0
        %1912 = vmatpush.bf16.msra.mxu0 0
        %1913 = vmatpush.bf16.msra.mxu0 0
        %1914 = vmatpush.bf16.msra.mxu0 0
        %1915 = vmatpush.bf16.msra.mxu0 0
        %1916 = vmatpush.bf16.msra.mxu0 0
        %1917 = vmatpush.bf16.msra.mxu0 %v1908
        %1918 = vmatmul.bf16.gmra.mxu0 %v1905
        %v1919 = vpop.f32.mrf.mxu0
        %v1920 = vadd.f32 0.0, %v1919
        %v1921 = vpop.f32.mrf.mxu0
        %1922 = vdwg.mxu0
        %v1923 = vadd.f32 %v1845, %v1920
        %v1925 = vperm.slane %v1609, 0
        %v1927 = vadd.f32 %v1923, %v1925
        %v1928 = vadd.f32 %v1525, %v1927
        %v1929 = vld [vmem:[%s1241] sm:$0x1]
        %v1930 = vld [vmem:[%s1250] sm:$0x1]
        %v1931 = vsel %vm1530, %v1928, 0.0
        %1932 = vadd.xlane.f32.xlu0 %v1931
        %v1933 = vpop.xlane.xlu0 %1932
        %v1934 = vmul.f32 %v1933, %v1540
        %v1935 = vsub.f32 %v1928, %v1934
        %v1936 = vmul.f32 %v1935, %v1935
        %v1937 = vsel %vm1530, %v1936, 0.0
        %1938 = vadd.xlane.f32.xlu0 %v1937
        %v1939 = vpop.xlane.xlu0 %1938
        %v1940 = vmul.f32 %v1939, %v1540
        %v1941 = vadd.f32 %v1940, 1e-12
        %v1942 = vrsqrt.pop %v1941
        %v1943 = vmul.f32 %v1942, %v1941
        %v1944 = vmul.f32 %v1943, %v1942
        %v1945 = vmul.f32 0.5, %v1944
        %v1946 = vsub.f32 1.5, %v1945
        %v1947 = vmul.f32 %v1942, %v1946
        %vm1948 = vweird.f32 %v1941
        %vm1949 = vweird.f32 %v1942
        %vm1950 = vmor %vm1948, %vm1949
        %v1951 = vsel %vm1950, %v1942, %v1947
        %v1952 = vmul.f32 %v1935, %v1951
        %v1954 = vperm.slane %v1929, 0
        %v1956 = vmul.f32 %v1952, %v1954
        %v1958 = vperm.slane %v1930, 0
        %v1960 = vadd.f32 %v1956, %v1958
        %v1961 = vpack.c.bf16 %v1960, %v1960
        %v1962 = vld [vmem:[%s1505] sm:$0xf]
        %v1963 = vld [vmem:[%s1505 + $0x4] sm:$0xf]
        %v1964 = vld [vmem:[%s1505 + $0x8] sm:$0xf]
        %v1965 = vld [vmem:[%s1505 + $0xc] sm:$0xf]
        %v1966 = vld [vmem:[%s1259] sm:$0x1]
        %v1968 = vperm.slane %v1966, 0
        %v1974 = vunpack.c.l.b16 %v1962
        %v1975 = vunpack.c.l.b16 %v1963
        %v1976 = vunpack.c.l.b16 %v1964
        %v1977 = vunpack.c.l.b16 %v1965
        %v1978 = vpack.c.b16 %v1975, %v1974
        %v1979 = vpack.c.b16 %v1977, %v1976
        %v1983 = vsel %vm1530, %v1961, 0
        %1985 = vmatpush.bf16.msra.mxu0 0
        %1986 = vmatpush.bf16.msra.mxu0 0
        %1987 = vmatpush.bf16.msra.mxu0 0
        %1988 = vmatpush.bf16.msra.mxu0 0
        %1989 = vmatpush.bf16.msra.mxu0 0
        %1990 = vmatpush.bf16.msra.mxu0 0
        %1991 = vmatpush.bf16.msra.mxu0 %v1979
        %1992 = vmatpush.bf16.msra.mxu0 %v1978
        %1993 = vmatmul.bf16.gmra.mxu0 %v1983
        %v1994 = vpop.f32.mrf.mxu0
        %v1995 = vadd.f32 %v1968, %v1994
        %v1996 = vpop.f32.mrf.mxu0
        %1997 = vdwg.mxu0
        %v1998 = vld [vmem:[%s1187] sm:$0xf]
        %v1999 = vld [vmem:[%s1269] sm:$0xf]
        %v2000 = vld [vmem:[%s1269 + $0x4] sm:$0xf]
        %v2001 = vld [vmem:[%s1269 + $0x8] sm:$0xf]
        %v2002 = vld [vmem:[%s1269 + $0xc] sm:$0xf]
        %v2003 = vld [vmem:[%s1278] sm:$0x1]
        %v2005 = vperm.slane %v2003, 0
        %v2011 = vunpack.c.l.b16 %v1999
        %v2012 = vunpack.c.l.b16 %v2000
        %v2013 = vunpack.c.l.b16 %v2001
        %v2014 = vunpack.c.l.b16 %v2002
        %v2015 = vpack.c.b16 %v2012, %v2011
        %v2016 = vpack.c.b16 %v2014, %v2013
        %v2020 = vsel %vm1530, %v1998, 0
        %2022 = vmatpush.bf16.msra.mxu0 0
        %2023 = vmatpush.bf16.msra.mxu0 0
        %2024 = vmatpush.bf16.msra.mxu0 0
        %2025 = vmatpush.bf16.msra.mxu0 0
        %2026 = vmatpush.bf16.msra.mxu0 0
        %2027 = vmatpush.bf16.msra.mxu0 0
        %2028 = vmatpush.bf16.msra.mxu0 %v2016
        %2029 = vmatpush.bf16.msra.mxu0 %v2015
        %2030 = vmatmul.bf16.gmra.mxu0 %v2020
        %v2031 = vpop.f32.mrf.mxu0
        %v2032 = vadd.f32 %v2005, %v2031
        %v2033 = vpop.f32.mrf.mxu0
        %2034 = vdwg.mxu0
        %v2035 = vld [vmem:[%s1288] sm:$0xf]
        %v2036 = vld [vmem:[%s1288 + $0x4] sm:$0xf]
        %v2037 = vld [vmem:[%s1288 + $0x8] sm:$0xf]
        %v2038 = vld [vmem:[%s1288 + $0xc] sm:$0xf]
        %v2039 = vld [vmem:[%s1297] sm:$0x1]
        %v2040 = vpack.c.bf16 %v1995, %v1995
        %v2041 = vpack.c.bf16 %v2032, %v2032
        %v2043 = vsel %vm1616, %v2040, 0
        %v2046 = vsel %vm1616, %v2041, 0
        %2048 = vmatpush.bf16.xpose.msra.mxu0 0
        %2049 = vmatpush.bf16.xpose.msra.mxu0 0
        %2050 = vmatpush.bf16.xpose.msra.mxu0 0
        %2051 = vmatpush.bf16.xpose.msra.mxu0 0
        %2052 = vmatpush.bf16.xpose.msra.mxu0 0
        %2053 = vmatpush.bf16.xpose.msra.mxu0 0
        %2054 = vmatpush.bf16.xpose.msra.mxu0 0
        %2055 = vmatpush.bf16.xpose.msra.mxu0 %v2046
        %2056 = vmatmul.bf16.gmra.mxu0 %v2043
        %v2057 = vpop.f32.mrf.mxu0
        %v2058 = vadd.f32 0.0, %v2057
        %v2059 = vpop.f32.mrf.mxu0
        %2060 = vdwg.mxu0
        %v2061 = vmul.f32 %v2058, 0.35355338
        %v2062 = vsel %vm1527, 1, 0
        %v2063 = vperm.slane %v2062, 0
        %vm2064 = vcmp.eq.s32.totalorder %v2063, 1
        %v2065 = vsel %vm2064, %v2061, -3.4028235e+38
        %v2066 = vsel %vm1616, %v2065, -inf
        %2067 = vmax.xlane.f32.xlu0 %v2066
        %v2068 = vpop.xlane.xlu0 %2067
        %v2069 = vsub.f32 %v2065, %v2068
        %v2070 = vmul.f32 %v2069, 1.442695
        %v2071 = vpow.pop %v2070
        %v2072 = vsel %vm1616, %v2071, 0.0
        %2073 = vadd.xlane.f32.xlu0 %v2072
        %v2074 = vpop.xlane.xlu0 %2073
        %v2075 = vrcp.pop %v2074
        %v2076 = vmul.f32 %v2071, %v2075
        %v2077 = vsel %vm2064, %v2076, 0.0
        %v2078 = vpack.c.bf16 %v2077, %v2077
        %v2080 = vunpack.c.l.b16 %v2041
        %v2081 = vpack.c.b16 %v2080, %v2080
        %2082 = vrot.lane.b32.xlu0 %v2081, 96
        %v2083 = vpop.permute.xlu0 %2082
        %v2085 = vsel %vm1616, %v2078, 0
        %v2088 = vsel %vm1654, %v2083, 0
        %2090 = vmatpush.bf16.msra.mxu0 0
        %2091 = vmatpush.bf16.msra.mxu0 0
        %2092 = vmatpush.bf16.msra.mxu0 0
        %2093 = vmatpush.bf16.msra.mxu0 0
        %2094 = vmatpush.bf16.msra.mxu0 0
        %2095 = vmatpush.bf16.msra.mxu0 0
        %2096 = vmatpush.bf16.msra.mxu0 0
        %2097 = vmatpush.bf16.msra.mxu0 %v2088
        %2098 = vmatmul.bf16.gmra.mxu0 %v2085
        %v2099 = vpop.f32.mrf.mxu0
        %v2100 = vadd.f32 0.0, %v2099
        %v2101 = vpop.f32.mrf.mxu0
        %2102 = vdwg.mxu0
        %v2103 = vpack.c.bf16 %v2100, %v2100
        %v2105 = vunpack.c.l.b16 %v2040
        %v2106 = vpack.c.b16 %v2105, %v2105
        %2107 = vrot.lane.b32.xlu0 %v2106, 120
        %v2108 = vpop.permute.xlu0 %2107
        %2109 = vrot.lane.b32.xlu0 %v2081, 120
        %v2110 = vpop.permute.xlu0 %2109
        %v2112 = vsel %vm1616, %v2108, 0
        %v2115 = vsel %vm1616, %v2110, 0
        %2117 = vmatpush.bf16.xpose.msra.mxu0 0
        %2118 = vmatpush.bf16.xpose.msra.mxu0 0
        %2119 = vmatpush.bf16.xpose.msra.mxu0 0
        %2120 = vmatpush.bf16.xpose.msra.mxu0 0
        %2121 = vmatpush.bf16.xpose.msra.mxu0 0
        %2122 = vmatpush.bf16.xpose.msra.mxu0 0
        %2123 = vmatpush.bf16.xpose.msra.mxu0 0
        %2124 = vmatpush.bf16.xpose.msra.mxu0 %v2115
        %2125 = vmatmul.bf16.gmra.mxu0 %v2112
        %v2126 = vpop.f32.mrf.mxu0
        %v2127 = vadd.f32 0.0, %v2126
        %v2128 = vpop.f32.mrf.mxu0
        %2129 = vdwg.mxu0
        %v2130 = vmul.f32 %v2127, 0.35355338
        %v2131 = vsel %vm2064, %v2130, -3.4028235e+38
        %v2132 = vsel %vm1616, %v2131, -inf
        %2133 = vmax.xlane.f32.xlu0 %v2132
        %v2134 = vpop.xlane.xlu0 %2133
        %v2135 = vsub.f32 %v2131, %v2134
        %v2136 = vmul.f32 %v2135, 1.442695
        %v2137 = vpow.pop %v2136
        %v2138 = vsel %vm1616, %v2137, 0.0
        %2139 = vadd.xlane.f32.xlu0 %v2138
        %v2140 = vpop.xlane.xlu0 %2139
        %v2141 = vrcp.pop %v2140
        %v2142 = vmul.f32 %v2137, %v2141
        %v2143 = vsel %vm2064, %v2142, 0.0
        %v2144 = vpack.c.bf16 %v2143, %v2143
        %2145 = vrot.lane.b32.xlu0 %v2081, 88
        %v2146 = vpop.permute.xlu0 %2145
        %v2148 = vsel %vm1616, %v2144, 0
        %v2151 = vsel %vm1654, %v2146, 0
        %2153 = vmatpush.bf16.msra.mxu0 0
        %2154 = vmatpush.bf16.msra.mxu0 0
        %2155 = vmatpush.bf16.msra.mxu0 0
        %2156 = vmatpush.bf16.msra.mxu0 0
        %2157 = vmatpush.bf16.msra.mxu0 0
        %2158 = vmatpush.bf16.msra.mxu0 0
        %2159 = vmatpush.bf16.msra.mxu0 0
        %2160 = vmatpush.bf16.msra.mxu0 %v2151
        %2161 = vmatmul.bf16.gmra.mxu0 %v2148
        %v2162 = vpop.f32.mrf.mxu0
        %v2163 = vadd.f32 0.0, %v2162
        %v2164 = vpop.f32.mrf.mxu0
        %2165 = vdwg.mxu0
        %v2166 = vpack.c.bf16 %v2163, %v2163
        %v2168 = vsel %vm1616, %v2166, 0
        %v2171 = vsel %vm1654, %v2036, 0
        %2173 = vmatpush.bf16.msra.mxu0 0
        %2174 = vmatpush.bf16.msra.mxu0 0
        %2175 = vmatpush.bf16.msra.mxu0 0
        %2176 = vmatpush.bf16.msra.mxu0 0
        %2177 = vmatpush.bf16.msra.mxu0 0
        %2178 = vmatpush.bf16.msra.mxu0 0
        %2179 = vmatpush.bf16.msra.mxu0 0
        %2180 = vmatpush.bf16.msra.mxu0 %v2171
        %2181 = vmatmul.bf16.gmra.mxu0 %v2168
        %v2182 = vpop.f32.mrf.mxu0
        %v2183 = vadd.f32 0.0, %v2182
        %v2184 = vpop.f32.mrf.mxu0
        %2185 = vdwg.mxu0
        %v2187 = vsel %vm1616, %v2103, 0
        %v2190 = vsel %vm1654, %v2035, 0
        %2192 = vmatpush.bf16.msra.mxu0 0
        %2193 = vmatpush.bf16.msra.mxu0 0
        %2194 = vmatpush.bf16.msra.mxu0 0
        %2195 = vmatpush.bf16.msra.mxu0 0
        %2196 = vmatpush.bf16.msra.mxu0 0
        %2197 = vmatpush.bf16.msra.mxu0 0
        %2198 = vmatpush.bf16.msra.mxu0 0
        %2199 = vmatpush.bf16.msra.mxu0 %v2190
        %2200 = vmatmul.bf16.gmra.mxu0 %v2187
        %v2201 = vpop.f32.mrf.mxu0
        %v2202 = vadd.f32 %v2183, %v2201
        %v2203 = vpop.f32.mrf.mxu0
        %2204 = vdwg.mxu0
        %2205 = vrot.lane.b32.xlu0 %v2106, 112
        %v2206 = vpop.permute.xlu0 %2205
        %2207 = vrot.lane.b32.xlu0 %v2081, 112
        %v2208 = vpop.permute.xlu0 %2207
        %v2210 = vsel %vm1616, %v2206, 0
        %v2213 = vsel %vm1616, %v2208, 0
        %2215 = vmatpush.bf16.xpose.msra.mxu0 0
        %2216 = vmatpush.bf16.xpose.msra.mxu0 0
        %2217 = vmatpush.bf16.xpose.msra.mxu0 0
        %2218 = vmatpush.bf16.xpose.msra.mxu0 0
        %2219 = vmatpush.bf16.xpose.msra.mxu0 0
        %2220 = vmatpush.bf16.xpose.msra.mxu0 0
        %2221 = vmatpush.bf16.xpose.msra.mxu0 0
        %2222 = vmatpush.bf16.xpose.msra.mxu0 %v2213
        %2223 = vmatmul.bf16.gmra.mxu0 %v2210
        %v2224 = vpop.f32.mrf.mxu0
        %v2225 = vadd.f32 0.0, %v2224
        %v2226 = vpop.f32.mrf.mxu0
        %2227 = vdwg.mxu0
        %v2228 = vmul.f32 %v2225, 0.35355338
        %v2229 = vsel %vm2064, %v2228, -3.4028235e+38
        %v2230 = vsel %vm1616, %v2229, -inf
        %2231 = vmax.xlane.f32.xlu0 %v2230
        %v2232 = vpop.xlane.xlu0 %2231
        %v2233 = vsub.f32 %v2229, %v2232
        %v2234 = vmul.f32 %v2233, 1.442695
        %v2235 = vpow.pop %v2234
        %v2236 = vsel %vm1616, %v2235, 0.0
        %2237 = vadd.xlane.f32.xlu0 %v2236
        %v2238 = vpop.xlane.xlu0 %2237
        %v2239 = vrcp.pop %v2238
        %v2240 = vmul.f32 %v2235, %v2239
        %v2241 = vsel %vm2064, %v2240, 0.0
        %v2242 = vpack.c.bf16 %v2241, %v2241
        %2243 = vrot.lane.b32.xlu0 %v2081, 80
        %v2244 = vpop.permute.xlu0 %2243
        %v2246 = vsel %vm1616, %v2242, 0
        %v2249 = vsel %vm1654, %v2244, 0
        %2251 = vmatpush.bf16.msra.mxu0 0
        %2252 = vmatpush.bf16.msra.mxu0 0
        %2253 = vmatpush.bf16.msra.mxu0 0
        %2254 = vmatpush.bf16.msra.mxu0 0
        %2255 = vmatpush.bf16.msra.mxu0 0
        %2256 = vmatpush.bf16.msra.mxu0 0
        %2257 = vmatpush.bf16.msra.mxu0 0
        %2258 = vmatpush.bf16.msra.mxu0 %v2249
        %2259 = vmatmul.bf16.gmra.mxu0 %v2246
        %v2260 = vpop.f32.mrf.mxu0
        %v2261 = vadd.f32 0.0, %v2260
        %v2262 = vpop.f32.mrf.mxu0
        %2263 = vdwg.mxu0
        %v2264 = vpack.c.bf16 %v2261, %v2261
        %v2266 = vsel %vm1616, %v2264, 0
        %v2269 = vsel %vm1654, %v2037, 0
        %2271 = vmatpush.bf16.msra.mxu0 0
        %2272 = vmatpush.bf16.msra.mxu0 0
        %2273 = vmatpush.bf16.msra.mxu0 0
        %2274 = vmatpush.bf16.msra.mxu0 0
        %2275 = vmatpush.bf16.msra.mxu0 0
        %2276 = vmatpush.bf16.msra.mxu0 0
        %2277 = vmatpush.bf16.msra.mxu0 0
        %2278 = vmatpush.bf16.msra.mxu0 %v2269
        %2279 = vmatmul.bf16.gmra.mxu0 %v2266
        %v2280 = vpop.f32.mrf.mxu0
        %v2281 = vadd.f32 0.0, %v2280
        %v2282 = vpop.f32.mrf.mxu0
        %2283 = vdwg.mxu0
        %v2284 = vadd.f32 %v2202, %v2281
        %2285 = vrot.lane.b32.xlu0 %v2106, 104
        %v2286 = vpop.permute.xlu0 %2285
        %2287 = vrot.lane.b32.xlu0 %v2081, 104
        %v2288 = vpop.permute.xlu0 %2287
        %v2290 = vsel %vm1616, %v2286, 0
        %v2293 = vsel %vm1616, %v2288, 0
        %2295 = vmatpush.bf16.xpose.msra.mxu0 0
        %2296 = vmatpush.bf16.xpose.msra.mxu0 0
        %2297 = vmatpush.bf16.xpose.msra.mxu0 0
        %2298 = vmatpush.bf16.xpose.msra.mxu0 0
        %2299 = vmatpush.bf16.xpose.msra.mxu0 0
        %2300 = vmatpush.bf16.xpose.msra.mxu0 0
        %2301 = vmatpush.bf16.xpose.msra.mxu0 0
        %2302 = vmatpush.bf16.xpose.msra.mxu0 %v2293
        %2303 = vmatmul.bf16.gmra.mxu0 %v2290
        %v2304 = vpop.f32.mrf.mxu0
        %v2305 = vadd.f32 0.0, %v2304
        %v2306 = vpop.f32.mrf.mxu0
        %2307 = vdwg.mxu0
        %v2308 = vmul.f32 %v2305, 0.35355338
        %v2309 = vsel %vm2064, %v2308, -3.4028235e+38
        %v2310 = vsel %vm1616, %v2309, -inf
        %2311 = vmax.xlane.f32.xlu0 %v2310
        %v2312 = vpop.xlane.xlu0 %2311
        %v2313 = vsub.f32 %v2309, %v2312
        %v2314 = vmul.f32 %v2313, 1.442695
        %v2315 = vpow.pop %v2314
        %v2316 = vsel %vm1616, %v2315, 0.0
        %2317 = vadd.xlane.f32.xlu0 %v2316
        %v2318 = vpop.xlane.xlu0 %2317
        %v2319 = vrcp.pop %v2318
        %v2320 = vmul.f32 %v2315, %v2319
        %v2321 = vsel %vm2064, %v2320, 0.0
        %v2322 = vpack.c.bf16 %v2321, %v2321
        %2323 = vrot.lane.b32.xlu0 %v2081, 72
        %v2324 = vpop.permute.xlu0 %2323
        %v2326 = vsel %vm1616, %v2322, 0
        %v2329 = vsel %vm1654, %v2324, 0
        %2331 = vmatpush.bf16.msra.mxu0 0
        %2332 = vmatpush.bf16.msra.mxu0 0
        %2333 = vmatpush.bf16.msra.mxu0 0
        %2334 = vmatpush.bf16.msra.mxu0 0
        %2335 = vmatpush.bf16.msra.mxu0 0
        %2336 = vmatpush.bf16.msra.mxu0 0
        %2337 = vmatpush.bf16.msra.mxu0 0
        %2338 = vmatpush.bf16.msra.mxu0 %v2329
        %2339 = vmatmul.bf16.gmra.mxu0 %v2326
        %v2340 = vpop.f32.mrf.mxu0
        %v2341 = vadd.f32 0.0, %v2340
        %v2342 = vpop.f32.mrf.mxu0
        %2343 = vdwg.mxu0
        %v2344 = vpack.c.bf16 %v2341, %v2341
        %v2346 = vsel %vm1616, %v2344, 0
        %v2349 = vsel %vm1654, %v2038, 0
        %2351 = vmatpush.bf16.msra.mxu0 0
        %2352 = vmatpush.bf16.msra.mxu0 0
        %2353 = vmatpush.bf16.msra.mxu0 0
        %2354 = vmatpush.bf16.msra.mxu0 0
        %2355 = vmatpush.bf16.msra.mxu0 0
        %2356 = vmatpush.bf16.msra.mxu0 0
        %2357 = vmatpush.bf16.msra.mxu0 0
        %2358 = vmatpush.bf16.msra.mxu0 %v2349
        %2359 = vmatmul.bf16.gmra.mxu0 %v2346
        %v2360 = vpop.f32.mrf.mxu0
        %v2361 = vadd.f32 0.0, %v2360
        %v2362 = vpop.f32.mrf.mxu0
        %2363 = vdwg.mxu0
        %v2364 = vadd.f32 %v2284, %v2361
        %v2366 = vperm.slane %v2039, 0
        %v2368 = vadd.f32 %v2364, %v2366
        %v2369 = vadd.f32 %v1928, %v2368
        %v2370 = vld [vmem:[%s1306] sm:$0x1]
        %v2371 = vld [vmem:[%s1315] sm:$0x1]
        %v2372 = vsel %vm1530, %v2369, 0.0
        %2373 = vadd.xlane.f32.xlu0 %v2372
        %v2374 = vpop.xlane.xlu0 %2373
        %v2375 = vmul.f32 %v2374, %v1540
        %v2376 = vsub.f32 %v2369, %v2375
        %v2377 = vmul.f32 %v2376, %v2376
        %v2378 = vsel %vm1530, %v2377, 0.0
        %2379 = vadd.xlane.f32.xlu0 %v2378
        %v2380 = vpop.xlane.xlu0 %2379
        %v2381 = vmul.f32 %v2380, %v1540
        %v2382 = vadd.f32 %v2381, 1e-12
        %v2383 = vrsqrt.pop %v2382
        %v2384 = vmul.f32 %v2383, %v2382
        %v2385 = vmul.f32 %v2384, %v2383
        %v2386 = vmul.f32 0.5, %v2385
        %v2387 = vsub.f32 1.5, %v2386
        %v2388 = vmul.f32 %v2383, %v2387
        %vm2389 = vweird.f32 %v2382
        %vm2390 = vweird.f32 %v2383
        %vm2391 = vmor %vm2389, %vm2390
        %v2392 = vsel %vm2391, %v2383, %v2388
        %v2393 = vmul.f32 %v2376, %v2392
        %v2395 = vperm.slane %v2370, 0
        %v2397 = vmul.f32 %v2393, %v2395
        %v2399 = vperm.slane %v2371, 0
        %v2401 = vadd.f32 %v2397, %v2399
        %v2402 = vpack.c.bf16 %v2401, %v2401
        %v2403 = vld [vmem:[%s1325] sm:$0xf]
        %v2404 = vld [vmem:[%s1325 + $0x4] sm:$0xf]
        %v2405 = vld [vmem:[%s1325 + $0x8] sm:$0xf]
        %v2406 = vld [vmem:[%s1325 + $0xc] sm:$0xf]
        %v2407 = vld [vmem:[%s1508] sm:$0x1]
        %v2409 = vperm.slane %v2407, 0
        %v2415 = vunpack.c.l.b16 %v2403
        %v2416 = vunpack.c.l.b16 %v2404
        %v2417 = vunpack.c.l.b16 %v2405
        %v2418 = vunpack.c.l.b16 %v2406
        %v2419 = vpack.c.b16 %v2416, %v2415
        %v2420 = vpack.c.b16 %v2418, %v2417
        %v2424 = vsel %vm1530, %v2402, 0
        %2426 = vmatpush.bf16.msra.mxu0 0
        %2427 = vmatpush.bf16.msra.mxu0 0
        %2428 = vmatpush.bf16.msra.mxu0 0
        %2429 = vmatpush.bf16.msra.mxu0 0
        %2430 = vmatpush.bf16.msra.mxu0 0
        %2431 = vmatpush.bf16.msra.mxu0 0
        %2432 = vmatpush.bf16.msra.mxu0 %v2420
        %2433 = vmatpush.bf16.msra.mxu0 %v2419
        %2434 = vmatmul.bf16.gmra.mxu0 %v2424
        %v2435 = vpop.f32.mrf.mxu0
        %v2436 = vadd.f32 %v2409, %v2435
        %v2437 = vpop.f32.mrf.mxu0
        %2438 = vdwg.mxu0
        %v2439 = vmax.f32 %v2436, 0.0
        %v2440 = vpack.c.bf16 %v2439, %v2439
        %v2441 = vld [vmem:[%s1513] sm:$0xf]
        %v2442 = vld [vmem:[%s1513 + $0x4] sm:$0xf]
        %v2443 = vld [vmem:[%s1513 + $0x8] sm:$0xf]
        %v2444 = vld [vmem:[%s1513 + $0xc] sm:$0xf]
        %v2445 = vld [vmem:[%s1513 + $0x10] sm:$0xf]
        %v2446 = vld [vmem:[%s1513 + $0x14] sm:$0xf]
        %v2447 = vld [vmem:[%s1513 + $0x18] sm:$0xf]
        %v2448 = vld [vmem:[%s1513 + $0x1c] sm:$0xf]
        %v2449 = vld [vmem:[%s1516] sm:$0x1]
        %v2451 = vperm.slane %v2449, 0
        %v2461 = vunpack.c.l.b16 %v2441
        %v2462 = vunpack.c.l.b16 %v2442
        %v2463 = vunpack.c.l.b16 %v2443
        %v2464 = vunpack.c.l.b16 %v2444
        %v2465 = vunpack.c.l.b16 %v2445
        %v2466 = vunpack.c.l.b16 %v2446
        %v2467 = vunpack.c.l.b16 %v2447
        %v2468 = vunpack.c.l.b16 %v2448
        %v2469 = vpack.c.b16 %v2462, %v2461
        %v2470 = vpack.c.b16 %v2464, %v2463
        %v2471 = vpack.c.b16 %v2466, %v2465
        %v2472 = vpack.c.b16 %v2468, %v2467
        %vm2477 = vcmask 523264
        %v2479 = vsel %vm2477, %v2440, 0
        %2481 = vmatpush.bf16.msra.mxu0 0
        %2482 = vmatpush.bf16.msra.mxu0 0
        %2483 = vmatpush.bf16.msra.mxu0 0
        %2484 = vmatpush.bf16.msra.mxu0 0
        %2485 = vmatpush.bf16.msra.mxu0 %v2472
        %2486 = vmatpush.bf16.msra.mxu0 %v2471
        %2487 = vmatpush.bf16.msra.mxu0 %v2470
        %2488 = vmatpush.bf16.msra.mxu0 %v2469
        %2489 = vmatmul.bf16.gmra.mxu0 %v2479
        %v2490 = vpop.f32.mrf.mxu0
        %v2491 = vadd.f32 %v2451, %v2490
        %v2492 = vpop.f32.mrf.mxu0
        %2493 = vdwg.mxu0
        %v2494 = vadd.f32 %v2369, %v2491
        %2495 = vst.msk [vmem:[#allocation2] sm:$0xff] %vm1530, %v2494
        %p2496 = scmp.eq.s32.totalorder %s73, 1
        // Predicated region
        $region201: #{tpu_custom_call.1} parent=127 // pred_check
          %p2497 = pneg %p2496
        $region202: #{tpu_custom_call.1} parent=127 // pred_check_branch
          %2499 = sbr.rel (%p2497) target = $region204
        $region203: #{tpu_custom_call.1} parent=127 // pred_region
          %v2500 = vld [vmem:[%s23] sm:$0x1]
          %v2501 = vld [vmem:[%s24] sm:$0x1]
          %v2502 = vsel %vm1530, %v2494, 0.0
          %2503 = vadd.xlane.f32.xlu0 %v2502
          %v2504 = vpop.xlane.xlu0 %2503
          %v2505 = vmul.f32 %v2504, %v1540
          %v2506 = vsub.f32 %v2494, %v2505
          %v2507 = vmul.f32 %v2506, %v2506
          %v2508 = vsel %vm1530, %v2507, 0.0
          %2509 = vadd.xlane.f32.xlu0 %v2508
          %v2510 = vpop.xlane.xlu0 %2509
          %v2511 = vmul.f32 %v2510, %v1540
          %v2512 = vadd.f32 %v2511, 1e-12
          %v2513 = vrsqrt.pop %v2512
          %v2514 = vmul.f32 %v2513, %v2512
          %v2515 = vmul.f32 %v2514, %v2513
          %v2516 = vmul.f32 0.5, %v2515
          %v2517 = vsub.f32 1.5, %v2516
          %v2518 = vmul.f32 %v2513, %v2517
          %vm2519 = vweird.f32 %v2512
          %vm2520 = vweird.f32 %v2513
          %vm2521 = vmor %vm2519, %vm2520
          %v2522 = vsel %vm2521, %v2513, %v2518
          %v2523 = vmul.f32 %v2506, %v2522
          %v2525 = vperm.slane %v2500, 0
          %v2527 = vmul.f32 %v2523, %v2525
          %v2529 = vperm.slane %v2501, 0
          %v2531 = vadd.f32 %v2527, %v2529
          %v2532 = vpack.c.bf16 %v2531, %v2531
          %v2533 = vld [vmem:[%s25] sm:$0xf]
          %v2534 = vld [vmem:[%s25 + $0x4] sm:$0xf]
          %v2535 = vld [vmem:[%s25 + $0x8] sm:$0xf]
          %v2536 = vld [vmem:[%s25 + $0xc] sm:$0xf]
          %v2537 = vld [vmem:[%s26] sm:$0x1]
          %v2539 = vperm.slane %v2537, 0
          %v2545 = vunpack.c.l.b16 %v2533
          %v2546 = vunpack.c.l.b16 %v2534
          %v2547 = vunpack.c.l.b16 %v2535
          %v2548 = vunpack.c.l.b16 %v2536
          %v2549 = vpack.c.b16 %v2546, %v2545
          %v2550 = vpack.c.b16 %v2548, %v2547
          %v2554 = vsel %vm1530, %v2532, 0
          %2556 = vmatpush.bf16.msra.mxu0 0
          %2557 = vmatpush.bf16.msra.mxu0 0
          %2558 = vmatpush.bf16.msra.mxu0 0
          %2559 = vmatpush.bf16.msra.mxu0 0
          %2560 = vmatpush.bf16.msra.mxu0 0
          %2561 = vmatpush.bf16.msra.mxu0 0
          %2562 = vmatpush.bf16.msra.mxu0 %v2550
          %2563 = vmatpush.bf16.msra.mxu0 %v2549
          %2564 = vmatmul.bf16.gmra.mxu0 %v2554
          %v2565 = vpop.f32.mrf.mxu0
          %v2566 = vadd.f32 %v2539, %v2565
          %v2567 = vpop.f32.mrf.mxu0
          %2568 = vdwg.mxu0
          %2569 = vst [vmem:[%s1490] sm:$0xff] %v2566
        $region204: #{tpu_custom_call.1} parent=127 // pred_fallthru
          _
        %s2570 = sand.u32 %s770, 1
        %s2571 = scalar_lea.sflag [#allocation5], %s2570
        %s2572 = sand.u32 %s770, 1
        %s2573 = smul.addr %s2572, 8
        %s2574 = scalar_lea.vmem [#allocation30], %s2573
        // Predicated region
        $region205: #{tpu_custom_call.1} parent=127 // pred_check
          %p2575 = pneg %p780
        $region206: #{tpu_custom_call.1} parent=127 // pred_check_branch
          %2577 = sbr.rel (%p2575) target = $region208
        $region207: #{tpu_custom_call.1} parent=127 // pred_region
          %2579 = vsyncadd %s2571, 0
          %s2580 = smul.addr %s72, 8
          %s2581 = scalar_lea.hbm %s27, %s2580
          %s2583 = sshll.u32 %s2574, 4
          %s2584 = int_to_ptr.vmem [resolvable:$true] %s2583
          %s2585 = sshll.u32 %s2581, 4
          %s2586 = int_to_ptr.hbm [resolvable:$true] %s2585
          %2588 = dma.vmem_to_hbm [thread:$0]  %s2584, 128, %s2586, %s2571
        $region208: #{tpu_custom_call.1} parent=127 // pred_fallthru
          _
      $region128: #{tpu_custom_call.1} parent=5 // pred_fallthru
        _
      %p2589 = scmp.le.s32.totalorder 2, %s63
      // Predicated region
      $region209: #{tpu_custom_call.1} parent=5 // pred_check
        %p2590 = pneg %p2589
      $region210: #{tpu_custom_call.1} parent=5 // pred_check_branch
        %2592 = sbr.rel (%p2590) target = $region212
      $region211: #{tpu_custom_call.1} parent=5 // pred_region
        %s2593 = ssub.s32 %s63, 2
        // Predicated region
        $region213: #{tpu_custom_call.1} parent=211 // pred_check
          %p2594 = pneg %p786
        $region214: #{tpu_custom_call.1} parent=211 // pred_check_branch
          %2596 = sbr.rel (%p2594) target = $region216
        $region215: #{tpu_custom_call.1} parent=211 // pred_region
          %s2597 = sand.u32 %s771, 1
          %s2598 = scalar_lea.sflag [#allocation5], %s2597
          %s2599 = sand.u32 %s771, 1
          %s2600 = smul.addr %s2599, 8
          %s2601 = scalar_lea.vmem [#allocation30], %s2600
          %2603 = dma.done %s2598, 128
        $region216: #{tpu_custom_call.1} parent=211 // pred_fallthru
          _
      $region212: #{tpu_custom_call.1} parent=5 // pred_fallthru
        _
    $region6: #{tpu_custom_call.1} parent=1 // loop_footer
      %s67 = sadd.s32 1, %s63
    $region7: #{tpu_custom_call.1} parent=1 // loop_footer_branch
      %62 = sbr.rel target = $region3
    $region8: #{tpu_custom_call.1} parent=1 // loop_exit
      _
    %2604 = vsyncpa [#allocation4], 1
    %s2605 = scalar_lea.sflag [#allocation4], 1
    %2606 = vsyncpa %s2605, 1
    %2607 = vsyncpa [#allocation7], 1
    %s2608 = scalar_lea.sflag [#allocation7], 1
    %2609 = vsyncpa %s2608, 1
    %2610 = vsyncpa [#allocation10], 1
    %s2611 = scalar_lea.sflag [#allocation10], 1
    %2612 = vsyncpa %s2611, 1
    %2613 = vsyncpa [#allocation13], 1
    %s2614 = scalar_lea.sflag [#allocation13], 1
    %2615 = vsyncpa %s2614, 1
    %2616 = vsyncpa [#allocation16], 1
    %s2617 = scalar_lea.sflag [#allocation16], 1
    %2618 = vsyncpa %s2617, 1
    %2619 = vsyncpa [#allocation19], 1
    %s2620 = scalar_lea.sflag [#allocation19], 1
    %2621 = vsyncpa %s2620, 1
    %2622 = vsyncpa [#allocation22], 1
    %s2623 = scalar_lea.sflag [#allocation22], 1
    %2624 = vsyncpa %s2623, 1
    %2625 = vsyncpa [#allocation25], 1
    %s2626 = scalar_lea.sflag [#allocation25], 1
    %2627 = vsyncpa %s2626, 1
    %2628 = vsyncpa [#allocation28], 1
    %s2629 = scalar_lea.sflag [#allocation28], 1
    %2630 = vsyncpa %s2629, 1
    %2631 = vsyncpa [#allocation5], 1
    %s2632 = scalar_lea.sflag [#allocation5], 1
    %2633 = vsyncpa %s2632, 1

// kernel: tpu_custom_call.1
$region0: #{tpu_custom_call.1}
  #allocation0 [shape = 'u32[]', space=smem, size = 0x4, offset = 0x4, fixed_abs, tag = 'smem constant byte address 0x4 - core index']
  #allocation1 [shape = 'u32[72,128]{1,0:T(1,128)}', space=vmem, size = 0x9000, scoped, tag = 'internal scratch']
  #allocation2 [shape = 'f32[8,32]{1,0:T(8,128)}', space=vmem, size = 0x1000, scoped, tag = 'scratch operand']
  %s0 = inlined_call_operand.hbm [shape: f32[2,8,32], index: 0, kind: input, shape index: {}]
  %s1 = inlined_call_operand.hbm [shape: bf16[2,8,32], index: 1, kind: input, shape index: {}]
  %s2 = inlined_call_operand.hbm [shape: f32[2,1,8], index: 2, kind: input, shape index: {}]
  %s3 = inlined_call_operand.hbm [shape: f32[2,1,32], index: 3, kind: input, shape index: {}]
  %s4 = inlined_call_operand.hbm [shape: f32[2,1,32], index: 4, kind: input, shape index: {}]
  %s5 = inlined_call_operand.vmem [shape: bf16[2,32,96], index: 5, kind: input, shape index: {}]
  %s6 = inlined_call_operand.hbm [shape: f32[2,1,96], index: 6, kind: input, shape index: {}]
  %s7 = inlined_call_operand.vmem [shape: bf16[2,32,32], index: 7, kind: input, shape index: {}]
  %s8 = inlined_call_operand.hbm [shape: f32[2,1,32], index: 8, kind: input, shape index: {}]
  %s9 = inlined_call_operand.hbm [shape: f32[2,1,32], index: 9, kind: input, shape index: {}]
  %s10 = inlined_call_operand.hbm [shape: f32[2,1,32], index: 10, kind: input, shape index: {}]
  %s11 = inlined_call_operand.vmem [shape: bf16[2,32,32], index: 11, kind: input, shape index: {}]
  %s12 = inlined_call_operand.hbm [shape: f32[2,1,32], index: 12, kind: input, shape index: {}]
  %s13 = inlined_call_operand.hbm [shape: bf16[2,32,64], index: 13, kind: input, shape index: {}]
  %s14 = inlined_call_operand.hbm [shape: f32[2,1,64], index: 14, kind: input, shape index: {}]
  %s15 = inlined_call_operand.hbm [shape: bf16[2,32,32], index: 15, kind: input, shape index: {}]
  %s16 = inlined_call_operand.hbm [shape: f32[2,1,32], index: 16, kind: input, shape index: {}]
  %s17 = inlined_call_operand.hbm [shape: f32[2,1,32], index: 17, kind: input, shape index: {}]
  %s18 = inlined_call_operand.hbm [shape: f32[2,1,32], index: 18, kind: input, shape index: {}]
  %s19 = inlined_call_operand.hbm [shape: bf16[2,32,64], index: 19, kind: input, shape index: {}]
  %s20 = inlined_call_operand.vmem [shape: f32[2,1,64], index: 20, kind: input, shape index: {}]
  %s21 = inlined_call_operand.vmem [shape: bf16[2,64,32], index: 21, kind: input, shape index: {}]
  %s22 = inlined_call_operand.vmem [shape: f32[2,1,32], index: 22, kind: input, shape index: {}]
  %s23 = inlined_call_operand.vmem [shape: f32[1,32], index: 23, kind: input, shape index: {}]
  %s24 = inlined_call_operand.vmem [shape: f32[1,32], index: 24, kind: input, shape index: {}]
  %s25 = inlined_call_operand.vmem [shape: bf16[32,128], index: 25, kind: input, shape index: {}]
  %s26 = inlined_call_operand.vmem [shape: f32[1,128], index: 26, kind: input, shape index: {}]
  %s27 = inlined_call_operand.hbm [shape: f32[2,8,128], index: 27, kind: output, shape index: {}]
  %s28 = sld [smem:[#allocation0]]
  $region217: #{tpu_custom_call.1} parent=0
    _
  %s30 = ssub.s32 1, %s28
  %s31 = scalar_select 0, %s30, %s28
  $region1: #{tpu_custom_call.1} parent=0
    #allocation3 [shape = 'u8[8192]{0}', space=vmem, size = 0x2000, scoped, tag = 'input window, operand 0']
    #allocation4 [shape = 's32[2]{0}', space=sflag, size = 0x8, scoped, tag = 'scoped memory for tpu_custom_call.1']
    #allocation5 [shape = 's32[2]{0}', space=sflag, size = 0x8, scoped, tag = 'scoped memory for tpu_custom_call.1']
    #allocation6 [shape = 'u8[4096]{0}', space=vmem, size = 0x1000, scoped, tag = 'input window, operand 1']
    #allocation7 [shape = 's32[2]{0}', space=sflag, size = 0x8, scoped, tag = 'scoped memory for tpu_custom_call.1']
    #allocation8 [shape = 'u8[1024]{0}', space=vmem, size = 0x400, scoped, tag = 'input window, operand 2']
    #allocation9 [shape = 'u8[1024]{0}', space=vmem, size = 0x400, scoped, tag = 'input window, operand 3']
    #allocation10 [shape = 's32[2]{0}', space=sflag, size = 0x8, scoped, tag = 'scoped memory for tpu_custom_call.1']
    #allocation11 [shape = 'u8[1024]{0}', space=vmem, size = 0x400, scoped, tag = 'input window, operand 4']
    #allocation12 [shape = 'u8[1024]{0}', space=vmem, size = 0x400, scoped, tag = 'input window, operand 6']
    #allocation13 [shape = 's32[2]{0}', space=sflag, size = 0x8, scoped, tag = 'scoped memory for tpu_custom_call.1']
    #allocation14 [shape = 'u8[1024]{0}', space=vmem, size = 0x400, scoped, tag = 'input window, operand 8']
    #allocation15 [shape = 'u8[1024]{0}', space=vmem, size = 0x400, scoped, tag = 'input window, operand 9']
    #allocation16 [shape = 's32[2]{0}', space=sflag, size = 0x8, scoped, tag = 'scoped memory for tpu_custom_call.1']
    #allocation17 [shape = 'u8[1024]{0}', space=vmem, size = 0x400, scoped, tag = 'input window, operand 10']
    #allocation18 [shape = 'u8[1024]{0}', space=vmem, size = 0x400, scoped, tag = 'input window, operand 12']
    #allocation19 [shape = 's32[2]{0}', space=sflag, size = 0x8, scoped, tag = 'scoped memory for tpu_custom_call.1']
    #allocation20 [shape = 'u8[16384]{0}', space=vmem, size = 0x4000, scoped, tag = 'input window, operand 13']
    #allocation21 [shape = 'u8[1024]{0}', space=vmem, size = 0x400, scoped, tag = 'input window, operand 14']
    #allocation22 [shape = 's32[2]{0}', space=sflag, size = 0x8, scoped, tag = 'scoped memory for tpu_custom_call.1']
    #allocation23 [shape = 'u8[16384]{0}', space=vmem, size = 0x4000, scoped, tag = 'input window, operand 15']
    #allocation24 [shape = 'u8[1024]{0}', space=vmem, size = 0x400, scoped, tag = 'input window, operand 16']
    #allocation25 [shape = 's32[2]{0}', space=sflag, size = 0x8, scoped, tag = 'scoped memory for tpu_custom_call.1']
    #allocation26 [shape = 'u8[1024]{0}', space=vmem, size = 0x400, scoped, tag = 'input window, operand 17']
    #allocation27 [shape = 'u8[1024]{0}', space=vmem, size = 0x400, scoped, tag = 'input window, operand 18']
    #allocation28 [shape = 's32[2]{0}', space=sflag, size = 0x8, scoped, tag = 'scoped memory for tpu_custom_call.1']
    #allocation29 [shape = 'u8[16384]{0}', space=vmem, size = 0x4000, scoped, tag = 'input window, operand 19']
    #allocation30 [shape = 'u8[8192]{0}', space=vmem, size = 0x2000, scoped, tag = 'output window, operand 0']
    %32 = vsyncpa [#allocation4], 0
    %s33 = scalar_lea.sflag [#allocation4], 1
    %34 = vsyncpa %s33, 0
    %35 = vsyncpa [#allocation7], 0
    %s36 = scalar_lea.sflag [#allocation7], 1
    %37 = vsyncpa %s36, 0
    %38 = vsyncpa [#allocation10], 0
    %s39 = scalar_lea.sflag [#allocation10], 1
    %40 = vsyncpa %s39, 0
    %41 = vsyncpa [#allocation13], 0
    %s42 = scalar_lea.sflag [#allocation13], 1
    %43 = vsyncpa %s42, 0
    %44 = vsyncpa [#allocation16], 0
    %s45 = scalar_lea.sflag [#allocation16], 1
    %46 = vsyncpa %s45, 0
    %47 = vsyncpa [#allocation19], 0
    %s48 = scalar_lea.sflag [#allocation19], 1
    %49 = vsyncpa %s48, 0
    %50 = vsyncpa [#allocation22], 0
    %s51 = scalar_lea.sflag [#allocation22], 1
    %52 = vsyncpa %s51, 0
    %53 = vsyncpa [#allocation25], 0
    %s54 = scalar_lea.sflag [#allocation25], 1
    %55 = vsyncpa %s54, 0
    %56 = vsyncpa [#allocation28], 0
    %s57 = scalar_lea.sflag [#allocation28], 1
    %58 = vsyncpa %s57, 0
    %59 = vsyncpa [#allocation5], 0
    %s60 = scalar_lea.sflag [#allocation5], 1
    %61 = vsyncpa %s60, 0
    loop: start=0, step=1, limit=6
    $region2: #{tpu_custom_call.1} parent=1 // loop_pre_header
      _
    $region3: #{tpu_custom_call.1} parent=1 // loop_header
      %s63 = sphi 0, %s67
      %p64 = scmp.ge.s32.totalorder %s63, 6
      %s70 = sphi 0, %s82
      %s71 = sphi 0, %s78
      %s72 = sphi 0, %s70
      %s73 = sphi 0, %s71
      %s74 = sphi 0, %s72
      %s75 = sphi 0, %s73
      %s85 = sphi 0, %s87
      %s88 = sphi 0, %s85
      %s89 = sphi 0, %s88
      %s105 = sphi 0, %s89
      %s111 = sphi 0, %s113
      %s114 = sphi 0, %s111
      %s115 = sphi 0, %s114
      %s131 = sphi 0, %s115
      %s137 = sphi 0, %s139
      %s140 = sphi 0, %s137
      %s141 = sphi 0, %s140
      %s157 = sphi 0, %s141
      %s163 = sphi 0, %s165
      %s166 = sphi 0, %s163
      %s167 = sphi 0, %s166
      %s183 = sphi 0, %s167
      %s189 = sphi 0, %s191
      %s192 = sphi 0, %s189
      %s193 = sphi 0, %s192
      %s209 = sphi 0, %s193
      %s215 = sphi 0, %s217
      %s218 = sphi 0, %s215
      %s219 = sphi 0, %s218
      %s235 = sphi 0, %s219
      %s241 = sphi 0, %s243
      %s244 = sphi 0, %s241
      %s245 = sphi 0, %s244
      %s261 = sphi 0, %s245
      %s267 = sphi 0, %s269
      %s270 = sphi 0, %s267
      %s271 = sphi 0, %s270
      %s287 = sphi 0, %s271
      %s293 = sphi 0, %s295
      %s296 = sphi 0, %s293
      %s297 = sphi 0, %s296
      %s313 = sphi 0, %s297
      %s319 = sphi 0, %s321
      %s322 = sphi 0, %s319
      %s323 = sphi 0, %s322
      %s339 = sphi 0, %s323
      %s345 = sphi 0, %s347
      %s348 = sphi 0, %s345
      %s349 = sphi 0, %s348
      %s365 = sphi 0, %s349
      %s371 = sphi 0, %s373
      %s374 = sphi 0, %s371
      %s375 = sphi 0, %s374
      %s391 = sphi 0, %s375
      %s397 = sphi 0, %s399
      %s400 = sphi 0, %s397
      %s401 = sphi 0, %s400
      %s417 = sphi 0, %s401
      %s423 = sphi 0, %s425
      %s426 = sphi 0, %s423
      %s427 = sphi 0, %s426
      %s443 = sphi 0, %s427
      %s449 = sphi 0, %s451
      %s452 = sphi 0, %s449
      %s453 = sphi 0, %s452
      %s469 = sphi 0, %s453
      %s475 = sphi 0, %s477
      %s478 = sphi 0, %s475
      %s479 = sphi 0, %s478
      %s495 = sphi 0, %s479
      %s501 = sphi 0, %s503
      %s504 = sphi 0, %s501
      %s505 = sphi 0, %s504
      %s521 = sphi 0, %s505
      %s527 = sphi 0, %s529
      %s530 = sphi 0, %s527
      %s531 = sphi 0, %s530
      %s547 = sphi 0, %s531
      %s553 = sphi 0, %s555
      %s556 = sphi 0, %s553
      %s557 = sphi 0, %s556
      %s573 = sphi 0, %s557
      %s579 = sphi 0, %s581
      %s582 = sphi 0, %s579
      %s583 = sphi 0, %s582
      %s599 = sphi 0, %s583
      %s605 = sphi 0, %s607
      %s608 = sphi 0, %s605
      %s609 = sphi 0, %s608
      %s625 = sphi 0, %s609
      %s631 = sphi 0, %s633
      %s634 = sphi 0, %s631
      %s635 = sphi 0, %s634
      %s651 = sphi 0, %s635
      %s657 = sphi 0, %s659
      %s660 = sphi 0, %s657
      %s661 = sphi 0, %s660
      %s677 = sphi 0, %s661
      %s681 = sphi 0, %s681
      %s683 = sphi 0, %s681
      %s684 = sphi 0, %s683
      %s698 = sphi 0, %s684
      %s702 = sphi 0, %s702
      %s704 = sphi 0, %s702
      %s705 = sphi 0, %s704
      %s719 = sphi 0, %s705
      %s723 = sphi 0, %s723
      %s725 = sphi 0, %s723
      %s726 = sphi 0, %s725
      %s740 = sphi 0, %s726
      %s744 = sphi 0, %s744
      %s746 = sphi 0, %s744
      %s747 = sphi 0, %s746
      %s761 = sphi 0, %s747
      %s767 = sphi 0, %s769
      %s770 = sphi 0, %s767
      %s771 = sphi 0, %s770
      %s787 = sphi 0, %s771
    $region4: #{tpu_custom_call.1} parent=1 // loop_header_branch
      %66 = sbr.rel (%p64) target = $region8
    $region5: #{tpu_custom_call.1} parent=1 // loop_body
      %s68 = ssub.s32 %s63, 1
      %s69 = ssub.s32 %s63, 2
      %s76 = sadd.s32 1, %s71
      %p77 = scmp.ge.s32.totalorder %s76, 2
      %s78 = scalar_select %p77, 0, %s76
      %s79 = sadd.s32 1, %s70
      %s80 = scalar_select %p77, %s79, %s70
      %p81 = scmp.ge.s32.totalorder %s80, 2
      %s82 = scalar_select %p81, 0, %s80
      %s83 = ssub.s32 %s70, %s82
      %p84 = scmp.eq.s32.totalorder %s83, 0
      %s86 = sadd.s32 %s85, 1
      %s87 = scalar_select %p84, %s85, %s86
      %p90 = pneg %p84
      %p91 = scmp.eq.s32.totalorder %s63, 3
      %p92 = por %p90, %p91
      %p93 = scmp.ne.s32.totalorder %s85, %s88
      %p94 = scmp.eq.s32.totalorder %s63, 0
      %p95 = por %p93, %p94
      %p96 = scmp.ne.s32.totalorder %s85, %s88
      %p97 = scmp.eq.s32.totalorder %s68, 3
      %p98 = por %p96, %p97
      %p99 = scmp.ne.s32.totalorder %s88, %s89
      %p100 = scmp.eq.s32.totalorder %s68, 0
      %p101 = por %p99, %p100
      %p102 = scmp.ne.s32.totalorder %s88, %s89
      %p103 = scmp.eq.s32.totalorder %s69, 3
      %p104 = por %p102, %p103
      %p106 = scmp.ne.s32.totalorder %s89, %s105
      %p107 = scmp.eq.s32.totalorder %s69, 0
      %p108 = por %p106, %p107
      %s109 = ssub.s32 %s70, %s82
      %p110 = scmp.eq.s32.totalorder %s109, 0
      %s112 = sadd.s32 %s111, 1
      %s113 = scalar_select %p110, %s111, %s112
      %p116 = pneg %p110
      %p117 = scmp.eq.s32.totalorder %s63, 3
      %p118 = por %p116, %p117
      %p119 = scmp.ne.s32.totalorder %s111, %s114
      %p120 = scmp.eq.s32.totalorder %s63, 0
      %p121 = por %p119, %p120
      %p122 = scmp.ne.s32.totalorder %s111, %s114
      %p123 = scmp.eq.s32.totalorder %s68, 3
      %p124 = por %p122, %p123
      %p125 = scmp.ne.s32.totalorder %s114, %s115
      %p126 = scmp.eq.s32.totalorder %s68, 0
      %p127 = por %p125, %p126
      %p128 = scmp.ne.s32.totalorder %s114, %s115
      %p129 = scmp.eq.s32.totalorder %s69, 3
      %p130 = por %p128, %p129
      %p132 = scmp.ne.s32.totalorder %s115, %s131
      %p133 = scmp.eq.s32.totalorder %s69, 0
      %p134 = por %p132, %p133
      %s135 = ssub.s32 %s70, %s82
      %p136 = scmp.eq.s32.totalorder %s135, 0
      %s138 = sadd.s32 %s137, 1
      %s139 = scalar_select %p136, %s137, %s138
      %p142 = pneg %p136
      %p143 = scmp.eq.s32.totalorder %s63, 3
      %p144 = por %p142, %p143
      %p145 = scmp.ne.s32.totalorder %s137, %s140
      %p146 = scmp.eq.s32.totalorder %s63, 0
      %p147 = por %p145, %p146
      %p148 = scmp.ne.s32.totalorder %s137, %s140
      %p149 = scmp.eq.s32.totalorder %s68, 3
      %p150 = por %p148, %p149
      %p151 = scmp.ne.s32.totalorder %s140, %s141
      %p152 = scmp.eq.s32.totalorder %s68, 0
      %p153 = por %p151, %p152
      %p154 = scmp.ne.s32.totalorder %s140, %s141
      %p155 = scmp.eq.s32.totalorder %s69, 3
      %p156 = por %p154, %p155
      %p158 = scmp.ne.s32.totalorder %s141, %s157
      %p159 = scmp.eq.s32.totalorder %s69, 0
      %p160 = por %p158, %p159
      %s161 = ssub.s32 %s71, %s78
      %p162 = scmp.eq.s32.totalorder %s161, 0
      %s164 = sadd.s32 %s163, 1
      %s165 = scalar_select %p162, %s163, %s164
      %p168 = pneg %p162
      %p169 = scmp.eq.s32.totalorder %s63, 3
      %p170 = por %p168, %p169
      %p171 = scmp.ne.s32.totalorder %s163, %s166
      %p172 = scmp.eq.s32.totalorder %s63, 0
      %p173 = por %p171, %p172
      %p174 = scmp.ne.s32.totalorder %s163, %s166
      %p175 = scmp.eq.s32.totalorder %s68, 3
      %p176 = por %p174, %p175
      %p177 = scmp.ne.s32.totalorder %s166, %s167
      %p178 = scmp.eq.s32.totalorder %s68, 0
      %p179 = por %p177, %p178
      %p180 = scmp.ne.s32.totalorder %s166, %s167
      %p181 = scmp.eq.s32.totalorder %s69, 3
      %p182 = por %p180, %p181
      %p184 = scmp.ne.s32.totalorder %s167, %s183
      %p185 = scmp.eq.s32.totalorder %s69, 0
      %p186 = por %p184, %p185
      %s187 = ssub.s32 %s71, %s78
      %p188 = scmp.eq.s32.totalorder %s187, 0
      %s190 = sadd.s32 %s189, 1
      %s191 = scalar_select %p188, %s189, %s190
      %p194 = pneg %p188
      %p195 = scmp.eq.s32.totalorder %s63, 3
      %p196 = por %p194, %p195
      %p197 = scmp.ne.s32.totalorder %s189, %s192
      %p198 = scmp.eq.s32.totalorder %s63, 0
      %p199 = por %p197, %p198
      %p200 = scmp.ne.s32.totalorder %s189, %s192
      %p201 = scmp.eq.s32.totalorder %s68, 3
      %p202 = por %p200, %p201
      %p203 = scmp.ne.s32.totalorder %s192, %s193
      %p204 = scmp.eq.s32.totalorder %s68, 0
      %p205 = por %p203, %p204
      %p206 = scmp.ne.s32.totalorder %s192, %s193
      %p207 = scmp.eq.s32.totalorder %s69, 3
      %p208 = por %p206, %p207
      %p210 = scmp.ne.s32.totalorder %s193, %s209
      %p211 = scmp.eq.s32.totalorder %s69, 0
      %p212 = por %p210, %p211
      %s213 = ssub.s32 %s71, %s78
      %p214 = scmp.eq.s32.totalorder %s213, 0
      %s216 = sadd.s32 %s215, 1
      %s217 = scalar_select %p214, %s215, %s216
      %p220 = pneg %p214
      %p221 = scmp.eq.s32.totalorder %s63, 3
      %p222 = por %p220, %p221
      %p223 = scmp.ne.s32.totalorder %s215, %s218
      %p224 = scmp.eq.s32.totalorder %s63, 0
      %p225 = por %p223, %p224
      %p226 = scmp.ne.s32.totalorder %s215, %s218
      %p227 = scmp.eq.s32.totalorder %s68, 3
      %p228 = por %p226, %p227
      %p229 = scmp.ne.s32.totalorder %s218, %s219
      %p230 = scmp.eq.s32.totalorder %s68, 0
      %p231 = por %p229, %p230
      %p232 = scmp.ne.s32.totalorder %s218, %s219
      %p233 = scmp.eq.s32.totalorder %s69, 3
      %p234 = por %p232, %p233
      %p236 = scmp.ne.s32.totalorder %s219, %s235
      %p237 = scmp.eq.s32.totalorder %s69, 0
      %p238 = por %p236, %p237
      %s239 = ssub.s32 %s71, %s78
      %p240 = scmp.eq.s32.totalorder %s239, 0
      %s242 = sadd.s32 %s241, 1
      %s243 = scalar_select %p240, %s241, %s242
      %p246 = pneg %p240
      %p247 = scmp.eq.s32.totalorder %s63, 3
      %p248 = por %p246, %p247
      %p249 = scmp.ne.s32.totalorder %s241, %s244
      %p250 = scmp.eq.s32.totalorder %s63, 0
      %p251 = por %p249, %p250
      %p252 = scmp.ne.s32.totalorder %s241, %s244
      %p253 = scmp.eq.s32.totalorder %s68, 3
      %p254 = por %p252, %p253
      %p255 = scmp.ne.s32.totalorder %s244, %s245
      %p256 = scmp.eq.s32.totalorder %s68, 0
      %p257 = por %p255, %p256
      %p258 = scmp.ne.s32.totalorder %s244, %s245
      %p259 = scmp.eq.s32.totalorder %s69, 3
      %p260 = por %p258, %p259
      %p262 = scmp.ne.s32.totalorder %s245, %s261
      %p263 = scmp.eq.s32.totalorder %s69, 0
      %p264 = por %p262, %p263
      %s265 = ssub.s32 %s71, %s78
      %p266 = scmp.eq.s32.totalorder %s265, 0
      %s268 = sadd.s32 %s267, 1
      %s269 = scalar_select %p266, %s267, %s268
      %p272 = pneg %p266
      %p273 = scmp.eq.s32.totalorder %s63, 3
      %p274 = por %p272, %p273
      %p275 = scmp.ne.s32.totalorder %s267, %s270
      %p276 = scmp.eq.s32.totalorder %s63, 0
      %p277 = por %p275, %p276
      %p278 = scmp.ne.s32.totalorder %s267, %s270
      %p279 = scmp.eq.s32.totalorder %s68, 3
      %p280 = por %p278, %p279
      %p281 = scmp.ne.s32.totalorder %s270, %s271
      %p282 = scmp.eq.s32.totalorder %s68, 0
      %p283 = por %p281, %p282
      %p284 = scmp.ne.s32.totalorder %s270, %s271
      %p285 = scmp.eq.s32.totalorder %s69, 3
      %p286 = por %p284, %p285
      %p288 = scmp.ne.s32.totalorder %s271, %s287
      %p289 = scmp.eq.s32.totalorder %s69, 0
      %p290 = por %p288, %p289
      %s291 = ssub.s32 %s71, %s78
      %p292 = scmp.eq.s32.totalorder %s291, 0
      %s294 = sadd.s32 %s293, 1
      %s295 = scalar_select %p292, %s293, %s294
      %p298 = pneg %p292
      %p299 = scmp.eq.s32.totalorder %s63, 3
      %p300 = por %p298, %p299
      %p301 = scmp.ne.s32.totalorder %s293, %s296
      %p302 = scmp.eq.s32.totalorder %s63, 0
      %p303 = por %p301, %p302
      %p304 = scmp.ne.s32.totalorder %s293, %s296
      %p305 = scmp.eq.s32.totalorder %s68, 3
      %p306 = por %p304, %p305
      %p307 = scmp.ne.s32.totalorder %s296, %s297
      %p308 = scmp.eq.s32.totalorder %s68, 0
      %p309 = por %p307, %p308
      %p310 = scmp.ne.s32.totalorder %s296, %s297
      %p311 = scmp.eq.s32.totalorder %s69, 3
      %p312 = por %p310, %p311
      %p314 = scmp.ne.s32.totalorder %s297, %s313
      %p315 = scmp.eq.s32.totalorder %s69, 0
      %p316 = por %p314, %p315
      %s317 = ssub.s32 %s71, %s78
      %p318 = scmp.eq.s32.totalorder %s317, 0
      %s320 = sadd.s32 %s319, 1
      %s321 = scalar_select %p318, %s319, %s320
      %p324 = pneg %p318
      %p325 = scmp.eq.s32.totalorder %s63, 3
      %p326 = por %p324, %p325
      %p327 = scmp.ne.s32.totalorder %s319, %s322
      %p328 = scmp.eq.s32.totalorder %s63, 0
      %p329 = por %p327, %p328
      %p330 = scmp.ne.s32.totalorder %s319, %s322
      %p331 = scmp.eq.s32.totalorder %s68, 3
      %p332 = por %p330, %p331
      %p333 = scmp.ne.s32.totalorder %s322, %s323
      %p334 = scmp.eq.s32.totalorder %s68, 0
      %p335 = por %p333, %p334
      %p336 = scmp.ne.s32.totalorder %s322, %s323
      %p337 = scmp.eq.s32.totalorder %s69, 3
      %p338 = por %p336, %p337
      %p340 = scmp.ne.s32.totalorder %s323, %s339
      %p341 = scmp.eq.s32.totalorder %s69, 0
      %p342 = por %p340, %p341
      %s343 = ssub.s32 %s71, %s78
      %p344 = scmp.eq.s32.totalorder %s343, 0
      %s346 = sadd.s32 %s345, 1
      %s347 = scalar_select %p344, %s345, %s346
      %p350 = pneg %p344
      %p351 = scmp.eq.s32.totalorder %s63, 3
      %p352 = por %p350, %p351
      %p353 = scmp.ne.s32.totalorder %s345, %s348
      %p354 = scmp.eq.s32.totalorder %s63, 0
      %p355 = por %p353, %p354
      %p356 = scmp.ne.s32.totalorder %s345, %s348
      %p357 = scmp.eq.s32.totalorder %s68, 3
      %p358 = por %p356, %p357
      %p359 = scmp.ne.s32.totalorder %s348, %s349
      %p360 = scmp.eq.s32.totalorder %s68, 0
      %p361 = por %p359, %p360
      %p362 = scmp.ne.s32.totalorder %s348, %s349
      %p363 = scmp.eq.s32.totalorder %s69, 3
      %p364 = por %p362, %p363
      %p366 = scmp.ne.s32.totalorder %s349, %s365
      %p367 = scmp.eq.s32.totalorder %s69, 0
      %p368 = por %p366, %p367
      %s369 = ssub.s32 %s71, %s78
      %p370 = scmp.eq.s32.totalorder %s369, 0
      %s372 = sadd.s32 %s371, 1
      %s373 = scalar_select %p370, %s371, %s372
      %p376 = pneg %p370
      %p377 = scmp.eq.s32.totalorder %s63, 3
      %p378 = por %p376, %p377
      %p379 = scmp.ne.s32.totalorder %s371, %s374
      %p380 = scmp.eq.s32.totalorder %s63, 0
      %p381 = por %p379, %p380
      %p382 = scmp.ne.s32.totalorder %s371, %s374
      %p383 = scmp.eq.s32.totalorder %s68, 3
      %p384 = por %p382, %p383
      %p385 = scmp.ne.s32.totalorder %s374, %s375
      %p386 = scmp.eq.s32.totalorder %s68, 0
      %p387 = por %p385, %p386
      %p388 = scmp.ne.s32.totalorder %s374, %s375
      %p389 = scmp.eq.s32.totalorder %s69, 3
      %p390 = por %p388, %p389
      %p392 = scmp.ne.s32.totalorder %s375, %s391
      %p393 = scmp.eq.s32.totalorder %s69, 0
      %p394 = por %p392, %p393
      %s395 = ssub.s32 %s71, %s78
      %p396 = scmp.eq.s32.totalorder %s395, 0
      %s398 = sadd.s32 %s397, 1
      %s399 = scalar_select %p396, %s397, %s398
      %p402 = pneg %p396
      %p403 = scmp.eq.s32.totalorder %s63, 3
      %p404 = por %p402, %p403
      %p405 = scmp.ne.s32.totalorder %s397, %s400
      %p406 = scmp.eq.s32.totalorder %s63, 0
      %p407 = por %p405, %p406
      %p408 = scmp.ne.s32.totalorder %s397, %s400
      %p409 = scmp.eq.s32.totalorder %s68, 3
      %p410 = por %p408, %p409
      %p411 = scmp.ne.s32.totalorder %s400, %s401
      %p412 = scmp.eq.s32.totalorder %s68, 0
      %p413 = por %p411, %p412
      %p414 = scmp.ne.s32.totalorder %s400, %s401
      %p415 = scmp.eq.s32.totalorder %s69, 3
      %p416 = por %p414, %p415
      %p418 = scmp.ne.s32.totalorder %s401, %s417
      %p419 = scmp.eq.s32.totalorder %s69, 0
      %p420 = por %p418, %p419
      %s421 = ssub.s32 %s71, %s78
      %p422 = scmp.eq.s32.totalorder %s421, 0
      %s424 = sadd.s32 %s423, 1
      %s425 = scalar_select %p422, %s423, %s424
      %p428 = pneg %p422
      %p429 = scmp.eq.s32.totalorder %s63, 3
      %p430 = por %p428, %p429
      %p431 = scmp.ne.s32.totalorder %s423, %s426
      %p432 = scmp.eq.s32.totalorder %s63, 0
      %p433 = por %p431, %p432
      %p434 = scmp.ne.s32.totalorder %s423, %s426
      %p435 = scmp.eq.s32.totalorder %s68, 3
      %p436 = por %p434, %p435
      %p437 = scmp.ne.s32.totalorder %s426, %s427
      %p438 = scmp.eq.s32.totalorder %s68, 0
      %p439 = por %p437, %p438
      %p440 = scmp.ne.s32.totalorder %s426, %s427
      %p441 = scmp.eq.s32.totalorder %s69, 3
      %p442 = por %p440, %p441
      %p444 = scmp.ne.s32.totalorder %s427, %s443
      %p445 = scmp.eq.s32.totalorder %s69, 0
      %p446 = por %p444, %p445
      %s447 = ssub.s32 %s71, %s78
      %p448 = scmp.eq.s32.totalorder %s447, 0
      %s450 = sadd.s32 %s449, 1
      %s451 = scalar_select %p448, %s449, %s450
      %p454 = pneg %p448
      %p455 = scmp.eq.s32.totalorder %s63, 3
      %p456 = por %p454, %p455
      %p457 = scmp.ne.s32.totalorder %s449, %s452
      %p458 = scmp.eq.s32.totalorder %s63, 0
      %p459 = por %p457, %p458
      %p460 = scmp.ne.s32.totalorder %s449, %s452
      %p461 = scmp.eq.s32.totalorder %s68, 3
      %p462 = por %p460, %p461
      %p463 = scmp.ne.s32.totalorder %s452, %s453
      %p464 = scmp.eq.s32.totalorder %s68, 0
      %p465 = por %p463, %p464
      %p466 = scmp.ne.s32.totalorder %s452, %s453
      %p467 = scmp.eq.s32.totalorder %s69, 3
      %p468 = por %p466, %p467
      %p470 = scmp.ne.s32.totalorder %s453, %s469
      %p471 = scmp.eq.s32.totalorder %s69, 0
      %p472 = por %p470, %p471
      %s473 = ssub.s32 %s71, %s78
      %p474 = scmp.eq.s32.totalorder %s473, 0
      %s476 = sadd.s32 %s475, 1
      %s477 = scalar_select %p474, %s475, %s476
      %p480 = pneg %p474
      %p481 = scmp.eq.s32.totalorder %s63, 3
      %p482 = por %p480, %p481
      %p483 = scmp.ne.s32.totalorder %s475, %s478
      %p484 = scmp.eq.s32.totalorder %s63, 0
      %p485 = por %p483, %p484
      %p486 = scmp.ne.s32.totalorder %s475, %s478
      %p487 = scmp.eq.s32.totalorder %s68, 3
      %p488 = por %p486, %p487
      %p489 = scmp.ne.s32.totalorder %s478, %s479
      %p490 = scmp.eq.s32.totalorder %s68, 0
      %p491 = por %p489, %p490
      %p492 = scmp.ne.s32.totalorder %s478, %s479
      %p493 = scmp.eq.s32.totalorder %s69, 3
      %p494 = por %p492, %p493
      %p496 = scmp.ne.s32.totalorder %s479, %s495
      %p497 = scmp.eq.s32.totalorder %s69, 0
      %p498 = por %p496, %p497
      %s499 = ssub.s32 %s71, %s78
      %p500 = scmp.eq.s32.totalorder %s499, 0
      %s502 = sadd.s32 %s501, 1
      %s503 = scalar_select %p500, %s501, %s502
      %p506 = pneg %p500
      %p507 = scmp.eq.s32.totalorder %s63, 3
      %p508 = por %p506, %p507
      %p509 = scmp.ne.s32.totalorder %s501, %s504
      %p510 = scmp.eq.s32.totalorder %s63, 0
      %p511 = por %p509, %p510
      %p512 = scmp.ne.s32.totalorder %s501, %s504
      %p513 = scmp.eq.s32.totalorder %s68, 3
      %p514 = por %p512, %p513
      %p515 = scmp.ne.s32.totalorder %s504, %s505
      %p516 = scmp.eq.s32.totalorder %s68, 0
      %p517 = por %p515, %p516
      %p518 = scmp.ne.s32.totalorder %s504, %s505
      %p519 = scmp.eq.s32.totalorder %s69, 3
      %p520 = por %p518, %p519
      %p522 = scmp.ne.s32.totalorder %s505, %s521
      %p523 = scmp.eq.s32.totalorder %s69, 0
      %p524 = por %p522, %p523
      %s525 = ssub.s32 %s71, %s78
      %p526 = scmp.eq.s32.totalorder %s525, 0
      %s528 = sadd.s32 %s527, 1
      %s529 = scalar_select %p526, %s527, %s528
      %p532 = pneg %p526
      %p533 = scmp.eq.s32.totalorder %s63, 3
      %p534 = por %p532, %p533
      %p535 = scmp.ne.s32.totalorder %s527, %s530
      %p536 = scmp.eq.s32.totalorder %s63, 0
      %p537 = por %p535, %p536
      %p538 = scmp.ne.s32.totalorder %s527, %s530
      %p539 = scmp.eq.s32.totalorder %s68, 3
      %p540 = por %p538, %p539
      %p541 = scmp.ne.s32.totalorder %s530, %s531
      %p542 = scmp.eq.s32.totalorder %s68, 0
      %p543 = por %p541, %p542
      %p544 = scmp.ne.s32.totalorder %s530, %s531
      %p545 = scmp.eq.s32.totalorder %s69, 3
      %p546 = por %p544, %p545
      %p548 = scmp.ne.s32.totalorder %s531, %s547
      %p549 = scmp.eq.s32.totalorder %s69, 0
      %p550 = por %p548, %p549
      %s551 = ssub.s32 %s71, %s78
      %p552 = scmp.eq.s32.totalorder %s551, 0
      %s554 = sadd.s32 %s553, 1
      %s555 = scalar_select %p552, %s553, %s554
      %p558 = pneg %p552
      %p559 = scmp.eq.s32.totalorder %s63, 3
      %p560 = por %p558, %p559
      %p561 = scmp.ne.s32.totalorder %s553, %s556
      %p562 = scmp.eq.s32.totalorder %s63, 0
      %p563 = por %p561, %p562
      %p564 = scmp.ne.s32.totalorder %s553, %s556
      %p565 = scmp.eq.s32.totalorder %s68, 3
      %p566 = por %p564, %p565
      %p567 = scmp.ne.s32.totalorder %s556, %s557
      %p568 = scmp.eq.s32.totalorder %s68, 0
      %p569 = por %p567, %p568
      %p570 = scmp.ne.s32.totalorder %s556, %s557
      %p571 = scmp.eq.s32.totalorder %s69, 3
      %p572 = por %p570, %p571
      %p574 = scmp.ne.s32.totalorder %s557, %s573
      %p575 = scmp.eq.s32.totalorder %s69, 0
      %p576 = por %p574, %p575
      %s577 = ssub.s32 %s71, %s78
      %p578 = scmp.eq.s32.totalorder %s577, 0
      %s580 = sadd.s32 %s579, 1
      %s581 = scalar_select %p578, %s579, %s580
      %p584 = pneg %p578
      %p585 = scmp.eq.s32.totalorder %s63, 3
      %p586 = por %p584, %p585
      %p587 = scmp.ne.s32.totalorder %s579, %s582
      %p588 = scmp.eq.s32.totalorder %s63, 0
      %p589 = por %p587, %p588
      %p590 = scmp.ne.s32.totalorder %s579, %s582
      %p591 = scmp.eq.s32.totalorder %s68, 3
      %p592 = por %p590, %p591
      %p593 = scmp.ne.s32.totalorder %s582, %s583
      %p594 = scmp.eq.s32.totalorder %s68, 0
      %p595 = por %p593, %p594
      %p596 = scmp.ne.s32.totalorder %s582, %s583
      %p597 = scmp.eq.s32.totalorder %s69, 3
      %p598 = por %p596, %p597
      %p600 = scmp.ne.s32.totalorder %s583, %s599
      %p601 = scmp.eq.s32.totalorder %s69, 0
      %p602 = por %p600, %p601
      %s603 = ssub.s32 %s71, %s78
      %p604 = scmp.eq.s32.totalorder %s603, 0
      %s606 = sadd.s32 %s605, 1
      %s607 = scalar_select %p604, %s605, %s606
      %p610 = pneg %p604
      %p611 = scmp.eq.s32.totalorder %s63, 3
      %p612 = por %p610, %p611
      %p613 = scmp.ne.s32.totalorder %s605, %s608
      %p614 = scmp.eq.s32.totalorder %s63, 0
      %p615 = por %p613, %p614
      %p616 = scmp.ne.s32.totalorder %s605, %s608
      %p617 = scmp.eq.s32.totalorder %s68, 3
      %p618 = por %p616, %p617
      %p619 = scmp.ne.s32.totalorder %s608, %s609
      %p620 = scmp.eq.s32.totalorder %s68, 0
      %p621 = por %p619, %p620
      %p622 = scmp.ne.s32.totalorder %s608, %s609
      %p623 = scmp.eq.s32.totalorder %s69, 3
      %p624 = por %p622, %p623
      %p626 = scmp.ne.s32.totalorder %s609, %s625
      %p627 = scmp.eq.s32.totalorder %s69, 0
      %p628 = por %p626, %p627
      %s629 = ssub.s32 %s71, %s78
      %p630 = scmp.eq.s32.totalorder %s629, 0
      %s632 = sadd.s32 %s631, 1
      %s633 = scalar_select %p630, %s631, %s632
      %p636 = pneg %p630
      %p637 = scmp.eq.s32.totalorder %s63, 3
      %p638 = por %p636, %p637
      %p639 = scmp.ne.s32.totalorder %s631, %s634
      %p640 = scmp.eq.s32.totalorder %s63, 0
      %p641 = por %p639, %p640
      %p642 = scmp.ne.s32.totalorder %s631, %s634
      %p643 = scmp.eq.s32.totalorder %s68, 3
      %p644 = por %p642, %p643
      %p645 = scmp.ne.s32.totalorder %s634, %s635
      %p646 = scmp.eq.s32.totalorder %s68, 0
      %p647 = por %p645, %p646
      %p648 = scmp.ne.s32.totalorder %s634, %s635
      %p649 = scmp.eq.s32.totalorder %s69, 3
      %p650 = por %p648, %p649
      %p652 = scmp.ne.s32.totalorder %s635, %s651
      %p653 = scmp.eq.s32.totalorder %s69, 0
      %p654 = por %p652, %p653
      %s655 = ssub.s32 %s71, %s78
      %p656 = scmp.eq.s32.totalorder %s655, 0
      %s658 = sadd.s32 %s657, 1
      %s659 = scalar_select %p656, %s657, %s658
      %p662 = pneg %p656
      %p663 = scmp.eq.s32.totalorder %s63, 3
      %p664 = por %p662, %p663
      %p665 = scmp.ne.s32.totalorder %s657, %s660
      %p666 = scmp.eq.s32.totalorder %s63, 0
      %p667 = por %p665, %p666
      %p668 = scmp.ne.s32.totalorder %s657, %s660
      %p669 = scmp.eq.s32.totalorder %s68, 3
      %p670 = por %p668, %p669
      %p671 = scmp.ne.s32.totalorder %s660, %s661
      %p672 = scmp.eq.s32.totalorder %s68, 0
      %p673 = por %p671, %p672
      %p674 = scmp.ne.s32.totalorder %s660, %s661
      %p675 = scmp.eq.s32.totalorder %s69, 3
      %p676 = por %p674, %p675
      %p678 = scmp.ne.s32.totalorder %s661, %s677
      %p679 = scmp.eq.s32.totalorder %s69, 0
      %p680 = por %p678, %p679
      %s682 = sadd.s32 %s681, 1
      %p685 = scmp.eq.s32.totalorder %s63, 3
      %p686 = scmp.ne.s32.totalorder %s681, %s683
      %p687 = scmp.eq.s32.totalorder %s63, 0
      %p688 = por %p686, %p687
      %p689 = scmp.ne.s32.totalorder %s681, %s683
      %p690 = scmp.eq.s32.totalorder %s68, 3
      %p691 = por %p689, %p690
      %p692 = scmp.ne.s32.totalorder %s683, %s684
      %p693 = scmp.eq.s32.totalorder %s68, 0
      %p694 = por %p692, %p693
      %p695 = scmp.ne.s32.totalorder %s683, %s684
      %p696 = scmp.eq.s32.totalorder %s69, 3
      %p697 = por %p695, %p696
      %p699 = scmp.ne.s32.totalorder %s684, %s698
      %p700 = scmp.eq.s32.totalorder %s69, 0
      %p701 = por %p699, %p700
      %s703 = sadd.s32 %s702, 1
      %p706 = scmp.eq.s32.totalorder %s63, 3
      %p707 = scmp.ne.s32.totalorder %s702, %s704
      %p708 = scmp.eq.s32.totalorder %s63, 0
      %p709 = por %p707, %p708
      %p710 = scmp.ne.s32.totalorder %s702, %s704
      %p711 = scmp.eq.s32.totalorder %s68, 3
      %p712 = por %p710, %p711
      %p713 = scmp.ne.s32.totalorder %s704, %s705
      %p714 = scmp.eq.s32.totalorder %s68, 0
      %p715 = por %p713, %p714
      %p716 = scmp.ne.s32.totalorder %s704, %s705
      %p717 = scmp.eq.s32.totalorder %s69, 3
      %p718 = por %p716, %p717
      %p720 = scmp.ne.s32.totalorder %s705, %s719
      %p721 = scmp.eq.s32.totalorder %s69, 0
      %p722 = por %p720, %p721
      %s724 = sadd.s32 %s723, 1
      %p727 = scmp.eq.s32.totalorder %s63, 3
      %p728 = scmp.ne.s32.totalorder %s723, %s725
      %p729 = scmp.eq.s32.totalorder %s63, 0
      %p730 = por %p728, %p729
      %p731 = scmp.ne.s32.totalorder %s723, %s725
      %p732 = scmp.eq.s32.totalorder %s68, 3
      %p733 = por %p731, %p732
      %p734 = scmp.ne.s32.totalorder %s725, %s726
      %p735 = scmp.eq.s32.totalorder %s68, 0
      %p736 = por %p734, %p735
      %p737 = scmp.ne.s32.totalorder %s725, %s726
      %p738 = scmp.eq.s32.totalorder %s69, 3
      %p739 = por %p737, %p738
      %p741 = scmp.ne.s32.totalorder %s726, %s740
      %p742 = scmp.eq.s32.totalorder %s69, 0
      %p743 = por %p741, %p742
      %s745 = sadd.s32 %s744, 1
      %p748 = scmp.eq.s32.totalorder %s63, 3
      %p749 = scmp.ne.s32.totalorder %s744, %s746
      %p750 = scmp.eq.s32.totalorder %s63, 0
      %p751 = por %p749, %p750
      %p752 = scmp.ne.s32.totalorder %s744, %s746
      %p753 = scmp.eq.s32.totalorder %s68, 3
      %p754 = por %p752, %p753
      %p755 = scmp.ne.s32.totalorder %s746, %s747
      %p756 = scmp.eq.s32.totalorder %s68, 0
      %p757 = por %p755, %p756
      %p758 = scmp.ne.s32.totalorder %s746, %s747
      %p759 = scmp.eq.s32.totalorder %s69, 3
      %p760 = por %p758, %p759
      %p762 = scmp.ne.s32.totalorder %s747, %s761
      %p763 = scmp.eq.s32.totalorder %s69, 0
      %p764 = por %p762, %p763
      %s765 = ssub.s32 %s70, %s82
      %p766 = scmp.eq.s32.totalorder %s765, 0
      %s768 = sadd.s32 %s767, 1
      %s769 = scalar_select %p766, %s767, %s768
      %p772 = pneg %p766
      %p773 = scmp.eq.s32.totalorder %s63, 3
      %p774 = por %p772, %p773
      %p775 = scmp.ne.s32.totalorder %s767, %s770
      %p776 = scmp.eq.s32.totalorder %s63, 0
      %p777 = por %p775, %p776
      %p778 = scmp.ne.s32.totalorder %s767, %s770
      %p779 = scmp.eq.s32.totalorder %s68, 3
      %p780 = por %p778, %p779
      %p781 = scmp.ne.s32.totalorder %s770, %s771
      %p782 = scmp.eq.s32.totalorder %s68, 0
      %p783 = por %p781, %p782
      %p784 = scmp.ne.s32.totalorder %s770, %s771
      %p785 = scmp.eq.s32.totalorder %s69, 3
      %p786 = por %p784, %p785
      %p788 = scmp.ne.s32.totalorder %s771, %s787
      %p789 = scmp.eq.s32.totalorder %s69, 0
      %p790 = por %p788, %p789
      %p791 = scmp.le.s32.totalorder 1, %s63
      %p792 = scmp.lt.s32.totalorder %s63, 5
      %p793 = pnand %p791, %p792
      %p794 = pneg %p793
      // Predicated region
      $region9: #{tpu_custom_call.1} parent=5 // pred_check
        _
      $region10: #{tpu_custom_call.1} parent=5 // pred_check_branch
        %796 = sbr.rel (%p793) target = $region12
      $region11: #{tpu_custom_call.1} parent=5 // pred_region
        %s797 = ssub.s32 %s63, 1
        // Predicated region
        $region13: #{tpu_custom_call.1} parent=11 // pred_check
          %p798 = pneg %p694
        $region14: #{tpu_custom_call.1} parent=11 // pred_check_branch
          %800 = sbr.rel (%p798) target = $region16
        $region15: #{tpu_custom_call.1} parent=11 // pred_region
          _
        $region16: #{tpu_custom_call.1} parent=11 // pred_fallthru
          _
        // Predicated region
        $region17: #{tpu_custom_call.1} parent=11 // pred_check
          %p801 = pneg %p715
        $region18: #{tpu_custom_call.1} parent=11 // pred_check_branch
          %803 = sbr.rel (%p801) target = $region20
        $region19: #{tpu_custom_call.1} parent=11 // pred_region
          _
        $region20: #{tpu_custom_call.1} parent=11 // pred_fallthru
          _
        // Predicated region
        $region21: #{tpu_custom_call.1} parent=11 // pred_check
          %p804 = pneg %p736
        $region22: #{tpu_custom_call.1} parent=11 // pred_check_branch
          %806 = sbr.rel (%p804) target = $region24
        $region23: #{tpu_custom_call.1} parent=11 // pred_region
          _
        $region24: #{tpu_custom_call.1} parent=11 // pred_fallthru
          _
        // Predicated region
        $region25: #{tpu_custom_call.1} parent=11 // pred_check
          %p807 = pneg %p757
        $region26: #{tpu_custom_call.1} parent=11 // pred_check_branch
          %809 = sbr.rel (%p807) target = $region28
        $region27: #{tpu_custom_call.1} parent=11 // pred_region
          _
        $region28: #{tpu_custom_call.1} parent=11 // pred_fallthru
          _
      $region12: #{tpu_custom_call.1} parent=5 // pred_fallthru
        _
      %p810 = scmp.lt.s32.totalorder %s63, 4
      // Predicated region
      $region29: #{tpu_custom_call.1} parent=5 // pred_check
        %p811 = pneg %p810
      $region30: #{tpu_custom_call.1} parent=5 // pred_check_branch
        %813 = sbr.rel (%p811) target = $region32
      $region31: #{tpu_custom_call.1} parent=5 // pred_region
        // Predicated region
        $region33: #{tpu_custom_call.1} parent=31 // pred_check
          %p814 = pneg %p95
        $region34: #{tpu_custom_call.1} parent=31 // pred_check_branch
          %816 = sbr.rel (%p814) target = $region36
        $region35: #{tpu_custom_call.1} parent=31 // pred_region
          %s817 = sand.u32 %s85, 1
          %s818 = scalar_lea.sflag [#allocation4], %s817
          %s819 = sand.u32 %s85, 1
          %s820 = smul.addr %s819, 8
          %s821 = scalar_lea.vmem [#allocation3], %s820
          %823 = vsyncadd %s818, 0
          %s824 = smul.addr %s70, 8
          %s825 = scalar_lea.hbm %s0, %s824
          %s827 = sshll.u32 %s825, 4
          %s828 = int_to_ptr.hbm [resolvable:$true] %s827
          %s829 = sshll.u32 %s821, 4
          %s830 = int_to_ptr.vmem [resolvable:$true] %s829
          %832 = dma.hbm_to_vmem [thread:$0]  %s828, 128, %s830, %s818
        $region36: #{tpu_custom_call.1} parent=31 // pred_fallthru
          _
        // Predicated region
        $region37: #{tpu_custom_call.1} parent=31 // pred_check
          %p833 = pneg %p121
        $region38: #{tpu_custom_call.1} parent=31 // pred_check_branch
          %835 = sbr.rel (%p833) target = $region40
        $region39: #{tpu_custom_call.1} parent=31 // pred_region
          %s836 = sand.u32 %s63, 1
          %s837 = scalar_lea.sflag [#allocation7], %s836
          %s838 = sand.u32 %s111, 1
          %s839 = smul.addr %s838, 4
          %s840 = scalar_lea.vmem [#allocation6], %s839
          %842 = vsyncadd %s837, 0
          %s843 = smul.addr %s70, 4
          %s844 = scalar_lea.hbm %s1, %s843
          %s846 = sshll.u32 %s844, 4
          %s847 = int_to_ptr.hbm [resolvable:$true] %s846
          %s848 = sshll.u32 %s840, 4
          %s849 = int_to_ptr.vmem [resolvable:$true] %s848
          %851 = dma.hbm_to_vmem [thread:$0]  %s847, 64, %s849, %s837
        $region40: #{tpu_custom_call.1} parent=31 // pred_fallthru
          _
        // Predicated region
        $region41: #{tpu_custom_call.1} parent=31 // pred_check
          %p852 = pneg %p147
        $region42: #{tpu_custom_call.1} parent=31 // pred_check_branch
          %854 = sbr.rel (%p852) target = $region44
        $region43: #{tpu_custom_call.1} parent=31 // pred_region
          %s855 = sand.u32 %s63, 1
          %s856 = scalar_lea.sflag [#allocation7], %s855
          %s857 = sand.u32 %s137, 1
          %s858 = scalar_lea.vmem [#allocation8], %s857
          %860 = vsyncadd %s856, 0
          %s861 = scalar_lea.hbm %s2, %s70
          %s863 = sshll.u32 %s861, 4
          %s864 = int_to_ptr.hbm [resolvable:$true] %s863
          %s865 = sshll.u32 %s858, 4
          %s866 = int_to_ptr.vmem [resolvable:$true] %s865
          %868 = dma.hbm_to_vmem [thread:$0]  %s864, 16, %s866, %s856
        $region44: #{tpu_custom_call.1} parent=31 // pred_fallthru
          _
        // Predicated region
        $region45: #{tpu_custom_call.1} parent=31 // pred_check
          %p869 = pneg %p173
        $region46: #{tpu_custom_call.1} parent=31 // pred_check_branch
          %871 = sbr.rel (%p869) target = $region48
        $region47: #{tpu_custom_call.1} parent=31 // pred_region
          %s872 = sand.u32 %s63, 1
          %s873 = scalar_lea.sflag [#allocation10], %s872
          %s874 = sand.u32 %s163, 1
          %s875 = scalar_lea.vmem [#allocation9], %s874
          %877 = vsyncadd %s873, 0
          %s878 = scalar_lea.hbm %s3, %s71
          %s880 = sshll.u32 %s878, 4
          %s881 = int_to_ptr.hbm [resolvable:$true] %s880
          %s882 = sshll.u32 %s875, 4
          %s883 = int_to_ptr.vmem [resolvable:$true] %s882
          %885 = dma.hbm_to_vmem [thread:$0]  %s881, 16, %s883, %s873
        $region48: #{tpu_custom_call.1} parent=31 // pred_fallthru
          _
        // Predicated region
        $region49: #{tpu_custom_call.1} parent=31 // pred_check
          %p886 = pneg %p199
        $region50: #{tpu_custom_call.1} parent=31 // pred_check_branch
          %888 = sbr.rel (%p886) target = $region52
        $region51: #{tpu_custom_call.1} parent=31 // pred_region
          %s889 = sand.u32 %s63, 1
          %s890 = scalar_lea.sflag [#allocation10], %s889
          %s891 = sand.u32 %s189, 1
          %s892 = scalar_lea.vmem [#allocation11], %s891
          %894 = vsyncadd %s890, 0
          %s895 = scalar_lea.hbm %s4, %s71
          %s897 = sshll.u32 %s895, 4
          %s898 = int_to_ptr.hbm [resolvable:$true] %s897
          %s899 = sshll.u32 %s892, 4
          %s900 = int_to_ptr.vmem [resolvable:$true] %s899
          %902 = dma.hbm_to_vmem [thread:$0]  %s898, 16, %s900, %s890
        $region52: #{tpu_custom_call.1} parent=31 // pred_fallthru
          _
        // Predicated region
        $region53: #{tpu_custom_call.1} parent=31 // pred_check
          %p903 = pneg %p225
        $region54: #{tpu_custom_call.1} parent=31 // pred_check_branch
          %905 = sbr.rel (%p903) target = $region56
        $region55: #{tpu_custom_call.1} parent=31 // pred_region
          %p906 = scmp.lt.s32.totalorder %s71, 1
          %s907 = scalar_select %p906, %s71, 1
          %s908 = smul.addr %s907, 4
          %s909 = smul.addr %s908, 4
          %s910 = scalar_lea.vmem %s5, %s909
        $region56: #{tpu_custom_call.1} parent=31 // pred_fallthru
          _
        // Predicated region
        $region57: #{tpu_custom_call.1} parent=31 // pred_check
          %p911 = pneg %p251
        $region58: #{tpu_custom_call.1} parent=31 // pred_check_branch
          %913 = sbr.rel (%p911) target = $region60
        $region59: #{tpu_custom_call.1} parent=31 // pred_region
          %s914 = sand.u32 %s63, 1
          %s915 = scalar_lea.sflag [#allocation13], %s914
          %s916 = sand.u32 %s241, 1
          %s917 = scalar_lea.vmem [#allocation12], %s916
          %919 = vsyncadd %s915, 0
          %s920 = scalar_lea.hbm %s6, %s71
          %s922 = sshll.u32 %s920, 4
          %s923 = int_to_ptr.hbm [resolvable:$true] %s922
          %s924 = sshll.u32 %s917, 4
          %s925 = int_to_ptr.vmem [resolvable:$true] %s924
          %927 = dma.hbm_to_vmem [thread:$0]  %s923, 16, %s925, %s915
        $region60: #{tpu_custom_call.1} parent=31 // pred_fallthru
          _
        // Predicated region
        $region61: #{tpu_custom_call.1} parent=31 // pred_check
          %p928 = pneg %p277
        $region62: #{tpu_custom_call.1} parent=31 // pred_check_branch
          %930 = sbr.rel (%p928) target = $region64
        $region63: #{tpu_custom_call.1} parent=31 // pred_region
          %p931 = scmp.lt.s32.totalorder %s71, 1
          %s932 = scalar_select %p931, %s71, 1
          %s933 = smul.addr %s932, 4
          %s934 = smul.addr %s933, 4
          %s935 = scalar_lea.vmem %s7, %s934
        $region64: #{tpu_custom_call.1} parent=31 // pred_fallthru
          _
        // Predicated region
        $region65: #{tpu_custom_call.1} parent=31 // pred_check
          %p936 = pneg %p303
        $region66: #{tpu_custom_call.1} parent=31 // pred_check_branch
          %938 = sbr.rel (%p936) target = $region68
        $region67: #{tpu_custom_call.1} parent=31 // pred_region
          %s939 = sand.u32 %s63, 1
          %s940 = scalar_lea.sflag [#allocation13], %s939
          %s941 = sand.u32 %s293, 1
          %s942 = scalar_lea.vmem [#allocation14], %s941
          %944 = vsyncadd %s940, 0
          %s945 = scalar_lea.hbm %s8, %s71
          %s947 = sshll.u32 %s945, 4
          %s948 = int_to_ptr.hbm [resolvable:$true] %s947
          %s949 = sshll.u32 %s942, 4
          %s950 = int_to_ptr.vmem [resolvable:$true] %s949
          %952 = dma.hbm_to_vmem [thread:$0]  %s948, 16, %s950, %s940
        $region68: #{tpu_custom_call.1} parent=31 // pred_fallthru
          _
        // Predicated region
        $region69: #{tpu_custom_call.1} parent=31 // pred_check
          %p953 = pneg %p329
        $region70: #{tpu_custom_call.1} parent=31 // pred_check_branch
          %955 = sbr.rel (%p953) target = $region72
        $region71: #{tpu_custom_call.1} parent=31 // pred_region
          %s956 = sand.u32 %s63, 1
          %s957 = scalar_lea.sflag [#allocation16], %s956
          %s958 = sand.u32 %s319, 1
          %s959 = scalar_lea.vmem [#allocation15], %s958
          %961 = vsyncadd %s957, 0
          %s962 = scalar_lea.hbm %s9, %s71
          %s964 = sshll.u32 %s962, 4
          %s965 = int_to_ptr.hbm [resolvable:$true] %s964
          %s966 = sshll.u32 %s959, 4
          %s967 = int_to_ptr.vmem [resolvable:$true] %s966
          %969 = dma.hbm_to_vmem [thread:$0]  %s965, 16, %s967, %s957
        $region72: #{tpu_custom_call.1} parent=31 // pred_fallthru
          _
        // Predicated region
        $region73: #{tpu_custom_call.1} parent=31 // pred_check
          %p970 = pneg %p355
        $region74: #{tpu_custom_call.1} parent=31 // pred_check_branch
          %972 = sbr.rel (%p970) target = $region76
        $region75: #{tpu_custom_call.1} parent=31 // pred_region
          %s973 = sand.u32 %s63, 1
          %s974 = scalar_lea.sflag [#allocation16], %s973
          %s975 = sand.u32 %s345, 1
          %s976 = scalar_lea.vmem [#allocation17], %s975
          %978 = vsyncadd %s974, 0
          %s979 = scalar_lea.hbm %s10, %s71
          %s981 = sshll.u32 %s979, 4
          %s982 = int_to_ptr.hbm [resolvable:$true] %s981
          %s983 = sshll.u32 %s976, 4
          %s984 = int_to_ptr.vmem [resolvable:$true] %s983
          %986 = dma.hbm_to_vmem [thread:$0]  %s982, 16, %s984, %s974
        $region76: #{tpu_custom_call.1} parent=31 // pred_fallthru
          _
        // Predicated region
        $region77: #{tpu_custom_call.1} parent=31 // pred_check
          %p987 = pneg %p381
        $region78: #{tpu_custom_call.1} parent=31 // pred_check_branch
          %989 = sbr.rel (%p987) target = $region80
        $region79: #{tpu_custom_call.1} parent=31 // pred_region
          %p990 = scmp.lt.s32.totalorder %s71, 1
          %s991 = scalar_select %p990, %s71, 1
          %s992 = smul.addr %s991, 4
          %s993 = smul.addr %s992, 4
          %s994 = scalar_lea.vmem %s11, %s993
        $region80: #{tpu_custom_call.1} parent=31 // pred_fallthru
          _
        // Predicated region
        $region81: #{tpu_custom_call.1} parent=31 // pred_check
          %p995 = pneg %p407
        $region82: #{tpu_custom_call.1} parent=31 // pred_check_branch
          %997 = sbr.rel (%p995) target = $region84
        $region83: #{tpu_custom_call.1} parent=31 // pred_region
          %s998 = sand.u32 %s63, 1
          %s999 = scalar_lea.sflag [#allocation19], %s998
          %s1000 = sand.u32 %s397, 1
          %s1001 = scalar_lea.vmem [#allocation18], %s1000
          %1003 = vsyncadd %s999, 0
          %s1004 = scalar_lea.hbm %s12, %s71
          %s1006 = sshll.u32 %s1004, 4
          %s1007 = int_to_ptr.hbm [resolvable:$true] %s1006
          %s1008 = sshll.u32 %s1001, 4
          %s1009 = int_to_ptr.vmem [resolvable:$true] %s1008
          %1011 = dma.hbm_to_vmem [thread:$0]  %s1007, 16, %s1009, %s999
        $region84: #{tpu_custom_call.1} parent=31 // pred_fallthru
          _
        // Predicated region
        $region85: #{tpu_custom_call.1} parent=31 // pred_check
          %p1012 = pneg %p433
        $region86: #{tpu_custom_call.1} parent=31 // pred_check_branch
          %1014 = sbr.rel (%p1012) target = $region88
        $region87: #{tpu_custom_call.1} parent=31 // pred_region
          %s1015 = sand.u32 %s63, 1
          %s1016 = scalar_lea.sflag [#allocation19], %s1015
          %s1017 = sand.u32 %s423, 1
          %s1018 = smul.addr %s1017, 16
          %s1019 = scalar_lea.vmem [#allocation20], %s1018
          %1021 = vsyncadd %s1016, 0
          %s1022 = smul.addr %s71, 4
          %s1023 = smul.addr %s1022, 4
          %s1024 = scalar_lea.hbm %s13, %s1023
          %s1025 = sshll.u32 %s1024, 4
          %s1026 = int_to_ptr.hbm [resolvable:$true] %s1025
          %s1027 = sshll.u32 %s1019, 4
          %s1028 = int_to_ptr.vmem [resolvable:$true] %s1027
          %1033 = dma.hbm_to_vmem [thread:$0]  %s1026, 256, %s1028, %s1016, 64, 64, 4
        $region88: #{tpu_custom_call.1} parent=31 // pred_fallthru
          _
        // Predicated region
        $region89: #{tpu_custom_call.1} parent=31 // pred_check
          %p1034 = pneg %p459
        $region90: #{tpu_custom_call.1} parent=31 // pred_check_branch
          %1036 = sbr.rel (%p1034) target = $region92
        $region91: #{tpu_custom_call.1} parent=31 // pred_region
          %s1037 = sand.u32 %s63, 1
          %s1038 = scalar_lea.sflag [#allocation22], %s1037
          %s1039 = sand.u32 %s449, 1
          %s1040 = scalar_lea.vmem [#allocation21], %s1039
          %1042 = vsyncadd %s1038, 0
          %s1043 = scalar_lea.hbm %s14, %s71
          %s1045 = sshll.u32 %s1043, 4
          %s1046 = int_to_ptr.hbm [resolvable:$true] %s1045
          %s1047 = sshll.u32 %s1040, 4
          %s1048 = int_to_ptr.vmem [resolvable:$true] %s1047
          %1050 = dma.hbm_to_vmem [thread:$0]  %s1046, 16, %s1048, %s1038
        $region92: #{tpu_custom_call.1} parent=31 // pred_fallthru
          _
        // Predicated region
        $region93: #{tpu_custom_call.1} parent=31 // pred_check
          %p1051 = pneg %p485
        $region94: #{tpu_custom_call.1} parent=31 // pred_check_branch
          %1053 = sbr.rel (%p1051) target = $region96
        $region95: #{tpu_custom_call.1} parent=31 // pred_region
          %s1054 = sand.u32 %s63, 1
          %s1055 = scalar_lea.sflag [#allocation22], %s1054
          %s1056 = sand.u32 %s475, 1
          %s1057 = smul.addr %s1056, 16
          %s1058 = scalar_lea.vmem [#allocation23], %s1057
          %1060 = vsyncadd %s1055, 0
          %s1061 = smul.addr %s71, 4
          %s1062 = smul.addr %s1061, 4
          %s1063 = scalar_lea.hbm %s15, %s1062
          %s1064 = sshll.u32 %s1063, 4
          %s1065 = int_to_ptr.hbm [resolvable:$true] %s1064
          %s1066 = sshll.u32 %s1058, 4
          %s1067 = int_to_ptr.vmem [resolvable:$true] %s1066
          %1072 = dma.hbm_to_vmem [thread:$0]  %s1065, 256, %s1067, %s1055, 64, 64, 4
        $region96: #{tpu_custom_call.1} parent=31 // pred_fallthru
          _
        // Predicated region
        $region97: #{tpu_custom_call.1} parent=31 // pred_check
          %p1073 = pneg %p511
        $region98: #{tpu_custom_call.1} parent=31 // pred_check_branch
          %1075 = sbr.rel (%p1073) target = $region100
        $region99: #{tpu_custom_call.1} parent=31 // pred_region
          %s1076 = sand.u32 %s63, 1
          %s1077 = scalar_lea.sflag [#allocation25], %s1076
          %s1078 = sand.u32 %s501, 1
          %s1079 = scalar_lea.vmem [#allocation24], %s1078
          %1081 = vsyncadd %s1077, 0
          %s1082 = scalar_lea.hbm %s16, %s71
          %s1084 = sshll.u32 %s1082, 4
          %s1085 = int_to_ptr.hbm [resolvable:$true] %s1084
          %s1086 = sshll.u32 %s1079, 4
          %s1087 = int_to_ptr.vmem [resolvable:$true] %s1086
          %1089 = dma.hbm_to_vmem [thread:$0]  %s1085, 16, %s1087, %s1077
        $region100: #{tpu_custom_call.1} parent=31 // pred_fallthru
          _
        // Predicated region
        $region101: #{tpu_custom_call.1} parent=31 // pred_check
          %p1090 = pneg %p537
        $region102: #{tpu_custom_call.1} parent=31 // pred_check_branch
          %1092 = sbr.rel (%p1090) target = $region104
        $region103: #{tpu_custom_call.1} parent=31 // pred_region
          %s1093 = sand.u32 %s63, 1
          %s1094 = scalar_lea.sflag [#allocation25], %s1093
          %s1095 = sand.u32 %s527, 1
          %s1096 = scalar_lea.vmem [#allocation26], %s1095
          %1098 = vsyncadd %s1094, 0
          %s1099 = scalar_lea.hbm %s17, %s71
          %s1101 = sshll.u32 %s1099, 4
          %s1102 = int_to_ptr.hbm [resolvable:$true] %s1101
          %s1103 = sshll.u32 %s1096, 4
          %s1104 = int_to_ptr.vmem [resolvable:$true] %s1103
          %1106 = dma.hbm_to_vmem [thread:$0]  %s1102, 16, %s1104, %s1094
        $region104: #{tpu_custom_call.1} parent=31 // pred_fallthru
          _
        // Predicated region
        $region105: #{tpu_custom_call.1} parent=31 // pred_check
          %p1107 = pneg %p563
        $region106: #{tpu_custom_call.1} parent=31 // pred_check_branch
          %1109 = sbr.rel (%p1107) target = $region108
        $region107: #{tpu_custom_call.1} parent=31 // pred_region
          %s1110 = sand.u32 %s63, 1
          %s1111 = scalar_lea.sflag [#allocation28], %s1110
          %s1112 = sand.u32 %s553, 1
          %s1113 = scalar_lea.vmem [#allocation27], %s1112
          %1115 = vsyncadd %s1111, 0
          %s1116 = scalar_lea.hbm %s18, %s71
          %s1118 = sshll.u32 %s1116, 4
          %s1119 = int_to_ptr.hbm [resolvable:$true] %s1118
          %s1120 = sshll.u32 %s1113, 4
          %s1121 = int_to_ptr.vmem [resolvable:$true] %s1120
          %1123 = dma.hbm_to_vmem [thread:$0]  %s1119, 16, %s1121, %s1111
        $region108: #{tpu_custom_call.1} parent=31 // pred_fallthru
          _
        // Predicated region
        $region109: #{tpu_custom_call.1} parent=31 // pred_check
          %p1124 = pneg %p589
        $region110: #{tpu_custom_call.1} parent=31 // pred_check_branch
          %1126 = sbr.rel (%p1124) target = $region112
        $region111: #{tpu_custom_call.1} parent=31 // pred_region
          %s1127 = sand.u32 %s63, 1
          %s1128 = scalar_lea.sflag [#allocation28], %s1127
          %s1129 = sand.u32 %s579, 1
          %s1130 = smul.addr %s1129, 16
          %s1131 = scalar_lea.vmem [#allocation29], %s1130
          %1133 = vsyncadd %s1128, 0
          %s1134 = smul.addr %s71, 4
          %s1135 = smul.addr %s1134, 4
          %s1136 = scalar_lea.hbm %s19, %s1135
          %s1137 = sshll.u32 %s1136, 4
          %s1138 = int_to_ptr.hbm [resolvable:$true] %s1137
          %s1139 = sshll.u32 %s1131, 4
          %s1140 = int_to_ptr.vmem [resolvable:$true] %s1139
          %1145 = dma.hbm_to_vmem [thread:$0]  %s1138, 256, %s1140, %s1128, 64, 64, 4
        $region112: #{tpu_custom_call.1} parent=31 // pred_fallthru
          _
        // Predicated region
        $region113: #{tpu_custom_call.1} parent=31 // pred_check
          %p1146 = pneg %p615
        $region114: #{tpu_custom_call.1} parent=31 // pred_check_branch
          %1148 = sbr.rel (%p1146) target = $region116
        $region115: #{tpu_custom_call.1} parent=31 // pred_region
          %p1149 = scmp.lt.s32.totalorder %s71, 1
          %s1150 = scalar_select %p1149, %s71, 1
          %s1151 = scalar_lea.vmem %s20, %s1150
        $region116: #{tpu_custom_call.1} parent=31 // pred_fallthru
          _
        // Predicated region
        $region117: #{tpu_custom_call.1} parent=31 // pred_check
          %p1152 = pneg %p641
        $region118: #{tpu_custom_call.1} parent=31 // pred_check_branch
          %1154 = sbr.rel (%p1152) target = $region120
        $region119: #{tpu_custom_call.1} parent=31 // pred_region
          %p1155 = scmp.lt.s32.totalorder %s71, 1
          %s1156 = scalar_select %p1155, %s71, 1
          %s1157 = smul.addr %s1156, 8
          %s1158 = smul.addr %s1157, 4
          %s1159 = scalar_lea.vmem %s21, %s1158
        $region120: #{tpu_custom_call.1} parent=31 // pred_fallthru
          _
        // Predicated region
        $region121: #{tpu_custom_call.1} parent=31 // pred_check
          %p1160 = pneg %p667
        $region122: #{tpu_custom_call.1} parent=31 // pred_check_branch
          %1162 = sbr.rel (%p1160) target = $region124
        $region123: #{tpu_custom_call.1} parent=31 // pred_region
          %p1163 = scmp.lt.s32.totalorder %s71, 1
          %s1164 = scalar_select %p1163, %s71, 1
          %s1165 = scalar_lea.vmem %s22, %s1164
        $region124: #{tpu_custom_call.1} parent=31 // pred_fallthru
          _
      $region32: #{tpu_custom_call.1} parent=5 // pred_fallthru
        _
      %p1166 = scmp.le.s32.totalorder 1, %s63
      %p1167 = scmp.lt.s32.totalorder %s63, 5
      %p1168 = pnand %p1166, %p1167
      %p1169 = pneg %p1168
      // Predicated region
      $region125: #{tpu_custom_call.1} parent=5 // pred_check
        _
      $region126: #{tpu_custom_call.1} parent=5 // pred_check_branch
        %1171 = sbr.rel (%p1168) target = $region128
      $region127: #{tpu_custom_call.1} parent=5 // pred_region
        %s1172 = ssub.s32 %s63, 1
        %s1173 = sand.u32 %s88, 1
        %s1174 = scalar_lea.sflag [#allocation4], %s1173
        %s1175 = sand.u32 %s88, 1
        %s1176 = smul.addr %s1175, 8
        %s1177 = scalar_lea.vmem [#allocation3], %s1176
        // Predicated region
        $region129: #{tpu_custom_call.1} parent=127 // pred_check
          %p1178 = pneg %p101
        $region130: #{tpu_custom_call.1} parent=127 // pred_check_branch
          %1180 = sbr.rel (%p1178) target = $region132
        $region131: #{tpu_custom_call.1} parent=127 // pred_region
          %1182 = dma.done %s1174, 128
        $region132: #{tpu_custom_call.1} parent=127 // pred_fallthru
          _
        %s1183 = sand.u32 %s68, 1
        %s1184 = scalar_lea.sflag [#allocation7], %s1183
        %s1185 = sand.u32 %s114, 1
        %s1186 = smul.addr %s1185, 4
        %s1187 = scalar_lea.vmem [#allocation6], %s1186
        // Predicated region
        $region133: #{tpu_custom_call.1} parent=127 // pred_check
          %p1188 = pneg %p127
        $region134: #{tpu_custom_call.1} parent=127 // pred_check_branch
          %1190 = sbr.rel (%p1188) target = $region136
        $region135: #{tpu_custom_call.1} parent=127 // pred_region
          %1192 = dma.done %s1184, 64
        $region136: #{tpu_custom_call.1} parent=127 // pred_fallthru
          _
        %s1193 = sand.u32 %s68, 1
        %s1194 = scalar_lea.sflag [#allocation7], %s1193
        %s1195 = sand.u32 %s140, 1
        %s1196 = scalar_lea.vmem [#allocation8], %s1195
        // Predicated region
        $region137: #{tpu_custom_call.1} parent=127 // pred_check
          %p1197 = pneg %p153
        $region138: #{tpu_custom_call.1} parent=127 // pred_check_branch
          %1199 = sbr.rel (%p1197) target = $region140
        $region139: #{tpu_custom_call.1} parent=127 // pred_region
          %1201 = dma.done %s1194, 16
        $region140: #{tpu_custom_call.1} parent=127 // pred_fallthru
          _
        %s1202 = sand.u32 %s68, 1
        %s1203 = scalar_lea.sflag [#allocation10], %s1202
        %s1204 = sand.u32 %s166, 1
        %s1205 = scalar_lea.vmem [#allocation9], %s1204
        // Predicated region
        $region141: #{tpu_custom_call.1} parent=127 // pred_check
          %p1206 = pneg %p179
        $region142: #{tpu_custom_call.1} parent=127 // pred_check_branch
          %1208 = sbr.rel (%p1206) target = $region144
        $region143: #{tpu_custom_call.1} parent=127 // pred_region
          %1210 = dma.done %s1203, 16
        $region144: #{tpu_custom_call.1} parent=127 // pred_fallthru
          _
        %s1211 = sand.u32 %s68, 1
        %s1212 = scalar_lea.sflag [#allocation10], %s1211
        %s1213 = sand.u32 %s192, 1
        %s1214 = scalar_lea.vmem [#allocation11], %s1213
        // Predicated region
        $region145: #{tpu_custom_call.1} parent=127 // pred_check
          %p1215 = pneg %p205
        $region146: #{tpu_custom_call.1} parent=127 // pred_check_branch
          %1217 = sbr.rel (%p1215) target = $region148
        $region147: #{tpu_custom_call.1} parent=127 // pred_region
          %1219 = dma.done %s1212, 16
        $region148: #{tpu_custom_call.1} parent=127 // pred_fallthru
          _
        %s1220 = sand.u32 %s68, 1
        %s1221 = scalar_lea.sflag [#allocation13], %s1220
        %s1222 = sand.u32 %s244, 1
        %s1223 = scalar_lea.vmem [#allocation12], %s1222
        // Predicated region
        $region149: #{tpu_custom_call.1} parent=127 // pred_check
          %p1224 = pneg %p257
        $region150: #{tpu_custom_call.1} parent=127 // pred_check_branch
          %1226 = sbr.rel (%p1224) target = $region152
        $region151: #{tpu_custom_call.1} parent=127 // pred_region
          %1228 = dma.done %s1221, 16
        $region152: #{tpu_custom_call.1} parent=127 // pred_fallthru
          _
        %s1229 = sand.u32 %s68, 1
        %s1230 = scalar_lea.sflag [#allocation13], %s1229
        %s1231 = sand.u32 %s296, 1
        %s1232 = scalar_lea.vmem [#allocation14], %s1231
        // Predicated region
        $region153: #{tpu_custom_call.1} parent=127 // pred_check
          %p1233 = pneg %p309
        $region154: #{tpu_custom_call.1} parent=127 // pred_check_branch
          %1235 = sbr.rel (%p1233) target = $region156
        $region155: #{tpu_custom_call.1} parent=127 // pred_region
          %1237 = dma.done %s1230, 16
        $region156: #{tpu_custom_call.1} parent=127 // pred_fallthru
          _
        %s1238 = sand.u32 %s68, 1
        %s1239 = scalar_lea.sflag [#allocation16], %s1238
        %s1240 = sand.u32 %s322, 1
        %s1241 = scalar_lea.vmem [#allocation15], %s1240
        // Predicated region
        $region157: #{tpu_custom_call.1} parent=127 // pred_check
          %p1242 = pneg %p335
        $region158: #{tpu_custom_call.1} parent=127 // pred_check_branch
          %1244 = sbr.rel (%p1242) target = $region160
        $region159: #{tpu_custom_call.1} parent=127 // pred_region
          %1246 = dma.done %s1239, 16
        $region160: #{tpu_custom_call.1} parent=127 // pred_fallthru
          _
        %s1247 = sand.u32 %s68, 1
        %s1248 = scalar_lea.sflag [#allocation16], %s1247
        %s1249 = sand.u32 %s348, 1
        %s1250 = scalar_lea.vmem [#allocation17], %s1249
        // Predicated region
        $region161: #{tpu_custom_call.1} parent=127 // pred_check
          %p1251 = pneg %p361
        $region162: #{tpu_custom_call.1} parent=127 // pred_check_branch
          %1253 = sbr.rel (%p1251) target = $region164
        $region163: #{tpu_custom_call.1} parent=127 // pred_region
          %1255 = dma.done %s1248, 16
        $region164: #{tpu_custom_call.1} parent=127 // pred_fallthru
          _
        %s1256 = sand.u32 %s68, 1
        %s1257 = scalar_lea.sflag [#allocation19], %s1256
        %s1258 = sand.u32 %s400, 1
        %s1259 = scalar_lea.vmem [#allocation18], %s1258
        // Predicated region
        $region165: #{tpu_custom_call.1} parent=127 // pred_check
          %p1260 = pneg %p413
        $region166: #{tpu_custom_call.1} parent=127 // pred_check_branch
          %1262 = sbr.rel (%p1260) target = $region168
        $region167: #{tpu_custom_call.1} parent=127 // pred_region
          %1264 = dma.done %s1257, 16
        $region168: #{tpu_custom_call.1} parent=127 // pred_fallthru
          _
        %s1265 = sand.u32 %s68, 1
        %s1266 = scalar_lea.sflag [#allocation19], %s1265
        %s1267 = sand.u32 %s426, 1
        %s1268 = smul.addr %s1267, 16
        %s1269 = scalar_lea.vmem [#allocation20], %s1268
        // Predicated region
        $region169: #{tpu_custom_call.1} parent=127 // pred_check
          %p1270 = pneg %p439
        $region170: #{tpu_custom_call.1} parent=127 // pred_check_branch
          %1272 = sbr.rel (%p1270) target = $region172
        $region171: #{tpu_custom_call.1} parent=127 // pred_region
          %1274 = dma.done %s1266, 256
        $region172: #{tpu_custom_call.1} parent=127 // pred_fallthru
          _
        %s1275 = sand.u32 %s68, 1
        %s1276 = scalar_lea.sflag [#allocation22], %s1275
        %s1277 = sand.u32 %s452, 1
        %s1278 = scalar_lea.vmem [#allocation21], %s1277
        // Predicated region
        $region173: #{tpu_custom_call.1} parent=127 // pred_check
          %p1279 = pneg %p465
        $region174: #{tpu_custom_call.1} parent=127 // pred_check_branch
          %1281 = sbr.rel (%p1279) target = $region176
        $region175: #{tpu_custom_call.1} parent=127 // pred_region
          %1283 = dma.done %s1276, 16
        $region176: #{tpu_custom_call.1} parent=127 // pred_fallthru
          _
        %s1284 = sand.u32 %s68, 1
        %s1285 = scalar_lea.sflag [#allocation22], %s1284
        %s1286 = sand.u32 %s478, 1
        %s1287 = smul.addr %s1286, 16
        %s1288 = scalar_lea.vmem [#allocation23], %s1287
        // Predicated region
        $region177: #{tpu_custom_call.1} parent=127 // pred_check
          %p1289 = pneg %p491
        $region178: #{tpu_custom_call.1} parent=127 // pred_check_branch
          %1291 = sbr.rel (%p1289) target = $region180
        $region179: #{tpu_custom_call.1} parent=127 // pred_region
          %1293 = dma.done %s1285, 256
        $region180: #{tpu_custom_call.1} parent=127 // pred_fallthru
          _
        %s1294 = sand.u32 %s68, 1
        %s1295 = scalar_lea.sflag [#allocation25], %s1294
        %s1296 = sand.u32 %s504, 1
        %s1297 = scalar_lea.vmem [#allocation24], %s1296
        // Predicated region
        $region181: #{tpu_custom_call.1} parent=127 // pred_check
          %p1298 = pneg %p517
        $region182: #{tpu_custom_call.1} parent=127 // pred_check_branch
          %1300 = sbr.rel (%p1298) target = $region184
        $region183: #{tpu_custom_call.1} parent=127 // pred_region
          %1302 = dma.done %s1295, 16
        $region184: #{tpu_custom_call.1} parent=127 // pred_fallthru
          _
        %s1303 = sand.u32 %s68, 1
        %s1304 = scalar_lea.sflag [#allocation25], %s1303
        %s1305 = sand.u32 %s530, 1
        %s1306 = scalar_lea.vmem [#allocation26], %s1305
        // Predicated region
        $region185: #{tpu_custom_call.1} parent=127 // pred_check
          %p1307 = pneg %p543
        $region186: #{tpu_custom_call.1} parent=127 // pred_check_branch
          %1309 = sbr.rel (%p1307) target = $region188
        $region187: #{tpu_custom_call.1} parent=127 // pred_region
          %1311 = dma.done %s1304, 16
        $region188: #{tpu_custom_call.1} parent=127 // pred_fallthru
          _
        %s1312 = sand.u32 %s68, 1
        %s1313 = scalar_lea.sflag [#allocation28], %s1312
        %s1314 = sand.u32 %s556, 1
        %s1315 = scalar_lea.vmem [#allocation27], %s1314
        // Predicated region
        $region189: #{tpu_custom_call.1} parent=127 // pred_check
          %p1316 = pneg %p569
        $region190: #{tpu_custom_call.1} parent=127 // pred_check_branch
          %1318 = sbr.rel (%p1316) target = $region192
        $region191: #{tpu_custom_call.1} parent=127 // pred_region
          %1320 = dma.done %s1313, 16
        $region192: #{tpu_custom_call.1} parent=127 // pred_fallthru
          _
        %s1321 = sand.u32 %s68, 1
        %s1322 = scalar_lea.sflag [#allocation28], %s1321
        %s1323 = sand.u32 %s582, 1
        %s1324 = smul.addr %s1323, 16
        %s1325 = scalar_lea.vmem [#allocation29], %s1324
        // Predicated region
        $region193: #{tpu_custom_call.1} parent=127 // pred_check
          %p1326 = pneg %p595
        $region194: #{tpu_custom_call.1} parent=127 // pred_check_branch
          %1328 = sbr.rel (%p1326) target = $region196
        $region195: #{tpu_custom_call.1} parent=127 // pred_region
          %1330 = dma.done %s1322, 256
        $region196: #{tpu_custom_call.1} parent=127 // pred_fallthru
          _
        %s1331 = sand.u32 %s88, 1
        %s1332 = scalar_lea.sflag [#allocation4], %s1331
        %s1333 = sand.u32 %s88, 1
        %s1334 = smul.addr %s1333, 8
        %s1335 = scalar_lea.vmem [#allocation3], %s1334
        %p1336 = pneg %p101
        %p1337 = pneg %p98
        %s1338 = sand.u32 %s68, 1
        %s1339 = scalar_lea.sflag [#allocation7], %s1338
        %s1340 = sand.u32 %s114, 1
        %s1341 = smul.addr %s1340, 4
        %s1342 = scalar_lea.vmem [#allocation6], %s1341
        %p1343 = pneg %p127
        %p1344 = pneg %p124
        %s1345 = sand.u32 %s68, 1
        %s1346 = scalar_lea.sflag [#allocation7], %s1345
        %s1347 = sand.u32 %s140, 1
        %s1348 = scalar_lea.vmem [#allocation8], %s1347
        %p1349 = pneg %p153
        %p1350 = pneg %p150
        %s1351 = sand.u32 %s68, 1
        %s1352 = scalar_lea.sflag [#allocation10], %s1351
        %s1353 = sand.u32 %s166, 1
        %s1354 = scalar_lea.vmem [#allocation9], %s1353
        %p1355 = pneg %p179
        %p1356 = pneg %p176
        %s1357 = sand.u32 %s68, 1
        %s1358 = scalar_lea.sflag [#allocation10], %s1357
        %s1359 = sand.u32 %s192, 1
        %s1360 = scalar_lea.vmem [#allocation11], %s1359
        %p1361 = pneg %p205
        %p1362 = pneg %p202
        %p1363 = scmp.lt.s32.totalorder %s73, 1
        %s1364 = scalar_select %p1363, %s73, 1
        %s1365 = smul.addr %s1364, 4
        %s1366 = smul.addr %s1365, 4
        %s1367 = scalar_lea.vmem %s5, %s1366
        %p1368 = pneg %p231
        %p1369 = pneg %p228
        %s1370 = sand.u32 %s68, 1
        %s1371 = scalar_lea.sflag [#allocation13], %s1370
        %s1372 = sand.u32 %s244, 1
        %s1373 = scalar_lea.vmem [#allocation12], %s1372
        %p1374 = pneg %p257
        %p1375 = pneg %p254
        %p1376 = scmp.lt.s32.totalorder %s73, 1
        %s1377 = scalar_select %p1376, %s73, 1
        %s1378 = smul.addr %s1377, 4
        %s1379 = smul.addr %s1378, 4
        %s1380 = scalar_lea.vmem %s7, %s1379
        %p1381 = pneg %p283
        %p1382 = pneg %p280
        %s1383 = sand.u32 %s68, 1
        %s1384 = scalar_lea.sflag [#allocation13], %s1383
        %s1385 = sand.u32 %s296, 1
        %s1386 = scalar_lea.vmem [#allocation14], %s1385
        %p1387 = pneg %p309
        %p1388 = pneg %p306
        %s1389 = sand.u32 %s68, 1
        %s1390 = scalar_lea.sflag [#allocation16], %s1389
        %s1391 = sand.u32 %s322, 1
        %s1392 = scalar_lea.vmem [#allocation15], %s1391
        %p1393 = pneg %p335
        %p1394 = pneg %p332
        %s1395 = sand.u32 %s68, 1
        %s1396 = scalar_lea.sflag [#allocation16], %s1395
        %s1397 = sand.u32 %s348, 1
        %s1398 = scalar_lea.vmem [#allocation17], %s1397
        %p1399 = pneg %p361
        %p1400 = pneg %p358
        %p1401 = scmp.lt.s32.totalorder %s73, 1
        %s1402 = scalar_select %p1401, %s73, 1
        %s1403 = smul.addr %s1402, 4
        %s1404 = smul.addr %s1403, 4
        %s1405 = scalar_lea.vmem %s11, %s1404
        %p1406 = pneg %p387
        %p1407 = pneg %p384
        %s1408 = sand.u32 %s68, 1
        %s1409 = scalar_lea.sflag [#allocation19], %s1408
        %s1410 = sand.u32 %s400, 1
        %s1411 = scalar_lea.vmem [#allocation18], %s1410
        %p1412 = pneg %p413
        %p1413 = pneg %p410
        %s1414 = sand.u32 %s68, 1
        %s1415 = scalar_lea.sflag [#allocation19], %s1414
        %s1416 = sand.u32 %s426, 1
        %s1417 = smul.addr %s1416, 16
        %s1418 = scalar_lea.vmem [#allocation20], %s1417
        %p1419 = pneg %p439
        %p1420 = pneg %p436
        %s1421 = sand.u32 %s68, 1
        %s1422 = scalar_lea.sflag [#allocation22], %s1421
        %s1423 = sand.u32 %s452, 1
        %s1424 = scalar_lea.vmem [#allocation21], %s1423
        %p1425 = pneg %p465
        %p1426 = pneg %p462
        %s1427 = sand.u32 %s68, 1
        %s1428 = scalar_lea.sflag [#allocation22], %s1427
        %s1429 = sand.u32 %s478, 1
        %s1430 = smul.addr %s1429, 16
        %s1431 = scalar_lea.vmem [#allocation23], %s1430
        %p1432 = pneg %p491
        %p1433 = pneg %p488
        %s1434 = sand.u32 %s68, 1
        %s1435 = scalar_lea.sflag [#allocation25], %s1434
        %s1436 = sand.u32 %s504, 1
        %s1437 = scalar_lea.vmem [#allocation24], %s1436
        %p1438 = pneg %p517
        %p1439 = pneg %p514
        %s1440 = sand.u32 %s68, 1
        %s1441 = scalar_lea.sflag [#allocation25], %s1440
        %s1442 = sand.u32 %s530, 1
        %s1443 = scalar_lea.vmem [#allocation26], %s1442
        %p1444 = pneg %p543
        %p1445 = pneg %p540
        %s1446 = sand.u32 %s68, 1
        %s1447 = scalar_lea.sflag [#allocation28], %s1446
        %s1448 = sand.u32 %s556, 1
        %s1449 = scalar_lea.vmem [#allocation27], %s1448
        %p1450 = pneg %p569
        %p1451 = pneg %p566
        %s1452 = sand.u32 %s68, 1
        %s1453 = scalar_lea.sflag [#allocation28], %s1452
        %s1454 = sand.u32 %s582, 1
        %s1455 = smul.addr %s1454, 16
        %s1456 = scalar_lea.vmem [#allocation29], %s1455
        %p1457 = pneg %p595
        %p1458 = pneg %p592
        %p1459 = scmp.lt.s32.totalorder %s73, 1
        %s1460 = scalar_select %p1459, %s73, 1
        %s1461 = scalar_lea.vmem %s20, %s1460
        %p1462 = pneg %p621
        %p1463 = pneg %p618
        %p1464 = scmp.lt.s32.totalorder %s73, 1
        %s1465 = scalar_select %p1464, %s73, 1
        %s1466 = smul.addr %s1465, 8
        %s1467 = smul.addr %s1466, 4
        %s1468 = scalar_lea.vmem %s21, %s1467
        %p1469 = pneg %p647
        %p1470 = pneg %p644
        %p1471 = scmp.lt.s32.totalorder %s73, 1
        %s1472 = scalar_select %p1471, %s73, 1
        %s1473 = scalar_lea.vmem %s22, %s1472
        %p1474 = pneg %p673
        %p1475 = pneg %p670
        %p1476 = pneg %p694
        %p1477 = pneg %p691
        %p1478 = pneg %p715
        %p1479 = pneg %p712
        %p1480 = pneg %p736
        %p1481 = pneg %p733
        %p1482 = pneg %p757
        %p1483 = pneg %p754
        %p1484 = pneg %p783
        %p1485 = pneg %p780
        %s1486 = sand.u32 %s770, 1
        %s1487 = scalar_lea.sflag [#allocation5], %s1486
        %s1488 = sand.u32 %s770, 1
        %s1489 = smul.addr %s1488, 8
        %s1490 = scalar_lea.vmem [#allocation30], %s1489
        %p1491 = scmp.lt.s32.totalorder %s73, 1
        %s1492 = scalar_select %p1491, %s73, 1
        %s1493 = smul.addr %s1492, 4
        %s1494 = smul.addr %s1493, 4
        %s1495 = scalar_lea.vmem %s5, %s1494
        %p1496 = scmp.lt.s32.totalorder %s73, 1
        %s1497 = scalar_select %p1496, %s73, 1
        %s1498 = smul.addr %s1497, 4
        %s1499 = smul.addr %s1498, 4
        %s1500 = scalar_lea.vmem %s7, %s1499
        %p1501 = scmp.lt.s32.totalorder %s73, 1
        %s1502 = scalar_select %p1501, %s73, 1
        %s1503 = smul.addr %s1502, 4
        %s1504 = smul.addr %s1503, 4
        %s1505 = scalar_lea.vmem %s11, %s1504
        %p1506 = scmp.lt.s32.totalorder %s73, 1
        %s1507 = scalar_select %p1506, %s73, 1
        %s1508 = scalar_lea.vmem %s20, %s1507
        %p1509 = scmp.lt.s32.totalorder %s73, 1
        %s1510 = scalar_select %p1509, %s73, 1
        %s1511 = smul.addr %s1510, 8
        %s1512 = smul.addr %s1511, 4
        %s1513 = scalar_lea.vmem %s21, %s1512
        %p1514 = scmp.lt.s32.totalorder %s73, 1
        %s1515 = scalar_select %p1514, %s73, 1
        %s1516 = scalar_lea.vmem %s22, %s1515
        %p1518 = scmp.eq.s32.totalorder %s73, 0
        // Predicated region
        $region197: #{tpu_custom_call.1} parent=127 // pred_check
          %p1519 = pneg %p1518
        $region198: #{tpu_custom_call.1} parent=127 // pred_check_branch
          %1521 = sbr.rel (%p1519) target = $region200
        $region199: #{tpu_custom_call.1} parent=127 // pred_region
          %v1522 = vld [vmem:[%s1177] sm:$0xff]
          %vm1523 = vcmask 261120
          %1524 = vst.msk [vmem:[#allocation2] sm:$0xff] %vm1523, %v1522
        $region200: #{tpu_custom_call.1} parent=127 // pred_fallthru
          _
        %v1525 = vld [vmem:[#allocation2] sm:$0xff]
        %v1526 = vld [vmem:[%s1196] sm:$0x1]
        %vm1527 = vcmp.gt.f32.partialorder %v1526, 0.0
        %v1528 = vld [vmem:[%s1205] sm:$0x1]
        %v1529 = vld [vmem:[%s1214] sm:$0x1]
        %vm1530 = vcmask 261120
        %v1531 = vsel %vm1530, %v1525, 0.0
        %1532 = vadd.xlane.f32.xlu0 %v1531
        %v1533 = vpop.xlane.xlu0 %1532
        %v1534 = vrcp.pop 32.0
        %v1535 = vmul.f32 32.0, %v1534
        %v1536 = vsub.f32 1.0, %v1535
        %v1537 = vmul.f32 %v1534, %v1536
        %v1538 = vadd.f32 %v1534, %v1537
        %vm1539 = vweird.f32 %v1534
        %v1540 = vsel %vm1539, %v1534, %v1538
        %v1541 = vmul.f32 %v1533, %v1540
        %v1542 = vsub.f32 %v1525, %v1541
        %v1543 = vmul.f32 %v1542, %v1542
        %v1544 = vsel %vm1530, %v1543, 0.0
        %1545 = vadd.xlane.f32.xlu0 %v1544
        %v1546 = vpop.xlane.xlu0 %1545
        %v1547 = vmul.f32 %v1546, %v1540
        %v1548 = vadd.f32 %v1547, 1e-12
        %v1549 = vrsqrt.pop %v1548
        %v1550 = vmul.f32 %v1549, %v1548
        %v1551 = vmul.f32 %v1550, %v1549
        %v1552 = vmul.f32 0.5, %v1551
        %v1553 = vsub.f32 1.5, %v1552
        %v1554 = vmul.f32 %v1549, %v1553
        %vm1555 = vweird.f32 %v1548
        %vm1556 = vweird.f32 %v1549
        %vm1557 = vmor %vm1555, %vm1556
        %v1558 = vsel %vm1557, %v1549, %v1554
        %v1559 = vmul.f32 %v1542, %v1558
        %v1561 = vperm.slane %v1528, 0
        %v1563 = vmul.f32 %v1559, %v1561
        %v1565 = vperm.slane %v1529, 0
        %v1567 = vadd.f32 %v1563, %v1565
        %v1568 = vpack.c.bf16 %v1567, %v1567
        %v1569 = vld [vmem:[%s1495] sm:$0xf]
        %v1570 = vld [vmem:[%s1495 + $0x4] sm:$0xf]
        %v1571 = vld [vmem:[%s1495 + $0x8] sm:$0xf]
        %v1572 = vld [vmem:[%s1495 + $0xc] sm:$0xf]
        %v1573 = vld [vmem:[%s1223] sm:$0x1]
        %v1575 = vperm.slane %v1573, 0
        %v1581 = vunpack.c.l.b16 %v1569
        %v1582 = vunpack.c.l.b16 %v1570
        %v1583 = vunpack.c.l.b16 %v1571
        %v1584 = vunpack.c.l.b16 %v1572
        %v1585 = vpack.c.b16 %v1582, %v1581
        %v1586 = vpack.c.b16 %v1584, %v1583
        %v1590 = vsel %vm1530, %v1568, 0
        %1592 = vmatpush.bf16.msra.mxu0 0
        %1593 = vmatpush.bf16.msra.mxu0 0
        %1594 = vmatpush.bf16.msra.mxu0 0
        %1595 = vmatpush.bf16.msra.mxu0 0
        %1596 = vmatpush.bf16.msra.mxu0 0
        %1597 = vmatpush.bf16.msra.mxu0 0
        %1598 = vmatpush.bf16.msra.mxu0 %v1586
        %1599 = vmatpush.bf16.msra.mxu0 %v1585
        %1600 = vmatmul.bf16.gmra.mxu0 %v1590
        %v1601 = vpop.f32.mrf.mxu0
        %v1602 = vadd.f32 %v1575, %v1601
        %v1603 = vpop.f32.mrf.mxu0
        %1604 = vdwg.mxu0
        %v1605 = vld [vmem:[%s1500] sm:$0xf]
        %v1606 = vld [vmem:[%s1500 + $0x4] sm:$0xf]
        %v1607 = vld [vmem:[%s1500 + $0x8] sm:$0xf]
        %v1608 = vld [vmem:[%s1500 + $0xc] sm:$0xf]
        %v1609 = vld [vmem:[%s1232] sm:$0x1]
        %v1610 = vpack.c.bf16 %v1602, %v1602
        %v1612 = vunpack.c.l.b16 %v1610
        %v1613 = vpack.c.b16 %v1612, %v1612
        %1614 = vrot.lane.b32.xlu0 %v1613, 96
        %v1615 = vpop.permute.xlu0 %1614
        %vm1616 = vcmask 64512
        %v1618 = vsel %vm1616, %v1610, 0
        %v1621 = vsel %vm1616, %v1615, 0
        %1623 = vmatpush.bf16.xpose.msra.mxu0 0
        %1624 = vmatpush.bf16.xpose.msra.mxu0 0
        %1625 = vmatpush.bf16.xpose.msra.mxu0 0
        %1626 = vmatpush.bf16.xpose.msra.mxu0 0
        %1627 = vmatpush.bf16.xpose.msra.mxu0 0
        %1628 = vmatpush.bf16.xpose.msra.mxu0 0
        %1629 = vmatpush.bf16.xpose.msra.mxu0 0
        %1630 = vmatpush.bf16.xpose.msra.mxu0 %v1621
        %1631 = vmatmul.bf16.gmra.mxu0 %v1618
        %v1632 = vpop.f32.mrf.mxu0
        %v1633 = vadd.f32 0.0, %v1632
        %v1634 = vpop.f32.mrf.mxu0
        %1635 = vdwg.mxu0
        %v1636 = vmul.f32 %v1633, 0.35355338
        %v1637 = vsel %vm1616, %v1636, -inf
        %1638 = vmax.xlane.f32.xlu0 %v1637
        %v1639 = vpop.xlane.xlu0 %1638
        %v1640 = vsub.f32 %v1636, %v1639
        %v1641 = vmul.f32 %v1640, 1.442695
        %v1642 = vpow.pop %v1641
        %v1643 = vsel %vm1616, %v1642, 0.0
        %1644 = vadd.xlane.f32.xlu0 %v1643
        %v1645 = vpop.xlane.xlu0 %1644
        %v1646 = vrcp.pop %v1645
        %v1647 = vmul.f32 %v1642, %v1646
        %v1648 = vpack.c.bf16 %v1647, %v1647
        %1649 = vrot.lane.b32.xlu0 %v1613, 64
        %v1650 = vpop.permute.xlu0 %1649
        %v1652 = vsel %vm1616, %v1648, 0
        %vm1654 = vcmask 1043456
        %v1656 = vsel %vm1654, %v1650, 0
        %1658 = vmatpush.bf16.msra.mxu0 0
        %1659 = vmatpush.bf16.msra.mxu0 0
        %1660 = vmatpush.bf16.msra.mxu0 0
        %1661 = vmatpush.bf16.msra.mxu0 0
        %1662 = vmatpush.bf16.msra.mxu0 0
        %1663 = vmatpush.bf16.msra.mxu0 0
        %1664 = vmatpush.bf16.msra.mxu0 0
        %1665 = vmatpush.bf16.msra.mxu0 %v1656
        %1666 = vmatmul.bf16.gmra.mxu0 %v1652
        %v1667 = vpop.f32.mrf.mxu0
        %v1668 = vadd.f32 0.0, %v1667
        %v1669 = vpop.f32.mrf.mxu0
        %1670 = vdwg.mxu0
        %v1671 = vpack.c.bf16 %v1668, %v1668
        %1672 = vrot.lane.b32.xlu0 %v1613, 120
        %v1673 = vpop.permute.xlu0 %1672
        %1674 = vrot.lane.b32.xlu0 %v1613, 88
        %v1675 = vpop.permute.xlu0 %1674
        %v1677 = vsel %vm1616, %v1673, 0
        %v1680 = vsel %vm1616, %v1675, 0
        %1682 = vmatpush.bf16.xpose.msra.mxu0 0
        %1683 = vmatpush.bf16.xpose.msra.mxu0 0
        %1684 = vmatpush.bf16.xpose.msra.mxu0 0
        %1685 = vmatpush.bf16.xpose.msra.mxu0 0
        %1686 = vmatpush.bf16.xpose.msra.mxu0 0
        %1687 = vmatpush.bf16.xpose.msra.mxu0 0
        %1688 = vmatpush.bf16.xpose.msra.mxu0 0
        %1689 = vmatpush.bf16.xpose.msra.mxu0 %v1680
        %1690 = vmatmul.bf16.gmra.mxu0 %v1677
        %v1691 = vpop.f32.mrf.mxu0
        %v1692 = vadd.f32 0.0, %v1691
        %v1693 = vpop.f32.mrf.mxu0
        %1694 = vdwg.mxu0
        %v1695 = vmul.f32 %v1692, 0.35355338
        %v1696 = vsel %vm1616, %v1695, -inf
        %1697 = vmax.xlane.f32.xlu0 %v1696
        %v1698 = vpop.xlane.xlu0 %1697
        %v1699 = vsub.f32 %v1695, %v1698
        %v1700 = vmul.f32 %v1699, 1.442695
        %v1701 = vpow.pop %v1700
        %v1702 = vsel %vm1616, %v1701, 0.0
        %1703 = vadd.xlane.f32.xlu0 %v1702
        %v1704 = vpop.xlane.xlu0 %1703
        %v1705 = vrcp.pop %v1704
        %v1706 = vmul.f32 %v1701, %v1705
        %v1707 = vpack.c.bf16 %v1706, %v1706
        %1708 = vrot.lane.b32.xlu0 %v1613, 56
        %v1709 = vpop.permute.xlu0 %1708
        %v1711 = vsel %vm1616, %v1707, 0
        %v1714 = vsel %vm1654, %v1709, 0
        %1716 = vmatpush.bf16.msra.mxu0 0
        %1717 = vmatpush.bf16.msra.mxu0 0
        %1718 = vmatpush.bf16.msra.mxu0 0
        %1719 = vmatpush.bf16.msra.mxu0 0
        %1720 = vmatpush.bf16.msra.mxu0 0
        %1721 = vmatpush.bf16.msra.mxu0 0
        %1722 = vmatpush.bf16.msra.mxu0 0
        %1723 = vmatpush.bf16.msra.mxu0 %v1714
        %1724 = vmatmul.bf16.gmra.mxu0 %v1711
        %v1725 = vpop.f32.mrf.mxu0
        %v1726 = vadd.f32 0.0, %v1725
        %v1727 = vpop.f32.mrf.mxu0
        %1728 = vdwg.mxu0
        %v1729 = vpack.c.bf16 %v1726, %v1726
        %v1731 = vsel %vm1616, %v1729, 0
        %v1734 = vsel %vm1654, %v1606, 0
        %1736 = vmatpush.bf16.msra.mxu0 0
        %1737 = vmatpush.bf16.msra.mxu0 0
        %1738 = vmatpush.bf16.msra.mxu0 0
        %1739 = vmatpush.bf16.msra.mxu0 0
        %1740 = vmatpush.bf16.msra.mxu0 0
        %1741 = vmatpush.bf16.msra.mxu0 0
        %1742 = vmatpush.bf16.msra.mxu0 0
        %1743 = vmatpush.bf16.msra.mxu0 %v1734
        %1744 = vmatmul.bf16.gmra.mxu0 %v1731
        %v1745 = vpop.f32.mrf.mxu0
        %v1746 = vadd.f32 0.0, %v1745
        %v1747 = vpop.f32.mrf.mxu0
        %1748 = vdwg.mxu0
        %v1750 = vsel %vm1616, %v1671, 0
        %v1753 = vsel %vm1654, %v1605, 0
        %1755 = vmatpush.bf16.msra.mxu0 0
        %1756 = vmatpush.bf16.msra.mxu0 0
        %1757 = vmatpush.bf16.msra.mxu0 0
        %1758 = vmatpush.bf16.msra.mxu0 0
        %1759 = vmatpush.bf16.msra.mxu0 0
        %1760 = vmatpush.bf16.msra.mxu0 0
        %1761 = vmatpush.bf16.msra.mxu0 0
        %1762 = vmatpush.bf16.msra.mxu0 %v1753
        %1763 = vmatmul.bf16.gmra.mxu0 %v1750
        %v1764 = vpop.f32.mrf.mxu0
        %v1765 = vadd.f32 %v1746, %v1764
        %v1766 = vpop.f32.mrf.mxu0
        %1767 = vdwg.mxu0
        %1768 = vrot.lane.b32.xlu0 %v1613, 112
        %v1769 = vpop.permute.xlu0 %1768
        %1770 = vrot.lane.b32.xlu0 %v1613, 80
        %v1771 = vpop.permute.xlu0 %1770
        %v1773 = vsel %vm1616, %v1769, 0
        %v1776 = vsel %vm1616, %v1771, 0
        %1778 = vmatpush.bf16.xpose.msra.mxu0 0
        %1779 = vmatpush.bf16.xpose.msra.mxu0 0
        %1780 = vmatpush.bf16.xpose.msra.mxu0 0
        %1781 = vmatpush.bf16.xpose.msra.mxu0 0
        %1782 = vmatpush.bf16.xpose.msra.mxu0 0
        %1783 = vmatpush.bf16.xpose.msra.mxu0 0
        %1784 = vmatpush.bf16.xpose.msra.mxu0 0
        %1785 = vmatpush.bf16.xpose.msra.mxu0 %v1776
        %1786 = vmatmul.bf16.gmra.mxu0 %v1773
        %v1787 = vpop.f32.mrf.mxu0
        %v1788 = vadd.f32 0.0, %v1787
        %v1789 = vpop.f32.mrf.mxu0
        %1790 = vdwg.mxu0
        %v1791 = vmul.f32 %v1788, 0.35355338
        %v1792 = vsel %vm1616, %v1791, -inf
        %1793 = vmax.xlane.f32.xlu0 %v1792
        %v1794 = vpop.xlane.xlu0 %1793
        %v1795 = vsub.f32 %v1791, %v1794
        %v1796 = vmul.f32 %v1795, 1.442695
        %v1797 = vpow.pop %v1796
        %v1798 = vsel %vm1616, %v1797, 0.0
        %1799 = vadd.xlane.f32.xlu0 %v1798
        %v1800 = vpop.xlane.xlu0 %1799
        %v1801 = vrcp.pop %v1800
        %v1802 = vmul.f32 %v1797, %v1801
        %v1803 = vpack.c.bf16 %v1802, %v1802
        %1804 = vrot.lane.b32.xlu0 %v1613, 48
        %v1805 = vpop.permute.xlu0 %1804
        %v1807 = vsel %vm1616, %v1803, 0
        %v1810 = vsel %vm1654, %v1805, 0
        %1812 = vmatpush.bf16.msra.mxu0 0
        %1813 = vmatpush.bf16.msra.mxu0 0
        %1814 = vmatpush.bf16.msra.mxu0 0
        %1815 = vmatpush.bf16.msra.mxu0 0
        %1816 = vmatpush.bf16.msra.mxu0 0
        %1817 = vmatpush.bf16.msra.mxu0 0
        %1818 = vmatpush.bf16.msra.mxu0 0
        %1819 = vmatpush.bf16.msra.mxu0 %v1810
        %1820 = vmatmul.bf16.gmra.mxu0 %v1807
        %v1821 = vpop.f32.mrf.mxu0
        %v1822 = vadd.f32 0.0, %v1821
        %v1823 = vpop.f32.mrf.mxu0
        %1824 = vdwg.mxu0
        %v1825 = vpack.c.bf16 %v1822, %v1822
        %v1827 = vsel %vm1616, %v1825, 0
        %v1830 = vsel %vm1654, %v1607, 0
        %1832 = vmatpush.bf16.msra.mxu0 0
        %1833 = vmatpush.bf16.msra.mxu0 0
        %1834 = vmatpush.bf16.msra.mxu0 0
        %1835 = vmatpush.bf16.msra.mxu0 0
        %1836 = vmatpush.bf16.msra.mxu0 0
        %1837 = vmatpush.bf16.msra.mxu0 0
        %1838 = vmatpush.bf16.msra.mxu0 0
        %1839 = vmatpush.bf16.msra.mxu0 %v1830
        %1840 = vmatmul.bf16.gmra.mxu0 %v1827
        %v1841 = vpop.f32.mrf.mxu0
        %v1842 = vadd.f32 0.0, %v1841
        %v1843 = vpop.f32.mrf.mxu0
        %1844 = vdwg.mxu0
        %v1845 = vadd.f32 %v1765, %v1842
        %1846 = vrot.lane.b32.xlu0 %v1613, 104
        %v1847 = vpop.permute.xlu0 %1846
        %1848 = vrot.lane.b32.xlu0 %v1613, 72
        %v1849 = vpop.permute.xlu0 %1848
        %v1851 = vsel %vm1616, %v1847, 0
        %v1854 = vsel %vm1616, %v1849, 0
        %1856 = vmatpush.bf16.xpose.msra.mxu0 0
        %1857 = vmatpush.bf16.xpose.msra.mxu0 0
        %1858 = vmatpush.bf16.xpose.msra.mxu0 0
        %1859 = vmatpush.bf16.xpose.msra.mxu0 0
        %1860 = vmatpush.bf16.xpose.msra.mxu0 0
        %1861 = vmatpush.bf16.xpose.msra.mxu0 0
        %1862 = vmatpush.bf16.xpose.msra.mxu0 0
        %1863 = vmatpush.bf16.xpose.msra.mxu0 %v1854
        %1864 = vmatmul.bf16.gmra.mxu0 %v1851
        %v1865 = vpop.f32.mrf.mxu0
        %v1866 = vadd.f32 0.0, %v1865
        %v1867 = vpop.f32.mrf.mxu0
        %1868 = vdwg.mxu0
        %v1869 = vmul.f32 %v1866, 0.35355338
        %v1870 = vsel %vm1616, %v1869, -inf
        %1871 = vmax.xlane.f32.xlu0 %v1870
        %v1872 = vpop.xlane.xlu0 %1871
        %v1873 = vsub.f32 %v1869, %v1872
        %v1874 = vmul.f32 %v1873, 1.442695
        %v1875 = vpow.pop %v1874
        %v1876 = vsel %vm1616, %v1875, 0.0
        %1877 = vadd.xlane.f32.xlu0 %v1876
        %v1878 = vpop.xlane.xlu0 %1877
        %v1879 = vrcp.pop %v1878
        %v1880 = vmul.f32 %v1875, %v1879
        %v1881 = vpack.c.bf16 %v1880, %v1880
        %1882 = vrot.lane.b32.xlu0 %v1613, 40
        %v1883 = vpop.permute.xlu0 %1882
        %v1885 = vsel %vm1616, %v1881, 0
        %v1888 = vsel %vm1654, %v1883, 0
        %1890 = vmatpush.bf16.msra.mxu0 0
        %1891 = vmatpush.bf16.msra.mxu0 0
        %1892 = vmatpush.bf16.msra.mxu0 0
        %1893 = vmatpush.bf16.msra.mxu0 0
        %1894 = vmatpush.bf16.msra.mxu0 0
        %1895 = vmatpush.bf16.msra.mxu0 0
        %1896 = vmatpush.bf16.msra.mxu0 0
        %1897 = vmatpush.bf16.msra.mxu0 %v1888
        %1898 = vmatmul.bf16.gmra.mxu0 %v1885
        %v1899 = vpop.f32.mrf.mxu0
        %v1900 = vadd.f32 0.0, %v1899
        %v1901 = vpop.f32.mrf.mxu0
        %1902 = vdwg.mxu0
        %v1903 = vpack.c.bf16 %v1900, %v1900
        %v1905 = vsel %vm1616, %v1903, 0
        %v1908 = vsel %vm1654, %v1608, 0
        %1910 = vmatpush.bf16.msra.mxu0 0
        %1911 = vmatpush.bf16.msra.mxu0 0
        %1912 = vmatpush.bf16.msra.mxu0 0
        %1913 = vmatpush.bf16.msra.mxu0 0
        %1914 = vmatpush.bf16.msra.mxu0 0
        %1915 = vmatpush.bf16.msra.mxu0 0
        %1916 = vmatpush.bf16.msra.mxu0 0
        %1917 = vmatpush.bf16.msra.mxu0 %v1908
        %1918 = vmatmul.bf16.gmra.mxu0 %v1905
        %v1919 = vpop.f32.mrf.mxu0
        %v1920 = vadd.f32 0.0, %v1919
        %v1921 = vpop.f32.mrf.mxu0
        %1922 = vdwg.mxu0
        %v1923 = vadd.f32 %v1845, %v1920
        %v1925 = vperm.slane %v1609, 0
        %v1927 = vadd.f32 %v1923, %v1925
        %v1928 = vadd.f32 %v1525, %v1927
        %v1929 = vld [vmem:[%s1241] sm:$0x1]
        %v1930 = vld [vmem:[%s1250] sm:$0x1]
        %v1931 = vsel %vm1530, %v1928, 0.0
        %1932 = vadd.xlane.f32.xlu0 %v1931
        %v1933 = vpop.xlane.xlu0 %1932
        %v1934 = vmul.f32 %v1933, %v1540
        %v1935 = vsub.f32 %v1928, %v1934
        %v1936 = vmul.f32 %v1935, %v1935
        %v1937 = vsel %vm1530, %v1936, 0.0
        %1938 = vadd.xlane.f32.xlu0 %v1937
        %v1939 = vpop.xlane.xlu0 %1938
        %v1940 = vmul.f32 %v1939, %v1540
        %v1941 = vadd.f32 %v1940, 1e-12
        %v1942 = vrsqrt.pop %v1941
        %v1943 = vmul.f32 %v1942, %v1941
        %v1944 = vmul.f32 %v1943, %v1942
        %v1945 = vmul.f32 0.5, %v1944
        %v1946 = vsub.f32 1.5, %v1945
        %v1947 = vmul.f32 %v1942, %v1946
        %vm1948 = vweird.f32 %v1941
        %vm1949 = vweird.f32 %v1942
        %vm1950 = vmor %vm1948, %vm1949
        %v1951 = vsel %vm1950, %v1942, %v1947
        %v1952 = vmul.f32 %v1935, %v1951
        %v1954 = vperm.slane %v1929, 0
        %v1956 = vmul.f32 %v1952, %v1954
        %v1958 = vperm.slane %v1930, 0
        %v1960 = vadd.f32 %v1956, %v1958
        %v1961 = vpack.c.bf16 %v1960, %v1960
        %v1962 = vld [vmem:[%s1505] sm:$0xf]
        %v1963 = vld [vmem:[%s1505 + $0x4] sm:$0xf]
        %v1964 = vld [vmem:[%s1505 + $0x8] sm:$0xf]
        %v1965 = vld [vmem:[%s1505 + $0xc] sm:$0xf]
        %v1966 = vld [vmem:[%s1259] sm:$0x1]
        %v1968 = vperm.slane %v1966, 0
        %v1974 = vunpack.c.l.b16 %v1962
        %v1975 = vunpack.c.l.b16 %v1963
        %v1976 = vunpack.c.l.b16 %v1964
        %v1977 = vunpack.c.l.b16 %v1965
        %v1978 = vpack.c.b16 %v1975, %v1974
        %v1979 = vpack.c.b16 %v1977, %v1976
        %v1983 = vsel %vm1530, %v1961, 0
        %1985 = vmatpush.bf16.msra.mxu0 0
        %1986 = vmatpush.bf16.msra.mxu0 0
        %1987 = vmatpush.bf16.msra.mxu0 0
        %1988 = vmatpush.bf16.msra.mxu0 0
        %1989 = vmatpush.bf16.msra.mxu0 0
        %1990 = vmatpush.bf16.msra.mxu0 0
        %1991 = vmatpush.bf16.msra.mxu0 %v1979
        %1992 = vmatpush.bf16.msra.mxu0 %v1978
        %1993 = vmatmul.bf16.gmra.mxu0 %v1983
        %v1994 = vpop.f32.mrf.mxu0
        %v1995 = vadd.f32 %v1968, %v1994
        %v1996 = vpop.f32.mrf.mxu0
        %1997 = vdwg.mxu0
        %v1998 = vld [vmem:[%s1187] sm:$0xf]
        %v1999 = vld [vmem:[%s1269] sm:$0xf]
        %v2000 = vld [vmem:[%s1269 + $0x4] sm:$0xf]
        %v2001 = vld [vmem:[%s1269 + $0x8] sm:$0xf]
        %v2002 = vld [vmem:[%s1269 + $0xc] sm:$0xf]
        %v2003 = vld [vmem:[%s1278] sm:$0x1]
        %v2005 = vperm.slane %v2003, 0
        %v2011 = vunpack.c.l.b16 %v1999
        %v2012 = vunpack.c.l.b16 %v2000
        %v2013 = vunpack.c.l.b16 %v2001
        %v2014 = vunpack.c.l.b16 %v2002
        %v2015 = vpack.c.b16 %v2012, %v2011
        %v2016 = vpack.c.b16 %v2014, %v2013
        %v2020 = vsel %vm1530, %v1998, 0
        %2022 = vmatpush.bf16.msra.mxu0 0
        %2023 = vmatpush.bf16.msra.mxu0 0
        %2024 = vmatpush.bf16.msra.mxu0 0
        %2025 = vmatpush.bf16.msra.mxu0 0
        %2026 = vmatpush.bf16.msra.mxu0 0
        %2027 = vmatpush.bf16.msra.mxu0 0
        %2028 = vmatpush.bf16.msra.mxu0 %v2016
        %2029 = vmatpush.bf16.msra.mxu0 %v2015
        %2030 = vmatmul.bf16.gmra.mxu0 %v2020
        %v2031 = vpop.f32.mrf.mxu0
        %v2032 = vadd.f32 %v2005, %v2031
        %v2033 = vpop.f32.mrf.mxu0
        %2034 = vdwg.mxu0
        %v2035 = vld [vmem:[%s1288] sm:$0xf]
        %v2036 = vld [vmem:[%s1288 + $0x4] sm:$0xf]
        %v2037 = vld [vmem:[%s1288 + $0x8] sm:$0xf]
        %v2038 = vld [vmem:[%s1288 + $0xc] sm:$0xf]
        %v2039 = vld [vmem:[%s1297] sm:$0x1]
        %v2040 = vpack.c.bf16 %v1995, %v1995
        %v2041 = vpack.c.bf16 %v2032, %v2032
        %v2043 = vsel %vm1616, %v2040, 0
        %v2046 = vsel %vm1616, %v2041, 0
        %2048 = vmatpush.bf16.xpose.msra.mxu0 0
        %2049 = vmatpush.bf16.xpose.msra.mxu0 0
        %2050 = vmatpush.bf16.xpose.msra.mxu0 0
        %2051 = vmatpush.bf16.xpose.msra.mxu0 0
        %2052 = vmatpush.bf16.xpose.msra.mxu0 0
        %2053 = vmatpush.bf16.xpose.msra.mxu0 0
        %2054 = vmatpush.bf16.xpose.msra.mxu0 0
        %2055 = vmatpush.bf16.xpose.msra.mxu0 %v2046
        %2056 = vmatmul.bf16.gmra.mxu0 %v2043
        %v2057 = vpop.f32.mrf.mxu0
        %v2058 = vadd.f32 0.0, %v2057
        %v2059 = vpop.f32.mrf.mxu0
        %2060 = vdwg.mxu0
        %v2061 = vmul.f32 %v2058, 0.35355338
        %v2062 = vsel %vm1527, 1, 0
        %v2063 = vperm.slane %v2062, 0
        %vm2064 = vcmp.eq.s32.totalorder %v2063, 1
        %v2065 = vsel %vm2064, %v2061, -3.4028235e+38
        %v2066 = vsel %vm1616, %v2065, -inf
        %2067 = vmax.xlane.f32.xlu0 %v2066
        %v2068 = vpop.xlane.xlu0 %2067
        %v2069 = vsub.f32 %v2065, %v2068
        %v2070 = vmul.f32 %v2069, 1.442695
        %v2071 = vpow.pop %v2070
        %v2072 = vsel %vm1616, %v2071, 0.0
        %2073 = vadd.xlane.f32.xlu0 %v2072
        %v2074 = vpop.xlane.xlu0 %2073
        %v2075 = vrcp.pop %v2074
        %v2076 = vmul.f32 %v2071, %v2075
        %v2077 = vsel %vm2064, %v2076, 0.0
        %v2078 = vpack.c.bf16 %v2077, %v2077
        %v2080 = vunpack.c.l.b16 %v2041
        %v2081 = vpack.c.b16 %v2080, %v2080
        %2082 = vrot.lane.b32.xlu0 %v2081, 96
        %v2083 = vpop.permute.xlu0 %2082
        %v2085 = vsel %vm1616, %v2078, 0
        %v2088 = vsel %vm1654, %v2083, 0
        %2090 = vmatpush.bf16.msra.mxu0 0
        %2091 = vmatpush.bf16.msra.mxu0 0
        %2092 = vmatpush.bf16.msra.mxu0 0
        %2093 = vmatpush.bf16.msra.mxu0 0
        %2094 = vmatpush.bf16.msra.mxu0 0
        %2095 = vmatpush.bf16.msra.mxu0 0
        %2096 = vmatpush.bf16.msra.mxu0 0
        %2097 = vmatpush.bf16.msra.mxu0 %v2088
        %2098 = vmatmul.bf16.gmra.mxu0 %v2085
        %v2099 = vpop.f32.mrf.mxu0
        %v2100 = vadd.f32 0.0, %v2099
        %v2101 = vpop.f32.mrf.mxu0
        %2102 = vdwg.mxu0
        %v2103 = vpack.c.bf16 %v2100, %v2100
        %v2105 = vunpack.c.l.b16 %v2040
        %v2106 = vpack.c.b16 %v2105, %v2105
        %2107 = vrot.lane.b32.xlu0 %v2106, 120
        %v2108 = vpop.permute.xlu0 %2107
        %2109 = vrot.lane.b32.xlu0 %v2081, 120
        %v2110 = vpop.permute.xlu0 %2109
        %v2112 = vsel %vm1616, %v2108, 0
        %v2115 = vsel %vm1616, %v2110, 0
        %2117 = vmatpush.bf16.xpose.msra.mxu0 0
        %2118 = vmatpush.bf16.xpose.msra.mxu0 0
        %2119 = vmatpush.bf16.xpose.msra.mxu0 0
        %2120 = vmatpush.bf16.xpose.msra.mxu0 0
        %2121 = vmatpush.bf16.xpose.msra.mxu0 0
        %2122 = vmatpush.bf16.xpose.msra.mxu0 0
        %2123 = vmatpush.bf16.xpose.msra.mxu0 0
        %2124 = vmatpush.bf16.xpose.msra.mxu0 %v2115
        %2125 = vmatmul.bf16.gmra.mxu0 %v2112
        %v2126 = vpop.f32.mrf.mxu0
        %v2127 = vadd.f32 0.0, %v2126
        %v2128 = vpop.f32.mrf.mxu0
        %2129 = vdwg.mxu0
        %v2130 = vmul.f32 %v2127, 0.35355338
        %v2131 = vsel %vm2064, %v2130, -3.4028235e+38
        %v2132 = vsel %vm1616, %v2131, -inf
        %2133 = vmax.xlane.f32.xlu0 %v2132
        %v2134 = vpop.xlane.xlu0 %2133
        %v2135 = vsub.f32 %v2131, %v2134
        %v2136 = vmul.f32 %v2135, 1.442695
        %v2137 = vpow.pop %v2136
        %v2138 = vsel %vm1616, %v2137, 0.0
        %2139 = vadd.xlane.f32.xlu0 %v2138
        %v2140 = vpop.xlane.xlu0 %2139
        %v2141 = vrcp.pop %v2140
        %v2142 = vmul.f32 %v2137, %v2141
        %v2143 = vsel %vm2064, %v2142, 0.0
        %v2144 = vpack.c.bf16 %v2143, %v2143
        %2145 = vrot.lane.b32.xlu0 %v2081, 88
        %v2146 = vpop.permute.xlu0 %2145
        %v2148 = vsel %vm1616, %v2144, 0
        %v2151 = vsel %vm1654, %v2146, 0
        %2153 = vmatpush.bf16.msra.mxu0 0
        %2154 = vmatpush.bf16.msra.mxu0 0
        %2155 = vmatpush.bf16.msra.mxu0 0
        %2156 = vmatpush.bf16.msra.mxu0 0
        %2157 = vmatpush.bf16.msra.mxu0 0
        %2158 = vmatpush.bf16.msra.mxu0 0
        %2159 = vmatpush.bf16.msra.mxu0 0
        %2160 = vmatpush.bf16.msra.mxu0 %v2151
        %2161 = vmatmul.bf16.gmra.mxu0 %v2148
        %v2162 = vpop.f32.mrf.mxu0
        %v2163 = vadd.f32 0.0, %v2162
        %v2164 = vpop.f32.mrf.mxu0
        %2165 = vdwg.mxu0
        %v2166 = vpack.c.bf16 %v2163, %v2163
        %v2168 = vsel %vm1616, %v2166, 0
        %v2171 = vsel %vm1654, %v2036, 0
        %2173 = vmatpush.bf16.msra.mxu0 0
        %2174 = vmatpush.bf16.msra.mxu0 0
        %2175 = vmatpush.bf16.msra.mxu0 0
        %2176 = vmatpush.bf16.msra.mxu0 0
        %2177 = vmatpush.bf16.msra.mxu0 0
        %2178 = vmatpush.bf16.msra.mxu0 0
        %2179 = vmatpush.bf16.msra.mxu0 0
        %2180 = vmatpush.bf16.msra.mxu0 %v2171
        %2181 = vmatmul.bf16.gmra.mxu0 %v2168
        %v2182 = vpop.f32.mrf.mxu0
        %v2183 = vadd.f32 0.0, %v2182
        %v2184 = vpop.f32.mrf.mxu0
        %2185 = vdwg.mxu0
        %v2187 = vsel %vm1616, %v2103, 0
        %v2190 = vsel %vm1654, %v2035, 0
        %2192 = vmatpush.bf16.msra.mxu0 0
        %2193 = vmatpush.bf16.msra.mxu0 0
        %2194 = vmatpush.bf16.msra.mxu0 0
        %2195 = vmatpush.bf16.msra.mxu0 0
        %2196 = vmatpush.bf16.msra.mxu0 0
        %2197 = vmatpush.bf16.msra.mxu0 0
        %2198 = vmatpush.bf16.msra.mxu0 0
        %2199 = vmatpush.bf16.msra.mxu0 %v2190
        %2200 = vmatmul.bf16.gmra.mxu0 %v2187
        %v2201 = vpop.f32.mrf.mxu0
        %v2202 = vadd.f32 %v2183, %v2201
        %v2203 = vpop.f32.mrf.mxu0
        %2204 = vdwg.mxu0
        %2205 = vrot.lane.b32.xlu0 %v2106, 112
        %v2206 = vpop.permute.xlu0 %2205
        %2207 = vrot.lane.b32.xlu0 %v2081, 112
        %v2208 = vpop.permute.xlu0 %2207
        %v2210 = vsel %vm1616, %v2206, 0
        %v2213 = vsel %vm1616, %v2208, 0
        %2215 = vmatpush.bf16.xpose.msra.mxu0 0
        %2216 = vmatpush.bf16.xpose.msra.mxu0 0
        %2217 = vmatpush.bf16.xpose.msra.mxu0 0
        %2218 = vmatpush.bf16.xpose.msra.mxu0 0
        %2219 = vmatpush.bf16.xpose.msra.mxu0 0
        %2220 = vmatpush.bf16.xpose.msra.mxu0 0
        %2221 = vmatpush.bf16.xpose.msra.mxu0 0
        %2222 = vmatpush.bf16.xpose.msra.mxu0 %v2213
        %2223 = vmatmul.bf16.gmra.mxu0 %v2210
        %v2224 = vpop.f32.mrf.mxu0
        %v2225 = vadd.f32 0.0, %v2224
        %v2226 = vpop.f32.mrf.mxu0
        %2227 = vdwg.mxu0
        %v2228 = vmul.f32 %v2225, 0.35355338
        %v2229 = vsel %vm2064, %v2228, -3.4028235e+38
        %v2230 = vsel %vm1616, %v2229, -inf
        %2231 = vmax.xlane.f32.xlu0 %v2230
        %v2232 = vpop.xlane.xlu0 %2231
        %v2233 = vsub.f32 %v2229, %v2232
        %v2234 = vmul.f32 %v2233, 1.442695
        %v2235 = vpow.pop %v2234
        %v2236 = vsel %vm1616, %v2235, 0.0
        %2237 = vadd.xlane.f32.xlu0 %v2236
        %v2238 = vpop.xlane.xlu0 %2237
        %v2239 = vrcp.pop %v2238
        %v2240 = vmul.f32 %v2235, %v2239
        %v2241 = vsel %vm2064, %v2240, 0.0
        %v2242 = vpack.c.bf16 %v2241, %v2241
        %2243 = vrot.lane.b32.xlu0 %v2081, 80
        %v2244 = vpop.permute.xlu0 %2243
        %v2246 = vsel %vm1616, %v2242, 0
        %v2249 = vsel %vm1654, %v2244, 0
        %2251 = vmatpush.bf16.msra.mxu0 0
        %2252 = vmatpush.bf16.msra.mxu0 0
        %2253 = vmatpush.bf16.msra.mxu0 0
        %2254 = vmatpush.bf16.msra.mxu0 0
        %2255 = vmatpush.bf16.msra.mxu0 0
        %2256 = vmatpush.bf16.msra.mxu0 0
        %2257 = vmatpush.bf16.msra.mxu0 0
        %2258 = vmatpush.bf16.msra.mxu0 %v2249
        %2259 = vmatmul.bf16.gmra.mxu0 %v2246
        %v2260 = vpop.f32.mrf.mxu0
        %v2261 = vadd.f32 0.0, %v2260
        %v2262 = vpop.f32.mrf.mxu0
        %2263 = vdwg.mxu0
        %v2264 = vpack.c.bf16 %v2261, %v2261
        %v2266 = vsel %vm1616, %v2264, 0
        %v2269 = vsel %vm1654, %v2037, 0
        %2271 = vmatpush.bf16.msra.mxu0 0
        %2272 = vmatpush.bf16.msra.mxu0 0
        %2273 = vmatpush.bf16.msra.mxu0 0
        %2274 = vmatpush.bf16.msra.mxu0 0
        %2275 = vmatpush.bf16.msra.mxu0 0
        %2276 = vmatpush.bf16.msra.mxu0 0
        %2277 = vmatpush.bf16.msra.mxu0 0
        %2278 = vmatpush.bf16.msra.mxu0 %v2269
        %2279 = vmatmul.bf16.gmra.mxu0 %v2266
        %v2280 = vpop.f32.mrf.mxu0
        %v2281 = vadd.f32 0.0, %v2280
        %v2282 = vpop.f32.mrf.mxu0
        %2283 = vdwg.mxu0
        %v2284 = vadd.f32 %v2202, %v2281
        %2285 = vrot.lane.b32.xlu0 %v2106, 104
        %v2286 = vpop.permute.xlu0 %2285
        %2287 = vrot.lane.b32.xlu0 %v2081, 104
        %v2288 = vpop.permute.xlu0 %2287
        %v2290 = vsel %vm1616, %v2286, 0
        %v2293 = vsel %vm1616, %v2288, 0
        %2295 = vmatpush.bf16.xpose.msra.mxu0 0
        %2296 = vmatpush.bf16.xpose.msra.mxu0 0
        %2297 = vmatpush.bf16.xpose.msra.mxu0 0
        %2298 = vmatpush.bf16.xpose.msra.mxu0 0
        %2299 = vmatpush.bf16.xpose.msra.mxu0 0
        %2300 = vmatpush.bf16.xpose.msra.mxu0 0
        %2301 = vmatpush.bf16.xpose.msra.mxu0 0
        %2302 = vmatpush.bf16.xpose.msra.mxu0 %v2293
        %2303 = vmatmul.bf16.gmra.mxu0 %v2290
        %v2304 = vpop.f32.mrf.mxu0
        %v2305 = vadd.f32 0.0, %v2304
        %v2306 = vpop.f32.mrf.mxu0
        %2307 = vdwg.mxu0
        %v2308 = vmul.f32 %v2305, 0.35355338
        %v2309 = vsel %vm2064, %v2308, -3.4028235e+38
        %v2310 = vsel %vm1616, %v2309, -inf
        %2311 = vmax.xlane.f32.xlu0 %v2310
        %v2312 = vpop.xlane.xlu0 %2311
        %v2313 = vsub.f32 %v2309, %v2312
        %v2314 = vmul.f32 %v2313, 1.442695
        %v2315 = vpow.pop %v2314
        %v2316 = vsel %vm1616, %v2315, 0.0
        %2317 = vadd.xlane.f32.xlu0 %v2316
        %v2318 = vpop.xlane.xlu0 %2317
        %v2319 = vrcp.pop %v2318
        %v2320 = vmul.f32 %v2315, %v2319
        %v2321 = vsel %vm2064, %v2320, 0.0
        %v2322 = vpack.c.bf16 %v2321, %v2321
        %2323 = vrot.lane.b32.xlu0 %v2081, 72
        %v2324 = vpop.permute.xlu0 %2323
        %v2326 = vsel %vm1616, %v2322, 0
        %v2329 = vsel %vm1654, %v2324, 0
        %2331 = vmatpush.bf16.msra.mxu0 0
        %2332 = vmatpush.bf16.msra.mxu0 0
        %2333 = vmatpush.bf16.msra.mxu0 0
        %2334 = vmatpush.bf16.msra.mxu0 0
        %2335 = vmatpush.bf16.msra.mxu0 0
        %2336 = vmatpush.bf16.msra.mxu0 0
        %2337 = vmatpush.bf16.msra.mxu0 0
        %2338 = vmatpush.bf16.msra.mxu0 %v2329
        %2339 = vmatmul.bf16.gmra.mxu0 %v2326
        %v2340 = vpop.f32.mrf.mxu0
        %v2341 = vadd.f32 0.0, %v2340
        %v2342 = vpop.f32.mrf.mxu0
        %2343 = vdwg.mxu0
        %v2344 = vpack.c.bf16 %v2341, %v2341
        %v2346 = vsel %vm1616, %v2344, 0
        %v2349 = vsel %vm1654, %v2038, 0
        %2351 = vmatpush.bf16.msra.mxu0 0
        %2352 = vmatpush.bf16.msra.mxu0 0
        %2353 = vmatpush.bf16.msra.mxu0 0
        %2354 = vmatpush.bf16.msra.mxu0 0
        %2355 = vmatpush.bf16.msra.mxu0 0
        %2356 = vmatpush.bf16.msra.mxu0 0
        %2357 = vmatpush.bf16.msra.mxu0 0
        %2358 = vmatpush.bf16.msra.mxu0 %v2349
        %2359 = vmatmul.bf16.gmra.mxu0 %v2346
        %v2360 = vpop.f32.mrf.mxu0
        %v2361 = vadd.f32 0.0, %v2360
        %v2362 = vpop.f32.mrf.mxu0
        %2363 = vdwg.mxu0
        %v2364 = vadd.f32 %v2284, %v2361
        %v2366 = vperm.slane %v2039, 0
        %v2368 = vadd.f32 %v2364, %v2366
        %v2369 = vadd.f32 %v1928, %v2368
        %v2370 = vld [vmem:[%s1306] sm:$0x1]
        %v2371 = vld [vmem:[%s1315] sm:$0x1]
        %v2372 = vsel %vm1530, %v2369, 0.0
        %2373 = vadd.xlane.f32.xlu0 %v2372
        %v2374 = vpop.xlane.xlu0 %2373
        %v2375 = vmul.f32 %v2374, %v1540
        %v2376 = vsub.f32 %v2369, %v2375
        %v2377 = vmul.f32 %v2376, %v2376
        %v2378 = vsel %vm1530, %v2377, 0.0
        %2379 = vadd.xlane.f32.xlu0 %v2378
        %v2380 = vpop.xlane.xlu0 %2379
        %v2381 = vmul.f32 %v2380, %v1540
        %v2382 = vadd.f32 %v2381, 1e-12
        %v2383 = vrsqrt.pop %v2382
        %v2384 = vmul.f32 %v2383, %v2382
        %v2385 = vmul.f32 %v2384, %v2383
        %v2386 = vmul.f32 0.5, %v2385
        %v2387 = vsub.f32 1.5, %v2386
        %v2388 = vmul.f32 %v2383, %v2387
        %vm2389 = vweird.f32 %v2382
        %vm2390 = vweird.f32 %v2383
        %vm2391 = vmor %vm2389, %vm2390
        %v2392 = vsel %vm2391, %v2383, %v2388
        %v2393 = vmul.f32 %v2376, %v2392
        %v2395 = vperm.slane %v2370, 0
        %v2397 = vmul.f32 %v2393, %v2395
        %v2399 = vperm.slane %v2371, 0
        %v2401 = vadd.f32 %v2397, %v2399
        %v2402 = vpack.c.bf16 %v2401, %v2401
        %v2403 = vld [vmem:[%s1325] sm:$0xf]
        %v2404 = vld [vmem:[%s1325 + $0x4] sm:$0xf]
        %v2405 = vld [vmem:[%s1325 + $0x8] sm:$0xf]
        %v2406 = vld [vmem:[%s1325 + $0xc] sm:$0xf]
        %v2407 = vld [vmem:[%s1508] sm:$0x1]
        %v2409 = vperm.slane %v2407, 0
        %v2415 = vunpack.c.l.b16 %v2403
        %v2416 = vunpack.c.l.b16 %v2404
        %v2417 = vunpack.c.l.b16 %v2405
        %v2418 = vunpack.c.l.b16 %v2406
        %v2419 = vpack.c.b16 %v2416, %v2415
        %v2420 = vpack.c.b16 %v2418, %v2417
        %v2424 = vsel %vm1530, %v2402, 0
        %2426 = vmatpush.bf16.msra.mxu0 0
        %2427 = vmatpush.bf16.msra.mxu0 0
        %2428 = vmatpush.bf16.msra.mxu0 0
        %2429 = vmatpush.bf16.msra.mxu0 0
        %2430 = vmatpush.bf16.msra.mxu0 0
        %2431 = vmatpush.bf16.msra.mxu0 0
        %2432 = vmatpush.bf16.msra.mxu0 %v2420
        %2433 = vmatpush.bf16.msra.mxu0 %v2419
        %2434 = vmatmul.bf16.gmra.mxu0 %v2424
        %v2435 = vpop.f32.mrf.mxu0
        %v2436 = vadd.f32 %v2409, %v2435
        %v2437 = vpop.f32.mrf.mxu0
        %2438 = vdwg.mxu0
        %v2439 = vmax.f32 %v2436, 0.0
        %v2440 = vpack.c.bf16 %v2439, %v2439
        %v2441 = vld [vmem:[%s1513] sm:$0xf]
        %v2442 = vld [vmem:[%s1513 + $0x4] sm:$0xf]
        %v2443 = vld [vmem:[%s1513 + $0x8] sm:$0xf]
        %v2444 = vld [vmem:[%s1513 + $0xc] sm:$0xf]
        %v2445 = vld [vmem:[%s1513 + $0x10] sm:$0xf]
        %v2446 = vld [vmem:[%s1513 + $0x14] sm:$0xf]
        %v2447 = vld [vmem:[%s1513 + $0x18] sm:$0xf]
        %v2448 = vld [vmem:[%s1513 + $0x1c] sm:$0xf]
        %v2449 = vld [vmem:[%s1516] sm:$0x1]
        %v2451 = vperm.slane %v2449, 0
        %v2461 = vunpack.c.l.b16 %v2441
        %v2462 = vunpack.c.l.b16 %v2442
        %v2463 = vunpack.c.l.b16 %v2443
        %v2464 = vunpack.c.l.b16 %v2444
        %v2465 = vunpack.c.l.b16 %v2445
        %v2466 = vunpack.c.l.b16 %v2446
        %v2467 = vunpack.c.l.b16 %v2447
        %v2468 = vunpack.c.l.b16 %v2448
        %v2469 = vpack.c.b16 %v2462, %v2461
        %v2470 = vpack.c.b16 %v2464, %v2463
        %v2471 = vpack.c.b16 %v2466, %v2465
        %v2472 = vpack.c.b16 %v2468, %v2467
        %vm2477 = vcmask 523264
        %v2479 = vsel %vm2477, %v2440, 0
        %2481 = vmatpush.bf16.msra.mxu0 0
        %2482 = vmatpush.bf16.msra.mxu0 0
        %2483 = vmatpush.bf16.msra.mxu0 0
        %2484 = vmatpush.bf16.msra.mxu0 0
        %2485 = vmatpush.bf16.msra.mxu0 %v2472
        %2486 = vmatpush.bf16.msra.mxu0 %v2471
        %2487 = vmatpush.bf16.msra.mxu0 %v2470
        %2488 = vmatpush.bf16.msra.mxu0 %v2469
        %2489 = vmatmul.bf16.gmra.mxu0 %v2479
        %v2490 = vpop.f32.mrf.mxu0
        %v2491 = vadd.f32 %v2451, %v2490
        %v2492 = vpop.f32.mrf.mxu0
        %2493 = vdwg.mxu0
        %v2494 = vadd.f32 %v2369, %v2491
        %2495 = vst.msk [vmem:[#allocation2] sm:$0xff] %vm1530, %v2494
        %p2496 = scmp.eq.s32.totalorder %s73, 1
        // Predicated region
        $region201: #{tpu_custom_call.1} parent=127 // pred_check
          %p2497 = pneg %p2496
        $region202: #{tpu_custom_call.1} parent=127 // pred_check_branch
          %2499 = sbr.rel (%p2497) target = $region204
        $region203: #{tpu_custom_call.1} parent=127 // pred_region
          %v2500 = vld [vmem:[%s23] sm:$0x1]
          %v2501 = vld [vmem:[%s24] sm:$0x1]
          %v2502 = vsel %vm1530, %v2494, 0.0
          %2503 = vadd.xlane.f32.xlu0 %v2502
          %v2504 = vpop.xlane.xlu0 %2503
          %v2505 = vmul.f32 %v2504, %v1540
          %v2506 = vsub.f32 %v2494, %v2505
          %v2507 = vmul.f32 %v2506, %v2506
          %v2508 = vsel %vm1530, %v2507, 0.0
          %2509 = vadd.xlane.f32.xlu0 %v2508
          %v2510 = vpop.xlane.xlu0 %2509
          %v2511 = vmul.f32 %v2510, %v1540
          %v2512 = vadd.f32 %v2511, 1e-12
          %v2513 = vrsqrt.pop %v2512
          %v2514 = vmul.f32 %v2513, %v2512
          %v2515 = vmul.f32 %v2514, %v2513
          %v2516 = vmul.f32 0.5, %v2515
          %v2517 = vsub.f32 1.5, %v2516
          %v2518 = vmul.f32 %v2513, %v2517
          %vm2519 = vweird.f32 %v2512
          %vm2520 = vweird.f32 %v2513
          %vm2521 = vmor %vm2519, %vm2520
          %v2522 = vsel %vm2521, %v2513, %v2518
          %v2523 = vmul.f32 %v2506, %v2522
          %v2525 = vperm.slane %v2500, 0
          %v2527 = vmul.f32 %v2523, %v2525
          %v2529 = vperm.slane %v2501, 0
          %v2531 = vadd.f32 %v2527, %v2529
          %v2532 = vpack.c.bf16 %v2531, %v2531
          %v2533 = vld [vmem:[%s25] sm:$0xf]
          %v2534 = vld [vmem:[%s25 + $0x4] sm:$0xf]
          %v2535 = vld [vmem:[%s25 + $0x8] sm:$0xf]
          %v2536 = vld [vmem:[%s25 + $0xc] sm:$0xf]
          %v2537 = vld [vmem:[%s26] sm:$0x1]
          %v2539 = vperm.slane %v2537, 0
          %v2545 = vunpack.c.l.b16 %v2533
          %v2546 = vunpack.c.l.b16 %v2534
          %v2547 = vunpack.c.l.b16 %v2535
          %v2548 = vunpack.c.l.b16 %v2536
          %v2549 = vpack.c.b16 %v2546, %v2545
          %v2550 = vpack.c.b16 %v2548, %v2547
          %v2554 = vsel %vm1530, %v2532, 0
          %2556 = vmatpush.bf16.msra.mxu0 0
          %2557 = vmatpush.bf16.msra.mxu0 0
          %2558 = vmatpush.bf16.msra.mxu0 0
          %2559 = vmatpush.bf16.msra.mxu0 0
          %2560 = vmatpush.bf16.msra.mxu0 0
          %2561 = vmatpush.bf16.msra.mxu0 0
          %2562 = vmatpush.bf16.msra.mxu0 %v2550
          %2563 = vmatpush.bf16.msra.mxu0 %v2549
          %2564 = vmatmul.bf16.gmra.mxu0 %v2554
          %v2565 = vpop.f32.mrf.mxu0
          %v2566 = vadd.f32 %v2539, %v2565
          %v2567 = vpop.f32.mrf.mxu0
          %2568 = vdwg.mxu0
          %2569 = vst [vmem:[%s1490] sm:$0xff] %v2566
        $region204: #{tpu_custom_call.1} parent=127 // pred_fallthru
          _
        %s2570 = sand.u32 %s770, 1
        %s2571 = scalar_lea.sflag [#allocation5], %s2570
        %s2572 = sand.u32 %s770, 1
        %s2573 = smul.addr %s2572, 8
        %s2574 = scalar_lea.vmem [#allocation30], %s2573
        // Predicated region
        $region205: #{tpu_custom_call.1} parent=127 // pred_check
          %p2575 = pneg %p780
        $region206: #{tpu_custom_call.1} parent=127 // pred_check_branch
          %2577 = sbr.rel (%p2575) target = $region208
        $region207: #{tpu_custom_call.1} parent=127 // pred_region
          %2579 = vsyncadd %s2571, 0
          %s2580 = smul.addr %s72, 8
          %s2581 = scalar_lea.hbm %s27, %s2580
          %s2583 = sshll.u32 %s2574, 4
          %s2584 = int_to_ptr.vmem [resolvable:$true] %s2583
          %s2585 = sshll.u32 %s2581, 4
          %s2586 = int_to_ptr.hbm [resolvable:$true] %s2585
          %2588 = dma.vmem_to_hbm [thread:$0]  %s2584, 128, %s2586, %s2571
        $region208: #{tpu_custom_call.1} parent=127 // pred_fallthru
          _
      $region128: #{tpu_custom_call.1} parent=5 // pred_fallthru
        _
      %p2589 = scmp.le.s32.totalorder 2, %s63
      // Predicated region
      $region209: #{tpu_custom_call.1} parent=5 // pred_check
        %p2590 = pneg %p2589
      $region210: #{tpu_custom_call.1} parent=5 // pred_check_branch
        %2592 = sbr.rel (%p2590) target = $region212
      $region211: #{tpu_custom_call.1} parent=5 // pred_region
        %s2593 = ssub.s32 %s63, 2
        // Predicated region
        $region213: #{tpu_custom_call.1} parent=211 // pred_check
          %p2594 = pneg %p786
        $region214: #{tpu_custom_call.1} parent=211 // pred_check_branch
          %2596 = sbr.rel (%p2594) target = $region216
        $region215: #{tpu_custom_call.1} parent=211 // pred_region
          %s2597 = sand.u32 %s771, 1
          %s2598 = scalar_lea.sflag [#allocation5], %s2597
          %s2599 = sand.u32 %s771, 1
          %s2600 = smul.addr %s2599, 8
          %s2601 = scalar_lea.vmem [#allocation30], %s2600
          %2603 = dma.done %s2598, 128
        $region216: #{tpu_custom_call.1} parent=211 // pred_fallthru
          _
      $region212: #{tpu_custom_call.1} parent=5 // pred_fallthru
        _
    $region6: #{tpu_custom_call.1} parent=1 // loop_footer
      %s67 = sadd.s32 1, %s63
    $region7: #{tpu_custom_call.1} parent=1 // loop_footer_branch
      %62 = sbr.rel target = $region3
    $region8: #{tpu_custom_call.1} parent=1 // loop_exit
      _
    %2604 = vsyncpa [#allocation4], 1
    %s2605 = scalar_lea.sflag [#allocation4], 1
    %2606 = vsyncpa %s2605, 1
    %2607 = vsyncpa [#allocation7], 1
    %s2608 = scalar_lea.sflag [#allocation7], 1
    %2609 = vsyncpa %s2608, 1
    %2610 = vsyncpa [#allocation10], 1
    %s2611 = scalar_lea.sflag [#allocation10], 1
    %2612 = vsyncpa %s2611, 1
    %2613 = vsyncpa [#allocation13], 1
    %s2614 = scalar_lea.sflag [#allocation13], 1
    %2615 = vsyncpa %s2614, 1
    %2616 = vsyncpa [#allocation16], 1
    %s2617 = scalar_lea.sflag [#allocation16], 1
    %2618 = vsyncpa %s2617, 1
    %2619 = vsyncpa [#allocation19], 1
    %s2620 = scalar_lea.sflag [#allocation19], 1
    %2621 = vsyncpa %s2620, 1
    %2622 = vsyncpa [#allocation22], 1
    %s2623 = scalar_lea.sflag [#allocation22], 1
    %2624 = vsyncpa %s2623, 1
    %2625 = vsyncpa [#allocation25], 1
    %s2626 = scalar_lea.sflag [#allocation25], 1
    %2627 = vsyncpa %s2626, 1
    %2628 = vsyncpa [#allocation28], 1
    %s2629 = scalar_lea.sflag [#allocation28], 1
    %2630 = vsyncpa %s2629, 1
    %2631 = vsyncpa [#allocation5], 1
    %s2632 = scalar_lea.sflag [#allocation5], 1
    %2633 = vsyncpa %s2632, 1

</llo_original>
